<compile_context>
chip_gen: v7x
topology: tpu7x:2x2x1
jax: 0.10.0
libtpu: 0.0.40
codegen_flags: <defaults>
</compile_context>

<pallas_src>
import functools

import numpy as np

import jax
import jax.numpy as jnp
from jax.experimental import pallas as pl
from jax.experimental.pallas import tpu as pltpu


def _rope_kernel(x_ref, t1_ref, t2_ref, pe_ref, po_ref, o_ref, *, precision):
    # x_ref / o_ref : (bh_block, seq_tile, lanes)   native dtype
    # t1_ref/t2_ref : (seq_tile, lanes) f32;  per position block: [cos|sin], [-sin|cos]
    # pe_ref/po_ref : (lanes, lanes) 0/1 block-diagonal permutation matrices, x.dtype
    t1 = t1_ref[...]
    t2 = t2_ref[...]
    pe = pe_ref[...]
    po = po_ref[...]
    for b in range(x_ref.shape[0]):          # small, statically unrolled (<= 8)
        x = x_ref[b]                         # (seq_tile, lanes), native dtype
        # MXU de-interleave: each output element is a single x-element * 1.0,
        # accumulated in f32 -> exact (single pass for bf16, HIGHEST for f32).
        xe = jnp.dot(x, pe, precision=precision,
                     preferred_element_type=jnp.float32)   # [even | even] per block
        xo = jnp.dot(x, po, precision=precision,
                     preferred_element_type=jnp.float32)   # [odd  | odd ] per block
        o_ref[b] = (xe * t1 + xo * t2).astype(o_ref.dtype)


def _pick_fold(head_dim, seq_len, target_lanes=128):
    """Fold factor f: pack f adjacent positions into lanes so f*head_dim ~ 128."""
    if head_dim >= target_lanes:
        return 1
    for f in range(target_lanes // head_dim, 0, -1):
        if seq_len % f == 0:
            return f
    return 1


def _pick_seq_tile(s_total, cap):
    """Largest multiple-of-8 divisor of s_total that is <= cap; else full extent."""
    best = 0
    for d in range(8, min(s_total, cap) + 1, 8):
        if s_total % d == 0:
            best = d
    if best == 0:
        best = s_total  # short/odd folded seq: full-extent block (legal block shape)
    return best


def _pick_bh_block(bh, cap):
    best = 1
    for d in range(1, min(bh, cap) + 1):
        if bh % d == 0:
            best = d
    return best


def rope(x, base=10000.0, *, seq_tile=None, bh_block=None):
    """Rotary position embedding. x: (batch, n_heads, seq_len, head_dim)."""
    batch, n_heads, seq_len, head_dim = x.shape
    assert head_dim % 2 == 0, "head_dim must be even"
    half = head_dim // 2

    f = _pick_fold(head_dim, seq_len)
    lanes = f * head_dim                       # folded last dim (128 when possible)
    s_fold = seq_len // f
    bh = batch * n_heads

    # ---- tiny f32 side tables, computed once in the wrapper -----------------------
    theta = 1.0 / (base ** (jnp.arange(0, head_dim, 2, dtype=jnp.float32) / head_dim))
    angles = jnp.arange(seq_len, dtype=jnp.float32)[:, None] * theta[None, :]  # (S, half)
    cos = jnp.cos(angles)
    sin = jnp.sin(angles)
    # per position: t1 = [cos | sin], t2 = [-sin | cos]; folded to (s_fold, lanes)
    t1 = jnp.concatenate([cos, sin], axis=-1).reshape(s_fold, lanes)
    t2 = jnp.concatenate([-sin, cos], axis=-1).reshape(s_fold, lanes)

    # ---- 0/1 de-interleave matrices (host constants, block-diagonal over the fold) -
    rows_even = np.arange(0, head_dim, 2)
    rows_odd = rows_even + 1
    cols = np.arange(half)
    pe_blk = np.zeros((head_dim, head_dim), np.float32)
    pe_blk[rows_even, cols] = 1.0
    pe_blk[rows_even, half + cols] = 1.0       # x_blk @ pe_blk = [x_even | x_even]
    po_blk = np.zeros((head_dim, head_dim), np.float32)
    po_blk[rows_odd, cols] = 1.0
    po_blk[rows_odd, half + cols] = 1.0        # x_blk @ po_blk = [x_odd  | x_odd ]
    eye_f = np.eye(f, dtype=np.float32)
    pe = jnp.asarray(np.kron(eye_f, pe_blk)).astype(x.dtype)
    po = jnp.asarray(np.kron(eye_f, po_blk)).astype(x.dtype)

    # bf16 (and narrower) inputs: single-pass DEFAULT matmul is exact here.
    # f32 inputs: HIGHEST required for exactness (multi-pass bf16 emulation).
    precision = (jax.lax.Precision.HIGHEST if x.dtype == jnp.float32
                 else jax.lax.Precision.DEFAULT)

    # ---- block sizing: ~1 MiB/step payload, footprint < default scoped VMEM -------
    itemsize = x.dtype.itemsize
    vmem_budget = 10 * 1024 * 1024   # stays under v5e's 16 MiB default scoped limit
    if seq_tile is None:
        cap = max(8, vmem_budget // (4 * lanes * (itemsize + 4)))
        seq_tile = _pick_seq_tile(s_fold, min(cap, 4096))
    assert s_fold % seq_tile == 0
    if bh_block is None:
        row_bytes = 4 * seq_tile * lanes
        cap = max(1, (vmem_budget // row_bytes - 4) // itemsize)
        bh_block = _pick_bh_block(bh, min(8, cap))
    assert bh % bh_block == 0

    x3 = x.reshape(bh, s_fold, lanes)          # free, contiguous reshape

    n_elems = bh * s_fold * lanes
    cost = pl.CostEstimate(
        flops=int(4 * bh * s_fold * lanes * lanes + 3 * n_elems),
        transcendentals=0,
        bytes_accessed=int(2 * n_elems * itemsize            # x in + out
                           + 2 * s_fold * lanes * 4          # t1, t2 (once per seq tile)
                           + 2 * lanes * lanes * itemsize),  # pe, po (fetched once)
    )

    # bh is the innermost grid axis -> table/permutation block indices are constant
    # across the inner loop, so Pallas keeps them resident in VMEM.
    grid = (s_fold // seq_tile, bh // bh_block)

    out3 = pl.pallas_call(
        functools.partial(_rope_kernel, precision=precision),
        out_shape=jax.ShapeDtypeStruct((bh, s_fold, lanes), x.dtype),
        grid_spec=pltpu.PrefetchScalarGridSpec(
            num_scalar_prefetch=0,
            grid=grid,
            in_specs=[
                pl.BlockSpec((bh_block, seq_tile, lanes), lambda s, b: (b, s, 0)),
                pl.BlockSpec((seq_tile, lanes), lambda s, b: (s, 0)),
                pl.BlockSpec((seq_tile, lanes), lambda s, b: (s, 0)),
                pl.BlockSpec((lanes, lanes), lambda s, b: (0, 0)),
                pl.BlockSpec((lanes, lanes), lambda s, b: (0, 0)),
            ],
            out_specs=pl.BlockSpec((bh_block, seq_tile, lanes),
                                   lambda s, b: (b, s, 0)),
        ),
        compiler_params=pltpu.CompilerParams(
            dimension_semantics=("parallel", "parallel"),
            # vmem_limit_bytes intentionally omitted: double-buffered footprint is
            # <= ~10 MiB, inside the default scoped limit on v5e/v6e/v7x.
        ),
        cost_estimate=cost,
    )(x3, t1, t2, pe, po)

    return out3.reshape(batch, n_heads, seq_len, head_dim)


if __name__ == "__main__":
    batch, n_heads, seq_len, head_dim = 2, 4, 8, 32
    base = 10000.0
    key = jax.random.PRNGKey(0)
    x = jax.random.normal(key, (batch, n_heads, seq_len, head_dim), dtype=jnp.float32)

    out = jax.block_until_ready(rope(x, base=base))

    # pure-JAX reference mirroring the PyTorch module
    theta = 1.0 / (base ** (jnp.arange(0, head_dim, 2, dtype=jnp.float32) / head_dim))
    angles = jnp.arange(seq_len, dtype=jnp.float32)[:, None] * theta[None, :]
    cos_r = jnp.cos(angles)[None, None]   # (1, 1, S, half)
    sin_r = jnp.sin(angles)[None, None]
    x1, x2 = x[..., 0::2], x[..., 1::2]
    ref = jnp.concatenate([-x2 * sin_r + x1 * cos_r, x1 * sin_r + x2 * cos_r], axis=-1)

    assert out.shape == x.shape
    assert jnp.allclose(out, ref, atol=1e-5, rtol=1e-5), "f32 mismatch vs reference"

    # exercise the optimized bf16 (single-pass DEFAULT matmul) path as well
    xb = x.astype(jnp.bfloat16)
    out_b = jax.block_until_ready(rope(xb, base=base)).astype(jnp.float32)
    xbf = xb.astype(jnp.float32)
    x1b, x2b = xbf[..., 0::2], xbf[..., 1::2]
    ref_b = jnp.concatenate([-x2b * sin_r + x1b * cos_r, x1b * sin_r + x2b * cos_r],
                            axis=-1)
    assert jnp.allclose(out_b, ref_b, atol=5e-2, rtol=2e-2), "bf16 mismatch vs reference"

    print("KERNEL_OK")
</pallas_src>

<mosaic_0001>
module attributes {stable_mosaic.version = 11 : i64} {
  func.func @_rope_kernel(%arg0: i32, %arg1: i32, %arg2: memref<8x2x128xf32, #tpu.memory_space<vmem>>, %arg3: memref<2x128xf32, #tpu.memory_space<vmem>>, %arg4: memref<2x128xf32, #tpu.memory_space<vmem>>, %arg5: memref<128x128xf32, #tpu.memory_space<vmem>>, %arg6: memref<128x128xf32, #tpu.memory_space<vmem>>, %arg7: memref<8x2x128xf32, #tpu.memory_space<vmem>>) attributes {dimension_semantics = [#tpu.dimension_semantics<parallel>, #tpu.dimension_semantics<parallel>], iteration_bounds = array<i64: 1, 1>, scalar_prefetch = 0 : i64, scratch_operands = 0 : i64, tpu.core_type = #tpu.core_type<tc>, window_params = [{transform_indices = @transform_0, window_bounds = array<i64: 8, 2, 128>}, {transform_indices = @transform_1, window_bounds = array<i64: 2, 128>}, {transform_indices = @transform_2, window_bounds = array<i64: 2, 128>}, {pipeline_mode = #tpu.pipeline_mode<synchronous>, transform_indices = @transform_3, window_bounds = array<i64: 128, 128>}, {pipeline_mode = #tpu.pipeline_mode<synchronous>, transform_indices = @transform_4, window_bounds = array<i64: 128, 128>}, {transform_indices = @transform_5, window_bounds = array<i64: 8, 2, 128>}]} {
    %c0 = arith.constant 0 : index
    %c0_0 = arith.constant 0 : index
    %0 = vector.load %arg3[%c0, %c0_0] : memref<2x128xf32, #tpu.memory_space<vmem>>, vector<2x128xf32>
    %c0_1 = arith.constant 0 : index
    %c0_2 = arith.constant 0 : index
    %1 = vector.load %arg4[%c0_1, %c0_2] : memref<2x128xf32, #tpu.memory_space<vmem>>, vector<2x128xf32>
    %c0_3 = arith.constant 0 : index
    %c0_4 = arith.constant 0 : index
    %2 = vector.load %arg5[%c0_3, %c0_4] : memref<128x128xf32, #tpu.memory_space<vmem>>, vector<128x128xf32>
    %c0_5 = arith.constant 0 : index
    %c0_6 = arith.constant 0 : index
    %3 = vector.load %arg6[%c0_5, %c0_6] : memref<128x128xf32, #tpu.memory_space<vmem>>, vector<128x128xf32>
    %c0_7 = arith.constant 0 : index
    %c0_8 = arith.constant 0 : index
    %c0_9 = arith.constant 0 : index
    %4 = vector.load %arg2[%c0_7, %c0_8, %c0_9] : memref<8x2x128xf32, #tpu.memory_space<vmem>>, vector<1x2x128xf32>
    %5 = vector.shape_cast %4 : vector<1x2x128xf32> to vector<2x128xf32>
    %cst = arith.constant dense<0.000000e+00> : vector<2x128xf32>
    %6 = tpu.matmul %5, %2, %cst {dimension_numbers = #tpu.dot_dimension_numbers<[1], [0], [0], [1], [0, 0, 1, 1], [], []>, precision = #tpu.contract_precision<fp32>} : vector<2x128xf32>, vector<128x128xf32>, vector<2x128xf32> -> vector<2x128xf32>
    %cst_10 = arith.constant dense<0.000000e+00> : vector<2x128xf32>
    %7 = tpu.matmul %5, %3, %cst_10 {dimension_numbers = #tpu.dot_dimension_numbers<[1], [0], [0], [1], [0, 0, 1, 1], [], []>, precision = #tpu.contract_precision<fp32>} : vector<2x128xf32>, vector<128x128xf32>, vector<2x128xf32> -> vector<2x128xf32>
    %8 = arith.mulf %6, %0 : vector<2x128xf32>
    %9 = arith.mulf %7, %1 : vector<2x128xf32>
    %10 = arith.addf %8, %9 : vector<2x128xf32>
    %c0_11 = arith.constant 0 : index
    %c0_12 = arith.constant 0 : index
    %c0_13 = arith.constant 0 : index
    %11 = vector.load %arg7[%c0_11, %c0_12, %c0_13] : memref<8x2x128xf32, #tpu.memory_space<vmem>>, vector<1x2x128xf32>
    %12 = vector.shape_cast %11 : vector<1x2x128xf32> to vector<2x128xf32>
    %13 = vector.shape_cast %10 : vector<2x128xf32> to vector<1x2x128xf32>
    tpu.vector_store %arg7[%c0_11, %c0_12, %c0_13], %13 {strides = array<i32>} : memref<8x2x128xf32, #tpu.memory_space<vmem>>, vector<1x2x128xf32>,
    %c1 = arith.constant 1 : index
    %c0_14 = arith.constant 0 : index
    %c0_15 = arith.constant 0 : index
    %14 = vector.load %arg2[%c1, %c0_14, %c0_15] : memref<8x2x128xf32, #tpu.memory_space<vmem>>, vector<1x2x128xf32>
    %15 = vector.shape_cast %14 : vector<1x2x128xf32> to vector<2x128xf32>
    %cst_16 = arith.constant dense<0.000000e+00> : vector<2x128xf32>
    %16 = tpu.matmul %15, %2, %cst_16 {dimension_numbers = #tpu.dot_dimension_numbers<[1], [0], [0], [1], [0, 0, 1, 1], [], []>, precision = #tpu.contract_precision<fp32>} : vector<2x128xf32>, vector<128x128xf32>, vector<2x128xf32> -> vector<2x128xf32>
    %cst_17 = arith.constant dense<0.000000e+00> : vector<2x128xf32>
    %17 = tpu.matmul %15, %3, %cst_17 {dimension_numbers = #tpu.dot_dimension_numbers<[1], [0], [0], [1], [0, 0, 1, 1], [], []>, precision = #tpu.contract_precision<fp32>} : vector<2x128xf32>, vector<128x128xf32>, vector<2x128xf32> -> vector<2x128xf32>
    %18 = arith.mulf %16, %0 : vector<2x128xf32>
    %19 = arith.mulf %17, %1 : vector<2x128xf32>
    %20 = arith.addf %18, %19 : vector<2x128xf32>
    %c1_18 = arith.constant 1 : index
    %c0_19 = arith.constant 0 : index
    %c0_20 = arith.constant 0 : index
    %21 = vector.load %arg7[%c1_18, %c0_19, %c0_20] : memref<8x2x128xf32, #tpu.memory_space<vmem>>, vector<1x2x128xf32>
    %22 = vector.shape_cast %21 : vector<1x2x128xf32> to vector<2x128xf32>
    %23 = vector.shape_cast %20 : vector<2x128xf32> to vector<1x2x128xf32>
    tpu.vector_store %arg7[%c1_18, %c0_19, %c0_20], %23 {strides = array<i32>} : memref<8x2x128xf32, #tpu.memory_space<vmem>>, vector<1x2x128xf32>,
    %c2 = arith.constant 2 : index
    %c0_21 = arith.constant 0 : index
    %c0_22 = arith.constant 0 : index
    %24 = vector.load %arg2[%c2, %c0_21, %c0_22] : memref<8x2x128xf32, #tpu.memory_space<vmem>>, vector<1x2x128xf32>
    %25 = vector.shape_cast %24 : vector<1x2x128xf32> to vector<2x128xf32>
    %cst_23 = arith.constant dense<0.000000e+00> : vector<2x128xf32>
    %26 = tpu.matmul %25, %2, %cst_23 {dimension_numbers = #tpu.dot_dimension_numbers<[1], [0], [0], [1], [0, 0, 1, 1], [], []>, precision = #tpu.contract_precision<fp32>} : vector<2x128xf32>, vector<128x128xf32>, vector<2x128xf32> -> vector<2x128xf32>
    %cst_24 = arith.constant dense<0.000000e+00> : vector<2x128xf32>
    %27 = tpu.matmul %25, %3, %cst_24 {dimension_numbers = #tpu.dot_dimension_numbers<[1], [0], [0], [1], [0, 0, 1, 1], [], []>, precision = #tpu.contract_precision<fp32>} : vector<2x128xf32>, vector<128x128xf32>, vector<2x128xf32> -> vector<2x128xf32>
    %28 = arith.mulf %26, %0 : vector<2x128xf32>
    %29 = arith.mulf %27, %1 : vector<2x128xf32>
    %30 = arith.addf %28, %29 : vector<2x128xf32>
    %c2_25 = arith.constant 2 : index
    %c0_26 = arith.constant 0 : index
    %c0_27 = arith.constant 0 : index
    %31 = vector.load %arg7[%c2_25, %c0_26, %c0_27] : memref<8x2x128xf32, #tpu.memory_space<vmem>>, vector<1x2x128xf32>
    %32 = vector.shape_cast %31 : vector<1x2x128xf32> to vector<2x128xf32>
    %33 = vector.shape_cast %30 : vector<2x128xf32> to vector<1x2x128xf32>
    tpu.vector_store %arg7[%c2_25, %c0_26, %c0_27], %33 {strides = array<i32>} : memref<8x2x128xf32, #tpu.memory_space<vmem>>, vector<1x2x128xf32>,
    %c3 = arith.constant 3 : index
    %c0_28 = arith.constant 0 : index
    %c0_29 = arith.constant 0 : index
    %34 = vector.load %arg2[%c3, %c0_28, %c0_29] : memref<8x2x128xf32, #tpu.memory_space<vmem>>, vector<1x2x128xf32>
    %35 = vector.shape_cast %34 : vector<1x2x128xf32> to vector<2x128xf32>
    %cst_30 = arith.constant dense<0.000000e+00> : vector<2x128xf32>
    %36 = tpu.matmul %35, %2, %cst_30 {dimension_numbers = #tpu.dot_dimension_numbers<[1], [0], [0], [1], [0, 0, 1, 1], [], []>, precision = #tpu.contract_precision<fp32>} : vector<2x128xf32>, vector<128x128xf32>, vector<2x128xf32> -> vector<2x128xf32>
    %cst_31 = arith.constant dense<0.000000e+00> : vector<2x128xf32>
    %37 = tpu.matmul %35, %3, %cst_31 {dimension_numbers = #tpu.dot_dimension_numbers<[1], [0], [0], [1], [0, 0, 1, 1], [], []>, precision = #tpu.contract_precision<fp32>} : vector<2x128xf32>, vector<128x128xf32>, vector<2x128xf32> -> vector<2x128xf32>
    %38 = arith.mulf %36, %0 : vector<2x128xf32>
    %39 = arith.mulf %37, %1 : vector<2x128xf32>
    %40 = arith.addf %38, %39 : vector<2x128xf32>
    %c3_32 = arith.constant 3 : index
    %c0_33 = arith.constant 0 : index
    %c0_34 = arith.constant 0 : index
    %41 = vector.load %arg7[%c3_32, %c0_33, %c0_34] : memref<8x2x128xf32, #tpu.memory_space<vmem>>, vector<1x2x128xf32>
    %42 = vector.shape_cast %41 : vector<1x2x128xf32> to vector<2x128xf32>
    %43 = vector.shape_cast %40 : vector<2x128xf32> to vector<1x2x128xf32>
    tpu.vector_store %arg7[%c3_32, %c0_33, %c0_34], %43 {strides = array<i32>} : memref<8x2x128xf32, #tpu.memory_space<vmem>>, vector<1x2x128xf32>,
    %c4 = arith.constant 4 : index
    %c0_35 = arith.constant 0 : index
    %c0_36 = arith.constant 0 : index
    %44 = vector.load %arg2[%c4, %c0_35, %c0_36] : memref<8x2x128xf32, #tpu.memory_space<vmem>>, vector<1x2x128xf32>
    %45 = vector.shape_cast %44 : vector<1x2x128xf32> to vector<2x128xf32>
    %cst_37 = arith.constant dense<0.000000e+00> : vector<2x128xf32>
    %46 = tpu.matmul %45, %2, %cst_37 {dimension_numbers = #tpu.dot_dimension_numbers<[1], [0], [0], [1], [0, 0, 1, 1], [], []>, precision = #tpu.contract_precision<fp32>} : vector<2x128xf32>, vector<128x128xf32>, vector<2x128xf32> -> vector<2x128xf32>
    %cst_38 = arith.constant dense<0.000000e+00> : vector<2x128xf32>
    %47 = tpu.matmul %45, %3, %cst_38 {dimension_numbers = #tpu.dot_dimension_numbers<[1], [0], [0], [1], [0, 0, 1, 1], [], []>, precision = #tpu.contract_precision<fp32>} : vector<2x128xf32>, vector<128x128xf32>, vector<2x128xf32> -> vector<2x128xf32>
    %48 = arith.mulf %46, %0 : vector<2x128xf32>
    %49 = arith.mulf %47, %1 : vector<2x128xf32>
    %50 = arith.addf %48, %49 : vector<2x128xf32>
    %c4_39 = arith.constant 4 : index
    %c0_40 = arith.constant 0 : index
    %c0_41 = arith.constant 0 : index
    %51 = vector.load %arg7[%c4_39, %c0_40, %c0_41] : memref<8x2x128xf32, #tpu.memory_space<vmem>>, vector<1x2x128xf32>
    %52 = vector.shape_cast %51 : vector<1x2x128xf32> to vector<2x128xf32>
    %53 = vector.shape_cast %50 : vector<2x128xf32> to vector<1x2x128xf32>
    tpu.vector_store %arg7[%c4_39, %c0_40, %c0_41], %53 {strides = array<i32>} : memref<8x2x128xf32, #tpu.memory_space<vmem>>, vector<1x2x128xf32>,
    %c5 = arith.constant 5 : index
    %c0_42 = arith.constant 0 : index
    %c0_43 = arith.constant 0 : index
    %54 = vector.load %arg2[%c5, %c0_42, %c0_43] : memref<8x2x128xf32, #tpu.memory_space<vmem>>, vector<1x2x128xf32>
    %55 = vector.shape_cast %54 : vector<1x2x128xf32> to vector<2x128xf32>
    %cst_44 = arith.constant dense<0.000000e+00> : vector<2x128xf32>
    %56 = tpu.matmul %55, %2, %cst_44 {dimension_numbers = #tpu.dot_dimension_numbers<[1], [0], [0], [1], [0, 0, 1, 1], [], []>, precision = #tpu.contract_precision<fp32>} : vector<2x128xf32>, vector<128x128xf32>, vector<2x128xf32> -> vector<2x128xf32>
    %cst_45 = arith.constant dense<0.000000e+00> : vector<2x128xf32>
    %57 = tpu.matmul %55, %3, %cst_45 {dimension_numbers = #tpu.dot_dimension_numbers<[1], [0], [0], [1], [0, 0, 1, 1], [], []>, precision = #tpu.contract_precision<fp32>} : vector<2x128xf32>, vector<128x128xf32>, vector<2x128xf32> -> vector<2x128xf32>
    %58 = arith.mulf %56, %0 : vector<2x128xf32>
    %59 = arith.mulf %57, %1 : vector<2x128xf32>
    %60 = arith.addf %58, %59 : vector<2x128xf32>
    %c5_46 = arith.constant 5 : index
    %c0_47 = arith.constant 0 : index
    %c0_48 = arith.constant 0 : index
    %61 = vector.load %arg7[%c5_46, %c0_47, %c0_48] : memref<8x2x128xf32, #tpu.memory_space<vmem>>, vector<1x2x128xf32>
    %62 = vector.shape_cast %61 : vector<1x2x128xf32> to vector<2x128xf32>
    %63 = vector.shape_cast %60 : vector<2x128xf32> to vector<1x2x128xf32>
    tpu.vector_store %arg7[%c5_46, %c0_47, %c0_48], %63 {strides = array<i32>} : memref<8x2x128xf32, #tpu.memory_space<vmem>>, vector<1x2x128xf32>,
    %c6 = arith.constant 6 : index
    %c0_49 = arith.constant 0 : index
    %c0_50 = arith.constant 0 : index
    %64 = vector.load %arg2[%c6, %c0_49, %c0_50] : memref<8x2x128xf32, #tpu.memory_space<vmem>>, vector<1x2x128xf32>
    %65 = vector.shape_cast %64 : vector<1x2x128xf32> to vector<2x128xf32>
    %cst_51 = arith.constant dense<0.000000e+00> : vector<2x128xf32>
    %66 = tpu.matmul %65, %2, %cst_51 {dimension_numbers = #tpu.dot_dimension_numbers<[1], [0], [0], [1], [0, 0, 1, 1], [], []>, precision = #tpu.contract_precision<fp32>} : vector<2x128xf32>, vector<128x128xf32>, vector<2x128xf32> -> vector<2x128xf32>
    %cst_52 = arith.constant dense<0.000000e+00> : vector<2x128xf32>
    %67 = tpu.matmul %65, %3, %cst_52 {dimension_numbers = #tpu.dot_dimension_numbers<[1], [0], [0], [1], [0, 0, 1, 1], [], []>, precision = #tpu.contract_precision<fp32>} : vector<2x128xf32>, vector<128x128xf32>, vector<2x128xf32> -> vector<2x128xf32>
    %68 = arith.mulf %66, %0 : vector<2x128xf32>
    %69 = arith.mulf %67, %1 : vector<2x128xf32>
    %70 = arith.addf %68, %69 : vector<2x128xf32>
    %c6_53 = arith.constant 6 : index
    %c0_54 = arith.constant 0 : index
    %c0_55 = arith.constant 0 : index
    %71 = vector.load %arg7[%c6_53, %c0_54, %c0_55] : memref<8x2x128xf32, #tpu.memory_space<vmem>>, vector<1x2x128xf32>
    %72 = vector.shape_cast %71 : vector<1x2x128xf32> to vector<2x128xf32>
    %73 = vector.shape_cast %70 : vector<2x128xf32> to vector<1x2x128xf32>
    tpu.vector_store %arg7[%c6_53, %c0_54, %c0_55], %73 {strides = array<i32>} : memref<8x2x128xf32, #tpu.memory_space<vmem>>, vector<1x2x128xf32>,
    %c7 = arith.constant 7 : index
    %c0_56 = arith.constant 0 : index
    %c0_57 = arith.constant 0 : index
    %74 = vector.load %arg2[%c7, %c0_56, %c0_57] : memref<8x2x128xf32, #tpu.memory_space<vmem>>, vector<1x2x128xf32>
    %75 = vector.shape_cast %74 : vector<1x2x128xf32> to vector<2x128xf32>
    %cst_58 = arith.constant dense<0.000000e+00> : vector<2x128xf32>
    %76 = tpu.matmul %75, %2, %cst_58 {dimension_numbers = #tpu.dot_dimension_numbers<[1], [0], [0], [1], [0, 0, 1, 1], [], []>, precision = #tpu.contract_precision<fp32>} : vector<2x128xf32>, vector<128x128xf32>, vector<2x128xf32> -> vector<2x128xf32>
    %cst_59 = arith.constant dense<0.000000e+00> : vector<2x128xf32>
    %77 = tpu.matmul %75, %3, %cst_59 {dimension_numbers = #tpu.dot_dimension_numbers<[1], [0], [0], [1], [0, 0, 1, 1], [], []>, precision = #tpu.contract_precision<fp32>} : vector<2x128xf32>, vector<128x128xf32>, vector<2x128xf32> -> vector<2x128xf32>
    %78 = arith.mulf %76, %0 : vector<2x128xf32>
    %79 = arith.mulf %77, %1 : vector<2x128xf32>
    %80 = arith.addf %78, %79 : vector<2x128xf32>
    %c7_60 = arith.constant 7 : index
    %c0_61 = arith.constant 0 : index
    %c0_62 = arith.constant 0 : index
    %81 = vector.load %arg7[%c7_60, %c0_61, %c0_62] : memref<8x2x128xf32, #tpu.memory_space<vmem>>, vector<1x2x128xf32>
    %82 = vector.shape_cast %81 : vector<1x2x128xf32> to vector<2x128xf32>
    %83 = vector.shape_cast %80 : vector<2x128xf32> to vector<1x2x128xf32>
    tpu.vector_store %arg7[%c7_60, %c0_61, %c0_62], %83 {strides = array<i32>} : memref<8x2x128xf32, #tpu.memory_space<vmem>>, vector<1x2x128xf32>,
    return
  }
  func.func @transform_0(%arg0: i32, %arg1: i32) -> (i32, i32, i32) {
    %c0_i32 = arith.constant 0 : i32
    %c0_i32_0 = arith.constant 0 : i32
    return %arg1, %arg0, %c0_i32 : i32, i32, i32
  }
  func.func @transform_1(%arg0: i32, %arg1: i32) -> (i32, i32) {
    %c0_i32 = arith.constant 0 : i32
    %c0_i32_0 = arith.constant 0 : i32
    return %arg0, %c0_i32 : i32, i32
  }
  func.func @transform_2(%arg0: i32, %arg1: i32) -> (i32, i32) {
    %c0_i32 = arith.constant 0 : i32
    %c0_i32_0 = arith.constant 0 : i32
    return %arg0, %c0_i32 : i32, i32
  }
  func.func @transform_3(%arg0: i32, %arg1: i32) -> (i32, i32) {
    %c0_i32 = arith.constant 0 : i32
    %c0_i32_0 = arith.constant 0 : i32
    %c0_i32_1 = arith.constant 0 : i32
    return %c0_i32, %c0_i32_0 : i32, i32
  }
  func.func @transform_4(%arg0: i32, %arg1: i32) -> (i32, i32) {
    %c0_i32 = arith.constant 0 : i32
    %c0_i32_0 = arith.constant 0 : i32
    %c0_i32_1 = arith.constant 0 : i32
    return %c0_i32, %c0_i32_0 : i32, i32
  }
  func.func @transform_5(%arg0: i32, %arg1: i32) -> (i32, i32, i32) {
    %c0_i32 = arith.constant 0 : i32
    %c0_i32_0 = arith.constant 0 : i32
    return %arg1, %arg0, %c0_i32 : i32, i32, i32
  }
}

</mosaic_0001>

<llo_original>
// kernel: tpu_custom_call.1
$region0: #{tpu_custom_call.1}
  #allocation0 [shape = 'u32[]', space=smem, size = 0x4, offset = 0x4, fixed_abs, tag = 'smem constant byte address 0x4 - core index']
  #allocation1 [shape = 'u32[144,128]{1,0:T(1,128)}', space=vmem, size = 0x12000, scoped, tag = 'internal scratch']
  %s0 = inlined_call_operand.hbm [shape: f32[8,2,128], index: 0, kind: input, shape index: {}]
  %s1 = inlined_call_operand.vmem [shape: f32[2,128], index: 1, kind: input, shape index: {}]
  %s2 = inlined_call_operand.vmem [shape: f32[2,128], index: 2, kind: input, shape index: {}]
  %s3 = inlined_call_operand.hbm [shape: f32[128,128], index: 3, kind: input, shape index: {}]
  %s4 = inlined_call_operand.hbm [shape: f32[128,128], index: 4, kind: input, shape index: {}]
  %s5 = inlined_call_operand.hbm [shape: f32[8,2,128], index: 5, kind: output, shape index: {}]
  %s6 = sld [smem:[#allocation0]]
  $region42: #{tpu_custom_call.1} parent=0
    _
  %s8 = ssub.s32 1, %s6
  %s9 = scalar_select 0, %s8, %s6
  $region1: #{tpu_custom_call.1} parent=0
    #allocation2 [shape = 'u8[8192]{0}', space=vmem, size = 0x2000, scoped, tag = 'input window, operand 0, single buffered']
    #allocation3 [shape = 's32[1]{0}', space=sflag, size = 0x4, scoped, tag = 'scoped memory for tpu_custom_call.1']
    #allocation4 [shape = 's32[1]{0}', space=sflag, size = 0x4, scoped, tag = 'scoped memory for tpu_custom_call.1']
    #allocation5 [shape = 'u8[65536]{0}', space=vmem, size = 0x10000, scoped, tag = 'input window, operand 3, single buffered']
    #allocation6 [shape = 's32[1]{0}', space=sflag, size = 0x4, scoped, tag = 'scoped memory for tpu_custom_call.1']
    #allocation7 [shape = 'u8[65536]{0}', space=vmem, size = 0x10000, scoped, tag = 'input window, operand 4, single buffered']
    #allocation8 [shape = 'u8[8192]{0}', space=vmem, size = 0x2000, scoped, tag = 'output window, operand 0, single buffered']
    %10 = vsyncpa [#allocation3], 0
    %11 = vsyncpa [#allocation6], 0
    %12 = vsyncpa [#allocation4], 0
    // Predicated region
    $region2: #{tpu_custom_call.1} parent=1 // pred_check
      _
    $region3: #{tpu_custom_call.1} parent=1 // pred_check_branch
      %14 = sbr.rel (0) target = $region5
    $region4: #{tpu_custom_call.1} parent=1 // pred_region
      %s16 = ssub.s32 256, 256
      %17 = vsyncadd [#allocation3], %s16
      %s18 = sshll.u32 [#allocation2], 4
      %s19 = int_to_ptr.vmem [resolvable:$true] %s18
      %24 = dma.hbm_to_vmem [thread:$0]  %s0, 256, %s19, [#allocation3], 32, 32, 2
    $region5: #{tpu_custom_call.1} parent=1 // pred_fallthru
      _
    // Predicated region
    $region6: #{tpu_custom_call.1} parent=1 // pred_check
      _
    $region7: #{tpu_custom_call.1} parent=1 // pred_check_branch
      %26 = sbr.rel (0) target = $region9
    $region8: #{tpu_custom_call.1} parent=1 // pred_region
      _
    $region9: #{tpu_custom_call.1} parent=1 // pred_fallthru
      _
    // Predicated region
    $region10: #{tpu_custom_call.1} parent=1 // pred_check
      _
    $region11: #{tpu_custom_call.1} parent=1 // pred_check_branch
      %28 = sbr.rel (0) target = $region13
    $region12: #{tpu_custom_call.1} parent=1 // pred_region
      _
    $region13: #{tpu_custom_call.1} parent=1 // pred_fallthru
      _
    // Predicated region
    $region14: #{tpu_custom_call.1} parent=1 // pred_check
      _
    $region15: #{tpu_custom_call.1} parent=1 // pred_check_branch
      %30 = sbr.rel (0) target = $region17
    $region16: #{tpu_custom_call.1} parent=1 // pred_region
      %s32 = ssub.s32 2048, 2048
      %33 = vsyncadd [#allocation6], %s32
      %s34 = sshll.u32 [#allocation5], 4
      %s35 = int_to_ptr.vmem [resolvable:$true] %s34
      %40 = dma.hbm_to_vmem [thread:$0]  %s3, 2048, %s35, [#allocation6], 128, 128, 8
    $region17: #{tpu_custom_call.1} parent=1 // pred_fallthru
      _
    // Predicated region
    $region18: #{tpu_custom_call.1} parent=1 // pred_check
      _
    $region19: #{tpu_custom_call.1} parent=1 // pred_check_branch
      %42 = sbr.rel (0) target = $region21
    $region20: #{tpu_custom_call.1} parent=1 // pred_region
      %s44 = ssub.s32 2048, 2048
      %45 = vsyncadd [#allocation6], %s44
      %s46 = sshll.u32 [#allocation7], 4
      %s47 = int_to_ptr.vmem [resolvable:$true] %s46
      %52 = dma.hbm_to_vmem [thread:$0]  %s4, 2048, %s47, [#allocation6], 128, 128, 8
    $region21: #{tpu_custom_call.1} parent=1 // pred_fallthru
      _
    // Predicated region
    $region22: #{tpu_custom_call.1} parent=1 // pred_check
      _
    $region23: #{tpu_custom_call.1} parent=1 // pred_check_branch
      %54 = sbr.rel (0) target = $region25
    $region24: #{tpu_custom_call.1} parent=1 // pred_region
      %55 = dma.done [#allocation3], 256
    $region25: #{tpu_custom_call.1} parent=1 // pred_fallthru
      _
    // Predicated region
    $region26: #{tpu_custom_call.1} parent=1 // pred_check
      _
    $region27: #{tpu_custom_call.1} parent=1 // pred_check_branch
      %57 = sbr.rel (0) target = $region29
    $region28: #{tpu_custom_call.1} parent=1 // pred_region
      %58 = dma.done [#allocation6], 2048
    $region29: #{tpu_custom_call.1} parent=1 // pred_fallthru
      _
    // Predicated region
    $region30: #{tpu_custom_call.1} parent=1 // pred_check
      _
    $region31: #{tpu_custom_call.1} parent=1 // pred_check_branch
      %60 = sbr.rel (0) target = $region33
    $region32: #{tpu_custom_call.1} parent=1 // pred_region
      %61 = dma.done [#allocation6], 2048
    $region33: #{tpu_custom_call.1} parent=1 // pred_fallthru
      _
    %v62 = vld [vmem:[%s1] sm:$0x3]
    %v63 = vld [vmem:[%s2] sm:$0x3]
    %v64 = vld [vmem:[#allocation5] sm:$0xff]
    %v65 = vld [vmem:[#allocation5 + $0x8] sm:$0xff]
    %v66 = vld [vmem:[#allocation5 + $0x10] sm:$0xff]
    %v67 = vld [vmem:[#allocation5 + $0x18] sm:$0xff]
    %v68 = vld [vmem:[#allocation5 + $0x20] sm:$0xff]
    %v69 = vld [vmem:[#allocation5 + $0x28] sm:$0xff]
    %v70 = vld [vmem:[#allocation5 + $0x30] sm:$0xff]
    %v71 = vld [vmem:[#allocation5 + $0x38] sm:$0xff]
    %v72 = vld [vmem:[#allocation5 + $0x40] sm:$0xff]
    %v73 = vld [vmem:[#allocation5 + $0x48] sm:$0xff]
    %v74 = vld [vmem:[#allocation5 + $0x50] sm:$0xff]
    %v75 = vld [vmem:[#allocation5 + $0x58] sm:$0xff]
    %v76 = vld [vmem:[#allocation5 + $0x60] sm:$0xff]
    %v77 = vld [vmem:[#allocation5 + $0x68] sm:$0xff]
    %v78 = vld [vmem:[#allocation5 + $0x70] sm:$0xff]
    %v79 = vld [vmem:[#allocation5 + $0x78] sm:$0xff]
    %v80 = vld [vmem:[#allocation7] sm:$0xff]
    %v81 = vld [vmem:[#allocation7 + $0x8] sm:$0xff]
    %v82 = vld [vmem:[#allocation7 + $0x10] sm:$0xff]
    %v83 = vld [vmem:[#allocation7 + $0x18] sm:$0xff]
    %v84 = vld [vmem:[#allocation7 + $0x20] sm:$0xff]
    %v85 = vld [vmem:[#allocation7 + $0x28] sm:$0xff]
    %v86 = vld [vmem:[#allocation7 + $0x30] sm:$0xff]
    %v87 = vld [vmem:[#allocation7 + $0x38] sm:$0xff]
    %v88 = vld [vmem:[#allocation7 + $0x40] sm:$0xff]
    %v89 = vld [vmem:[#allocation7 + $0x48] sm:$0xff]
    %v90 = vld [vmem:[#allocation7 + $0x50] sm:$0xff]
    %v91 = vld [vmem:[#allocation7 + $0x58] sm:$0xff]
    %v92 = vld [vmem:[#allocation7 + $0x60] sm:$0xff]
    %v93 = vld [vmem:[#allocation7 + $0x68] sm:$0xff]
    %v94 = vld [vmem:[#allocation7 + $0x70] sm:$0xff]
    %v95 = vld [vmem:[#allocation7 + $0x78] sm:$0xff]
    %v96 = vld [vmem:[#allocation2] sm:$0x3]
    %97 = vmatprep.subr.mxu0 0.0
    %v98 = vand.u32 %v64, 4294901760
    %99 = vmatpush1.msra.mxu0 %v98
    %100 = vmatprep.subr.mxu0 0.0
    %v101 = vand.u32 %v65, 4294901760
    %102 = vmatpush1.msra.mxu0 %v101
    %103 = vmatprep.subr.mxu0 0.0
    %v104 = vand.u32 %v66, 4294901760
    %105 = vmatpush1.msra.mxu0 %v104
    %106 = vmatprep.subr.mxu0 0.0
    %v107 = vand.u32 %v67, 4294901760
    %108 = vmatpush1.msra.mxu0 %v107
    %109 = vmatprep.subr.mxu0 0.0
    %v110 = vand.u32 %v68, 4294901760
    %111 = vmatpush1.msra.mxu0 %v110
    %112 = vmatprep.subr.mxu0 0.0
    %v113 = vand.u32 %v69, 4294901760
    %114 = vmatpush1.msra.mxu0 %v113
    %115 = vmatprep.subr.mxu0 0.0
    %v116 = vand.u32 %v70, 4294901760
    %117 = vmatpush1.msra.mxu0 %v116
    %118 = vmatprep.subr.mxu0 0.0
    %v119 = vand.u32 %v71, 4294901760
    %120 = vmatpush1.msra.mxu0 %v119
    %121 = vmatprep.subr.mxu0 0.0
    %v122 = vand.u32 %v72, 4294901760
    %123 = vmatpush1.msra.mxu0 %v122
    %124 = vmatprep.subr.mxu0 0.0
    %v125 = vand.u32 %v73, 4294901760
    %126 = vmatpush1.msra.mxu0 %v125
    %127 = vmatprep.subr.mxu0 0.0
    %v128 = vand.u32 %v74, 4294901760
    %129 = vmatpush1.msra.mxu0 %v128
    %130 = vmatprep.subr.mxu0 0.0
    %v131 = vand.u32 %v75, 4294901760
    %132 = vmatpush1.msra.mxu0 %v131
    %133 = vmatprep.subr.mxu0 0.0
    %v134 = vand.u32 %v76, 4294901760
    %135 = vmatpush1.msra.mxu0 %v134
    %136 = vmatprep.subr.mxu0 0.0
    %v137 = vand.u32 %v77, 4294901760
    %138 = vmatpush1.msra.mxu0 %v137
    %139 = vmatprep.subr.mxu0 0.0
    %v140 = vand.u32 %v78, 4294901760
    %141 = vmatpush1.msra.mxu0 %v140
    %142 = vmatprep.subr.mxu0 0.0
    %v143 = vand.u32 %v79, 4294901760
    %144 = vmatpush1.msra.mxu0 %v143
    %145 = vmatprep.subr.mxu0 0.0
    %146 = vmatpush1.msra.mxu0 0.0
    %147 = vmatprep.subr.mxu0 0.0
    %148 = vmatpush1.msra.mxu0 0.0
    %149 = vmatprep.subr.mxu0 0.0
    %150 = vmatpush1.msra.mxu0 0.0
    %151 = vmatprep.subr.mxu0 0.0
    %152 = vmatpush1.msra.mxu0 0.0
    %153 = vmatprep.subr.mxu0 0.0
    %154 = vmatpush1.msra.mxu0 0.0
    %155 = vmatprep.subr.mxu0 0.0
    %156 = vmatpush1.msra.mxu0 0.0
    %157 = vmatprep.subr.mxu0 0.0
    %158 = vmatpush1.msra.mxu0 0.0
    %159 = vmatprep.subr.mxu0 0.0
    %160 = vmatpush1.msra.mxu0 0.0
    %161 = vmatprep.subr.mxu0 0.0
    %162 = vmatpush1.msra.mxu0 0.0
    %163 = vmatprep.subr.mxu0 0.0
    %164 = vmatpush1.msra.mxu0 0.0
    %165 = vmatprep.subr.mxu0 0.0
    %166 = vmatpush1.msra.mxu0 0.0
    %167 = vmatprep.subr.mxu0 0.0
    %168 = vmatpush1.msra.mxu0 0.0
    %169 = vmatprep.subr.mxu0 0.0
    %170 = vmatpush1.msra.mxu0 0.0
    %171 = vmatprep.subr.mxu0 0.0
    %172 = vmatpush1.msra.mxu0 0.0
    %173 = vmatprep.subr.mxu0 0.0
    %174 = vmatpush1.msra.mxu0 0.0
    %175 = vmatprep.subr.mxu0 0.0
    %176 = vmatpush1.msra.mxu0 0.0
    %177 = vmatprep.mubr.f32.mxu0 0.0
    %v178 = vand.u32 %v96, 4294901760
    %v179 = vsub.f32 %v96, %v178
    %v180 = vand.u32 %v179, 4294901760
    %v181 = vsub.f32 %v179, %v180
    %v182 = vand.u32 %v181, 4294901760
    %183 = vmatmul.mubr.f32.gmra.mrb[0].mxu0 %v182
    %v184 = vpop.f32.mrb[0].mxu0
    %v185 = vadd.f32 0.0, %v184
    %v186 = vpop.f32.mrb[0].mxu0
    %187 = vdwg.mxu0
    %188 = vmatprep.subr.mxu0 0.0
    %v189 = vand.u32 %v64, 4294901760
    %v190 = vsub.f32 %v64, %v189
    %v191 = vand.u32 %v190, 4294901760
    %v192 = vsub.f32 %v190, %v191
    %v193 = vand.u32 %v192, 4294901760
    %194 = vmatpush1.msra.mxu0 %v193
    %195 = vmatprep.subr.mxu0 0.0
    %v196 = vand.u32 %v65, 4294901760
    %v197 = vsub.f32 %v65, %v196
    %v198 = vand.u32 %v197, 4294901760
    %v199 = vsub.f32 %v197, %v198
    %v200 = vand.u32 %v199, 4294901760
    %201 = vmatpush1.msra.mxu0 %v200
    %202 = vmatprep.subr.mxu0 0.0
    %v203 = vand.u32 %v66, 4294901760
    %v204 = vsub.f32 %v66, %v203
    %v205 = vand.u32 %v204, 4294901760
    %v206 = vsub.f32 %v204, %v205
    %v207 = vand.u32 %v206, 4294901760
    %208 = vmatpush1.msra.mxu0 %v207
    %209 = vmatprep.subr.mxu0 0.0
    %v210 = vand.u32 %v67, 4294901760
    %v211 = vsub.f32 %v67, %v210
    %v212 = vand.u32 %v211, 4294901760
    %v213 = vsub.f32 %v211, %v212
    %v214 = vand.u32 %v213, 4294901760
    %215 = vmatpush1.msra.mxu0 %v214
    %216 = vmatprep.subr.mxu0 0.0
    %v217 = vand.u32 %v68, 4294901760
    %v218 = vsub.f32 %v68, %v217
    %v219 = vand.u32 %v218, 4294901760
    %v220 = vsub.f32 %v218, %v219
    %v221 = vand.u32 %v220, 4294901760
    %222 = vmatpush1.msra.mxu0 %v221
    %223 = vmatprep.subr.mxu0 0.0
    %v224 = vand.u32 %v69, 4294901760
    %v225 = vsub.f32 %v69, %v224
    %v226 = vand.u32 %v225, 4294901760
    %v227 = vsub.f32 %v225, %v226
    %v228 = vand.u32 %v227, 4294901760
    %229 = vmatpush1.msra.mxu0 %v228
    %230 = vmatprep.subr.mxu0 0.0
    %v231 = vand.u32 %v70, 4294901760
    %v232 = vsub.f32 %v70, %v231
    %v233 = vand.u32 %v232, 4294901760
    %v234 = vsub.f32 %v232, %v233
    %v235 = vand.u32 %v234, 4294901760
    %236 = vmatpush1.msra.mxu0 %v235
    %237 = vmatprep.subr.mxu0 0.0
    %v238 = vand.u32 %v71, 4294901760
    %v239 = vsub.f32 %v71, %v238
    %v240 = vand.u32 %v239, 4294901760
    %v241 = vsub.f32 %v239, %v240
    %v242 = vand.u32 %v241, 4294901760
    %243 = vmatpush1.msra.mxu0 %v242
    %244 = vmatprep.subr.mxu0 0.0
    %v245 = vand.u32 %v72, 4294901760
    %v246 = vsub.f32 %v72, %v245
    %v247 = vand.u32 %v246, 4294901760
    %v248 = vsub.f32 %v246, %v247
    %v249 = vand.u32 %v248, 4294901760
    %250 = vmatpush1.msra.mxu0 %v249
    %251 = vmatprep.subr.mxu0 0.0
    %v252 = vand.u32 %v73, 4294901760
    %v253 = vsub.f32 %v73, %v252
    %v254 = vand.u32 %v253, 4294901760
    %v255 = vsub.f32 %v253, %v254
    %v256 = vand.u32 %v255, 4294901760
    %257 = vmatpush1.msra.mxu0 %v256
    %258 = vmatprep.subr.mxu0 0.0
    %v259 = vand.u32 %v74, 4294901760
    %v260 = vsub.f32 %v74, %v259
    %v261 = vand.u32 %v260, 4294901760
    %v262 = vsub.f32 %v260, %v261
    %v263 = vand.u32 %v262, 4294901760
    %264 = vmatpush1.msra.mxu0 %v263
    %265 = vmatprep.subr.mxu0 0.0
    %v266 = vand.u32 %v75, 4294901760
    %v267 = vsub.f32 %v75, %v266
    %v268 = vand.u32 %v267, 4294901760
    %v269 = vsub.f32 %v267, %v268
    %v270 = vand.u32 %v269, 4294901760
    %271 = vmatpush1.msra.mxu0 %v270
    %272 = vmatprep.subr.mxu0 0.0
    %v273 = vand.u32 %v76, 4294901760
    %v274 = vsub.f32 %v76, %v273
    %v275 = vand.u32 %v274, 4294901760
    %v276 = vsub.f32 %v274, %v275
    %v277 = vand.u32 %v276, 4294901760
    %278 = vmatpush1.msra.mxu0 %v277
    %279 = vmatprep.subr.mxu0 0.0
    %v280 = vand.u32 %v77, 4294901760
    %v281 = vsub.f32 %v77, %v280
    %v282 = vand.u32 %v281, 4294901760
    %v283 = vsub.f32 %v281, %v282
    %v284 = vand.u32 %v283, 4294901760
    %285 = vmatpush1.msra.mxu0 %v284
    %286 = vmatprep.subr.mxu0 0.0
    %v287 = vand.u32 %v78, 4294901760
    %v288 = vsub.f32 %v78, %v287
    %v289 = vand.u32 %v288, 4294901760
    %v290 = vsub.f32 %v288, %v289
    %v291 = vand.u32 %v290, 4294901760
    %292 = vmatpush1.msra.mxu0 %v291
    %293 = vmatprep.subr.mxu0 0.0
    %v294 = vand.u32 %v79, 4294901760
    %v295 = vsub.f32 %v79, %v294
    %v296 = vand.u32 %v295, 4294901760
    %v297 = vsub.f32 %v295, %v296
    %v298 = vand.u32 %v297, 4294901760
    %299 = vmatpush1.msra.mxu0 %v298
    %300 = vmatprep.subr.mxu0 0.0
    %301 = vmatpush1.msra.mxu0 0.0
    %302 = vmatprep.subr.mxu0 0.0
    %303 = vmatpush1.msra.mxu0 0.0
    %304 = vmatprep.subr.mxu0 0.0
    %305 = vmatpush1.msra.mxu0 0.0
    %306 = vmatprep.subr.mxu0 0.0
    %307 = vmatpush1.msra.mxu0 0.0
    %308 = vmatprep.subr.mxu0 0.0
    %309 = vmatpush1.msra.mxu0 0.0
    %310 = vmatprep.subr.mxu0 0.0
    %311 = vmatpush1.msra.mxu0 0.0
    %312 = vmatprep.subr.mxu0 0.0
    %313 = vmatpush1.msra.mxu0 0.0
    %314 = vmatprep.subr.mxu0 0.0
    %315 = vmatpush1.msra.mxu0 0.0
    %316 = vmatprep.subr.mxu0 0.0
    %317 = vmatpush1.msra.mxu0 0.0
    %318 = vmatprep.subr.mxu0 0.0
    %319 = vmatpush1.msra.mxu0 0.0
    %320 = vmatprep.subr.mxu0 0.0
    %321 = vmatpush1.msra.mxu0 0.0
    %322 = vmatprep.subr.mxu0 0.0
    %323 = vmatpush1.msra.mxu0 0.0
    %324 = vmatprep.subr.mxu0 0.0
    %325 = vmatpush1.msra.mxu0 0.0
    %326 = vmatprep.subr.mxu0 0.0
    %327 = vmatpush1.msra.mxu0 0.0
    %328 = vmatprep.subr.mxu0 0.0
    %329 = vmatpush1.msra.mxu0 0.0
    %330 = vmatprep.subr.mxu0 0.0
    %331 = vmatpush1.msra.mxu0 0.0
    %332 = vmatprep.mubr.f32.mxu0 0.0
    %v333 = vand.u32 %v96, 4294901760
    %334 = vmatmul.mubr.f32.gmra.mrb[0].mxu0 %v333
    %v335 = vpop.f32.mrb[0].mxu0
    %v336 = vadd.f32 %v185, %v335
    %v337 = vpop.f32.mrb[0].mxu0
    %338 = vdwg.mxu0
    %339 = vmatprep.subr.mxu0 0.0
    %v340 = vand.u32 %v64, 4294901760
    %v341 = vsub.f32 %v64, %v340
    %342 = vmatpush1.msra.mxu0 %v341
    %343 = vmatprep.subr.mxu0 0.0
    %v344 = vand.u32 %v65, 4294901760
    %v345 = vsub.f32 %v65, %v344
    %346 = vmatpush1.msra.mxu0 %v345
    %347 = vmatprep.subr.mxu0 0.0
    %v348 = vand.u32 %v66, 4294901760
    %v349 = vsub.f32 %v66, %v348
    %350 = vmatpush1.msra.mxu0 %v349
    %351 = vmatprep.subr.mxu0 0.0
    %v352 = vand.u32 %v67, 4294901760
    %v353 = vsub.f32 %v67, %v352
    %354 = vmatpush1.msra.mxu0 %v353
    %355 = vmatprep.subr.mxu0 0.0
    %v356 = vand.u32 %v68, 4294901760
    %v357 = vsub.f32 %v68, %v356
    %358 = vmatpush1.msra.mxu0 %v357
    %359 = vmatprep.subr.mxu0 0.0
    %v360 = vand.u32 %v69, 4294901760
    %v361 = vsub.f32 %v69, %v360
    %362 = vmatpush1.msra.mxu0 %v361
    %363 = vmatprep.subr.mxu0 0.0
    %v364 = vand.u32 %v70, 4294901760
    %v365 = vsub.f32 %v70, %v364
    %366 = vmatpush1.msra.mxu0 %v365
    %367 = vmatprep.subr.mxu0 0.0
    %v368 = vand.u32 %v71, 4294901760
    %v369 = vsub.f32 %v71, %v368
    %370 = vmatpush1.msra.mxu0 %v369
    %371 = vmatprep.subr.mxu0 0.0
    %v372 = vand.u32 %v72, 4294901760
    %v373 = vsub.f32 %v72, %v372
    %374 = vmatpush1.msra.mxu0 %v373
    %375 = vmatprep.subr.mxu0 0.0
    %v376 = vand.u32 %v73, 4294901760
    %v377 = vsub.f32 %v73, %v376
    %378 = vmatpush1.msra.mxu0 %v377
    %379 = vmatprep.subr.mxu0 0.0
    %v380 = vand.u32 %v74, 4294901760
    %v381 = vsub.f32 %v74, %v380
    %382 = vmatpush1.msra.mxu0 %v381
    %383 = vmatprep.subr.mxu0 0.0
    %v384 = vand.u32 %v75, 4294901760
    %v385 = vsub.f32 %v75, %v384
    %386 = vmatpush1.msra.mxu0 %v385
    %387 = vmatprep.subr.mxu0 0.0
    %v388 = vand.u32 %v76, 4294901760
    %v389 = vsub.f32 %v76, %v388
    %390 = vmatpush1.msra.mxu0 %v389
    %391 = vmatprep.subr.mxu0 0.0
    %v392 = vand.u32 %v77, 4294901760
    %v393 = vsub.f32 %v77, %v392
    %394 = vmatpush1.msra.mxu0 %v393
    %395 = vmatprep.subr.mxu0 0.0
    %v396 = vand.u32 %v78, 4294901760
    %v397 = vsub.f32 %v78, %v396
    %398 = vmatpush1.msra.mxu0 %v397
    %399 = vmatprep.subr.mxu0 0.0
    %v400 = vand.u32 %v79, 4294901760
    %v401 = vsub.f32 %v79, %v400
    %402 = vmatpush1.msra.mxu0 %v401
    %403 = vmatprep.subr.mxu0 0.0
    %404 = vmatpush1.msra.mxu0 0.0
    %405 = vmatprep.subr.mxu0 0.0
    %406 = vmatpush1.msra.mxu0 0.0
    %407 = vmatprep.subr.mxu0 0.0
    %408 = vmatpush1.msra.mxu0 0.0
    %409 = vmatprep.subr.mxu0 0.0
    %410 = vmatpush1.msra.mxu0 0.0
    %411 = vmatprep.subr.mxu0 0.0
    %412 = vmatpush1.msra.mxu0 0.0
    %413 = vmatprep.subr.mxu0 0.0
    %414 = vmatpush1.msra.mxu0 0.0
    %415 = vmatprep.subr.mxu0 0.0
    %416 = vmatpush1.msra.mxu0 0.0
    %417 = vmatprep.subr.mxu0 0.0
    %418 = vmatpush1.msra.mxu0 0.0
    %419 = vmatprep.subr.mxu0 0.0
    %420 = vmatpush1.msra.mxu0 0.0
    %421 = vmatprep.subr.mxu0 0.0
    %422 = vmatpush1.msra.mxu0 0.0
    %423 = vmatprep.subr.mxu0 0.0
    %424 = vmatpush1.msra.mxu0 0.0
    %425 = vmatprep.subr.mxu0 0.0
    %426 = vmatpush1.msra.mxu0 0.0
    %427 = vmatprep.subr.mxu0 0.0
    %428 = vmatpush1.msra.mxu0 0.0
    %429 = vmatprep.subr.mxu0 0.0
    %430 = vmatpush1.msra.mxu0 0.0
    %431 = vmatprep.subr.mxu0 0.0
    %432 = vmatpush1.msra.mxu0 0.0
    %433 = vmatprep.subr.mxu0 0.0
    %434 = vmatpush1.msra.mxu0 0.0
    %435 = vmatprep.mubr.f32.mxu0 0.0
    %v436 = vand.u32 %v96, 4294901760
    %v437 = vsub.f32 %v96, %v436
    %438 = vmatmul.mubr.f32.gmra.mrb[0].mxu0 %v437
    %v439 = vpop.f32.mrb[0].mxu0
    %v440 = vadd.f32 %v336, %v439
    %v441 = vpop.f32.mrb[0].mxu0
    %442 = vdwg.mxu0
    %443 = vmatprep.subr.mxu0 0.0
    %v444 = vand.u32 %v64, 4294901760
    %445 = vmatpush1.msra.mxu0 %v444
    %446 = vmatprep.subr.mxu0 0.0
    %v447 = vand.u32 %v65, 4294901760
    %448 = vmatpush1.msra.mxu0 %v447
    %449 = vmatprep.subr.mxu0 0.0
    %v450 = vand.u32 %v66, 4294901760
    %451 = vmatpush1.msra.mxu0 %v450
    %452 = vmatprep.subr.mxu0 0.0
    %v453 = vand.u32 %v67, 4294901760
    %454 = vmatpush1.msra.mxu0 %v453
    %455 = vmatprep.subr.mxu0 0.0
    %v456 = vand.u32 %v68, 4294901760
    %457 = vmatpush1.msra.mxu0 %v456
    %458 = vmatprep.subr.mxu0 0.0
    %v459 = vand.u32 %v69, 4294901760
    %460 = vmatpush1.msra.mxu0 %v459
    %461 = vmatprep.subr.mxu0 0.0
    %v462 = vand.u32 %v70, 4294901760
    %463 = vmatpush1.msra.mxu0 %v462
    %464 = vmatprep.subr.mxu0 0.0
    %v465 = vand.u32 %v71, 4294901760
    %466 = vmatpush1.msra.mxu0 %v465
    %467 = vmatprep.subr.mxu0 0.0
    %v468 = vand.u32 %v72, 4294901760
    %469 = vmatpush1.msra.mxu0 %v468
    %470 = vmatprep.subr.mxu0 0.0
    %v471 = vand.u32 %v73, 4294901760
    %472 = vmatpush1.msra.mxu0 %v471
    %473 = vmatprep.subr.mxu0 0.0
    %v474 = vand.u32 %v74, 4294901760
    %475 = vmatpush1.msra.mxu0 %v474
    %476 = vmatprep.subr.mxu0 0.0
    %v477 = vand.u32 %v75, 4294901760
    %478 = vmatpush1.msra.mxu0 %v477
    %479 = vmatprep.subr.mxu0 0.0
    %v480 = vand.u32 %v76, 4294901760
    %481 = vmatpush1.msra.mxu0 %v480
    %482 = vmatprep.subr.mxu0 0.0
    %v483 = vand.u32 %v77, 4294901760
    %484 = vmatpush1.msra.mxu0 %v483
    %485 = vmatprep.subr.mxu0 0.0
    %v486 = vand.u32 %v78, 4294901760
    %487 = vmatpush1.msra.mxu0 %v486
    %488 = vmatprep.subr.mxu0 0.0
    %v489 = vand.u32 %v79, 4294901760
    %490 = vmatpush1.msra.mxu0 %v489
    %491 = vmatprep.subr.mxu0 0.0
    %492 = vmatpush1.msra.mxu0 0.0
    %493 = vmatprep.subr.mxu0 0.0
    %494 = vmatpush1.msra.mxu0 0.0
    %495 = vmatprep.subr.mxu0 0.0
    %496 = vmatpush1.msra.mxu0 0.0
    %497 = vmatprep.subr.mxu0 0.0
    %498 = vmatpush1.msra.mxu0 0.0
    %499 = vmatprep.subr.mxu0 0.0
    %500 = vmatpush1.msra.mxu0 0.0
    %501 = vmatprep.subr.mxu0 0.0
    %502 = vmatpush1.msra.mxu0 0.0
    %503 = vmatprep.subr.mxu0 0.0
    %504 = vmatpush1.msra.mxu0 0.0
    %505 = vmatprep.subr.mxu0 0.0
    %506 = vmatpush1.msra.mxu0 0.0
    %507 = vmatprep.subr.mxu0 0.0
    %508 = vmatpush1.msra.mxu0 0.0
    %509 = vmatprep.subr.mxu0 0.0
    %510 = vmatpush1.msra.mxu0 0.0
    %511 = vmatprep.subr.mxu0 0.0
    %512 = vmatpush1.msra.mxu0 0.0
    %513 = vmatprep.subr.mxu0 0.0
    %514 = vmatpush1.msra.mxu0 0.0
    %515 = vmatprep.subr.mxu0 0.0
    %516 = vmatpush1.msra.mxu0 0.0
    %517 = vmatprep.subr.mxu0 0.0
    %518 = vmatpush1.msra.mxu0 0.0
    %519 = vmatprep.subr.mxu0 0.0
    %520 = vmatpush1.msra.mxu0 0.0
    %521 = vmatprep.subr.mxu0 0.0
    %522 = vmatpush1.msra.mxu0 0.0
    %523 = vmatprep.mubr.f32.mxu0 0.0
    %v524 = vand.u32 %v96, 4294901760
    %v525 = vsub.f32 %v96, %v524
    %v526 = vand.u32 %v525, 4294901760
    %527 = vmatmul.mubr.f32.gmra.mrb[0].mxu0 %v526
    %v528 = vpop.f32.mrb[0].mxu0
    %v529 = vadd.f32 %v440, %v528
    %v530 = vpop.f32.mrb[0].mxu0
    %531 = vdwg.mxu0
    %532 = vmatprep.subr.mxu0 0.0
    %v533 = vand.u32 %v64, 4294901760
    %v534 = vsub.f32 %v64, %v533
    %v535 = vand.u32 %v534, 4294901760
    %536 = vmatpush1.msra.mxu0 %v535
    %537 = vmatprep.subr.mxu0 0.0
    %v538 = vand.u32 %v65, 4294901760
    %v539 = vsub.f32 %v65, %v538
    %v540 = vand.u32 %v539, 4294901760
    %541 = vmatpush1.msra.mxu0 %v540
    %542 = vmatprep.subr.mxu0 0.0
    %v543 = vand.u32 %v66, 4294901760
    %v544 = vsub.f32 %v66, %v543
    %v545 = vand.u32 %v544, 4294901760
    %546 = vmatpush1.msra.mxu0 %v545
    %547 = vmatprep.subr.mxu0 0.0
    %v548 = vand.u32 %v67, 4294901760
    %v549 = vsub.f32 %v67, %v548
    %v550 = vand.u32 %v549, 4294901760
    %551 = vmatpush1.msra.mxu0 %v550
    %552 = vmatprep.subr.mxu0 0.0
    %v553 = vand.u32 %v68, 4294901760
    %v554 = vsub.f32 %v68, %v553
    %v555 = vand.u32 %v554, 4294901760
    %556 = vmatpush1.msra.mxu0 %v555
    %557 = vmatprep.subr.mxu0 0.0
    %v558 = vand.u32 %v69, 4294901760
    %v559 = vsub.f32 %v69, %v558
    %v560 = vand.u32 %v559, 4294901760
    %561 = vmatpush1.msra.mxu0 %v560
    %562 = vmatprep.subr.mxu0 0.0
    %v563 = vand.u32 %v70, 4294901760
    %v564 = vsub.f32 %v70, %v563
    %v565 = vand.u32 %v564, 4294901760
    %566 = vmatpush1.msra.mxu0 %v565
    %567 = vmatprep.subr.mxu0 0.0
    %v568 = vand.u32 %v71, 4294901760
    %v569 = vsub.f32 %v71, %v568
    %v570 = vand.u32 %v569, 4294901760
    %571 = vmatpush1.msra.mxu0 %v570
    %572 = vmatprep.subr.mxu0 0.0
    %v573 = vand.u32 %v72, 4294901760
    %v574 = vsub.f32 %v72, %v573
    %v575 = vand.u32 %v574, 4294901760
    %576 = vmatpush1.msra.mxu0 %v575
    %577 = vmatprep.subr.mxu0 0.0
    %v578 = vand.u32 %v73, 4294901760
    %v579 = vsub.f32 %v73, %v578
    %v580 = vand.u32 %v579, 4294901760
    %581 = vmatpush1.msra.mxu0 %v580
    %582 = vmatprep.subr.mxu0 0.0
    %v583 = vand.u32 %v74, 4294901760
    %v584 = vsub.f32 %v74, %v583
    %v585 = vand.u32 %v584, 4294901760
    %586 = vmatpush1.msra.mxu0 %v585
    %587 = vmatprep.subr.mxu0 0.0
    %v588 = vand.u32 %v75, 4294901760
    %v589 = vsub.f32 %v75, %v588
    %v590 = vand.u32 %v589, 4294901760
    %591 = vmatpush1.msra.mxu0 %v590
    %592 = vmatprep.subr.mxu0 0.0
    %v593 = vand.u32 %v76, 4294901760
    %v594 = vsub.f32 %v76, %v593
    %v595 = vand.u32 %v594, 4294901760
    %596 = vmatpush1.msra.mxu0 %v595
    %597 = vmatprep.subr.mxu0 0.0
    %v598 = vand.u32 %v77, 4294901760
    %v599 = vsub.f32 %v77, %v598
    %v600 = vand.u32 %v599, 4294901760
    %601 = vmatpush1.msra.mxu0 %v600
    %602 = vmatprep.subr.mxu0 0.0
    %v603 = vand.u32 %v78, 4294901760
    %v604 = vsub.f32 %v78, %v603
    %v605 = vand.u32 %v604, 4294901760
    %606 = vmatpush1.msra.mxu0 %v605
    %607 = vmatprep.subr.mxu0 0.0
    %v608 = vand.u32 %v79, 4294901760
    %v609 = vsub.f32 %v79, %v608
    %v610 = vand.u32 %v609, 4294901760
    %611 = vmatpush1.msra.mxu0 %v610
    %612 = vmatprep.subr.mxu0 0.0
    %613 = vmatpush1.msra.mxu0 0.0
    %614 = vmatprep.subr.mxu0 0.0
    %615 = vmatpush1.msra.mxu0 0.0
    %616 = vmatprep.subr.mxu0 0.0
    %617 = vmatpush1.msra.mxu0 0.0
    %618 = vmatprep.subr.mxu0 0.0
    %619 = vmatpush1.msra.mxu0 0.0
    %620 = vmatprep.subr.mxu0 0.0
    %621 = vmatpush1.msra.mxu0 0.0
    %622 = vmatprep.subr.mxu0 0.0
    %623 = vmatpush1.msra.mxu0 0.0
    %624 = vmatprep.subr.mxu0 0.0
    %625 = vmatpush1.msra.mxu0 0.0
    %626 = vmatprep.subr.mxu0 0.0
    %627 = vmatpush1.msra.mxu0 0.0
    %628 = vmatprep.subr.mxu0 0.0
    %629 = vmatpush1.msra.mxu0 0.0
    %630 = vmatprep.subr.mxu0 0.0
    %631 = vmatpush1.msra.mxu0 0.0
    %632 = vmatprep.subr.mxu0 0.0
    %633 = vmatpush1.msra.mxu0 0.0
    %634 = vmatprep.subr.mxu0 0.0
    %635 = vmatpush1.msra.mxu0 0.0
    %636 = vmatprep.subr.mxu0 0.0
    %637 = vmatpush1.msra.mxu0 0.0
    %638 = vmatprep.subr.mxu0 0.0
    %639 = vmatpush1.msra.mxu0 0.0
    %640 = vmatprep.subr.mxu0 0.0
    %641 = vmatpush1.msra.mxu0 0.0
    %642 = vmatprep.subr.mxu0 0.0
    %643 = vmatpush1.msra.mxu0 0.0
    %644 = vmatprep.mubr.f32.mxu0 0.0
    %v645 = vand.u32 %v96, 4294901760
    %646 = vmatmul.mubr.f32.gmra.mrb[0].mxu0 %v645
    %v647 = vpop.f32.mrb[0].mxu0
    %v648 = vadd.f32 %v529, %v647
    %v649 = vpop.f32.mrb[0].mxu0
    %650 = vdwg.mxu0
    %651 = vmatprep.subr.mxu0 0.0
    %v652 = vand.u32 %v64, 4294901760
    %653 = vmatpush1.msra.mxu0 %v652
    %654 = vmatprep.subr.mxu0 0.0
    %v655 = vand.u32 %v65, 4294901760
    %656 = vmatpush1.msra.mxu0 %v655
    %657 = vmatprep.subr.mxu0 0.0
    %v658 = vand.u32 %v66, 4294901760
    %659 = vmatpush1.msra.mxu0 %v658
    %660 = vmatprep.subr.mxu0 0.0
    %v661 = vand.u32 %v67, 4294901760
    %662 = vmatpush1.msra.mxu0 %v661
    %663 = vmatprep.subr.mxu0 0.0
    %v664 = vand.u32 %v68, 4294901760
    %665 = vmatpush1.msra.mxu0 %v664
    %666 = vmatprep.subr.mxu0 0.0
    %v667 = vand.u32 %v69, 4294901760
    %668 = vmatpush1.msra.mxu0 %v667
    %669 = vmatprep.subr.mxu0 0.0
    %v670 = vand.u32 %v70, 4294901760
    %671 = vmatpush1.msra.mxu0 %v670
    %672 = vmatprep.subr.mxu0 0.0
    %v673 = vand.u32 %v71, 4294901760
    %674 = vmatpush1.msra.mxu0 %v673
    %675 = vmatprep.subr.mxu0 0.0
    %v676 = vand.u32 %v72, 4294901760
    %677 = vmatpush1.msra.mxu0 %v676
    %678 = vmatprep.subr.mxu0 0.0
    %v679 = vand.u32 %v73, 4294901760
    %680 = vmatpush1.msra.mxu0 %v679
    %681 = vmatprep.subr.mxu0 0.0
    %v682 = vand.u32 %v74, 4294901760
    %683 = vmatpush1.msra.mxu0 %v682
    %684 = vmatprep.subr.mxu0 0.0
    %v685 = vand.u32 %v75, 4294901760
    %686 = vmatpush1.msra.mxu0 %v685
    %687 = vmatprep.subr.mxu0 0.0
    %v688 = vand.u32 %v76, 4294901760
    %689 = vmatpush1.msra.mxu0 %v688
    %690 = vmatprep.subr.mxu0 0.0
    %v691 = vand.u32 %v77, 4294901760
    %692 = vmatpush1.msra.mxu0 %v691
    %693 = vmatprep.subr.mxu0 0.0
    %v694 = vand.u32 %v78, 4294901760
    %695 = vmatpush1.msra.mxu0 %v694
    %696 = vmatprep.subr.mxu0 0.0
    %v697 = vand.u32 %v79, 4294901760
    %698 = vmatpush1.msra.mxu0 %v697
    %699 = vmatprep.subr.mxu0 0.0
    %700 = vmatpush1.msra.mxu0 0.0
    %701 = vmatprep.subr.mxu0 0.0
    %702 = vmatpush1.msra.mxu0 0.0
    %703 = vmatprep.subr.mxu0 0.0
    %704 = vmatpush1.msra.mxu0 0.0
    %705 = vmatprep.subr.mxu0 0.0
    %706 = vmatpush1.msra.mxu0 0.0
    %707 = vmatprep.subr.mxu0 0.0
    %708 = vmatpush1.msra.mxu0 0.0
    %709 = vmatprep.subr.mxu0 0.0
    %710 = vmatpush1.msra.mxu0 0.0
    %711 = vmatprep.subr.mxu0 0.0
    %712 = vmatpush1.msra.mxu0 0.0
    %713 = vmatprep.subr.mxu0 0.0
    %714 = vmatpush1.msra.mxu0 0.0
    %715 = vmatprep.subr.mxu0 0.0
    %716 = vmatpush1.msra.mxu0 0.0
    %717 = vmatprep.subr.mxu0 0.0
    %718 = vmatpush1.msra.mxu0 0.0
    %719 = vmatprep.subr.mxu0 0.0
    %720 = vmatpush1.msra.mxu0 0.0
    %721 = vmatprep.subr.mxu0 0.0
    %722 = vmatpush1.msra.mxu0 0.0
    %723 = vmatprep.subr.mxu0 0.0
    %724 = vmatpush1.msra.mxu0 0.0
    %725 = vmatprep.subr.mxu0 0.0
    %726 = vmatpush1.msra.mxu0 0.0
    %727 = vmatprep.subr.mxu0 0.0
    %728 = vmatpush1.msra.mxu0 0.0
    %729 = vmatprep.subr.mxu0 0.0
    %730 = vmatpush1.msra.mxu0 0.0
    %731 = vmatprep.mubr.f32.mxu0 0.0
    %v732 = vand.u32 %v96, 4294901760
    %733 = vmatmul.mubr.f32.gmra.mrb[0].mxu0 %v732
    %v734 = vpop.f32.mrb[0].mxu0
    %v735 = vadd.f32 %v648, %v734
    %v736 = vpop.f32.mrb[0].mxu0
    %737 = vdwg.mxu0
    %738 = vmatprep.subr.mxu0 0.0
    %v739 = vand.u32 %v80, 4294901760
    %740 = vmatpush1.msra.mxu0 %v739
    %741 = vmatprep.subr.mxu0 0.0
    %v742 = vand.u32 %v81, 4294901760
    %743 = vmatpush1.msra.mxu0 %v742
    %744 = vmatprep.subr.mxu0 0.0
    %v745 = vand.u32 %v82, 4294901760
    %746 = vmatpush1.msra.mxu0 %v745
    %747 = vmatprep.subr.mxu0 0.0
    %v748 = vand.u32 %v83, 4294901760
    %749 = vmatpush1.msra.mxu0 %v748
    %750 = vmatprep.subr.mxu0 0.0
    %v751 = vand.u32 %v84, 4294901760
    %752 = vmatpush1.msra.mxu0 %v751
    %753 = vmatprep.subr.mxu0 0.0
    %v754 = vand.u32 %v85, 4294901760
    %755 = vmatpush1.msra.mxu0 %v754
    %756 = vmatprep.subr.mxu0 0.0
    %v757 = vand.u32 %v86, 4294901760
    %758 = vmatpush1.msra.mxu0 %v757
    %759 = vmatprep.subr.mxu0 0.0
    %v760 = vand.u32 %v87, 4294901760
    %761 = vmatpush1.msra.mxu0 %v760
    %762 = vmatprep.subr.mxu0 0.0
    %v763 = vand.u32 %v88, 4294901760
    %764 = vmatpush1.msra.mxu0 %v763
    %765 = vmatprep.subr.mxu0 0.0
    %v766 = vand.u32 %v89, 4294901760
    %767 = vmatpush1.msra.mxu0 %v766
    %768 = vmatprep.subr.mxu0 0.0
    %v769 = vand.u32 %v90, 4294901760
    %770 = vmatpush1.msra.mxu0 %v769
    %771 = vmatprep.subr.mxu0 0.0
    %v772 = vand.u32 %v91, 4294901760
    %773 = vmatpush1.msra.mxu0 %v772
    %774 = vmatprep.subr.mxu0 0.0
    %v775 = vand.u32 %v92, 4294901760
    %776 = vmatpush1.msra.mxu0 %v775
    %777 = vmatprep.subr.mxu0 0.0
    %v778 = vand.u32 %v93, 4294901760
    %779 = vmatpush1.msra.mxu0 %v778
    %780 = vmatprep.subr.mxu0 0.0
    %v781 = vand.u32 %v94, 4294901760
    %782 = vmatpush1.msra.mxu0 %v781
    %783 = vmatprep.subr.mxu0 0.0
    %v784 = vand.u32 %v95, 4294901760
    %785 = vmatpush1.msra.mxu0 %v784
    %786 = vmatprep.subr.mxu0 0.0
    %787 = vmatpush1.msra.mxu0 0.0
    %788 = vmatprep.subr.mxu0 0.0
    %789 = vmatpush1.msra.mxu0 0.0
    %790 = vmatprep.subr.mxu0 0.0
    %791 = vmatpush1.msra.mxu0 0.0
    %792 = vmatprep.subr.mxu0 0.0
    %793 = vmatpush1.msra.mxu0 0.0
    %794 = vmatprep.subr.mxu0 0.0
    %795 = vmatpush1.msra.mxu0 0.0
    %796 = vmatprep.subr.mxu0 0.0
    %797 = vmatpush1.msra.mxu0 0.0
    %798 = vmatprep.subr.mxu0 0.0
    %799 = vmatpush1.msra.mxu0 0.0
    %800 = vmatprep.subr.mxu0 0.0
    %801 = vmatpush1.msra.mxu0 0.0
    %802 = vmatprep.subr.mxu0 0.0
    %803 = vmatpush1.msra.mxu0 0.0
    %804 = vmatprep.subr.mxu0 0.0
    %805 = vmatpush1.msra.mxu0 0.0
    %806 = vmatprep.subr.mxu0 0.0
    %807 = vmatpush1.msra.mxu0 0.0
    %808 = vmatprep.subr.mxu0 0.0
    %809 = vmatpush1.msra.mxu0 0.0
    %810 = vmatprep.subr.mxu0 0.0
    %811 = vmatpush1.msra.mxu0 0.0
    %812 = vmatprep.subr.mxu0 0.0
    %813 = vmatpush1.msra.mxu0 0.0
    %814 = vmatprep.subr.mxu0 0.0
    %815 = vmatpush1.msra.mxu0 0.0
    %816 = vmatprep.subr.mxu0 0.0
    %817 = vmatpush1.msra.mxu0 0.0
    %818 = vmatprep.mubr.f32.mxu0 0.0
    %v819 = vand.u32 %v96, 4294901760
    %v820 = vsub.f32 %v96, %v819
    %v821 = vand.u32 %v820, 4294901760
    %v822 = vsub.f32 %v820, %v821
    %v823 = vand.u32 %v822, 4294901760
    %824 = vmatmul.mubr.f32.gmra.mrb[0].mxu0 %v823
    %v825 = vpop.f32.mrb[0].mxu0
    %v826 = vadd.f32 0.0, %v825
    %v827 = vpop.f32.mrb[0].mxu0
    %828 = vdwg.mxu0
    %829 = vmatprep.subr.mxu0 0.0
    %v830 = vand.u32 %v80, 4294901760
    %v831 = vsub.f32 %v80, %v830
    %v832 = vand.u32 %v831, 4294901760
    %v833 = vsub.f32 %v831, %v832
    %v834 = vand.u32 %v833, 4294901760
    %835 = vmatpush1.msra.mxu0 %v834
    %836 = vmatprep.subr.mxu0 0.0
    %v837 = vand.u32 %v81, 4294901760
    %v838 = vsub.f32 %v81, %v837
    %v839 = vand.u32 %v838, 4294901760
    %v840 = vsub.f32 %v838, %v839
    %v841 = vand.u32 %v840, 4294901760
    %842 = vmatpush1.msra.mxu0 %v841
    %843 = vmatprep.subr.mxu0 0.0
    %v844 = vand.u32 %v82, 4294901760
    %v845 = vsub.f32 %v82, %v844
    %v846 = vand.u32 %v845, 4294901760
    %v847 = vsub.f32 %v845, %v846
    %v848 = vand.u32 %v847, 4294901760
    %849 = vmatpush1.msra.mxu0 %v848
    %850 = vmatprep.subr.mxu0 0.0
    %v851 = vand.u32 %v83, 4294901760
    %v852 = vsub.f32 %v83, %v851
    %v853 = vand.u32 %v852, 4294901760
    %v854 = vsub.f32 %v852, %v853
    %v855 = vand.u32 %v854, 4294901760
    %856 = vmatpush1.msra.mxu0 %v855
    %857 = vmatprep.subr.mxu0 0.0
    %v858 = vand.u32 %v84, 4294901760
    %v859 = vsub.f32 %v84, %v858
    %v860 = vand.u32 %v859, 4294901760
    %v861 = vsub.f32 %v859, %v860
    %v862 = vand.u32 %v861, 4294901760
    %863 = vmatpush1.msra.mxu0 %v862
    %864 = vmatprep.subr.mxu0 0.0
    %v865 = vand.u32 %v85, 4294901760
    %v866 = vsub.f32 %v85, %v865
    %v867 = vand.u32 %v866, 4294901760
    %v868 = vsub.f32 %v866, %v867
    %v869 = vand.u32 %v868, 4294901760
    %870 = vmatpush1.msra.mxu0 %v869
    %871 = vmatprep.subr.mxu0 0.0
    %v872 = vand.u32 %v86, 4294901760
    %v873 = vsub.f32 %v86, %v872
    %v874 = vand.u32 %v873, 4294901760
    %v875 = vsub.f32 %v873, %v874
    %v876 = vand.u32 %v875, 4294901760
    %877 = vmatpush1.msra.mxu0 %v876
    %878 = vmatprep.subr.mxu0 0.0
    %v879 = vand.u32 %v87, 4294901760
    %v880 = vsub.f32 %v87, %v879
    %v881 = vand.u32 %v880, 4294901760
    %v882 = vsub.f32 %v880, %v881
    %v883 = vand.u32 %v882, 4294901760
    %884 = vmatpush1.msra.mxu0 %v883
    %885 = vmatprep.subr.mxu0 0.0
    %v886 = vand.u32 %v88, 4294901760
    %v887 = vsub.f32 %v88, %v886
    %v888 = vand.u32 %v887, 4294901760
    %v889 = vsub.f32 %v887, %v888
    %v890 = vand.u32 %v889, 4294901760
    %891 = vmatpush1.msra.mxu0 %v890
    %892 = vmatprep.subr.mxu0 0.0
    %v893 = vand.u32 %v89, 4294901760
    %v894 = vsub.f32 %v89, %v893
    %v895 = vand.u32 %v894, 4294901760
    %v896 = vsub.f32 %v894, %v895
    %v897 = vand.u32 %v896, 4294901760
    %898 = vmatpush1.msra.mxu0 %v897
    %899 = vmatprep.subr.mxu0 0.0
    %v900 = vand.u32 %v90, 4294901760
    %v901 = vsub.f32 %v90, %v900
    %v902 = vand.u32 %v901, 4294901760
    %v903 = vsub.f32 %v901, %v902
    %v904 = vand.u32 %v903, 4294901760
    %905 = vmatpush1.msra.mxu0 %v904
    %906 = vmatprep.subr.mxu0 0.0
    %v907 = vand.u32 %v91, 4294901760
    %v908 = vsub.f32 %v91, %v907
    %v909 = vand.u32 %v908, 4294901760
    %v910 = vsub.f32 %v908, %v909
    %v911 = vand.u32 %v910, 4294901760
    %912 = vmatpush1.msra.mxu0 %v911
    %913 = vmatprep.subr.mxu0 0.0
    %v914 = vand.u32 %v92, 4294901760
    %v915 = vsub.f32 %v92, %v914
    %v916 = vand.u32 %v915, 4294901760
    %v917 = vsub.f32 %v915, %v916
    %v918 = vand.u32 %v917, 4294901760
    %919 = vmatpush1.msra.mxu0 %v918
    %920 = vmatprep.subr.mxu0 0.0
    %v921 = vand.u32 %v93, 4294901760
    %v922 = vsub.f32 %v93, %v921
    %v923 = vand.u32 %v922, 4294901760
    %v924 = vsub.f32 %v922, %v923
    %v925 = vand.u32 %v924, 4294901760
    %926 = vmatpush1.msra.mxu0 %v925
    %927 = vmatprep.subr.mxu0 0.0
    %v928 = vand.u32 %v94, 4294901760
    %v929 = vsub.f32 %v94, %v928
    %v930 = vand.u32 %v929, 4294901760
    %v931 = vsub.f32 %v929, %v930
    %v932 = vand.u32 %v931, 4294901760
    %933 = vmatpush1.msra.mxu0 %v932
    %934 = vmatprep.subr.mxu0 0.0
    %v935 = vand.u32 %v95, 4294901760
    %v936 = vsub.f32 %v95, %v935
    %v937 = vand.u32 %v936, 4294901760
    %v938 = vsub.f32 %v936, %v937
    %v939 = vand.u32 %v938, 4294901760
    %940 = vmatpush1.msra.mxu0 %v939
    %941 = vmatprep.subr.mxu0 0.0
    %942 = vmatpush1.msra.mxu0 0.0
    %943 = vmatprep.subr.mxu0 0.0
    %944 = vmatpush1.msra.mxu0 0.0
    %945 = vmatprep.subr.mxu0 0.0
    %946 = vmatpush1.msra.mxu0 0.0
    %947 = vmatprep.subr.mxu0 0.0
    %948 = vmatpush1.msra.mxu0 0.0
    %949 = vmatprep.subr.mxu0 0.0
    %950 = vmatpush1.msra.mxu0 0.0
    %951 = vmatprep.subr.mxu0 0.0
    %952 = vmatpush1.msra.mxu0 0.0
    %953 = vmatprep.subr.mxu0 0.0
    %954 = vmatpush1.msra.mxu0 0.0
    %955 = vmatprep.subr.mxu0 0.0
    %956 = vmatpush1.msra.mxu0 0.0
    %957 = vmatprep.subr.mxu0 0.0
    %958 = vmatpush1.msra.mxu0 0.0
    %959 = vmatprep.subr.mxu0 0.0
    %960 = vmatpush1.msra.mxu0 0.0
    %961 = vmatprep.subr.mxu0 0.0
    %962 = vmatpush1.msra.mxu0 0.0
    %963 = vmatprep.subr.mxu0 0.0
    %964 = vmatpush1.msra.mxu0 0.0
    %965 = vmatprep.subr.mxu0 0.0
    %966 = vmatpush1.msra.mxu0 0.0
    %967 = vmatprep.subr.mxu0 0.0
    %968 = vmatpush1.msra.mxu0 0.0
    %969 = vmatprep.subr.mxu0 0.0
    %970 = vmatpush1.msra.mxu0 0.0
    %971 = vmatprep.subr.mxu0 0.0
    %972 = vmatpush1.msra.mxu0 0.0
    %973 = vmatprep.mubr.f32.mxu0 0.0
    %v974 = vand.u32 %v96, 4294901760
    %975 = vmatmul.mubr.f32.gmra.mrb[0].mxu0 %v974
    %v976 = vpop.f32.mrb[0].mxu0
    %v977 = vadd.f32 %v826, %v976
    %v978 = vpop.f32.mrb[0].mxu0
    %979 = vdwg.mxu0
    %980 = vmatprep.subr.mxu0 0.0
    %v981 = vand.u32 %v80, 4294901760
    %v982 = vsub.f32 %v80, %v981
    %983 = vmatpush1.msra.mxu0 %v982
    %984 = vmatprep.subr.mxu0 0.0
    %v985 = vand.u32 %v81, 4294901760
    %v986 = vsub.f32 %v81, %v985
    %987 = vmatpush1.msra.mxu0 %v986
    %988 = vmatprep.subr.mxu0 0.0
    %v989 = vand.u32 %v82, 4294901760
    %v990 = vsub.f32 %v82, %v989
    %991 = vmatpush1.msra.mxu0 %v990
    %992 = vmatprep.subr.mxu0 0.0
    %v993 = vand.u32 %v83, 4294901760
    %v994 = vsub.f32 %v83, %v993
    %995 = vmatpush1.msra.mxu0 %v994
    %996 = vmatprep.subr.mxu0 0.0
    %v997 = vand.u32 %v84, 4294901760
    %v998 = vsub.f32 %v84, %v997
    %999 = vmatpush1.msra.mxu0 %v998
    %1000 = vmatprep.subr.mxu0 0.0
    %v1001 = vand.u32 %v85, 4294901760
    %v1002 = vsub.f32 %v85, %v1001
    %1003 = vmatpush1.msra.mxu0 %v1002
    %1004 = vmatprep.subr.mxu0 0.0
    %v1005 = vand.u32 %v86, 4294901760
    %v1006 = vsub.f32 %v86, %v1005
    %1007 = vmatpush1.msra.mxu0 %v1006
    %1008 = vmatprep.subr.mxu0 0.0
    %v1009 = vand.u32 %v87, 4294901760
    %v1010 = vsub.f32 %v87, %v1009
    %1011 = vmatpush1.msra.mxu0 %v1010
    %1012 = vmatprep.subr.mxu0 0.0
    %v1013 = vand.u32 %v88, 4294901760
    %v1014 = vsub.f32 %v88, %v1013
    %1015 = vmatpush1.msra.mxu0 %v1014
    %1016 = vmatprep.subr.mxu0 0.0
    %v1017 = vand.u32 %v89, 4294901760
    %v1018 = vsub.f32 %v89, %v1017
    %1019 = vmatpush1.msra.mxu0 %v1018
    %1020 = vmatprep.subr.mxu0 0.0
    %v1021 = vand.u32 %v90, 4294901760
    %v1022 = vsub.f32 %v90, %v1021
    %1023 = vmatpush1.msra.mxu0 %v1022
    %1024 = vmatprep.subr.mxu0 0.0
    %v1025 = vand.u32 %v91, 4294901760
    %v1026 = vsub.f32 %v91, %v1025
    %1027 = vmatpush1.msra.mxu0 %v1026
    %1028 = vmatprep.subr.mxu0 0.0
    %v1029 = vand.u32 %v92, 4294901760
    %v1030 = vsub.f32 %v92, %v1029
    %1031 = vmatpush1.msra.mxu0 %v1030
    %1032 = vmatprep.subr.mxu0 0.0
    %v1033 = vand.u32 %v93, 4294901760
    %v1034 = vsub.f32 %v93, %v1033
    %1035 = vmatpush1.msra.mxu0 %v1034
    %1036 = vmatprep.subr.mxu0 0.0
    %v1037 = vand.u32 %v94, 4294901760
    %v1038 = vsub.f32 %v94, %v1037
    %1039 = vmatpush1.msra.mxu0 %v1038
    %1040 = vmatprep.subr.mxu0 0.0
    %v1041 = vand.u32 %v95, 4294901760
    %v1042 = vsub.f32 %v95, %v1041
    %1043 = vmatpush1.msra.mxu0 %v1042
    %1044 = vmatprep.subr.mxu0 0.0
    %1045 = vmatpush1.msra.mxu0 0.0
    %1046 = vmatprep.subr.mxu0 0.0
    %1047 = vmatpush1.msra.mxu0 0.0
    %1048 = vmatprep.subr.mxu0 0.0
    %1049 = vmatpush1.msra.mxu0 0.0
    %1050 = vmatprep.subr.mxu0 0.0
    %1051 = vmatpush1.msra.mxu0 0.0
    %1052 = vmatprep.subr.mxu0 0.0
    %1053 = vmatpush1.msra.mxu0 0.0
    %1054 = vmatprep.subr.mxu0 0.0
    %1055 = vmatpush1.msra.mxu0 0.0
    %1056 = vmatprep.subr.mxu0 0.0
    %1057 = vmatpush1.msra.mxu0 0.0
    %1058 = vmatprep.subr.mxu0 0.0
    %1059 = vmatpush1.msra.mxu0 0.0
    %1060 = vmatprep.subr.mxu0 0.0
    %1061 = vmatpush1.msra.mxu0 0.0
    %1062 = vmatprep.subr.mxu0 0.0
    %1063 = vmatpush1.msra.mxu0 0.0
    %1064 = vmatprep.subr.mxu0 0.0
    %1065 = vmatpush1.msra.mxu0 0.0
    %1066 = vmatprep.subr.mxu0 0.0
    %1067 = vmatpush1.msra.mxu0 0.0
    %1068 = vmatprep.subr.mxu0 0.0
    %1069 = vmatpush1.msra.mxu0 0.0
    %1070 = vmatprep.subr.mxu0 0.0
    %1071 = vmatpush1.msra.mxu0 0.0
    %1072 = vmatprep.subr.mxu0 0.0
    %1073 = vmatpush1.msra.mxu0 0.0
    %1074 = vmatprep.subr.mxu0 0.0
    %1075 = vmatpush1.msra.mxu0 0.0
    %1076 = vmatprep.mubr.f32.mxu0 0.0
    %v1077 = vand.u32 %v96, 4294901760
    %v1078 = vsub.f32 %v96, %v1077
    %1079 = vmatmul.mubr.f32.gmra.mrb[0].mxu0 %v1078
    %v1080 = vpop.f32.mrb[0].mxu0
    %v1081 = vadd.f32 %v977, %v1080
    %v1082 = vpop.f32.mrb[0].mxu0
    %1083 = vdwg.mxu0
    %1084 = vmatprep.subr.mxu0 0.0
    %v1085 = vand.u32 %v80, 4294901760
    %1086 = vmatpush1.msra.mxu0 %v1085
    %1087 = vmatprep.subr.mxu0 0.0
    %v1088 = vand.u32 %v81, 4294901760
    %1089 = vmatpush1.msra.mxu0 %v1088
    %1090 = vmatprep.subr.mxu0 0.0
    %v1091 = vand.u32 %v82, 4294901760
    %1092 = vmatpush1.msra.mxu0 %v1091
    %1093 = vmatprep.subr.mxu0 0.0
    %v1094 = vand.u32 %v83, 4294901760
    %1095 = vmatpush1.msra.mxu0 %v1094
    %1096 = vmatprep.subr.mxu0 0.0
    %v1097 = vand.u32 %v84, 4294901760
    %1098 = vmatpush1.msra.mxu0 %v1097
    %1099 = vmatprep.subr.mxu0 0.0
    %v1100 = vand.u32 %v85, 4294901760
    %1101 = vmatpush1.msra.mxu0 %v1100
    %1102 = vmatprep.subr.mxu0 0.0
    %v1103 = vand.u32 %v86, 4294901760
    %1104 = vmatpush1.msra.mxu0 %v1103
    %1105 = vmatprep.subr.mxu0 0.0
    %v1106 = vand.u32 %v87, 4294901760
    %1107 = vmatpush1.msra.mxu0 %v1106
    %1108 = vmatprep.subr.mxu0 0.0
    %v1109 = vand.u32 %v88, 4294901760
    %1110 = vmatpush1.msra.mxu0 %v1109
    %1111 = vmatprep.subr.mxu0 0.0
    %v1112 = vand.u32 %v89, 4294901760
    %1113 = vmatpush1.msra.mxu0 %v1112
    %1114 = vmatprep.subr.mxu0 0.0
    %v1115 = vand.u32 %v90, 4294901760
    %1116 = vmatpush1.msra.mxu0 %v1115
    %1117 = vmatprep.subr.mxu0 0.0
    %v1118 = vand.u32 %v91, 4294901760
    %1119 = vmatpush1.msra.mxu0 %v1118
    %1120 = vmatprep.subr.mxu0 0.0
    %v1121 = vand.u32 %v92, 4294901760
    %1122 = vmatpush1.msra.mxu0 %v1121
    %1123 = vmatprep.subr.mxu0 0.0
    %v1124 = vand.u32 %v93, 4294901760
    %1125 = vmatpush1.msra.mxu0 %v1124
    %1126 = vmatprep.subr.mxu0 0.0
    %v1127 = vand.u32 %v94, 4294901760
    %1128 = vmatpush1.msra.mxu0 %v1127
    %1129 = vmatprep.subr.mxu0 0.0
    %v1130 = vand.u32 %v95, 4294901760
    %1131 = vmatpush1.msra.mxu0 %v1130
    %1132 = vmatprep.subr.mxu0 0.0
    %1133 = vmatpush1.msra.mxu0 0.0
    %1134 = vmatprep.subr.mxu0 0.0
    %1135 = vmatpush1.msra.mxu0 0.0
    %1136 = vmatprep.subr.mxu0 0.0
    %1137 = vmatpush1.msra.mxu0 0.0
    %1138 = vmatprep.subr.mxu0 0.0
    %1139 = vmatpush1.msra.mxu0 0.0
    %1140 = vmatprep.subr.mxu0 0.0
    %1141 = vmatpush1.msra.mxu0 0.0
    %1142 = vmatprep.subr.mxu0 0.0
    %1143 = vmatpush1.msra.mxu0 0.0
    %1144 = vmatprep.subr.mxu0 0.0
    %1145 = vmatpush1.msra.mxu0 0.0
    %1146 = vmatprep.subr.mxu0 0.0
    %1147 = vmatpush1.msra.mxu0 0.0
    %1148 = vmatprep.subr.mxu0 0.0
    %1149 = vmatpush1.msra.mxu0 0.0
    %1150 = vmatprep.subr.mxu0 0.0
    %1151 = vmatpush1.msra.mxu0 0.0
    %1152 = vmatprep.subr.mxu0 0.0
    %1153 = vmatpush1.msra.mxu0 0.0
    %1154 = vmatprep.subr.mxu0 0.0
    %1155 = vmatpush1.msra.mxu0 0.0
    %1156 = vmatprep.subr.mxu0 0.0
    %1157 = vmatpush1.msra.mxu0 0.0
    %1158 = vmatprep.subr.mxu0 0.0
    %1159 = vmatpush1.msra.mxu0 0.0
    %1160 = vmatprep.subr.mxu0 0.0
    %1161 = vmatpush1.msra.mxu0 0.0
    %1162 = vmatprep.subr.mxu0 0.0
    %1163 = vmatpush1.msra.mxu0 0.0
    %1164 = vmatprep.mubr.f32.mxu0 0.0
    %v1165 = vand.u32 %v96, 4294901760
    %v1166 = vsub.f32 %v96, %v1165
    %v1167 = vand.u32 %v1166, 4294901760
    %1168 = vmatmul.mubr.f32.gmra.mrb[0].mxu0 %v1167
    %v1169 = vpop.f32.mrb[0].mxu0
    %v1170 = vadd.f32 %v1081, %v1169
    %v1171 = vpop.f32.mrb[0].mxu0
    %1172 = vdwg.mxu0
    %1173 = vmatprep.subr.mxu0 0.0
    %v1174 = vand.u32 %v80, 4294901760
    %v1175 = vsub.f32 %v80, %v1174
    %v1176 = vand.u32 %v1175, 4294901760
    %1177 = vmatpush1.msra.mxu0 %v1176
    %1178 = vmatprep.subr.mxu0 0.0
    %v1179 = vand.u32 %v81, 4294901760
    %v1180 = vsub.f32 %v81, %v1179
    %v1181 = vand.u32 %v1180, 4294901760
    %1182 = vmatpush1.msra.mxu0 %v1181
    %1183 = vmatprep.subr.mxu0 0.0
    %v1184 = vand.u32 %v82, 4294901760
    %v1185 = vsub.f32 %v82, %v1184
    %v1186 = vand.u32 %v1185, 4294901760
    %1187 = vmatpush1.msra.mxu0 %v1186
    %1188 = vmatprep.subr.mxu0 0.0
    %v1189 = vand.u32 %v83, 4294901760
    %v1190 = vsub.f32 %v83, %v1189
    %v1191 = vand.u32 %v1190, 4294901760
    %1192 = vmatpush1.msra.mxu0 %v1191
    %1193 = vmatprep.subr.mxu0 0.0
    %v1194 = vand.u32 %v84, 4294901760
    %v1195 = vsub.f32 %v84, %v1194
    %v1196 = vand.u32 %v1195, 4294901760
    %1197 = vmatpush1.msra.mxu0 %v1196
    %1198 = vmatprep.subr.mxu0 0.0
    %v1199 = vand.u32 %v85, 4294901760
    %v1200 = vsub.f32 %v85, %v1199
    %v1201 = vand.u32 %v1200, 4294901760
    %1202 = vmatpush1.msra.mxu0 %v1201
    %1203 = vmatprep.subr.mxu0 0.0
    %v1204 = vand.u32 %v86, 4294901760
    %v1205 = vsub.f32 %v86, %v1204
    %v1206 = vand.u32 %v1205, 4294901760
    %1207 = vmatpush1.msra.mxu0 %v1206
    %1208 = vmatprep.subr.mxu0 0.0
    %v1209 = vand.u32 %v87, 4294901760
    %v1210 = vsub.f32 %v87, %v1209
    %v1211 = vand.u32 %v1210, 4294901760
    %1212 = vmatpush1.msra.mxu0 %v1211
    %1213 = vmatprep.subr.mxu0 0.0
    %v1214 = vand.u32 %v88, 4294901760
    %v1215 = vsub.f32 %v88, %v1214
    %v1216 = vand.u32 %v1215, 4294901760
    %1217 = vmatpush1.msra.mxu0 %v1216
    %1218 = vmatprep.subr.mxu0 0.0
    %v1219 = vand.u32 %v89, 4294901760
    %v1220 = vsub.f32 %v89, %v1219
    %v1221 = vand.u32 %v1220, 4294901760
    %1222 = vmatpush1.msra.mxu0 %v1221
    %1223 = vmatprep.subr.mxu0 0.0
    %v1224 = vand.u32 %v90, 4294901760
    %v1225 = vsub.f32 %v90, %v1224
    %v1226 = vand.u32 %v1225, 4294901760
    %1227 = vmatpush1.msra.mxu0 %v1226
    %1228 = vmatprep.subr.mxu0 0.0
    %v1229 = vand.u32 %v91, 4294901760
    %v1230 = vsub.f32 %v91, %v1229
    %v1231 = vand.u32 %v1230, 4294901760
    %1232 = vmatpush1.msra.mxu0 %v1231
    %1233 = vmatprep.subr.mxu0 0.0
    %v1234 = vand.u32 %v92, 4294901760
    %v1235 = vsub.f32 %v92, %v1234
    %v1236 = vand.u32 %v1235, 4294901760
    %1237 = vmatpush1.msra.mxu0 %v1236
    %1238 = vmatprep.subr.mxu0 0.0
    %v1239 = vand.u32 %v93, 4294901760
    %v1240 = vsub.f32 %v93, %v1239
    %v1241 = vand.u32 %v1240, 4294901760
    %1242 = vmatpush1.msra.mxu0 %v1241
    %1243 = vmatprep.subr.mxu0 0.0
    %v1244 = vand.u32 %v94, 4294901760
    %v1245 = vsub.f32 %v94, %v1244
    %v1246 = vand.u32 %v1245, 4294901760
    %1247 = vmatpush1.msra.mxu0 %v1246
    %1248 = vmatprep.subr.mxu0 0.0
    %v1249 = vand.u32 %v95, 4294901760
    %v1250 = vsub.f32 %v95, %v1249
    %v1251 = vand.u32 %v1250, 4294901760
    %1252 = vmatpush1.msra.mxu0 %v1251
    %1253 = vmatprep.subr.mxu0 0.0
    %1254 = vmatpush1.msra.mxu0 0.0
    %1255 = vmatprep.subr.mxu0 0.0
    %1256 = vmatpush1.msra.mxu0 0.0
    %1257 = vmatprep.subr.mxu0 0.0
    %1258 = vmatpush1.msra.mxu0 0.0
    %1259 = vmatprep.subr.mxu0 0.0
    %1260 = vmatpush1.msra.mxu0 0.0
    %1261 = vmatprep.subr.mxu0 0.0
    %1262 = vmatpush1.msra.mxu0 0.0
    %1263 = vmatprep.subr.mxu0 0.0
    %1264 = vmatpush1.msra.mxu0 0.0
    %1265 = vmatprep.subr.mxu0 0.0
    %1266 = vmatpush1.msra.mxu0 0.0
    %1267 = vmatprep.subr.mxu0 0.0
    %1268 = vmatpush1.msra.mxu0 0.0
    %1269 = vmatprep.subr.mxu0 0.0
    %1270 = vmatpush1.msra.mxu0 0.0
    %1271 = vmatprep.subr.mxu0 0.0
    %1272 = vmatpush1.msra.mxu0 0.0
    %1273 = vmatprep.subr.mxu0 0.0
    %1274 = vmatpush1.msra.mxu0 0.0
    %1275 = vmatprep.subr.mxu0 0.0
    %1276 = vmatpush1.msra.mxu0 0.0
    %1277 = vmatprep.subr.mxu0 0.0
    %1278 = vmatpush1.msra.mxu0 0.0
    %1279 = vmatprep.subr.mxu0 0.0
    %1280 = vmatpush1.msra.mxu0 0.0
    %1281 = vmatprep.subr.mxu0 0.0
    %1282 = vmatpush1.msra.mxu0 0.0
    %1283 = vmatprep.subr.mxu0 0.0
    %1284 = vmatpush1.msra.mxu0 0.0
    %1285 = vmatprep.mubr.f32.mxu0 0.0
    %v1286 = vand.u32 %v96, 4294901760
    %1287 = vmatmul.mubr.f32.gmra.mrb[0].mxu0 %v1286
    %v1288 = vpop.f32.mrb[0].mxu0
    %v1289 = vadd.f32 %v1170, %v1288
    %v1290 = vpop.f32.mrb[0].mxu0
    %1291 = vdwg.mxu0
    %1292 = vmatprep.subr.mxu0 0.0
    %v1293 = vand.u32 %v80, 4294901760
    %1294 = vmatpush1.msra.mxu0 %v1293
    %1295 = vmatprep.subr.mxu0 0.0
    %v1296 = vand.u32 %v81, 4294901760
    %1297 = vmatpush1.msra.mxu0 %v1296
    %1298 = vmatprep.subr.mxu0 0.0
    %v1299 = vand.u32 %v82, 4294901760
    %1300 = vmatpush1.msra.mxu0 %v1299
    %1301 = vmatprep.subr.mxu0 0.0
    %v1302 = vand.u32 %v83, 4294901760
    %1303 = vmatpush1.msra.mxu0 %v1302
    %1304 = vmatprep.subr.mxu0 0.0
    %v1305 = vand.u32 %v84, 4294901760
    %1306 = vmatpush1.msra.mxu0 %v1305
    %1307 = vmatprep.subr.mxu0 0.0
    %v1308 = vand.u32 %v85, 4294901760
    %1309 = vmatpush1.msra.mxu0 %v1308
    %1310 = vmatprep.subr.mxu0 0.0
    %v1311 = vand.u32 %v86, 4294901760
    %1312 = vmatpush1.msra.mxu0 %v1311
    %1313 = vmatprep.subr.mxu0 0.0
    %v1314 = vand.u32 %v87, 4294901760
    %1315 = vmatpush1.msra.mxu0 %v1314
    %1316 = vmatprep.subr.mxu0 0.0
    %v1317 = vand.u32 %v88, 4294901760
    %1318 = vmatpush1.msra.mxu0 %v1317
    %1319 = vmatprep.subr.mxu0 0.0
    %v1320 = vand.u32 %v89, 4294901760
    %1321 = vmatpush1.msra.mxu0 %v1320
    %1322 = vmatprep.subr.mxu0 0.0
    %v1323 = vand.u32 %v90, 4294901760
    %1324 = vmatpush1.msra.mxu0 %v1323
    %1325 = vmatprep.subr.mxu0 0.0
    %v1326 = vand.u32 %v91, 4294901760
    %1327 = vmatpush1.msra.mxu0 %v1326
    %1328 = vmatprep.subr.mxu0 0.0
    %v1329 = vand.u32 %v92, 4294901760
    %1330 = vmatpush1.msra.mxu0 %v1329
    %1331 = vmatprep.subr.mxu0 0.0
    %v1332 = vand.u32 %v93, 4294901760
    %1333 = vmatpush1.msra.mxu0 %v1332
    %1334 = vmatprep.subr.mxu0 0.0
    %v1335 = vand.u32 %v94, 4294901760
    %1336 = vmatpush1.msra.mxu0 %v1335
    %1337 = vmatprep.subr.mxu0 0.0
    %v1338 = vand.u32 %v95, 4294901760
    %1339 = vmatpush1.msra.mxu0 %v1338
    %1340 = vmatprep.subr.mxu0 0.0
    %1341 = vmatpush1.msra.mxu0 0.0
    %1342 = vmatprep.subr.mxu0 0.0
    %1343 = vmatpush1.msra.mxu0 0.0
    %1344 = vmatprep.subr.mxu0 0.0
    %1345 = vmatpush1.msra.mxu0 0.0
    %1346 = vmatprep.subr.mxu0 0.0
    %1347 = vmatpush1.msra.mxu0 0.0
    %1348 = vmatprep.subr.mxu0 0.0
    %1349 = vmatpush1.msra.mxu0 0.0
    %1350 = vmatprep.subr.mxu0 0.0
    %1351 = vmatpush1.msra.mxu0 0.0
    %1352 = vmatprep.subr.mxu0 0.0
    %1353 = vmatpush1.msra.mxu0 0.0
    %1354 = vmatprep.subr.mxu0 0.0
    %1355 = vmatpush1.msra.mxu0 0.0
    %1356 = vmatprep.subr.mxu0 0.0
    %1357 = vmatpush1.msra.mxu0 0.0
    %1358 = vmatprep.subr.mxu0 0.0
    %1359 = vmatpush1.msra.mxu0 0.0
    %1360 = vmatprep.subr.mxu0 0.0
    %1361 = vmatpush1.msra.mxu0 0.0
    %1362 = vmatprep.subr.mxu0 0.0
    %1363 = vmatpush1.msra.mxu0 0.0
    %1364 = vmatprep.subr.mxu0 0.0
    %1365 = vmatpush1.msra.mxu0 0.0
    %1366 = vmatprep.subr.mxu0 0.0
    %1367 = vmatpush1.msra.mxu0 0.0
    %1368 = vmatprep.subr.mxu0 0.0
    %1369 = vmatpush1.msra.mxu0 0.0
    %1370 = vmatprep.subr.mxu0 0.0
    %1371 = vmatpush1.msra.mxu0 0.0
    %1372 = vmatprep.mubr.f32.mxu0 0.0
    %v1373 = vand.u32 %v96, 4294901760
    %1374 = vmatmul.mubr.f32.gmra.mrb[0].mxu0 %v1373
    %v1375 = vpop.f32.mrb[0].mxu0
    %v1376 = vadd.f32 %v1289, %v1375
    %v1377 = vpop.f32.mrb[0].mxu0
    %1378 = vdwg.mxu0
    %v1379 = vmul.f32 %v735, %v62
    %v1380 = vmul.f32 %v1376, %v63
    %v1381 = vadd.f32 %v1379, %v1380
    %1382 = vst [vmem:[#allocation8] sm:$0x3] %v1381
    %s1383 = scalar_lea.vmem [#allocation2], 2
    %v1384 = vld [vmem:[%s1383] sm:$0x3]
    %1385 = vmatprep.subr.mxu0 0.0
    %v1386 = vand.u32 %v64, 4294901760
    %1387 = vmatpush1.msra.mxu0 %v1386
    %1388 = vmatprep.subr.mxu0 0.0
    %v1389 = vand.u32 %v65, 4294901760
    %1390 = vmatpush1.msra.mxu0 %v1389
    %1391 = vmatprep.subr.mxu0 0.0
    %v1392 = vand.u32 %v66, 4294901760
    %1393 = vmatpush1.msra.mxu0 %v1392
    %1394 = vmatprep.subr.mxu0 0.0
    %v1395 = vand.u32 %v67, 4294901760
    %1396 = vmatpush1.msra.mxu0 %v1395
    %1397 = vmatprep.subr.mxu0 0.0
    %v1398 = vand.u32 %v68, 4294901760
    %1399 = vmatpush1.msra.mxu0 %v1398
    %1400 = vmatprep.subr.mxu0 0.0
    %v1401 = vand.u32 %v69, 4294901760
    %1402 = vmatpush1.msra.mxu0 %v1401
    %1403 = vmatprep.subr.mxu0 0.0
    %v1404 = vand.u32 %v70, 4294901760
    %1405 = vmatpush1.msra.mxu0 %v1404
    %1406 = vmatprep.subr.mxu0 0.0
    %v1407 = vand.u32 %v71, 4294901760
    %1408 = vmatpush1.msra.mxu0 %v1407
    %1409 = vmatprep.subr.mxu0 0.0
    %v1410 = vand.u32 %v72, 4294901760
    %1411 = vmatpush1.msra.mxu0 %v1410
    %1412 = vmatprep.subr.mxu0 0.0
    %v1413 = vand.u32 %v73, 4294901760
    %1414 = vmatpush1.msra.mxu0 %v1413
    %1415 = vmatprep.subr.mxu0 0.0
    %v1416 = vand.u32 %v74, 4294901760
    %1417 = vmatpush1.msra.mxu0 %v1416
    %1418 = vmatprep.subr.mxu0 0.0
    %v1419 = vand.u32 %v75, 4294901760
    %1420 = vmatpush1.msra.mxu0 %v1419
    %1421 = vmatprep.subr.mxu0 0.0
    %v1422 = vand.u32 %v76, 4294901760
    %1423 = vmatpush1.msra.mxu0 %v1422
    %1424 = vmatprep.subr.mxu0 0.0
    %v1425 = vand.u32 %v77, 4294901760
    %1426 = vmatpush1.msra.mxu0 %v1425
    %1427 = vmatprep.subr.mxu0 0.0
    %v1428 = vand.u32 %v78, 4294901760
    %1429 = vmatpush1.msra.mxu0 %v1428
    %1430 = vmatprep.subr.mxu0 0.0
    %v1431 = vand.u32 %v79, 4294901760
    %1432 = vmatpush1.msra.mxu0 %v1431
    %1433 = vmatprep.subr.mxu0 0.0
    %1434 = vmatpush1.msra.mxu0 0.0
    %1435 = vmatprep.subr.mxu0 0.0
    %1436 = vmatpush1.msra.mxu0 0.0
    %1437 = vmatprep.subr.mxu0 0.0
    %1438 = vmatpush1.msra.mxu0 0.0
    %1439 = vmatprep.subr.mxu0 0.0
    %1440 = vmatpush1.msra.mxu0 0.0
    %1441 = vmatprep.subr.mxu0 0.0
    %1442 = vmatpush1.msra.mxu0 0.0
    %1443 = vmatprep.subr.mxu0 0.0
    %1444 = vmatpush1.msra.mxu0 0.0
    %1445 = vmatprep.subr.mxu0 0.0
    %1446 = vmatpush1.msra.mxu0 0.0
    %1447 = vmatprep.subr.mxu0 0.0
    %1448 = vmatpush1.msra.mxu0 0.0
    %1449 = vmatprep.subr.mxu0 0.0
    %1450 = vmatpush1.msra.mxu0 0.0
    %1451 = vmatprep.subr.mxu0 0.0
    %1452 = vmatpush1.msra.mxu0 0.0
    %1453 = vmatprep.subr.mxu0 0.0
    %1454 = vmatpush1.msra.mxu0 0.0
    %1455 = vmatprep.subr.mxu0 0.0
    %1456 = vmatpush1.msra.mxu0 0.0
    %1457 = vmatprep.subr.mxu0 0.0
    %1458 = vmatpush1.msra.mxu0 0.0
    %1459 = vmatprep.subr.mxu0 0.0
    %1460 = vmatpush1.msra.mxu0 0.0
    %1461 = vmatprep.subr.mxu0 0.0
    %1462 = vmatpush1.msra.mxu0 0.0
    %1463 = vmatprep.subr.mxu0 0.0
    %1464 = vmatpush1.msra.mxu0 0.0
    %1465 = vmatprep.mubr.f32.mxu0 0.0
    %v1466 = vand.u32 %v1384, 4294901760
    %v1467 = vsub.f32 %v1384, %v1466
    %v1468 = vand.u32 %v1467, 4294901760
    %v1469 = vsub.f32 %v1467, %v1468
    %v1470 = vand.u32 %v1469, 4294901760
    %1471 = vmatmul.mubr.f32.gmra.mrb[0].mxu0 %v1470
    %v1472 = vpop.f32.mrb[0].mxu0
    %v1473 = vadd.f32 0.0, %v1472
    %v1474 = vpop.f32.mrb[0].mxu0
    %1475 = vdwg.mxu0
    %1476 = vmatprep.subr.mxu0 0.0
    %v1477 = vand.u32 %v64, 4294901760
    %v1478 = vsub.f32 %v64, %v1477
    %v1479 = vand.u32 %v1478, 4294901760
    %v1480 = vsub.f32 %v1478, %v1479
    %v1481 = vand.u32 %v1480, 4294901760
    %1482 = vmatpush1.msra.mxu0 %v1481
    %1483 = vmatprep.subr.mxu0 0.0
    %v1484 = vand.u32 %v65, 4294901760
    %v1485 = vsub.f32 %v65, %v1484
    %v1486 = vand.u32 %v1485, 4294901760
    %v1487 = vsub.f32 %v1485, %v1486
    %v1488 = vand.u32 %v1487, 4294901760
    %1489 = vmatpush1.msra.mxu0 %v1488
    %1490 = vmatprep.subr.mxu0 0.0
    %v1491 = vand.u32 %v66, 4294901760
    %v1492 = vsub.f32 %v66, %v1491
    %v1493 = vand.u32 %v1492, 4294901760
    %v1494 = vsub.f32 %v1492, %v1493
    %v1495 = vand.u32 %v1494, 4294901760
    %1496 = vmatpush1.msra.mxu0 %v1495
    %1497 = vmatprep.subr.mxu0 0.0
    %v1498 = vand.u32 %v67, 4294901760
    %v1499 = vsub.f32 %v67, %v1498
    %v1500 = vand.u32 %v1499, 4294901760
    %v1501 = vsub.f32 %v1499, %v1500
    %v1502 = vand.u32 %v1501, 4294901760
    %1503 = vmatpush1.msra.mxu0 %v1502
    %1504 = vmatprep.subr.mxu0 0.0
    %v1505 = vand.u32 %v68, 4294901760
    %v1506 = vsub.f32 %v68, %v1505
    %v1507 = vand.u32 %v1506, 4294901760
    %v1508 = vsub.f32 %v1506, %v1507
    %v1509 = vand.u32 %v1508, 4294901760
    %1510 = vmatpush1.msra.mxu0 %v1509
    %1511 = vmatprep.subr.mxu0 0.0
    %v1512 = vand.u32 %v69, 4294901760
    %v1513 = vsub.f32 %v69, %v1512
    %v1514 = vand.u32 %v1513, 4294901760
    %v1515 = vsub.f32 %v1513, %v1514
    %v1516 = vand.u32 %v1515, 4294901760
    %1517 = vmatpush1.msra.mxu0 %v1516
    %1518 = vmatprep.subr.mxu0 0.0
    %v1519 = vand.u32 %v70, 4294901760
    %v1520 = vsub.f32 %v70, %v1519
    %v1521 = vand.u32 %v1520, 4294901760
    %v1522 = vsub.f32 %v1520, %v1521
    %v1523 = vand.u32 %v1522, 4294901760
    %1524 = vmatpush1.msra.mxu0 %v1523
    %1525 = vmatprep.subr.mxu0 0.0
    %v1526 = vand.u32 %v71, 4294901760
    %v1527 = vsub.f32 %v71, %v1526
    %v1528 = vand.u32 %v1527, 4294901760
    %v1529 = vsub.f32 %v1527, %v1528
    %v1530 = vand.u32 %v1529, 4294901760
    %1531 = vmatpush1.msra.mxu0 %v1530
    %1532 = vmatprep.subr.mxu0 0.0
    %v1533 = vand.u32 %v72, 4294901760
    %v1534 = vsub.f32 %v72, %v1533
    %v1535 = vand.u32 %v1534, 4294901760
    %v1536 = vsub.f32 %v1534, %v1535
    %v1537 = vand.u32 %v1536, 4294901760
    %1538 = vmatpush1.msra.mxu0 %v1537
    %1539 = vmatprep.subr.mxu0 0.0
    %v1540 = vand.u32 %v73, 4294901760
    %v1541 = vsub.f32 %v73, %v1540
    %v1542 = vand.u32 %v1541, 4294901760
    %v1543 = vsub.f32 %v1541, %v1542
    %v1544 = vand.u32 %v1543, 4294901760
    %1545 = vmatpush1.msra.mxu0 %v1544
    %1546 = vmatprep.subr.mxu0 0.0
    %v1547 = vand.u32 %v74, 4294901760
    %v1548 = vsub.f32 %v74, %v1547
    %v1549 = vand.u32 %v1548, 4294901760
    %v1550 = vsub.f32 %v1548, %v1549
    %v1551 = vand.u32 %v1550, 4294901760
    %1552 = vmatpush1.msra.mxu0 %v1551
    %1553 = vmatprep.subr.mxu0 0.0
    %v1554 = vand.u32 %v75, 4294901760
    %v1555 = vsub.f32 %v75, %v1554
    %v1556 = vand.u32 %v1555, 4294901760
    %v1557 = vsub.f32 %v1555, %v1556
    %v1558 = vand.u32 %v1557, 4294901760
    %1559 = vmatpush1.msra.mxu0 %v1558
    %1560 = vmatprep.subr.mxu0 0.0
    %v1561 = vand.u32 %v76, 4294901760
    %v1562 = vsub.f32 %v76, %v1561
    %v1563 = vand.u32 %v1562, 4294901760
    %v1564 = vsub.f32 %v1562, %v1563
    %v1565 = vand.u32 %v1564, 4294901760
    %1566 = vmatpush1.msra.mxu0 %v1565
    %1567 = vmatprep.subr.mxu0 0.0
    %v1568 = vand.u32 %v77, 4294901760
    %v1569 = vsub.f32 %v77, %v1568
    %v1570 = vand.u32 %v1569, 4294901760
    %v1571 = vsub.f32 %v1569, %v1570
    %v1572 = vand.u32 %v1571, 4294901760
    %1573 = vmatpush1.msra.mxu0 %v1572
    %1574 = vmatprep.subr.mxu0 0.0
    %v1575 = vand.u32 %v78, 4294901760
    %v1576 = vsub.f32 %v78, %v1575
    %v1577 = vand.u32 %v1576, 4294901760
    %v1578 = vsub.f32 %v1576, %v1577
    %v1579 = vand.u32 %v1578, 4294901760
    %1580 = vmatpush1.msra.mxu0 %v1579
    %1581 = vmatprep.subr.mxu0 0.0
    %v1582 = vand.u32 %v79, 4294901760
    %v1583 = vsub.f32 %v79, %v1582
    %v1584 = vand.u32 %v1583, 4294901760
    %v1585 = vsub.f32 %v1583, %v1584
    %v1586 = vand.u32 %v1585, 4294901760
    %1587 = vmatpush1.msra.mxu0 %v1586
    %1588 = vmatprep.subr.mxu0 0.0
    %1589 = vmatpush1.msra.mxu0 0.0
    %1590 = vmatprep.subr.mxu0 0.0
    %1591 = vmatpush1.msra.mxu0 0.0
    %1592 = vmatprep.subr.mxu0 0.0
    %1593 = vmatpush1.msra.mxu0 0.0
    %1594 = vmatprep.subr.mxu0 0.0
    %1595 = vmatpush1.msra.mxu0 0.0
    %1596 = vmatprep.subr.mxu0 0.0
    %1597 = vmatpush1.msra.mxu0 0.0
    %1598 = vmatprep.subr.mxu0 0.0
    %1599 = vmatpush1.msra.mxu0 0.0
    %1600 = vmatprep.subr.mxu0 0.0
    %1601 = vmatpush1.msra.mxu0 0.0
    %1602 = vmatprep.subr.mxu0 0.0
    %1603 = vmatpush1.msra.mxu0 0.0
    %1604 = vmatprep.subr.mxu0 0.0
    %1605 = vmatpush1.msra.mxu0 0.0
    %1606 = vmatprep.subr.mxu0 0.0
    %1607 = vmatpush1.msra.mxu0 0.0
    %1608 = vmatprep.subr.mxu0 0.0
    %1609 = vmatpush1.msra.mxu0 0.0
    %1610 = vmatprep.subr.mxu0 0.0
    %1611 = vmatpush1.msra.mxu0 0.0
    %1612 = vmatprep.subr.mxu0 0.0
    %1613 = vmatpush1.msra.mxu0 0.0
    %1614 = vmatprep.subr.mxu0 0.0
    %1615 = vmatpush1.msra.mxu0 0.0
    %1616 = vmatprep.subr.mxu0 0.0
    %1617 = vmatpush1.msra.mxu0 0.0
    %1618 = vmatprep.subr.mxu0 0.0
    %1619 = vmatpush1.msra.mxu0 0.0
    %1620 = vmatprep.mubr.f32.mxu0 0.0
    %v1621 = vand.u32 %v1384, 4294901760
    %1622 = vmatmul.mubr.f32.gmra.mrb[0].mxu0 %v1621
    %v1623 = vpop.f32.mrb[0].mxu0
    %v1624 = vadd.f32 %v1473, %v1623
    %v1625 = vpop.f32.mrb[0].mxu0
    %1626 = vdwg.mxu0
    %1627 = vmatprep.subr.mxu0 0.0
    %v1628 = vand.u32 %v64, 4294901760
    %v1629 = vsub.f32 %v64, %v1628
    %1630 = vmatpush1.msra.mxu0 %v1629
    %1631 = vmatprep.subr.mxu0 0.0
    %v1632 = vand.u32 %v65, 4294901760
    %v1633 = vsub.f32 %v65, %v1632
    %1634 = vmatpush1.msra.mxu0 %v1633
    %1635 = vmatprep.subr.mxu0 0.0
    %v1636 = vand.u32 %v66, 4294901760
    %v1637 = vsub.f32 %v66, %v1636
    %1638 = vmatpush1.msra.mxu0 %v1637
    %1639 = vmatprep.subr.mxu0 0.0
    %v1640 = vand.u32 %v67, 4294901760
    %v1641 = vsub.f32 %v67, %v1640
    %1642 = vmatpush1.msra.mxu0 %v1641
    %1643 = vmatprep.subr.mxu0 0.0
    %v1644 = vand.u32 %v68, 4294901760
    %v1645 = vsub.f32 %v68, %v1644
    %1646 = vmatpush1.msra.mxu0 %v1645
    %1647 = vmatprep.subr.mxu0 0.0
    %v1648 = vand.u32 %v69, 4294901760
    %v1649 = vsub.f32 %v69, %v1648
    %1650 = vmatpush1.msra.mxu0 %v1649
    %1651 = vmatprep.subr.mxu0 0.0
    %v1652 = vand.u32 %v70, 4294901760
    %v1653 = vsub.f32 %v70, %v1652
    %1654 = vmatpush1.msra.mxu0 %v1653
    %1655 = vmatprep.subr.mxu0 0.0
    %v1656 = vand.u32 %v71, 4294901760
    %v1657 = vsub.f32 %v71, %v1656
    %1658 = vmatpush1.msra.mxu0 %v1657
    %1659 = vmatprep.subr.mxu0 0.0
    %v1660 = vand.u32 %v72, 4294901760
    %v1661 = vsub.f32 %v72, %v1660
    %1662 = vmatpush1.msra.mxu0 %v1661
    %1663 = vmatprep.subr.mxu0 0.0
    %v1664 = vand.u32 %v73, 4294901760
    %v1665 = vsub.f32 %v73, %v1664
    %1666 = vmatpush1.msra.mxu0 %v1665
    %1667 = vmatprep.subr.mxu0 0.0
    %v1668 = vand.u32 %v74, 4294901760
    %v1669 = vsub.f32 %v74, %v1668
    %1670 = vmatpush1.msra.mxu0 %v1669
    %1671 = vmatprep.subr.mxu0 0.0
    %v1672 = vand.u32 %v75, 4294901760
    %v1673 = vsub.f32 %v75, %v1672
    %1674 = vmatpush1.msra.mxu0 %v1673
    %1675 = vmatprep.subr.mxu0 0.0
    %v1676 = vand.u32 %v76, 4294901760
    %v1677 = vsub.f32 %v76, %v1676
    %1678 = vmatpush1.msra.mxu0 %v1677
    %1679 = vmatprep.subr.mxu0 0.0
    %v1680 = vand.u32 %v77, 4294901760
    %v1681 = vsub.f32 %v77, %v1680
    %1682 = vmatpush1.msra.mxu0 %v1681
    %1683 = vmatprep.subr.mxu0 0.0
    %v1684 = vand.u32 %v78, 4294901760
    %v1685 = vsub.f32 %v78, %v1684
    %1686 = vmatpush1.msra.mxu0 %v1685
    %1687 = vmatprep.subr.mxu0 0.0
    %v1688 = vand.u32 %v79, 4294901760
    %v1689 = vsub.f32 %v79, %v1688
    %1690 = vmatpush1.msra.mxu0 %v1689
    %1691 = vmatprep.subr.mxu0 0.0
    %1692 = vmatpush1.msra.mxu0 0.0
    %1693 = vmatprep.subr.mxu0 0.0
    %1694 = vmatpush1.msra.mxu0 0.0
    %1695 = vmatprep.subr.mxu0 0.0
    %1696 = vmatpush1.msra.mxu0 0.0
    %1697 = vmatprep.subr.mxu0 0.0
    %1698 = vmatpush1.msra.mxu0 0.0
    %1699 = vmatprep.subr.mxu0 0.0
    %1700 = vmatpush1.msra.mxu0 0.0
    %1701 = vmatprep.subr.mxu0 0.0
    %1702 = vmatpush1.msra.mxu0 0.0
    %1703 = vmatprep.subr.mxu0 0.0
    %1704 = vmatpush1.msra.mxu0 0.0
    %1705 = vmatprep.subr.mxu0 0.0
    %1706 = vmatpush1.msra.mxu0 0.0
    %1707 = vmatprep.subr.mxu0 0.0
    %1708 = vmatpush1.msra.mxu0 0.0
    %1709 = vmatprep.subr.mxu0 0.0
    %1710 = vmatpush1.msra.mxu0 0.0
    %1711 = vmatprep.subr.mxu0 0.0
    %1712 = vmatpush1.msra.mxu0 0.0
    %1713 = vmatprep.subr.mxu0 0.0
    %1714 = vmatpush1.msra.mxu0 0.0
    %1715 = vmatprep.subr.mxu0 0.0
    %1716 = vmatpush1.msra.mxu0 0.0
    %1717 = vmatprep.subr.mxu0 0.0
    %1718 = vmatpush1.msra.mxu0 0.0
    %1719 = vmatprep.subr.mxu0 0.0
    %1720 = vmatpush1.msra.mxu0 0.0
    %1721 = vmatprep.subr.mxu0 0.0
    %1722 = vmatpush1.msra.mxu0 0.0
    %1723 = vmatprep.mubr.f32.mxu0 0.0
    %v1724 = vand.u32 %v1384, 4294901760
    %v1725 = vsub.f32 %v1384, %v1724
    %1726 = vmatmul.mubr.f32.gmra.mrb[0].mxu0 %v1725
    %v1727 = vpop.f32.mrb[0].mxu0
    %v1728 = vadd.f32 %v1624, %v1727
    %v1729 = vpop.f32.mrb[0].mxu0
    %1730 = vdwg.mxu0
    %1731 = vmatprep.subr.mxu0 0.0
    %v1732 = vand.u32 %v64, 4294901760
    %1733 = vmatpush1.msra.mxu0 %v1732
    %1734 = vmatprep.subr.mxu0 0.0
    %v1735 = vand.u32 %v65, 4294901760
    %1736 = vmatpush1.msra.mxu0 %v1735
    %1737 = vmatprep.subr.mxu0 0.0
    %v1738 = vand.u32 %v66, 4294901760
    %1739 = vmatpush1.msra.mxu0 %v1738
    %1740 = vmatprep.subr.mxu0 0.0
    %v1741 = vand.u32 %v67, 4294901760
    %1742 = vmatpush1.msra.mxu0 %v1741
    %1743 = vmatprep.subr.mxu0 0.0
    %v1744 = vand.u32 %v68, 4294901760
    %1745 = vmatpush1.msra.mxu0 %v1744
    %1746 = vmatprep.subr.mxu0 0.0
    %v1747 = vand.u32 %v69, 4294901760
    %1748 = vmatpush1.msra.mxu0 %v1747
    %1749 = vmatprep.subr.mxu0 0.0
    %v1750 = vand.u32 %v70, 4294901760
    %1751 = vmatpush1.msra.mxu0 %v1750
    %1752 = vmatprep.subr.mxu0 0.0
    %v1753 = vand.u32 %v71, 4294901760
    %1754 = vmatpush1.msra.mxu0 %v1753
    %1755 = vmatprep.subr.mxu0 0.0
    %v1756 = vand.u32 %v72, 4294901760
    %1757 = vmatpush1.msra.mxu0 %v1756
    %1758 = vmatprep.subr.mxu0 0.0
    %v1759 = vand.u32 %v73, 4294901760
    %1760 = vmatpush1.msra.mxu0 %v1759
    %1761 = vmatprep.subr.mxu0 0.0
    %v1762 = vand.u32 %v74, 4294901760
    %1763 = vmatpush1.msra.mxu0 %v1762
    %1764 = vmatprep.subr.mxu0 0.0
    %v1765 = vand.u32 %v75, 4294901760
    %1766 = vmatpush1.msra.mxu0 %v1765
    %1767 = vmatprep.subr.mxu0 0.0
    %v1768 = vand.u32 %v76, 4294901760
    %1769 = vmatpush1.msra.mxu0 %v1768
    %1770 = vmatprep.subr.mxu0 0.0
    %v1771 = vand.u32 %v77, 4294901760
    %1772 = vmatpush1.msra.mxu0 %v1771
    %1773 = vmatprep.subr.mxu0 0.0
    %v1774 = vand.u32 %v78, 4294901760
    %1775 = vmatpush1.msra.mxu0 %v1774
    %1776 = vmatprep.subr.mxu0 0.0
    %v1777 = vand.u32 %v79, 4294901760
    %1778 = vmatpush1.msra.mxu0 %v1777
    %1779 = vmatprep.subr.mxu0 0.0
    %1780 = vmatpush1.msra.mxu0 0.0
    %1781 = vmatprep.subr.mxu0 0.0
    %1782 = vmatpush1.msra.mxu0 0.0
    %1783 = vmatprep.subr.mxu0 0.0
    %1784 = vmatpush1.msra.mxu0 0.0
    %1785 = vmatprep.subr.mxu0 0.0
    %1786 = vmatpush1.msra.mxu0 0.0
    %1787 = vmatprep.subr.mxu0 0.0
    %1788 = vmatpush1.msra.mxu0 0.0
    %1789 = vmatprep.subr.mxu0 0.0
    %1790 = vmatpush1.msra.mxu0 0.0
    %1791 = vmatprep.subr.mxu0 0.0
    %1792 = vmatpush1.msra.mxu0 0.0
    %1793 = vmatprep.subr.mxu0 0.0
    %1794 = vmatpush1.msra.mxu0 0.0
    %1795 = vmatprep.subr.mxu0 0.0
    %1796 = vmatpush1.msra.mxu0 0.0
    %1797 = vmatprep.subr.mxu0 0.0
    %1798 = vmatpush1.msra.mxu0 0.0
    %1799 = vmatprep.subr.mxu0 0.0
    %1800 = vmatpush1.msra.mxu0 0.0
    %1801 = vmatprep.subr.mxu0 0.0
    %1802 = vmatpush1.msra.mxu0 0.0
    %1803 = vmatprep.subr.mxu0 0.0
    %1804 = vmatpush1.msra.mxu0 0.0
    %1805 = vmatprep.subr.mxu0 0.0
    %1806 = vmatpush1.msra.mxu0 0.0
    %1807 = vmatprep.subr.mxu0 0.0
    %1808 = vmatpush1.msra.mxu0 0.0
    %1809 = vmatprep.subr.mxu0 0.0
    %1810 = vmatpush1.msra.mxu0 0.0
    %1811 = vmatprep.mubr.f32.mxu0 0.0
    %v1812 = vand.u32 %v1384, 4294901760
    %v1813 = vsub.f32 %v1384, %v1812
    %v1814 = vand.u32 %v1813, 4294901760
    %1815 = vmatmul.mubr.f32.gmra.mrb[0].mxu0 %v1814
    %v1816 = vpop.f32.mrb[0].mxu0
    %v1817 = vadd.f32 %v1728, %v1816
    %v1818 = vpop.f32.mrb[0].mxu0
    %1819 = vdwg.mxu0
    %1820 = vmatprep.subr.mxu0 0.0
    %v1821 = vand.u32 %v64, 4294901760
    %v1822 = vsub.f32 %v64, %v1821
    %v1823 = vand.u32 %v1822, 4294901760
    %1824 = vmatpush1.msra.mxu0 %v1823
    %1825 = vmatprep.subr.mxu0 0.0
    %v1826 = vand.u32 %v65, 4294901760
    %v1827 = vsub.f32 %v65, %v1826
    %v1828 = vand.u32 %v1827, 4294901760
    %1829 = vmatpush1.msra.mxu0 %v1828
    %1830 = vmatprep.subr.mxu0 0.0
    %v1831 = vand.u32 %v66, 4294901760
    %v1832 = vsub.f32 %v66, %v1831
    %v1833 = vand.u32 %v1832, 4294901760
    %1834 = vmatpush1.msra.mxu0 %v1833
    %1835 = vmatprep.subr.mxu0 0.0
    %v1836 = vand.u32 %v67, 4294901760
    %v1837 = vsub.f32 %v67, %v1836
    %v1838 = vand.u32 %v1837, 4294901760
    %1839 = vmatpush1.msra.mxu0 %v1838
    %1840 = vmatprep.subr.mxu0 0.0
    %v1841 = vand.u32 %v68, 4294901760
    %v1842 = vsub.f32 %v68, %v1841
    %v1843 = vand.u32 %v1842, 4294901760
    %1844 = vmatpush1.msra.mxu0 %v1843
    %1845 = vmatprep.subr.mxu0 0.0
    %v1846 = vand.u32 %v69, 4294901760
    %v1847 = vsub.f32 %v69, %v1846
    %v1848 = vand.u32 %v1847, 4294901760
    %1849 = vmatpush1.msra.mxu0 %v1848
    %1850 = vmatprep.subr.mxu0 0.0
    %v1851 = vand.u32 %v70, 4294901760
    %v1852 = vsub.f32 %v70, %v1851
    %v1853 = vand.u32 %v1852, 4294901760
    %1854 = vmatpush1.msra.mxu0 %v1853
    %1855 = vmatprep.subr.mxu0 0.0
    %v1856 = vand.u32 %v71, 4294901760
    %v1857 = vsub.f32 %v71, %v1856
    %v1858 = vand.u32 %v1857, 4294901760
    %1859 = vmatpush1.msra.mxu0 %v1858
    %1860 = vmatprep.subr.mxu0 0.0
    %v1861 = vand.u32 %v72, 4294901760
    %v1862 = vsub.f32 %v72, %v1861
    %v1863 = vand.u32 %v1862, 4294901760
    %1864 = vmatpush1.msra.mxu0 %v1863
    %1865 = vmatprep.subr.mxu0 0.0
    %v1866 = vand.u32 %v73, 4294901760
    %v1867 = vsub.f32 %v73, %v1866
    %v1868 = vand.u32 %v1867, 4294901760
    %1869 = vmatpush1.msra.mxu0 %v1868
    %1870 = vmatprep.subr.mxu0 0.0
    %v1871 = vand.u32 %v74, 4294901760
    %v1872 = vsub.f32 %v74, %v1871
    %v1873 = vand.u32 %v1872, 4294901760
    %1874 = vmatpush1.msra.mxu0 %v1873
    %1875 = vmatprep.subr.mxu0 0.0
    %v1876 = vand.u32 %v75, 4294901760
    %v1877 = vsub.f32 %v75, %v1876
    %v1878 = vand.u32 %v1877, 4294901760
    %1879 = vmatpush1.msra.mxu0 %v1878
    %1880 = vmatprep.subr.mxu0 0.0
    %v1881 = vand.u32 %v76, 4294901760
    %v1882 = vsub.f32 %v76, %v1881
    %v1883 = vand.u32 %v1882, 4294901760
    %1884 = vmatpush1.msra.mxu0 %v1883
    %1885 = vmatprep.subr.mxu0 0.0
    %v1886 = vand.u32 %v77, 4294901760
    %v1887 = vsub.f32 %v77, %v1886
    %v1888 = vand.u32 %v1887, 4294901760
    %1889 = vmatpush1.msra.mxu0 %v1888
    %1890 = vmatprep.subr.mxu0 0.0
    %v1891 = vand.u32 %v78, 4294901760
    %v1892 = vsub.f32 %v78, %v1891
    %v1893 = vand.u32 %v1892, 4294901760
    %1894 = vmatpush1.msra.mxu0 %v1893
    %1895 = vmatprep.subr.mxu0 0.0
    %v1896 = vand.u32 %v79, 4294901760
    %v1897 = vsub.f32 %v79, %v1896
    %v1898 = vand.u32 %v1897, 4294901760
    %1899 = vmatpush1.msra.mxu0 %v1898
    %1900 = vmatprep.subr.mxu0 0.0
    %1901 = vmatpush1.msra.mxu0 0.0
    %1902 = vmatprep.subr.mxu0 0.0
    %1903 = vmatpush1.msra.mxu0 0.0
    %1904 = vmatprep.subr.mxu0 0.0
    %1905 = vmatpush1.msra.mxu0 0.0
    %1906 = vmatprep.subr.mxu0 0.0
    %1907 = vmatpush1.msra.mxu0 0.0
    %1908 = vmatprep.subr.mxu0 0.0
    %1909 = vmatpush1.msra.mxu0 0.0
    %1910 = vmatprep.subr.mxu0 0.0
    %1911 = vmatpush1.msra.mxu0 0.0
    %1912 = vmatprep.subr.mxu0 0.0
    %1913 = vmatpush1.msra.mxu0 0.0
    %1914 = vmatprep.subr.mxu0 0.0
    %1915 = vmatpush1.msra.mxu0 0.0
    %1916 = vmatprep.subr.mxu0 0.0
    %1917 = vmatpush1.msra.mxu0 0.0
    %1918 = vmatprep.subr.mxu0 0.0
    %1919 = vmatpush1.msra.mxu0 0.0
    %1920 = vmatprep.subr.mxu0 0.0
    %1921 = vmatpush1.msra.mxu0 0.0
    %1922 = vmatprep.subr.mxu0 0.0
    %1923 = vmatpush1.msra.mxu0 0.0
    %1924 = vmatprep.subr.mxu0 0.0
    %1925 = vmatpush1.msra.mxu0 0.0
    %1926 = vmatprep.subr.mxu0 0.0
    %1927 = vmatpush1.msra.mxu0 0.0
    %1928 = vmatprep.subr.mxu0 0.0
    %1929 = vmatpush1.msra.mxu0 0.0
    %1930 = vmatprep.subr.mxu0 0.0
    %1931 = vmatpush1.msra.mxu0 0.0
    %1932 = vmatprep.mubr.f32.mxu0 0.0
    %v1933 = vand.u32 %v1384, 4294901760
    %1934 = vmatmul.mubr.f32.gmra.mrb[0].mxu0 %v1933
    %v1935 = vpop.f32.mrb[0].mxu0
    %v1936 = vadd.f32 %v1817, %v1935
    %v1937 = vpop.f32.mrb[0].mxu0
    %1938 = vdwg.mxu0
    %1939 = vmatprep.subr.mxu0 0.0
    %v1940 = vand.u32 %v64, 4294901760
    %1941 = vmatpush1.msra.mxu0 %v1940
    %1942 = vmatprep.subr.mxu0 0.0
    %v1943 = vand.u32 %v65, 4294901760
    %1944 = vmatpush1.msra.mxu0 %v1943
    %1945 = vmatprep.subr.mxu0 0.0
    %v1946 = vand.u32 %v66, 4294901760
    %1947 = vmatpush1.msra.mxu0 %v1946
    %1948 = vmatprep.subr.mxu0 0.0
    %v1949 = vand.u32 %v67, 4294901760
    %1950 = vmatpush1.msra.mxu0 %v1949
    %1951 = vmatprep.subr.mxu0 0.0
    %v1952 = vand.u32 %v68, 4294901760
    %1953 = vmatpush1.msra.mxu0 %v1952
    %1954 = vmatprep.subr.mxu0 0.0
    %v1955 = vand.u32 %v69, 4294901760
    %1956 = vmatpush1.msra.mxu0 %v1955
    %1957 = vmatprep.subr.mxu0 0.0
    %v1958 = vand.u32 %v70, 4294901760
    %1959 = vmatpush1.msra.mxu0 %v1958
    %1960 = vmatprep.subr.mxu0 0.0
    %v1961 = vand.u32 %v71, 4294901760
    %1962 = vmatpush1.msra.mxu0 %v1961
    %1963 = vmatprep.subr.mxu0 0.0
    %v1964 = vand.u32 %v72, 4294901760
    %1965 = vmatpush1.msra.mxu0 %v1964
    %1966 = vmatprep.subr.mxu0 0.0
    %v1967 = vand.u32 %v73, 4294901760
    %1968 = vmatpush1.msra.mxu0 %v1967
    %1969 = vmatprep.subr.mxu0 0.0
    %v1970 = vand.u32 %v74, 4294901760
    %1971 = vmatpush1.msra.mxu0 %v1970
    %1972 = vmatprep.subr.mxu0 0.0
    %v1973 = vand.u32 %v75, 4294901760
    %1974 = vmatpush1.msra.mxu0 %v1973
    %1975 = vmatprep.subr.mxu0 0.0
    %v1976 = vand.u32 %v76, 4294901760
    %1977 = vmatpush1.msra.mxu0 %v1976
    %1978 = vmatprep.subr.mxu0 0.0
    %v1979 = vand.u32 %v77, 4294901760
    %1980 = vmatpush1.msra.mxu0 %v1979
    %1981 = vmatprep.subr.mxu0 0.0
    %v1982 = vand.u32 %v78, 4294901760
    %1983 = vmatpush1.msra.mxu0 %v1982
    %1984 = vmatprep.subr.mxu0 0.0
    %v1985 = vand.u32 %v79, 4294901760
    %1986 = vmatpush1.msra.mxu0 %v1985
    %1987 = vmatprep.subr.mxu0 0.0
    %1988 = vmatpush1.msra.mxu0 0.0
    %1989 = vmatprep.subr.mxu0 0.0
    %1990 = vmatpush1.msra.mxu0 0.0
    %1991 = vmatprep.subr.mxu0 0.0
    %1992 = vmatpush1.msra.mxu0 0.0
    %1993 = vmatprep.subr.mxu0 0.0
    %1994 = vmatpush1.msra.mxu0 0.0
    %1995 = vmatprep.subr.mxu0 0.0
    %1996 = vmatpush1.msra.mxu0 0.0
    %1997 = vmatprep.subr.mxu0 0.0
    %1998 = vmatpush1.msra.mxu0 0.0
    %1999 = vmatprep.subr.mxu0 0.0
    %2000 = vmatpush1.msra.mxu0 0.0
    %2001 = vmatprep.subr.mxu0 0.0
    %2002 = vmatpush1.msra.mxu0 0.0
    %2003 = vmatprep.subr.mxu0 0.0
    %2004 = vmatpush1.msra.mxu0 0.0
    %2005 = vmatprep.subr.mxu0 0.0
    %2006 = vmatpush1.msra.mxu0 0.0
    %2007 = vmatprep.subr.mxu0 0.0
    %2008 = vmatpush1.msra.mxu0 0.0
    %2009 = vmatprep.subr.mxu0 0.0
    %2010 = vmatpush1.msra.mxu0 0.0
    %2011 = vmatprep.subr.mxu0 0.0
    %2012 = vmatpush1.msra.mxu0 0.0
    %2013 = vmatprep.subr.mxu0 0.0
    %2014 = vmatpush1.msra.mxu0 0.0
    %2015 = vmatprep.subr.mxu0 0.0
    %2016 = vmatpush1.msra.mxu0 0.0
    %2017 = vmatprep.subr.mxu0 0.0
    %2018 = vmatpush1.msra.mxu0 0.0
    %2019 = vmatprep.mubr.f32.mxu0 0.0
    %v2020 = vand.u32 %v1384, 4294901760
    %2021 = vmatmul.mubr.f32.gmra.mrb[0].mxu0 %v2020
    %v2022 = vpop.f32.mrb[0].mxu0
    %v2023 = vadd.f32 %v1936, %v2022
    %v2024 = vpop.f32.mrb[0].mxu0
    %2025 = vdwg.mxu0
    %2026 = vmatprep.subr.mxu0 0.0
    %v2027 = vand.u32 %v80, 4294901760
    %2028 = vmatpush1.msra.mxu0 %v2027
    %2029 = vmatprep.subr.mxu0 0.0
    %v2030 = vand.u32 %v81, 4294901760
    %2031 = vmatpush1.msra.mxu0 %v2030
    %2032 = vmatprep.subr.mxu0 0.0
    %v2033 = vand.u32 %v82, 4294901760
    %2034 = vmatpush1.msra.mxu0 %v2033
    %2035 = vmatprep.subr.mxu0 0.0
    %v2036 = vand.u32 %v83, 4294901760
    %2037 = vmatpush1.msra.mxu0 %v2036
    %2038 = vmatprep.subr.mxu0 0.0
    %v2039 = vand.u32 %v84, 4294901760
    %2040 = vmatpush1.msra.mxu0 %v2039
    %2041 = vmatprep.subr.mxu0 0.0
    %v2042 = vand.u32 %v85, 4294901760
    %2043 = vmatpush1.msra.mxu0 %v2042
    %2044 = vmatprep.subr.mxu0 0.0
    %v2045 = vand.u32 %v86, 4294901760
    %2046 = vmatpush1.msra.mxu0 %v2045
    %2047 = vmatprep.subr.mxu0 0.0
    %v2048 = vand.u32 %v87, 4294901760
    %2049 = vmatpush1.msra.mxu0 %v2048
    %2050 = vmatprep.subr.mxu0 0.0
    %v2051 = vand.u32 %v88, 4294901760
    %2052 = vmatpush1.msra.mxu0 %v2051
    %2053 = vmatprep.subr.mxu0 0.0
    %v2054 = vand.u32 %v89, 4294901760
    %2055 = vmatpush1.msra.mxu0 %v2054
    %2056 = vmatprep.subr.mxu0 0.0
    %v2057 = vand.u32 %v90, 4294901760
    %2058 = vmatpush1.msra.mxu0 %v2057
    %2059 = vmatprep.subr.mxu0 0.0
    %v2060 = vand.u32 %v91, 4294901760
    %2061 = vmatpush1.msra.mxu0 %v2060
    %2062 = vmatprep.subr.mxu0 0.0
    %v2063 = vand.u32 %v92, 4294901760
    %2064 = vmatpush1.msra.mxu0 %v2063
    %2065 = vmatprep.subr.mxu0 0.0
    %v2066 = vand.u32 %v93, 4294901760
    %2067 = vmatpush1.msra.mxu0 %v2066
    %2068 = vmatprep.subr.mxu0 0.0
    %v2069 = vand.u32 %v94, 4294901760
    %2070 = vmatpush1.msra.mxu0 %v2069
    %2071 = vmatprep.subr.mxu0 0.0
    %v2072 = vand.u32 %v95, 4294901760
    %2073 = vmatpush1.msra.mxu0 %v2072
    %2074 = vmatprep.subr.mxu0 0.0
    %2075 = vmatpush1.msra.mxu0 0.0
    %2076 = vmatprep.subr.mxu0 0.0
    %2077 = vmatpush1.msra.mxu0 0.0
    %2078 = vmatprep.subr.mxu0 0.0
    %2079 = vmatpush1.msra.mxu0 0.0
    %2080 = vmatprep.subr.mxu0 0.0
    %2081 = vmatpush1.msra.mxu0 0.0
    %2082 = vmatprep.subr.mxu0 0.0
    %2083 = vmatpush1.msra.mxu0 0.0
    %2084 = vmatprep.subr.mxu0 0.0
    %2085 = vmatpush1.msra.mxu0 0.0
    %2086 = vmatprep.subr.mxu0 0.0
    %2087 = vmatpush1.msra.mxu0 0.0
    %2088 = vmatprep.subr.mxu0 0.0
    %2089 = vmatpush1.msra.mxu0 0.0
    %2090 = vmatprep.subr.mxu0 0.0
    %2091 = vmatpush1.msra.mxu0 0.0
    %2092 = vmatprep.subr.mxu0 0.0
    %2093 = vmatpush1.msra.mxu0 0.0
    %2094 = vmatprep.subr.mxu0 0.0
    %2095 = vmatpush1.msra.mxu0 0.0
    %2096 = vmatprep.subr.mxu0 0.0
    %2097 = vmatpush1.msra.mxu0 0.0
    %2098 = vmatprep.subr.mxu0 0.0
    %2099 = vmatpush1.msra.mxu0 0.0
    %2100 = vmatprep.subr.mxu0 0.0
    %2101 = vmatpush1.msra.mxu0 0.0
    %2102 = vmatprep.subr.mxu0 0.0
    %2103 = vmatpush1.msra.mxu0 0.0
    %2104 = vmatprep.subr.mxu0 0.0
    %2105 = vmatpush1.msra.mxu0 0.0
    %2106 = vmatprep.mubr.f32.mxu0 0.0
    %v2107 = vand.u32 %v1384, 4294901760
    %v2108 = vsub.f32 %v1384, %v2107
    %v2109 = vand.u32 %v2108, 4294901760
    %v2110 = vsub.f32 %v2108, %v2109
    %v2111 = vand.u32 %v2110, 4294901760
    %2112 = vmatmul.mubr.f32.gmra.mrb[0].mxu0 %v2111
    %v2113 = vpop.f32.mrb[0].mxu0
    %v2114 = vadd.f32 0.0, %v2113
    %v2115 = vpop.f32.mrb[0].mxu0
    %2116 = vdwg.mxu0
    %2117 = vmatprep.subr.mxu0 0.0
    %v2118 = vand.u32 %v80, 4294901760
    %v2119 = vsub.f32 %v80, %v2118
    %v2120 = vand.u32 %v2119, 4294901760
    %v2121 = vsub.f32 %v2119, %v2120
    %v2122 = vand.u32 %v2121, 4294901760
    %2123 = vmatpush1.msra.mxu0 %v2122
    %2124 = vmatprep.subr.mxu0 0.0
    %v2125 = vand.u32 %v81, 4294901760
    %v2126 = vsub.f32 %v81, %v2125
    %v2127 = vand.u32 %v2126, 4294901760
    %v2128 = vsub.f32 %v2126, %v2127
    %v2129 = vand.u32 %v2128, 4294901760
    %2130 = vmatpush1.msra.mxu0 %v2129
    %2131 = vmatprep.subr.mxu0 0.0
    %v2132 = vand.u32 %v82, 4294901760
    %v2133 = vsub.f32 %v82, %v2132
    %v2134 = vand.u32 %v2133, 4294901760
    %v2135 = vsub.f32 %v2133, %v2134
    %v2136 = vand.u32 %v2135, 4294901760
    %2137 = vmatpush1.msra.mxu0 %v2136
    %2138 = vmatprep.subr.mxu0 0.0
    %v2139 = vand.u32 %v83, 4294901760
    %v2140 = vsub.f32 %v83, %v2139
    %v2141 = vand.u32 %v2140, 4294901760
    %v2142 = vsub.f32 %v2140, %v2141
    %v2143 = vand.u32 %v2142, 4294901760
    %2144 = vmatpush1.msra.mxu0 %v2143
    %2145 = vmatprep.subr.mxu0 0.0
    %v2146 = vand.u32 %v84, 4294901760
    %v2147 = vsub.f32 %v84, %v2146
    %v2148 = vand.u32 %v2147, 4294901760
    %v2149 = vsub.f32 %v2147, %v2148
    %v2150 = vand.u32 %v2149, 4294901760
    %2151 = vmatpush1.msra.mxu0 %v2150
    %2152 = vmatprep.subr.mxu0 0.0
    %v2153 = vand.u32 %v85, 4294901760
    %v2154 = vsub.f32 %v85, %v2153
    %v2155 = vand.u32 %v2154, 4294901760
    %v2156 = vsub.f32 %v2154, %v2155
    %v2157 = vand.u32 %v2156, 4294901760
    %2158 = vmatpush1.msra.mxu0 %v2157
    %2159 = vmatprep.subr.mxu0 0.0
    %v2160 = vand.u32 %v86, 4294901760
    %v2161 = vsub.f32 %v86, %v2160
    %v2162 = vand.u32 %v2161, 4294901760
    %v2163 = vsub.f32 %v2161, %v2162
    %v2164 = vand.u32 %v2163, 4294901760
    %2165 = vmatpush1.msra.mxu0 %v2164
    %2166 = vmatprep.subr.mxu0 0.0
    %v2167 = vand.u32 %v87, 4294901760
    %v2168 = vsub.f32 %v87, %v2167
    %v2169 = vand.u32 %v2168, 4294901760
    %v2170 = vsub.f32 %v2168, %v2169
    %v2171 = vand.u32 %v2170, 4294901760
    %2172 = vmatpush1.msra.mxu0 %v2171
    %2173 = vmatprep.subr.mxu0 0.0
    %v2174 = vand.u32 %v88, 4294901760
    %v2175 = vsub.f32 %v88, %v2174
    %v2176 = vand.u32 %v2175, 4294901760
    %v2177 = vsub.f32 %v2175, %v2176
    %v2178 = vand.u32 %v2177, 4294901760
    %2179 = vmatpush1.msra.mxu0 %v2178
    %2180 = vmatprep.subr.mxu0 0.0
    %v2181 = vand.u32 %v89, 4294901760
    %v2182 = vsub.f32 %v89, %v2181
    %v2183 = vand.u32 %v2182, 4294901760
    %v2184 = vsub.f32 %v2182, %v2183
    %v2185 = vand.u32 %v2184, 4294901760
    %2186 = vmatpush1.msra.mxu0 %v2185
    %2187 = vmatprep.subr.mxu0 0.0
    %v2188 = vand.u32 %v90, 4294901760
    %v2189 = vsub.f32 %v90, %v2188
    %v2190 = vand.u32 %v2189, 4294901760
    %v2191 = vsub.f32 %v2189, %v2190
    %v2192 = vand.u32 %v2191, 4294901760
    %2193 = vmatpush1.msra.mxu0 %v2192
    %2194 = vmatprep.subr.mxu0 0.0
    %v2195 = vand.u32 %v91, 4294901760
    %v2196 = vsub.f32 %v91, %v2195
    %v2197 = vand.u32 %v2196, 4294901760
    %v2198 = vsub.f32 %v2196, %v2197
    %v2199 = vand.u32 %v2198, 4294901760
    %2200 = vmatpush1.msra.mxu0 %v2199
    %2201 = vmatprep.subr.mxu0 0.0
    %v2202 = vand.u32 %v92, 4294901760
    %v2203 = vsub.f32 %v92, %v2202
    %v2204 = vand.u32 %v2203, 4294901760
    %v2205 = vsub.f32 %v2203, %v2204
    %v2206 = vand.u32 %v2205, 4294901760
    %2207 = vmatpush1.msra.mxu0 %v2206
    %2208 = vmatprep.subr.mxu0 0.0
    %v2209 = vand.u32 %v93, 4294901760
    %v2210 = vsub.f32 %v93, %v2209
    %v2211 = vand.u32 %v2210, 4294901760
    %v2212 = vsub.f32 %v2210, %v2211
    %v2213 = vand.u32 %v2212, 4294901760
    %2214 = vmatpush1.msra.mxu0 %v2213
    %2215 = vmatprep.subr.mxu0 0.0
    %v2216 = vand.u32 %v94, 4294901760
    %v2217 = vsub.f32 %v94, %v2216
    %v2218 = vand.u32 %v2217, 4294901760
    %v2219 = vsub.f32 %v2217, %v2218
    %v2220 = vand.u32 %v2219, 4294901760
    %2221 = vmatpush1.msra.mxu0 %v2220
    %2222 = vmatprep.subr.mxu0 0.0
    %v2223 = vand.u32 %v95, 4294901760
    %v2224 = vsub.f32 %v95, %v2223
    %v2225 = vand.u32 %v2224, 4294901760
    %v2226 = vsub.f32 %v2224, %v2225
    %v2227 = vand.u32 %v2226, 4294901760
    %2228 = vmatpush1.msra.mxu0 %v2227
    %2229 = vmatprep.subr.mxu0 0.0
    %2230 = vmatpush1.msra.mxu0 0.0
    %2231 = vmatprep.subr.mxu0 0.0
    %2232 = vmatpush1.msra.mxu0 0.0
    %2233 = vmatprep.subr.mxu0 0.0
    %2234 = vmatpush1.msra.mxu0 0.0
    %2235 = vmatprep.subr.mxu0 0.0
    %2236 = vmatpush1.msra.mxu0 0.0
    %2237 = vmatprep.subr.mxu0 0.0
    %2238 = vmatpush1.msra.mxu0 0.0
    %2239 = vmatprep.subr.mxu0 0.0
    %2240 = vmatpush1.msra.mxu0 0.0
    %2241 = vmatprep.subr.mxu0 0.0
    %2242 = vmatpush1.msra.mxu0 0.0
    %2243 = vmatprep.subr.mxu0 0.0
    %2244 = vmatpush1.msra.mxu0 0.0
    %2245 = vmatprep.subr.mxu0 0.0
    %2246 = vmatpush1.msra.mxu0 0.0
    %2247 = vmatprep.subr.mxu0 0.0
    %2248 = vmatpush1.msra.mxu0 0.0
    %2249 = vmatprep.subr.mxu0 0.0
    %2250 = vmatpush1.msra.mxu0 0.0
    %2251 = vmatprep.subr.mxu0 0.0
    %2252 = vmatpush1.msra.mxu0 0.0
    %2253 = vmatprep.subr.mxu0 0.0
    %2254 = vmatpush1.msra.mxu0 0.0
    %2255 = vmatprep.subr.mxu0 0.0
    %2256 = vmatpush1.msra.mxu0 0.0
    %2257 = vmatprep.subr.mxu0 0.0
    %2258 = vmatpush1.msra.mxu0 0.0
    %2259 = vmatprep.subr.mxu0 0.0
    %2260 = vmatpush1.msra.mxu0 0.0
    %2261 = vmatprep.mubr.f32.mxu0 0.0
    %v2262 = vand.u32 %v1384, 4294901760
    %2263 = vmatmul.mubr.f32.gmra.mrb[0].mxu0 %v2262
    %v2264 = vpop.f32.mrb[0].mxu0
    %v2265 = vadd.f32 %v2114, %v2264
    %v2266 = vpop.f32.mrb[0].mxu0
    %2267 = vdwg.mxu0
    %2268 = vmatprep.subr.mxu0 0.0
    %v2269 = vand.u32 %v80, 4294901760
    %v2270 = vsub.f32 %v80, %v2269
    %2271 = vmatpush1.msra.mxu0 %v2270
    %2272 = vmatprep.subr.mxu0 0.0
    %v2273 = vand.u32 %v81, 4294901760
    %v2274 = vsub.f32 %v81, %v2273
    %2275 = vmatpush1.msra.mxu0 %v2274
    %2276 = vmatprep.subr.mxu0 0.0
    %v2277 = vand.u32 %v82, 4294901760
    %v2278 = vsub.f32 %v82, %v2277
    %2279 = vmatpush1.msra.mxu0 %v2278
    %2280 = vmatprep.subr.mxu0 0.0
    %v2281 = vand.u32 %v83, 4294901760
    %v2282 = vsub.f32 %v83, %v2281
    %2283 = vmatpush1.msra.mxu0 %v2282
    %2284 = vmatprep.subr.mxu0 0.0
    %v2285 = vand.u32 %v84, 4294901760
    %v2286 = vsub.f32 %v84, %v2285
    %2287 = vmatpush1.msra.mxu0 %v2286
    %2288 = vmatprep.subr.mxu0 0.0
    %v2289 = vand.u32 %v85, 4294901760
    %v2290 = vsub.f32 %v85, %v2289
    %2291 = vmatpush1.msra.mxu0 %v2290
    %2292 = vmatprep.subr.mxu0 0.0
    %v2293 = vand.u32 %v86, 4294901760
    %v2294 = vsub.f32 %v86, %v2293
    %2295 = vmatpush1.msra.mxu0 %v2294
    %2296 = vmatprep.subr.mxu0 0.0
    %v2297 = vand.u32 %v87, 4294901760
    %v2298 = vsub.f32 %v87, %v2297
    %2299 = vmatpush1.msra.mxu0 %v2298
    %2300 = vmatprep.subr.mxu0 0.0
    %v2301 = vand.u32 %v88, 4294901760
    %v2302 = vsub.f32 %v88, %v2301
    %2303 = vmatpush1.msra.mxu0 %v2302
    %2304 = vmatprep.subr.mxu0 0.0
    %v2305 = vand.u32 %v89, 4294901760
    %v2306 = vsub.f32 %v89, %v2305
    %2307 = vmatpush1.msra.mxu0 %v2306
    %2308 = vmatprep.subr.mxu0 0.0
    %v2309 = vand.u32 %v90, 4294901760
    %v2310 = vsub.f32 %v90, %v2309
    %2311 = vmatpush1.msra.mxu0 %v2310
    %2312 = vmatprep.subr.mxu0 0.0
    %v2313 = vand.u32 %v91, 4294901760
    %v2314 = vsub.f32 %v91, %v2313
    %2315 = vmatpush1.msra.mxu0 %v2314
    %2316 = vmatprep.subr.mxu0 0.0
    %v2317 = vand.u32 %v92, 4294901760
    %v2318 = vsub.f32 %v92, %v2317
    %2319 = vmatpush1.msra.mxu0 %v2318
    %2320 = vmatprep.subr.mxu0 0.0
    %v2321 = vand.u32 %v93, 4294901760
    %v2322 = vsub.f32 %v93, %v2321
    %2323 = vmatpush1.msra.mxu0 %v2322
    %2324 = vmatprep.subr.mxu0 0.0
    %v2325 = vand.u32 %v94, 4294901760
    %v2326 = vsub.f32 %v94, %v2325
    %2327 = vmatpush1.msra.mxu0 %v2326
    %2328 = vmatprep.subr.mxu0 0.0
    %v2329 = vand.u32 %v95, 4294901760
    %v2330 = vsub.f32 %v95, %v2329
    %2331 = vmatpush1.msra.mxu0 %v2330
    %2332 = vmatprep.subr.mxu0 0.0
    %2333 = vmatpush1.msra.mxu0 0.0
    %2334 = vmatprep.subr.mxu0 0.0
    %2335 = vmatpush1.msra.mxu0 0.0
    %2336 = vmatprep.subr.mxu0 0.0
    %2337 = vmatpush1.msra.mxu0 0.0
    %2338 = vmatprep.subr.mxu0 0.0
    %2339 = vmatpush1.msra.mxu0 0.0
    %2340 = vmatprep.subr.mxu0 0.0
    %2341 = vmatpush1.msra.mxu0 0.0
    %2342 = vmatprep.subr.mxu0 0.0
    %2343 = vmatpush1.msra.mxu0 0.0
    %2344 = vmatprep.subr.mxu0 0.0
    %2345 = vmatpush1.msra.mxu0 0.0
    %2346 = vmatprep.subr.mxu0 0.0
    %2347 = vmatpush1.msra.mxu0 0.0
    %2348 = vmatprep.subr.mxu0 0.0
    %2349 = vmatpush1.msra.mxu0 0.0
    %2350 = vmatprep.subr.mxu0 0.0
    %2351 = vmatpush1.msra.mxu0 0.0
    %2352 = vmatprep.subr.mxu0 0.0
    %2353 = vmatpush1.msra.mxu0 0.0
    %2354 = vmatprep.subr.mxu0 0.0
    %2355 = vmatpush1.msra.mxu0 0.0
    %2356 = vmatprep.subr.mxu0 0.0
    %2357 = vmatpush1.msra.mxu0 0.0
    %2358 = vmatprep.subr.mxu0 0.0
    %2359 = vmatpush1.msra.mxu0 0.0
    %2360 = vmatprep.subr.mxu0 0.0
    %2361 = vmatpush1.msra.mxu0 0.0
    %2362 = vmatprep.subr.mxu0 0.0
    %2363 = vmatpush1.msra.mxu0 0.0
    %2364 = vmatprep.mubr.f32.mxu0 0.0
    %v2365 = vand.u32 %v1384, 4294901760
    %v2366 = vsub.f32 %v1384, %v2365
    %2367 = vmatmul.mubr.f32.gmra.mrb[0].mxu0 %v2366
    %v2368 = vpop.f32.mrb[0].mxu0
    %v2369 = vadd.f32 %v2265, %v2368
    %v2370 = vpop.f32.mrb[0].mxu0
    %2371 = vdwg.mxu0
    %2372 = vmatprep.subr.mxu0 0.0
    %v2373 = vand.u32 %v80, 4294901760
    %2374 = vmatpush1.msra.mxu0 %v2373
    %2375 = vmatprep.subr.mxu0 0.0
    %v2376 = vand.u32 %v81, 4294901760
    %2377 = vmatpush1.msra.mxu0 %v2376
    %2378 = vmatprep.subr.mxu0 0.0
    %v2379 = vand.u32 %v82, 4294901760
    %2380 = vmatpush1.msra.mxu0 %v2379
    %2381 = vmatprep.subr.mxu0 0.0
    %v2382 = vand.u32 %v83, 4294901760
    %2383 = vmatpush1.msra.mxu0 %v2382
    %2384 = vmatprep.subr.mxu0 0.0
    %v2385 = vand.u32 %v84, 4294901760
    %2386 = vmatpush1.msra.mxu0 %v2385
    %2387 = vmatprep.subr.mxu0 0.0
    %v2388 = vand.u32 %v85, 4294901760
    %2389 = vmatpush1.msra.mxu0 %v2388
    %2390 = vmatprep.subr.mxu0 0.0
    %v2391 = vand.u32 %v86, 4294901760
    %2392 = vmatpush1.msra.mxu0 %v2391
    %2393 = vmatprep.subr.mxu0 0.0
    %v2394 = vand.u32 %v87, 4294901760
    %2395 = vmatpush1.msra.mxu0 %v2394
    %2396 = vmatprep.subr.mxu0 0.0
    %v2397 = vand.u32 %v88, 4294901760
    %2398 = vmatpush1.msra.mxu0 %v2397
    %2399 = vmatprep.subr.mxu0 0.0
    %v2400 = vand.u32 %v89, 4294901760
    %2401 = vmatpush1.msra.mxu0 %v2400
    %2402 = vmatprep.subr.mxu0 0.0
    %v2403 = vand.u32 %v90, 4294901760
    %2404 = vmatpush1.msra.mxu0 %v2403
    %2405 = vmatprep.subr.mxu0 0.0
    %v2406 = vand.u32 %v91, 4294901760
    %2407 = vmatpush1.msra.mxu0 %v2406
    %2408 = vmatprep.subr.mxu0 0.0
    %v2409 = vand.u32 %v92, 4294901760
    %2410 = vmatpush1.msra.mxu0 %v2409
    %2411 = vmatprep.subr.mxu0 0.0
    %v2412 = vand.u32 %v93, 4294901760
    %2413 = vmatpush1.msra.mxu0 %v2412
    %2414 = vmatprep.subr.mxu0 0.0
    %v2415 = vand.u32 %v94, 4294901760
    %2416 = vmatpush1.msra.mxu0 %v2415
    %2417 = vmatprep.subr.mxu0 0.0
    %v2418 = vand.u32 %v95, 4294901760
    %2419 = vmatpush1.msra.mxu0 %v2418
    %2420 = vmatprep.subr.mxu0 0.0
    %2421 = vmatpush1.msra.mxu0 0.0
    %2422 = vmatprep.subr.mxu0 0.0
    %2423 = vmatpush1.msra.mxu0 0.0
    %2424 = vmatprep.subr.mxu0 0.0
    %2425 = vmatpush1.msra.mxu0 0.0
    %2426 = vmatprep.subr.mxu0 0.0
    %2427 = vmatpush1.msra.mxu0 0.0
    %2428 = vmatprep.subr.mxu0 0.0
    %2429 = vmatpush1.msra.mxu0 0.0
    %2430 = vmatprep.subr.mxu0 0.0
    %2431 = vmatpush1.msra.mxu0 0.0
    %2432 = vmatprep.subr.mxu0 0.0
    %2433 = vmatpush1.msra.mxu0 0.0
    %2434 = vmatprep.subr.mxu0 0.0
    %2435 = vmatpush1.msra.mxu0 0.0
    %2436 = vmatprep.subr.mxu0 0.0
    %2437 = vmatpush1.msra.mxu0 0.0
    %2438 = vmatprep.subr.mxu0 0.0
    %2439 = vmatpush1.msra.mxu0 0.0
    %2440 = vmatprep.subr.mxu0 0.0
    %2441 = vmatpush1.msra.mxu0 0.0
    %2442 = vmatprep.subr.mxu0 0.0
    %2443 = vmatpush1.msra.mxu0 0.0
    %2444 = vmatprep.subr.mxu0 0.0
    %2445 = vmatpush1.msra.mxu0 0.0
    %2446 = vmatprep.subr.mxu0 0.0
    %2447 = vmatpush1.msra.mxu0 0.0
    %2448 = vmatprep.subr.mxu0 0.0
    %2449 = vmatpush1.msra.mxu0 0.0
    %2450 = vmatprep.subr.mxu0 0.0
    %2451 = vmatpush1.msra.mxu0 0.0
    %2452 = vmatprep.mubr.f32.mxu0 0.0
    %v2453 = vand.u32 %v1384, 4294901760
    %v2454 = vsub.f32 %v1384, %v2453
    %v2455 = vand.u32 %v2454, 4294901760
    %2456 = vmatmul.mubr.f32.gmra.mrb[0].mxu0 %v2455
    %v2457 = vpop.f32.mrb[0].mxu0
    %v2458 = vadd.f32 %v2369, %v2457
    %v2459 = vpop.f32.mrb[0].mxu0
    %2460 = vdwg.mxu0
    %2461 = vmatprep.subr.mxu0 0.0
    %v2462 = vand.u32 %v80, 4294901760
    %v2463 = vsub.f32 %v80, %v2462
    %v2464 = vand.u32 %v2463, 4294901760
    %2465 = vmatpush1.msra.mxu0 %v2464
    %2466 = vmatprep.subr.mxu0 0.0
    %v2467 = vand.u32 %v81, 4294901760
    %v2468 = vsub.f32 %v81, %v2467
    %v2469 = vand.u32 %v2468, 4294901760
    %2470 = vmatpush1.msra.mxu0 %v2469
    %2471 = vmatprep.subr.mxu0 0.0
    %v2472 = vand.u32 %v82, 4294901760
    %v2473 = vsub.f32 %v82, %v2472
    %v2474 = vand.u32 %v2473, 4294901760
    %2475 = vmatpush1.msra.mxu0 %v2474
    %2476 = vmatprep.subr.mxu0 0.0
    %v2477 = vand.u32 %v83, 4294901760
    %v2478 = vsub.f32 %v83, %v2477
    %v2479 = vand.u32 %v2478, 4294901760
    %2480 = vmatpush1.msra.mxu0 %v2479
    %2481 = vmatprep.subr.mxu0 0.0
    %v2482 = vand.u32 %v84, 4294901760
    %v2483 = vsub.f32 %v84, %v2482
    %v2484 = vand.u32 %v2483, 4294901760
    %2485 = vmatpush1.msra.mxu0 %v2484
    %2486 = vmatprep.subr.mxu0 0.0
    %v2487 = vand.u32 %v85, 4294901760
    %v2488 = vsub.f32 %v85, %v2487
    %v2489 = vand.u32 %v2488, 4294901760
    %2490 = vmatpush1.msra.mxu0 %v2489
    %2491 = vmatprep.subr.mxu0 0.0
    %v2492 = vand.u32 %v86, 4294901760
    %v2493 = vsub.f32 %v86, %v2492
    %v2494 = vand.u32 %v2493, 4294901760
    %2495 = vmatpush1.msra.mxu0 %v2494
    %2496 = vmatprep.subr.mxu0 0.0
    %v2497 = vand.u32 %v87, 4294901760
    %v2498 = vsub.f32 %v87, %v2497
    %v2499 = vand.u32 %v2498, 4294901760
    %2500 = vmatpush1.msra.mxu0 %v2499
    %2501 = vmatprep.subr.mxu0 0.0
    %v2502 = vand.u32 %v88, 4294901760
    %v2503 = vsub.f32 %v88, %v2502
    %v2504 = vand.u32 %v2503, 4294901760
    %2505 = vmatpush1.msra.mxu0 %v2504
    %2506 = vmatprep.subr.mxu0 0.0
    %v2507 = vand.u32 %v89, 4294901760
    %v2508 = vsub.f32 %v89, %v2507
    %v2509 = vand.u32 %v2508, 4294901760
    %2510 = vmatpush1.msra.mxu0 %v2509
    %2511 = vmatprep.subr.mxu0 0.0
    %v2512 = vand.u32 %v90, 4294901760
    %v2513 = vsub.f32 %v90, %v2512
    %v2514 = vand.u32 %v2513, 4294901760
    %2515 = vmatpush1.msra.mxu0 %v2514
    %2516 = vmatprep.subr.mxu0 0.0
    %v2517 = vand.u32 %v91, 4294901760
    %v2518 = vsub.f32 %v91, %v2517
    %v2519 = vand.u32 %v2518, 4294901760
    %2520 = vmatpush1.msra.mxu0 %v2519
    %2521 = vmatprep.subr.mxu0 0.0
    %v2522 = vand.u32 %v92, 4294901760
    %v2523 = vsub.f32 %v92, %v2522
    %v2524 = vand.u32 %v2523, 4294901760
    %2525 = vmatpush1.msra.mxu0 %v2524
    %2526 = vmatprep.subr.mxu0 0.0
    %v2527 = vand.u32 %v93, 4294901760
    %v2528 = vsub.f32 %v93, %v2527
    %v2529 = vand.u32 %v2528, 4294901760
    %2530 = vmatpush1.msra.mxu0 %v2529
    %2531 = vmatprep.subr.mxu0 0.0
    %v2532 = vand.u32 %v94, 4294901760
    %v2533 = vsub.f32 %v94, %v2532
    %v2534 = vand.u32 %v2533, 4294901760
    %2535 = vmatpush1.msra.mxu0 %v2534
    %2536 = vmatprep.subr.mxu0 0.0
    %v2537 = vand.u32 %v95, 4294901760
    %v2538 = vsub.f32 %v95, %v2537
    %v2539 = vand.u32 %v2538, 4294901760
    %2540 = vmatpush1.msra.mxu0 %v2539
    %2541 = vmatprep.subr.mxu0 0.0
    %2542 = vmatpush1.msra.mxu0 0.0
    %2543 = vmatprep.subr.mxu0 0.0
    %2544 = vmatpush1.msra.mxu0 0.0
    %2545 = vmatprep.subr.mxu0 0.0
    %2546 = vmatpush1.msra.mxu0 0.0
    %2547 = vmatprep.subr.mxu0 0.0
    %2548 = vmatpush1.msra.mxu0 0.0
    %2549 = vmatprep.subr.mxu0 0.0
    %2550 = vmatpush1.msra.mxu0 0.0
    %2551 = vmatprep.subr.mxu0 0.0
    %2552 = vmatpush1.msra.mxu0 0.0
    %2553 = vmatprep.subr.mxu0 0.0
    %2554 = vmatpush1.msra.mxu0 0.0
    %2555 = vmatprep.subr.mxu0 0.0
    %2556 = vmatpush1.msra.mxu0 0.0
    %2557 = vmatprep.subr.mxu0 0.0
    %2558 = vmatpush1.msra.mxu0 0.0
    %2559 = vmatprep.subr.mxu0 0.0
    %2560 = vmatpush1.msra.mxu0 0.0
    %2561 = vmatprep.subr.mxu0 0.0
    %2562 = vmatpush1.msra.mxu0 0.0
    %2563 = vmatprep.subr.mxu0 0.0
    %2564 = vmatpush1.msra.mxu0 0.0
    %2565 = vmatprep.subr.mxu0 0.0
    %2566 = vmatpush1.msra.mxu0 0.0
    %2567 = vmatprep.subr.mxu0 0.0
    %2568 = vmatpush1.msra.mxu0 0.0
    %2569 = vmatprep.subr.mxu0 0.0
    %2570 = vmatpush1.msra.mxu0 0.0
    %2571 = vmatprep.subr.mxu0 0.0
    %2572 = vmatpush1.msra.mxu0 0.0
    %2573 = vmatprep.mubr.f32.mxu0 0.0
    %v2574 = vand.u32 %v1384, 4294901760
    %2575 = vmatmul.mubr.f32.gmra.mrb[0].mxu0 %v2574
    %v2576 = vpop.f32.mrb[0].mxu0
    %v2577 = vadd.f32 %v2458, %v2576
    %v2578 = vpop.f32.mrb[0].mxu0
    %2579 = vdwg.mxu0
    %2580 = vmatprep.subr.mxu0 0.0
    %v2581 = vand.u32 %v80, 4294901760
    %2582 = vmatpush1.msra.mxu0 %v2581
    %2583 = vmatprep.subr.mxu0 0.0
    %v2584 = vand.u32 %v81, 4294901760
    %2585 = vmatpush1.msra.mxu0 %v2584
    %2586 = vmatprep.subr.mxu0 0.0
    %v2587 = vand.u32 %v82, 4294901760
    %2588 = vmatpush1.msra.mxu0 %v2587
    %2589 = vmatprep.subr.mxu0 0.0
    %v2590 = vand.u32 %v83, 4294901760
    %2591 = vmatpush1.msra.mxu0 %v2590
    %2592 = vmatprep.subr.mxu0 0.0
    %v2593 = vand.u32 %v84, 4294901760
    %2594 = vmatpush1.msra.mxu0 %v2593
    %2595 = vmatprep.subr.mxu0 0.0
    %v2596 = vand.u32 %v85, 4294901760
    %2597 = vmatpush1.msra.mxu0 %v2596
    %2598 = vmatprep.subr.mxu0 0.0
    %v2599 = vand.u32 %v86, 4294901760
    %2600 = vmatpush1.msra.mxu0 %v2599
    %2601 = vmatprep.subr.mxu0 0.0
    %v2602 = vand.u32 %v87, 4294901760
    %2603 = vmatpush1.msra.mxu0 %v2602
    %2604 = vmatprep.subr.mxu0 0.0
    %v2605 = vand.u32 %v88, 4294901760
    %2606 = vmatpush1.msra.mxu0 %v2605
    %2607 = vmatprep.subr.mxu0 0.0
    %v2608 = vand.u32 %v89, 4294901760
    %2609 = vmatpush1.msra.mxu0 %v2608
    %2610 = vmatprep.subr.mxu0 0.0
    %v2611 = vand.u32 %v90, 4294901760
    %2612 = vmatpush1.msra.mxu0 %v2611
    %2613 = vmatprep.subr.mxu0 0.0
    %v2614 = vand.u32 %v91, 4294901760
    %2615 = vmatpush1.msra.mxu0 %v2614
    %2616 = vmatprep.subr.mxu0 0.0
    %v2617 = vand.u32 %v92, 4294901760
    %2618 = vmatpush1.msra.mxu0 %v2617
    %2619 = vmatprep.subr.mxu0 0.0
    %v2620 = vand.u32 %v93, 4294901760
    %2621 = vmatpush1.msra.mxu0 %v2620
    %2622 = vmatprep.subr.mxu0 0.0
    %v2623 = vand.u32 %v94, 4294901760
    %2624 = vmatpush1.msra.mxu0 %v2623
    %2625 = vmatprep.subr.mxu0 0.0
    %v2626 = vand.u32 %v95, 4294901760
    %2627 = vmatpush1.msra.mxu0 %v2626
    %2628 = vmatprep.subr.mxu0 0.0
    %2629 = vmatpush1.msra.mxu0 0.0
    %2630 = vmatprep.subr.mxu0 0.0
    %2631 = vmatpush1.msra.mxu0 0.0
    %2632 = vmatprep.subr.mxu0 0.0
    %2633 = vmatpush1.msra.mxu0 0.0
    %2634 = vmatprep.subr.mxu0 0.0
    %2635 = vmatpush1.msra.mxu0 0.0
    %2636 = vmatprep.subr.mxu0 0.0
    %2637 = vmatpush1.msra.mxu0 0.0
    %2638 = vmatprep.subr.mxu0 0.0
    %2639 = vmatpush1.msra.mxu0 0.0
    %2640 = vmatprep.subr.mxu0 0.0
    %2641 = vmatpush1.msra.mxu0 0.0
    %2642 = vmatprep.subr.mxu0 0.0
    %2643 = vmatpush1.msra.mxu0 0.0
    %2644 = vmatprep.subr.mxu0 0.0
    %2645 = vmatpush1.msra.mxu0 0.0
    %2646 = vmatprep.subr.mxu0 0.0
    %2647 = vmatpush1.msra.mxu0 0.0
    %2648 = vmatprep.subr.mxu0 0.0
    %2649 = vmatpush1.msra.mxu0 0.0
    %2650 = vmatprep.subr.mxu0 0.0
    %2651 = vmatpush1.msra.mxu0 0.0
    %2652 = vmatprep.subr.mxu0 0.0
    %2653 = vmatpush1.msra.mxu0 0.0
    %2654 = vmatprep.subr.mxu0 0.0
    %2655 = vmatpush1.msra.mxu0 0.0
    %2656 = vmatprep.subr.mxu0 0.0
    %2657 = vmatpush1.msra.mxu0 0.0
    %2658 = vmatprep.subr.mxu0 0.0
    %2659 = vmatpush1.msra.mxu0 0.0
    %2660 = vmatprep.mubr.f32.mxu0 0.0
    %v2661 = vand.u32 %v1384, 4294901760
    %2662 = vmatmul.mubr.f32.gmra.mrb[0].mxu0 %v2661
    %v2663 = vpop.f32.mrb[0].mxu0
    %v2664 = vadd.f32 %v2577, %v2663
    %v2665 = vpop.f32.mrb[0].mxu0
    %2666 = vdwg.mxu0
    %v2667 = vmul.f32 %v2023, %v62
    %v2668 = vmul.f32 %v2664, %v63
    %v2669 = vadd.f32 %v2667, %v2668
    %s2670 = scalar_lea.vmem [#allocation8], 2
    %2671 = vst [vmem:[%s2670] sm:$0x3] %v2669
    %s2672 = scalar_lea.vmem [#allocation2], 4
    %v2673 = vld [vmem:[%s2672] sm:$0x3]
    %2674 = vmatprep.subr.mxu0 0.0
    %v2675 = vand.u32 %v64, 4294901760
    %2676 = vmatpush1.msra.mxu0 %v2675
    %2677 = vmatprep.subr.mxu0 0.0
    %v2678 = vand.u32 %v65, 4294901760
    %2679 = vmatpush1.msra.mxu0 %v2678
    %2680 = vmatprep.subr.mxu0 0.0
    %v2681 = vand.u32 %v66, 4294901760
    %2682 = vmatpush1.msra.mxu0 %v2681
    %2683 = vmatprep.subr.mxu0 0.0
    %v2684 = vand.u32 %v67, 4294901760
    %2685 = vmatpush1.msra.mxu0 %v2684
    %2686 = vmatprep.subr.mxu0 0.0
    %v2687 = vand.u32 %v68, 4294901760
    %2688 = vmatpush1.msra.mxu0 %v2687
    %2689 = vmatprep.subr.mxu0 0.0
    %v2690 = vand.u32 %v69, 4294901760
    %2691 = vmatpush1.msra.mxu0 %v2690
    %2692 = vmatprep.subr.mxu0 0.0
    %v2693 = vand.u32 %v70, 4294901760
    %2694 = vmatpush1.msra.mxu0 %v2693
    %2695 = vmatprep.subr.mxu0 0.0
    %v2696 = vand.u32 %v71, 4294901760
    %2697 = vmatpush1.msra.mxu0 %v2696
    %2698 = vmatprep.subr.mxu0 0.0
    %v2699 = vand.u32 %v72, 4294901760
    %2700 = vmatpush1.msra.mxu0 %v2699
    %2701 = vmatprep.subr.mxu0 0.0
    %v2702 = vand.u32 %v73, 4294901760
    %2703 = vmatpush1.msra.mxu0 %v2702
    %2704 = vmatprep.subr.mxu0 0.0
    %v2705 = vand.u32 %v74, 4294901760
    %2706 = vmatpush1.msra.mxu0 %v2705
    %2707 = vmatprep.subr.mxu0 0.0
    %v2708 = vand.u32 %v75, 4294901760
    %2709 = vmatpush1.msra.mxu0 %v2708
    %2710 = vmatprep.subr.mxu0 0.0
    %v2711 = vand.u32 %v76, 4294901760
    %2712 = vmatpush1.msra.mxu0 %v2711
    %2713 = vmatprep.subr.mxu0 0.0
    %v2714 = vand.u32 %v77, 4294901760
    %2715 = vmatpush1.msra.mxu0 %v2714
    %2716 = vmatprep.subr.mxu0 0.0
    %v2717 = vand.u32 %v78, 4294901760
    %2718 = vmatpush1.msra.mxu0 %v2717
    %2719 = vmatprep.subr.mxu0 0.0
    %v2720 = vand.u32 %v79, 4294901760
    %2721 = vmatpush1.msra.mxu0 %v2720
    %2722 = vmatprep.subr.mxu0 0.0
    %2723 = vmatpush1.msra.mxu0 0.0
    %2724 = vmatprep.subr.mxu0 0.0
    %2725 = vmatpush1.msra.mxu0 0.0
    %2726 = vmatprep.subr.mxu0 0.0
    %2727 = vmatpush1.msra.mxu0 0.0
    %2728 = vmatprep.subr.mxu0 0.0
    %2729 = vmatpush1.msra.mxu0 0.0
    %2730 = vmatprep.subr.mxu0 0.0
    %2731 = vmatpush1.msra.mxu0 0.0
    %2732 = vmatprep.subr.mxu0 0.0
    %2733 = vmatpush1.msra.mxu0 0.0
    %2734 = vmatprep.subr.mxu0 0.0
    %2735 = vmatpush1.msra.mxu0 0.0
    %2736 = vmatprep.subr.mxu0 0.0
    %2737 = vmatpush1.msra.mxu0 0.0
    %2738 = vmatprep.subr.mxu0 0.0
    %2739 = vmatpush1.msra.mxu0 0.0
    %2740 = vmatprep.subr.mxu0 0.0
    %2741 = vmatpush1.msra.mxu0 0.0
    %2742 = vmatprep.subr.mxu0 0.0
    %2743 = vmatpush1.msra.mxu0 0.0
    %2744 = vmatprep.subr.mxu0 0.0
    %2745 = vmatpush1.msra.mxu0 0.0
    %2746 = vmatprep.subr.mxu0 0.0
    %2747 = vmatpush1.msra.mxu0 0.0
    %2748 = vmatprep.subr.mxu0 0.0
    %2749 = vmatpush1.msra.mxu0 0.0
    %2750 = vmatprep.subr.mxu0 0.0
    %2751 = vmatpush1.msra.mxu0 0.0
    %2752 = vmatprep.subr.mxu0 0.0
    %2753 = vmatpush1.msra.mxu0 0.0
    %2754 = vmatprep.mubr.f32.mxu0 0.0
    %v2755 = vand.u32 %v2673, 4294901760
    %v2756 = vsub.f32 %v2673, %v2755
    %v2757 = vand.u32 %v2756, 4294901760
    %v2758 = vsub.f32 %v2756, %v2757
    %v2759 = vand.u32 %v2758, 4294901760
    %2760 = vmatmul.mubr.f32.gmra.mrb[0].mxu0 %v2759
    %v2761 = vpop.f32.mrb[0].mxu0
    %v2762 = vadd.f32 0.0, %v2761
    %v2763 = vpop.f32.mrb[0].mxu0
    %2764 = vdwg.mxu0
    %2765 = vmatprep.subr.mxu0 0.0
    %v2766 = vand.u32 %v64, 4294901760
    %v2767 = vsub.f32 %v64, %v2766
    %v2768 = vand.u32 %v2767, 4294901760
    %v2769 = vsub.f32 %v2767, %v2768
    %v2770 = vand.u32 %v2769, 4294901760
    %2771 = vmatpush1.msra.mxu0 %v2770
    %2772 = vmatprep.subr.mxu0 0.0
    %v2773 = vand.u32 %v65, 4294901760
    %v2774 = vsub.f32 %v65, %v2773
    %v2775 = vand.u32 %v2774, 4294901760
    %v2776 = vsub.f32 %v2774, %v2775
    %v2777 = vand.u32 %v2776, 4294901760
    %2778 = vmatpush1.msra.mxu0 %v2777
    %2779 = vmatprep.subr.mxu0 0.0
    %v2780 = vand.u32 %v66, 4294901760
    %v2781 = vsub.f32 %v66, %v2780
    %v2782 = vand.u32 %v2781, 4294901760
    %v2783 = vsub.f32 %v2781, %v2782
    %v2784 = vand.u32 %v2783, 4294901760
    %2785 = vmatpush1.msra.mxu0 %v2784
    %2786 = vmatprep.subr.mxu0 0.0
    %v2787 = vand.u32 %v67, 4294901760
    %v2788 = vsub.f32 %v67, %v2787
    %v2789 = vand.u32 %v2788, 4294901760
    %v2790 = vsub.f32 %v2788, %v2789
    %v2791 = vand.u32 %v2790, 4294901760
    %2792 = vmatpush1.msra.mxu0 %v2791
    %2793 = vmatprep.subr.mxu0 0.0
    %v2794 = vand.u32 %v68, 4294901760
    %v2795 = vsub.f32 %v68, %v2794
    %v2796 = vand.u32 %v2795, 4294901760
    %v2797 = vsub.f32 %v2795, %v2796
    %v2798 = vand.u32 %v2797, 4294901760
    %2799 = vmatpush1.msra.mxu0 %v2798
    %2800 = vmatprep.subr.mxu0 0.0
    %v2801 = vand.u32 %v69, 4294901760
    %v2802 = vsub.f32 %v69, %v2801
    %v2803 = vand.u32 %v2802, 4294901760
    %v2804 = vsub.f32 %v2802, %v2803
    %v2805 = vand.u32 %v2804, 4294901760
    %2806 = vmatpush1.msra.mxu0 %v2805
    %2807 = vmatprep.subr.mxu0 0.0
    %v2808 = vand.u32 %v70, 4294901760
    %v2809 = vsub.f32 %v70, %v2808
    %v2810 = vand.u32 %v2809, 4294901760
    %v2811 = vsub.f32 %v2809, %v2810
    %v2812 = vand.u32 %v2811, 4294901760
    %2813 = vmatpush1.msra.mxu0 %v2812
    %2814 = vmatprep.subr.mxu0 0.0
    %v2815 = vand.u32 %v71, 4294901760
    %v2816 = vsub.f32 %v71, %v2815
    %v2817 = vand.u32 %v2816, 4294901760
    %v2818 = vsub.f32 %v2816, %v2817
    %v2819 = vand.u32 %v2818, 4294901760
    %2820 = vmatpush1.msra.mxu0 %v2819
    %2821 = vmatprep.subr.mxu0 0.0
    %v2822 = vand.u32 %v72, 4294901760
    %v2823 = vsub.f32 %v72, %v2822
    %v2824 = vand.u32 %v2823, 4294901760
    %v2825 = vsub.f32 %v2823, %v2824
    %v2826 = vand.u32 %v2825, 4294901760
    %2827 = vmatpush1.msra.mxu0 %v2826
    %2828 = vmatprep.subr.mxu0 0.0
    %v2829 = vand.u32 %v73, 4294901760
    %v2830 = vsub.f32 %v73, %v2829
    %v2831 = vand.u32 %v2830, 4294901760
    %v2832 = vsub.f32 %v2830, %v2831
    %v2833 = vand.u32 %v2832, 4294901760
    %2834 = vmatpush1.msra.mxu0 %v2833
    %2835 = vmatprep.subr.mxu0 0.0
    %v2836 = vand.u32 %v74, 4294901760
    %v2837 = vsub.f32 %v74, %v2836
    %v2838 = vand.u32 %v2837, 4294901760
    %v2839 = vsub.f32 %v2837, %v2838
    %v2840 = vand.u32 %v2839, 4294901760
    %2841 = vmatpush1.msra.mxu0 %v2840
    %2842 = vmatprep.subr.mxu0 0.0
    %v2843 = vand.u32 %v75, 4294901760
    %v2844 = vsub.f32 %v75, %v2843
    %v2845 = vand.u32 %v2844, 4294901760
    %v2846 = vsub.f32 %v2844, %v2845
    %v2847 = vand.u32 %v2846, 4294901760
    %2848 = vmatpush1.msra.mxu0 %v2847
    %2849 = vmatprep.subr.mxu0 0.0
    %v2850 = vand.u32 %v76, 4294901760
    %v2851 = vsub.f32 %v76, %v2850
    %v2852 = vand.u32 %v2851, 4294901760
    %v2853 = vsub.f32 %v2851, %v2852
    %v2854 = vand.u32 %v2853, 4294901760
    %2855 = vmatpush1.msra.mxu0 %v2854
    %2856 = vmatprep.subr.mxu0 0.0
    %v2857 = vand.u32 %v77, 4294901760
    %v2858 = vsub.f32 %v77, %v2857
    %v2859 = vand.u32 %v2858, 4294901760
    %v2860 = vsub.f32 %v2858, %v2859
    %v2861 = vand.u32 %v2860, 4294901760
    %2862 = vmatpush1.msra.mxu0 %v2861
    %2863 = vmatprep.subr.mxu0 0.0
    %v2864 = vand.u32 %v78, 4294901760
    %v2865 = vsub.f32 %v78, %v2864
    %v2866 = vand.u32 %v2865, 4294901760
    %v2867 = vsub.f32 %v2865, %v2866
    %v2868 = vand.u32 %v2867, 4294901760
    %2869 = vmatpush1.msra.mxu0 %v2868
    %2870 = vmatprep.subr.mxu0 0.0
    %v2871 = vand.u32 %v79, 4294901760
    %v2872 = vsub.f32 %v79, %v2871
    %v2873 = vand.u32 %v2872, 4294901760
    %v2874 = vsub.f32 %v2872, %v2873
    %v2875 = vand.u32 %v2874, 4294901760
    %2876 = vmatpush1.msra.mxu0 %v2875
    %2877 = vmatprep.subr.mxu0 0.0
    %2878 = vmatpush1.msra.mxu0 0.0
    %2879 = vmatprep.subr.mxu0 0.0
    %2880 = vmatpush1.msra.mxu0 0.0
    %2881 = vmatprep.subr.mxu0 0.0
    %2882 = vmatpush1.msra.mxu0 0.0
    %2883 = vmatprep.subr.mxu0 0.0
    %2884 = vmatpush1.msra.mxu0 0.0
    %2885 = vmatprep.subr.mxu0 0.0
    %2886 = vmatpush1.msra.mxu0 0.0
    %2887 = vmatprep.subr.mxu0 0.0
    %2888 = vmatpush1.msra.mxu0 0.0
    %2889 = vmatprep.subr.mxu0 0.0
    %2890 = vmatpush1.msra.mxu0 0.0
    %2891 = vmatprep.subr.mxu0 0.0
    %2892 = vmatpush1.msra.mxu0 0.0
    %2893 = vmatprep.subr.mxu0 0.0
    %2894 = vmatpush1.msra.mxu0 0.0
    %2895 = vmatprep.subr.mxu0 0.0
    %2896 = vmatpush1.msra.mxu0 0.0
    %2897 = vmatprep.subr.mxu0 0.0
    %2898 = vmatpush1.msra.mxu0 0.0
    %2899 = vmatprep.subr.mxu0 0.0
    %2900 = vmatpush1.msra.mxu0 0.0
    %2901 = vmatprep.subr.mxu0 0.0
    %2902 = vmatpush1.msra.mxu0 0.0
    %2903 = vmatprep.subr.mxu0 0.0
    %2904 = vmatpush1.msra.mxu0 0.0
    %2905 = vmatprep.subr.mxu0 0.0
    %2906 = vmatpush1.msra.mxu0 0.0
    %2907 = vmatprep.subr.mxu0 0.0
    %2908 = vmatpush1.msra.mxu0 0.0
    %2909 = vmatprep.mubr.f32.mxu0 0.0
    %v2910 = vand.u32 %v2673, 4294901760
    %2911 = vmatmul.mubr.f32.gmra.mrb[0].mxu0 %v2910
    %v2912 = vpop.f32.mrb[0].mxu0
    %v2913 = vadd.f32 %v2762, %v2912
    %v2914 = vpop.f32.mrb[0].mxu0
    %2915 = vdwg.mxu0
    %2916 = vmatprep.subr.mxu0 0.0
    %v2917 = vand.u32 %v64, 4294901760
    %v2918 = vsub.f32 %v64, %v2917
    %2919 = vmatpush1.msra.mxu0 %v2918
    %2920 = vmatprep.subr.mxu0 0.0
    %v2921 = vand.u32 %v65, 4294901760
    %v2922 = vsub.f32 %v65, %v2921
    %2923 = vmatpush1.msra.mxu0 %v2922
    %2924 = vmatprep.subr.mxu0 0.0
    %v2925 = vand.u32 %v66, 4294901760
    %v2926 = vsub.f32 %v66, %v2925
    %2927 = vmatpush1.msra.mxu0 %v2926
    %2928 = vmatprep.subr.mxu0 0.0
    %v2929 = vand.u32 %v67, 4294901760
    %v2930 = vsub.f32 %v67, %v2929
    %2931 = vmatpush1.msra.mxu0 %v2930
    %2932 = vmatprep.subr.mxu0 0.0
    %v2933 = vand.u32 %v68, 4294901760
    %v2934 = vsub.f32 %v68, %v2933
    %2935 = vmatpush1.msra.mxu0 %v2934
    %2936 = vmatprep.subr.mxu0 0.0
    %v2937 = vand.u32 %v69, 4294901760
    %v2938 = vsub.f32 %v69, %v2937
    %2939 = vmatpush1.msra.mxu0 %v2938
    %2940 = vmatprep.subr.mxu0 0.0
    %v2941 = vand.u32 %v70, 4294901760
    %v2942 = vsub.f32 %v70, %v2941
    %2943 = vmatpush1.msra.mxu0 %v2942
    %2944 = vmatprep.subr.mxu0 0.0
    %v2945 = vand.u32 %v71, 4294901760
    %v2946 = vsub.f32 %v71, %v2945
    %2947 = vmatpush1.msra.mxu0 %v2946
    %2948 = vmatprep.subr.mxu0 0.0
    %v2949 = vand.u32 %v72, 4294901760
    %v2950 = vsub.f32 %v72, %v2949
    %2951 = vmatpush1.msra.mxu0 %v2950
    %2952 = vmatprep.subr.mxu0 0.0
    %v2953 = vand.u32 %v73, 4294901760
    %v2954 = vsub.f32 %v73, %v2953
    %2955 = vmatpush1.msra.mxu0 %v2954
    %2956 = vmatprep.subr.mxu0 0.0
    %v2957 = vand.u32 %v74, 4294901760
    %v2958 = vsub.f32 %v74, %v2957
    %2959 = vmatpush1.msra.mxu0 %v2958
    %2960 = vmatprep.subr.mxu0 0.0
    %v2961 = vand.u32 %v75, 4294901760
    %v2962 = vsub.f32 %v75, %v2961
    %2963 = vmatpush1.msra.mxu0 %v2962
    %2964 = vmatprep.subr.mxu0 0.0
    %v2965 = vand.u32 %v76, 4294901760
    %v2966 = vsub.f32 %v76, %v2965
    %2967 = vmatpush1.msra.mxu0 %v2966
    %2968 = vmatprep.subr.mxu0 0.0
    %v2969 = vand.u32 %v77, 4294901760
    %v2970 = vsub.f32 %v77, %v2969
    %2971 = vmatpush1.msra.mxu0 %v2970
    %2972 = vmatprep.subr.mxu0 0.0
    %v2973 = vand.u32 %v78, 4294901760
    %v2974 = vsub.f32 %v78, %v2973
    %2975 = vmatpush1.msra.mxu0 %v2974
    %2976 = vmatprep.subr.mxu0 0.0
    %v2977 = vand.u32 %v79, 4294901760
    %v2978 = vsub.f32 %v79, %v2977
    %2979 = vmatpush1.msra.mxu0 %v2978
    %2980 = vmatprep.subr.mxu0 0.0
    %2981 = vmatpush1.msra.mxu0 0.0
    %2982 = vmatprep.subr.mxu0 0.0
    %2983 = vmatpush1.msra.mxu0 0.0
    %2984 = vmatprep.subr.mxu0 0.0
    %2985 = vmatpush1.msra.mxu0 0.0
    %2986 = vmatprep.subr.mxu0 0.0
    %2987 = vmatpush1.msra.mxu0 0.0
    %2988 = vmatprep.subr.mxu0 0.0
    %2989 = vmatpush1.msra.mxu0 0.0
    %2990 = vmatprep.subr.mxu0 0.0
    %2991 = vmatpush1.msra.mxu0 0.0
    %2992 = vmatprep.subr.mxu0 0.0
    %2993 = vmatpush1.msra.mxu0 0.0
    %2994 = vmatprep.subr.mxu0 0.0
    %2995 = vmatpush1.msra.mxu0 0.0
    %2996 = vmatprep.subr.mxu0 0.0
    %2997 = vmatpush1.msra.mxu0 0.0
    %2998 = vmatprep.subr.mxu0 0.0
    %2999 = vmatpush1.msra.mxu0 0.0
    %3000 = vmatprep.subr.mxu0 0.0
    %3001 = vmatpush1.msra.mxu0 0.0
    %3002 = vmatprep.subr.mxu0 0.0
    %3003 = vmatpush1.msra.mxu0 0.0
    %3004 = vmatprep.subr.mxu0 0.0
    %3005 = vmatpush1.msra.mxu0 0.0
    %3006 = vmatprep.subr.mxu0 0.0
    %3007 = vmatpush1.msra.mxu0 0.0
    %3008 = vmatprep.subr.mxu0 0.0
    %3009 = vmatpush1.msra.mxu0 0.0
    %3010 = vmatprep.subr.mxu0 0.0
    %3011 = vmatpush1.msra.mxu0 0.0
    %3012 = vmatprep.mubr.f32.mxu0 0.0
    %v3013 = vand.u32 %v2673, 4294901760
    %v3014 = vsub.f32 %v2673, %v3013
    %3015 = vmatmul.mubr.f32.gmra.mrb[0].mxu0 %v3014
    %v3016 = vpop.f32.mrb[0].mxu0
    %v3017 = vadd.f32 %v2913, %v3016
    %v3018 = vpop.f32.mrb[0].mxu0
    %3019 = vdwg.mxu0
    %3020 = vmatprep.subr.mxu0 0.0
    %v3021 = vand.u32 %v64, 4294901760
    %3022 = vmatpush1.msra.mxu0 %v3021
    %3023 = vmatprep.subr.mxu0 0.0
    %v3024 = vand.u32 %v65, 4294901760
    %3025 = vmatpush1.msra.mxu0 %v3024
    %3026 = vmatprep.subr.mxu0 0.0
    %v3027 = vand.u32 %v66, 4294901760
    %3028 = vmatpush1.msra.mxu0 %v3027
    %3029 = vmatprep.subr.mxu0 0.0
    %v3030 = vand.u32 %v67, 4294901760
    %3031 = vmatpush1.msra.mxu0 %v3030
    %3032 = vmatprep.subr.mxu0 0.0
    %v3033 = vand.u32 %v68, 4294901760
    %3034 = vmatpush1.msra.mxu0 %v3033
    %3035 = vmatprep.subr.mxu0 0.0
    %v3036 = vand.u32 %v69, 4294901760
    %3037 = vmatpush1.msra.mxu0 %v3036
    %3038 = vmatprep.subr.mxu0 0.0
    %v3039 = vand.u32 %v70, 4294901760
    %3040 = vmatpush1.msra.mxu0 %v3039
    %3041 = vmatprep.subr.mxu0 0.0
    %v3042 = vand.u32 %v71, 4294901760
    %3043 = vmatpush1.msra.mxu0 %v3042
    %3044 = vmatprep.subr.mxu0 0.0
    %v3045 = vand.u32 %v72, 4294901760
    %3046 = vmatpush1.msra.mxu0 %v3045
    %3047 = vmatprep.subr.mxu0 0.0
    %v3048 = vand.u32 %v73, 4294901760
    %3049 = vmatpush1.msra.mxu0 %v3048
    %3050 = vmatprep.subr.mxu0 0.0
    %v3051 = vand.u32 %v74, 4294901760
    %3052 = vmatpush1.msra.mxu0 %v3051
    %3053 = vmatprep.subr.mxu0 0.0
    %v3054 = vand.u32 %v75, 4294901760
    %3055 = vmatpush1.msra.mxu0 %v3054
    %3056 = vmatprep.subr.mxu0 0.0
    %v3057 = vand.u32 %v76, 4294901760
    %3058 = vmatpush1.msra.mxu0 %v3057
    %3059 = vmatprep.subr.mxu0 0.0
    %v3060 = vand.u32 %v77, 4294901760
    %3061 = vmatpush1.msra.mxu0 %v3060
    %3062 = vmatprep.subr.mxu0 0.0
    %v3063 = vand.u32 %v78, 4294901760
    %3064 = vmatpush1.msra.mxu0 %v3063
    %3065 = vmatprep.subr.mxu0 0.0
    %v3066 = vand.u32 %v79, 4294901760
    %3067 = vmatpush1.msra.mxu0 %v3066
    %3068 = vmatprep.subr.mxu0 0.0
    %3069 = vmatpush1.msra.mxu0 0.0
    %3070 = vmatprep.subr.mxu0 0.0
    %3071 = vmatpush1.msra.mxu0 0.0
    %3072 = vmatprep.subr.mxu0 0.0
    %3073 = vmatpush1.msra.mxu0 0.0
    %3074 = vmatprep.subr.mxu0 0.0
    %3075 = vmatpush1.msra.mxu0 0.0
    %3076 = vmatprep.subr.mxu0 0.0
    %3077 = vmatpush1.msra.mxu0 0.0
    %3078 = vmatprep.subr.mxu0 0.0
    %3079 = vmatpush1.msra.mxu0 0.0
    %3080 = vmatprep.subr.mxu0 0.0
    %3081 = vmatpush1.msra.mxu0 0.0
    %3082 = vmatprep.subr.mxu0 0.0
    %3083 = vmatpush1.msra.mxu0 0.0
    %3084 = vmatprep.subr.mxu0 0.0
    %3085 = vmatpush1.msra.mxu0 0.0
    %3086 = vmatprep.subr.mxu0 0.0
    %3087 = vmatpush1.msra.mxu0 0.0
    %3088 = vmatprep.subr.mxu0 0.0
    %3089 = vmatpush1.msra.mxu0 0.0
    %3090 = vmatprep.subr.mxu0 0.0
    %3091 = vmatpush1.msra.mxu0 0.0
    %3092 = vmatprep.subr.mxu0 0.0
    %3093 = vmatpush1.msra.mxu0 0.0
    %3094 = vmatprep.subr.mxu0 0.0
    %3095 = vmatpush1.msra.mxu0 0.0
    %3096 = vmatprep.subr.mxu0 0.0
    %3097 = vmatpush1.msra.mxu0 0.0
    %3098 = vmatprep.subr.mxu0 0.0
    %3099 = vmatpush1.msra.mxu0 0.0
    %3100 = vmatprep.mubr.f32.mxu0 0.0
    %v3101 = vand.u32 %v2673, 4294901760
    %v3102 = vsub.f32 %v2673, %v3101
    %v3103 = vand.u32 %v3102, 4294901760
    %3104 = vmatmul.mubr.f32.gmra.mrb[0].mxu0 %v3103
    %v3105 = vpop.f32.mrb[0].mxu0
    %v3106 = vadd.f32 %v3017, %v3105
    %v3107 = vpop.f32.mrb[0].mxu0
    %3108 = vdwg.mxu0
    %3109 = vmatprep.subr.mxu0 0.0
    %v3110 = vand.u32 %v64, 4294901760
    %v3111 = vsub.f32 %v64, %v3110
    %v3112 = vand.u32 %v3111, 4294901760
    %3113 = vmatpush1.msra.mxu0 %v3112
    %3114 = vmatprep.subr.mxu0 0.0
    %v3115 = vand.u32 %v65, 4294901760
    %v3116 = vsub.f32 %v65, %v3115
    %v3117 = vand.u32 %v3116, 4294901760
    %3118 = vmatpush1.msra.mxu0 %v3117
    %3119 = vmatprep.subr.mxu0 0.0
    %v3120 = vand.u32 %v66, 4294901760
    %v3121 = vsub.f32 %v66, %v3120
    %v3122 = vand.u32 %v3121, 4294901760
    %3123 = vmatpush1.msra.mxu0 %v3122
    %3124 = vmatprep.subr.mxu0 0.0
    %v3125 = vand.u32 %v67, 4294901760
    %v3126 = vsub.f32 %v67, %v3125
    %v3127 = vand.u32 %v3126, 4294901760
    %3128 = vmatpush1.msra.mxu0 %v3127
    %3129 = vmatprep.subr.mxu0 0.0
    %v3130 = vand.u32 %v68, 4294901760
    %v3131 = vsub.f32 %v68, %v3130
    %v3132 = vand.u32 %v3131, 4294901760
    %3133 = vmatpush1.msra.mxu0 %v3132
    %3134 = vmatprep.subr.mxu0 0.0
    %v3135 = vand.u32 %v69, 4294901760
    %v3136 = vsub.f32 %v69, %v3135
    %v3137 = vand.u32 %v3136, 4294901760
    %3138 = vmatpush1.msra.mxu0 %v3137
    %3139 = vmatprep.subr.mxu0 0.0
    %v3140 = vand.u32 %v70, 4294901760
    %v3141 = vsub.f32 %v70, %v3140
    %v3142 = vand.u32 %v3141, 4294901760
    %3143 = vmatpush1.msra.mxu0 %v3142
    %3144 = vmatprep.subr.mxu0 0.0
    %v3145 = vand.u32 %v71, 4294901760
    %v3146 = vsub.f32 %v71, %v3145
    %v3147 = vand.u32 %v3146, 4294901760
    %3148 = vmatpush1.msra.mxu0 %v3147
    %3149 = vmatprep.subr.mxu0 0.0
    %v3150 = vand.u32 %v72, 4294901760
    %v3151 = vsub.f32 %v72, %v3150
    %v3152 = vand.u32 %v3151, 4294901760
    %3153 = vmatpush1.msra.mxu0 %v3152
    %3154 = vmatprep.subr.mxu0 0.0
    %v3155 = vand.u32 %v73, 4294901760
    %v3156 = vsub.f32 %v73, %v3155
    %v3157 = vand.u32 %v3156, 4294901760
    %3158 = vmatpush1.msra.mxu0 %v3157
    %3159 = vmatprep.subr.mxu0 0.0
    %v3160 = vand.u32 %v74, 4294901760
    %v3161 = vsub.f32 %v74, %v3160
    %v3162 = vand.u32 %v3161, 4294901760
    %3163 = vmatpush1.msra.mxu0 %v3162
    %3164 = vmatprep.subr.mxu0 0.0
    %v3165 = vand.u32 %v75, 4294901760
    %v3166 = vsub.f32 %v75, %v3165
    %v3167 = vand.u32 %v3166, 4294901760
    %3168 = vmatpush1.msra.mxu0 %v3167
    %3169 = vmatprep.subr.mxu0 0.0
    %v3170 = vand.u32 %v76, 4294901760
    %v3171 = vsub.f32 %v76, %v3170
    %v3172 = vand.u32 %v3171, 4294901760
    %3173 = vmatpush1.msra.mxu0 %v3172
    %3174 = vmatprep.subr.mxu0 0.0
    %v3175 = vand.u32 %v77, 4294901760
    %v3176 = vsub.f32 %v77, %v3175
    %v3177 = vand.u32 %v3176, 4294901760
    %3178 = vmatpush1.msra.mxu0 %v3177
    %3179 = vmatprep.subr.mxu0 0.0
    %v3180 = vand.u32 %v78, 4294901760
    %v3181 = vsub.f32 %v78, %v3180
    %v3182 = vand.u32 %v3181, 4294901760
    %3183 = vmatpush1.msra.mxu0 %v3182
    %3184 = vmatprep.subr.mxu0 0.0
    %v3185 = vand.u32 %v79, 4294901760
    %v3186 = vsub.f32 %v79, %v3185
    %v3187 = vand.u32 %v3186, 4294901760
    %3188 = vmatpush1.msra.mxu0 %v3187
    %3189 = vmatprep.subr.mxu0 0.0
    %3190 = vmatpush1.msra.mxu0 0.0
    %3191 = vmatprep.subr.mxu0 0.0
    %3192 = vmatpush1.msra.mxu0 0.0
    %3193 = vmatprep.subr.mxu0 0.0
    %3194 = vmatpush1.msra.mxu0 0.0
    %3195 = vmatprep.subr.mxu0 0.0
    %3196 = vmatpush1.msra.mxu0 0.0
    %3197 = vmatprep.subr.mxu0 0.0
    %3198 = vmatpush1.msra.mxu0 0.0
    %3199 = vmatprep.subr.mxu0 0.0
    %3200 = vmatpush1.msra.mxu0 0.0
    %3201 = vmatprep.subr.mxu0 0.0
    %3202 = vmatpush1.msra.mxu0 0.0
    %3203 = vmatprep.subr.mxu0 0.0
    %3204 = vmatpush1.msra.mxu0 0.0
    %3205 = vmatprep.subr.mxu0 0.0
    %3206 = vmatpush1.msra.mxu0 0.0
    %3207 = vmatprep.subr.mxu0 0.0
    %3208 = vmatpush1.msra.mxu0 0.0
    %3209 = vmatprep.subr.mxu0 0.0
    %3210 = vmatpush1.msra.mxu0 0.0
    %3211 = vmatprep.subr.mxu0 0.0
    %3212 = vmatpush1.msra.mxu0 0.0
    %3213 = vmatprep.subr.mxu0 0.0
    %3214 = vmatpush1.msra.mxu0 0.0
    %3215 = vmatprep.subr.mxu0 0.0
    %3216 = vmatpush1.msra.mxu0 0.0
    %3217 = vmatprep.subr.mxu0 0.0
    %3218 = vmatpush1.msra.mxu0 0.0
    %3219 = vmatprep.subr.mxu0 0.0
    %3220 = vmatpush1.msra.mxu0 0.0
    %3221 = vmatprep.mubr.f32.mxu0 0.0
    %v3222 = vand.u32 %v2673, 4294901760
    %3223 = vmatmul.mubr.f32.gmra.mrb[0].mxu0 %v3222
    %v3224 = vpop.f32.mrb[0].mxu0
    %v3225 = vadd.f32 %v3106, %v3224
    %v3226 = vpop.f32.mrb[0].mxu0
    %3227 = vdwg.mxu0
    %3228 = vmatprep.subr.mxu0 0.0
    %v3229 = vand.u32 %v64, 4294901760
    %3230 = vmatpush1.msra.mxu0 %v3229
    %3231 = vmatprep.subr.mxu0 0.0
    %v3232 = vand.u32 %v65, 4294901760
    %3233 = vmatpush1.msra.mxu0 %v3232
    %3234 = vmatprep.subr.mxu0 0.0
    %v3235 = vand.u32 %v66, 4294901760
    %3236 = vmatpush1.msra.mxu0 %v3235
    %3237 = vmatprep.subr.mxu0 0.0
    %v3238 = vand.u32 %v67, 4294901760
    %3239 = vmatpush1.msra.mxu0 %v3238
    %3240 = vmatprep.subr.mxu0 0.0
    %v3241 = vand.u32 %v68, 4294901760
    %3242 = vmatpush1.msra.mxu0 %v3241
    %3243 = vmatprep.subr.mxu0 0.0
    %v3244 = vand.u32 %v69, 4294901760
    %3245 = vmatpush1.msra.mxu0 %v3244
    %3246 = vmatprep.subr.mxu0 0.0
    %v3247 = vand.u32 %v70, 4294901760
    %3248 = vmatpush1.msra.mxu0 %v3247
    %3249 = vmatprep.subr.mxu0 0.0
    %v3250 = vand.u32 %v71, 4294901760
    %3251 = vmatpush1.msra.mxu0 %v3250
    %3252 = vmatprep.subr.mxu0 0.0
    %v3253 = vand.u32 %v72, 4294901760
    %3254 = vmatpush1.msra.mxu0 %v3253
    %3255 = vmatprep.subr.mxu0 0.0
    %v3256 = vand.u32 %v73, 4294901760
    %3257 = vmatpush1.msra.mxu0 %v3256
    %3258 = vmatprep.subr.mxu0 0.0
    %v3259 = vand.u32 %v74, 4294901760
    %3260 = vmatpush1.msra.mxu0 %v3259
    %3261 = vmatprep.subr.mxu0 0.0
    %v3262 = vand.u32 %v75, 4294901760
    %3263 = vmatpush1.msra.mxu0 %v3262
    %3264 = vmatprep.subr.mxu0 0.0
    %v3265 = vand.u32 %v76, 4294901760
    %3266 = vmatpush1.msra.mxu0 %v3265
    %3267 = vmatprep.subr.mxu0 0.0
    %v3268 = vand.u32 %v77, 4294901760
    %3269 = vmatpush1.msra.mxu0 %v3268
    %3270 = vmatprep.subr.mxu0 0.0
    %v3271 = vand.u32 %v78, 4294901760
    %3272 = vmatpush1.msra.mxu0 %v3271
    %3273 = vmatprep.subr.mxu0 0.0
    %v3274 = vand.u32 %v79, 4294901760
    %3275 = vmatpush1.msra.mxu0 %v3274
    %3276 = vmatprep.subr.mxu0 0.0
    %3277 = vmatpush1.msra.mxu0 0.0
    %3278 = vmatprep.subr.mxu0 0.0
    %3279 = vmatpush1.msra.mxu0 0.0
    %3280 = vmatprep.subr.mxu0 0.0
    %3281 = vmatpush1.msra.mxu0 0.0
    %3282 = vmatprep.subr.mxu0 0.0
    %3283 = vmatpush1.msra.mxu0 0.0
    %3284 = vmatprep.subr.mxu0 0.0
    %3285 = vmatpush1.msra.mxu0 0.0
    %3286 = vmatprep.subr.mxu0 0.0
    %3287 = vmatpush1.msra.mxu0 0.0
    %3288 = vmatprep.subr.mxu0 0.0
    %3289 = vmatpush1.msra.mxu0 0.0
    %3290 = vmatprep.subr.mxu0 0.0
    %3291 = vmatpush1.msra.mxu0 0.0
    %3292 = vmatprep.subr.mxu0 0.0
    %3293 = vmatpush1.msra.mxu0 0.0
    %3294 = vmatprep.subr.mxu0 0.0
    %3295 = vmatpush1.msra.mxu0 0.0
    %3296 = vmatprep.subr.mxu0 0.0
    %3297 = vmatpush1.msra.mxu0 0.0
    %3298 = vmatprep.subr.mxu0 0.0
    %3299 = vmatpush1.msra.mxu0 0.0
    %3300 = vmatprep.subr.mxu0 0.0
    %3301 = vmatpush1.msra.mxu0 0.0
    %3302 = vmatprep.subr.mxu0 0.0
    %3303 = vmatpush1.msra.mxu0 0.0
    %3304 = vmatprep.subr.mxu0 0.0
    %3305 = vmatpush1.msra.mxu0 0.0
    %3306 = vmatprep.subr.mxu0 0.0
    %3307 = vmatpush1.msra.mxu0 0.0
    %3308 = vmatprep.mubr.f32.mxu0 0.0
    %v3309 = vand.u32 %v2673, 4294901760
    %3310 = vmatmul.mubr.f32.gmra.mrb[0].mxu0 %v3309
    %v3311 = vpop.f32.mrb[0].mxu0
    %v3312 = vadd.f32 %v3225, %v3311
    %v3313 = vpop.f32.mrb[0].mxu0
    %3314 = vdwg.mxu0
    %3315 = vmatprep.subr.mxu0 0.0
    %v3316 = vand.u32 %v80, 4294901760
    %3317 = vmatpush1.msra.mxu0 %v3316
    %3318 = vmatprep.subr.mxu0 0.0
    %v3319 = vand.u32 %v81, 4294901760
    %3320 = vmatpush1.msra.mxu0 %v3319
    %3321 = vmatprep.subr.mxu0 0.0
    %v3322 = vand.u32 %v82, 4294901760
    %3323 = vmatpush1.msra.mxu0 %v3322
    %3324 = vmatprep.subr.mxu0 0.0
    %v3325 = vand.u32 %v83, 4294901760
    %3326 = vmatpush1.msra.mxu0 %v3325
    %3327 = vmatprep.subr.mxu0 0.0
    %v3328 = vand.u32 %v84, 4294901760
    %3329 = vmatpush1.msra.mxu0 %v3328
    %3330 = vmatprep.subr.mxu0 0.0
    %v3331 = vand.u32 %v85, 4294901760
    %3332 = vmatpush1.msra.mxu0 %v3331
    %3333 = vmatprep.subr.mxu0 0.0
    %v3334 = vand.u32 %v86, 4294901760
    %3335 = vmatpush1.msra.mxu0 %v3334
    %3336 = vmatprep.subr.mxu0 0.0
    %v3337 = vand.u32 %v87, 4294901760
    %3338 = vmatpush1.msra.mxu0 %v3337
    %3339 = vmatprep.subr.mxu0 0.0
    %v3340 = vand.u32 %v88, 4294901760
    %3341 = vmatpush1.msra.mxu0 %v3340
    %3342 = vmatprep.subr.mxu0 0.0
    %v3343 = vand.u32 %v89, 4294901760
    %3344 = vmatpush1.msra.mxu0 %v3343
    %3345 = vmatprep.subr.mxu0 0.0
    %v3346 = vand.u32 %v90, 4294901760
    %3347 = vmatpush1.msra.mxu0 %v3346
    %3348 = vmatprep.subr.mxu0 0.0
    %v3349 = vand.u32 %v91, 4294901760
    %3350 = vmatpush1.msra.mxu0 %v3349
    %3351 = vmatprep.subr.mxu0 0.0
    %v3352 = vand.u32 %v92, 4294901760
    %3353 = vmatpush1.msra.mxu0 %v3352
    %3354 = vmatprep.subr.mxu0 0.0
    %v3355 = vand.u32 %v93, 4294901760
    %3356 = vmatpush1.msra.mxu0 %v3355
    %3357 = vmatprep.subr.mxu0 0.0
    %v3358 = vand.u32 %v94, 4294901760
    %3359 = vmatpush1.msra.mxu0 %v3358
    %3360 = vmatprep.subr.mxu0 0.0
    %v3361 = vand.u32 %v95, 4294901760
    %3362 = vmatpush1.msra.mxu0 %v3361
    %3363 = vmatprep.subr.mxu0 0.0
    %3364 = vmatpush1.msra.mxu0 0.0
    %3365 = vmatprep.subr.mxu0 0.0
    %3366 = vmatpush1.msra.mxu0 0.0
    %3367 = vmatprep.subr.mxu0 0.0
    %3368 = vmatpush1.msra.mxu0 0.0
    %3369 = vmatprep.subr.mxu0 0.0
    %3370 = vmatpush1.msra.mxu0 0.0
    %3371 = vmatprep.subr.mxu0 0.0
    %3372 = vmatpush1.msra.mxu0 0.0
    %3373 = vmatprep.subr.mxu0 0.0
    %3374 = vmatpush1.msra.mxu0 0.0
    %3375 = vmatprep.subr.mxu0 0.0
    %3376 = vmatpush1.msra.mxu0 0.0
    %3377 = vmatprep.subr.mxu0 0.0
    %3378 = vmatpush1.msra.mxu0 0.0
    %3379 = vmatprep.subr.mxu0 0.0
    %3380 = vmatpush1.msra.mxu0 0.0
    %3381 = vmatprep.subr.mxu0 0.0
    %3382 = vmatpush1.msra.mxu0 0.0
    %3383 = vmatprep.subr.mxu0 0.0
    %3384 = vmatpush1.msra.mxu0 0.0
    %3385 = vmatprep.subr.mxu0 0.0
    %3386 = vmatpush1.msra.mxu0 0.0
    %3387 = vmatprep.subr.mxu0 0.0
    %3388 = vmatpush1.msra.mxu0 0.0
    %3389 = vmatprep.subr.mxu0 0.0
    %3390 = vmatpush1.msra.mxu0 0.0
    %3391 = vmatprep.subr.mxu0 0.0
    %3392 = vmatpush1.msra.mxu0 0.0
    %3393 = vmatprep.subr.mxu0 0.0
    %3394 = vmatpush1.msra.mxu0 0.0
    %3395 = vmatprep.mubr.f32.mxu0 0.0
    %v3396 = vand.u32 %v2673, 4294901760
    %v3397 = vsub.f32 %v2673, %v3396
    %v3398 = vand.u32 %v3397, 4294901760
    %v3399 = vsub.f32 %v3397, %v3398
    %v3400 = vand.u32 %v3399, 4294901760
    %3401 = vmatmul.mubr.f32.gmra.mrb[0].mxu0 %v3400
    %v3402 = vpop.f32.mrb[0].mxu0
    %v3403 = vadd.f32 0.0, %v3402
    %v3404 = vpop.f32.mrb[0].mxu0
    %3405 = vdwg.mxu0
    %3406 = vmatprep.subr.mxu0 0.0
    %v3407 = vand.u32 %v80, 4294901760
    %v3408 = vsub.f32 %v80, %v3407
    %v3409 = vand.u32 %v3408, 4294901760
    %v3410 = vsub.f32 %v3408, %v3409
    %v3411 = vand.u32 %v3410, 4294901760
    %3412 = vmatpush1.msra.mxu0 %v3411
    %3413 = vmatprep.subr.mxu0 0.0
    %v3414 = vand.u32 %v81, 4294901760
    %v3415 = vsub.f32 %v81, %v3414
    %v3416 = vand.u32 %v3415, 4294901760
    %v3417 = vsub.f32 %v3415, %v3416
    %v3418 = vand.u32 %v3417, 4294901760
    %3419 = vmatpush1.msra.mxu0 %v3418
    %3420 = vmatprep.subr.mxu0 0.0
    %v3421 = vand.u32 %v82, 4294901760
    %v3422 = vsub.f32 %v82, %v3421
    %v3423 = vand.u32 %v3422, 4294901760
    %v3424 = vsub.f32 %v3422, %v3423
    %v3425 = vand.u32 %v3424, 4294901760
    %3426 = vmatpush1.msra.mxu0 %v3425
    %3427 = vmatprep.subr.mxu0 0.0
    %v3428 = vand.u32 %v83, 4294901760
    %v3429 = vsub.f32 %v83, %v3428
    %v3430 = vand.u32 %v3429, 4294901760
    %v3431 = vsub.f32 %v3429, %v3430
    %v3432 = vand.u32 %v3431, 4294901760
    %3433 = vmatpush1.msra.mxu0 %v3432
    %3434 = vmatprep.subr.mxu0 0.0
    %v3435 = vand.u32 %v84, 4294901760
    %v3436 = vsub.f32 %v84, %v3435
    %v3437 = vand.u32 %v3436, 4294901760
    %v3438 = vsub.f32 %v3436, %v3437
    %v3439 = vand.u32 %v3438, 4294901760
    %3440 = vmatpush1.msra.mxu0 %v3439
    %3441 = vmatprep.subr.mxu0 0.0
    %v3442 = vand.u32 %v85, 4294901760
    %v3443 = vsub.f32 %v85, %v3442
    %v3444 = vand.u32 %v3443, 4294901760
    %v3445 = vsub.f32 %v3443, %v3444
    %v3446 = vand.u32 %v3445, 4294901760
    %3447 = vmatpush1.msra.mxu0 %v3446
    %3448 = vmatprep.subr.mxu0 0.0
    %v3449 = vand.u32 %v86, 4294901760
    %v3450 = vsub.f32 %v86, %v3449
    %v3451 = vand.u32 %v3450, 4294901760
    %v3452 = vsub.f32 %v3450, %v3451
    %v3453 = vand.u32 %v3452, 4294901760
    %3454 = vmatpush1.msra.mxu0 %v3453
    %3455 = vmatprep.subr.mxu0 0.0
    %v3456 = vand.u32 %v87, 4294901760
    %v3457 = vsub.f32 %v87, %v3456
    %v3458 = vand.u32 %v3457, 4294901760
    %v3459 = vsub.f32 %v3457, %v3458
    %v3460 = vand.u32 %v3459, 4294901760
    %3461 = vmatpush1.msra.mxu0 %v3460
    %3462 = vmatprep.subr.mxu0 0.0
    %v3463 = vand.u32 %v88, 4294901760
    %v3464 = vsub.f32 %v88, %v3463
    %v3465 = vand.u32 %v3464, 4294901760
    %v3466 = vsub.f32 %v3464, %v3465
    %v3467 = vand.u32 %v3466, 4294901760
    %3468 = vmatpush1.msra.mxu0 %v3467
    %3469 = vmatprep.subr.mxu0 0.0
    %v3470 = vand.u32 %v89, 4294901760
    %v3471 = vsub.f32 %v89, %v3470
    %v3472 = vand.u32 %v3471, 4294901760
    %v3473 = vsub.f32 %v3471, %v3472
    %v3474 = vand.u32 %v3473, 4294901760
    %3475 = vmatpush1.msra.mxu0 %v3474
    %3476 = vmatprep.subr.mxu0 0.0
    %v3477 = vand.u32 %v90, 4294901760
    %v3478 = vsub.f32 %v90, %v3477
    %v3479 = vand.u32 %v3478, 4294901760
    %v3480 = vsub.f32 %v3478, %v3479
    %v3481 = vand.u32 %v3480, 4294901760
    %3482 = vmatpush1.msra.mxu0 %v3481
    %3483 = vmatprep.subr.mxu0 0.0
    %v3484 = vand.u32 %v91, 4294901760
    %v3485 = vsub.f32 %v91, %v3484
    %v3486 = vand.u32 %v3485, 4294901760
    %v3487 = vsub.f32 %v3485, %v3486
    %v3488 = vand.u32 %v3487, 4294901760
    %3489 = vmatpush1.msra.mxu0 %v3488
    %3490 = vmatprep.subr.mxu0 0.0
    %v3491 = vand.u32 %v92, 4294901760
    %v3492 = vsub.f32 %v92, %v3491
    %v3493 = vand.u32 %v3492, 4294901760
    %v3494 = vsub.f32 %v3492, %v3493
    %v3495 = vand.u32 %v3494, 4294901760
    %3496 = vmatpush1.msra.mxu0 %v3495
    %3497 = vmatprep.subr.mxu0 0.0
    %v3498 = vand.u32 %v93, 4294901760
    %v3499 = vsub.f32 %v93, %v3498
    %v3500 = vand.u32 %v3499, 4294901760
    %v3501 = vsub.f32 %v3499, %v3500
    %v3502 = vand.u32 %v3501, 4294901760
    %3503 = vmatpush1.msra.mxu0 %v3502
    %3504 = vmatprep.subr.mxu0 0.0
    %v3505 = vand.u32 %v94, 4294901760
    %v3506 = vsub.f32 %v94, %v3505
    %v3507 = vand.u32 %v3506, 4294901760
    %v3508 = vsub.f32 %v3506, %v3507
    %v3509 = vand.u32 %v3508, 4294901760
    %3510 = vmatpush1.msra.mxu0 %v3509
    %3511 = vmatprep.subr.mxu0 0.0
    %v3512 = vand.u32 %v95, 4294901760
    %v3513 = vsub.f32 %v95, %v3512
    %v3514 = vand.u32 %v3513, 4294901760
    %v3515 = vsub.f32 %v3513, %v3514
    %v3516 = vand.u32 %v3515, 4294901760
    %3517 = vmatpush1.msra.mxu0 %v3516
    %3518 = vmatprep.subr.mxu0 0.0
    %3519 = vmatpush1.msra.mxu0 0.0
    %3520 = vmatprep.subr.mxu0 0.0
    %3521 = vmatpush1.msra.mxu0 0.0
    %3522 = vmatprep.subr.mxu0 0.0
    %3523 = vmatpush1.msra.mxu0 0.0
    %3524 = vmatprep.subr.mxu0 0.0
    %3525 = vmatpush1.msra.mxu0 0.0
    %3526 = vmatprep.subr.mxu0 0.0
    %3527 = vmatpush1.msra.mxu0 0.0
    %3528 = vmatprep.subr.mxu0 0.0
    %3529 = vmatpush1.msra.mxu0 0.0
    %3530 = vmatprep.subr.mxu0 0.0
    %3531 = vmatpush1.msra.mxu0 0.0
    %3532 = vmatprep.subr.mxu0 0.0
    %3533 = vmatpush1.msra.mxu0 0.0
    %3534 = vmatprep.subr.mxu0 0.0
    %3535 = vmatpush1.msra.mxu0 0.0
    %3536 = vmatprep.subr.mxu0 0.0
    %3537 = vmatpush1.msra.mxu0 0.0
    %3538 = vmatprep.subr.mxu0 0.0
    %3539 = vmatpush1.msra.mxu0 0.0
    %3540 = vmatprep.subr.mxu0 0.0
    %3541 = vmatpush1.msra.mxu0 0.0
    %3542 = vmatprep.subr.mxu0 0.0
    %3543 = vmatpush1.msra.mxu0 0.0
    %3544 = vmatprep.subr.mxu0 0.0
    %3545 = vmatpush1.msra.mxu0 0.0
    %3546 = vmatprep.subr.mxu0 0.0
    %3547 = vmatpush1.msra.mxu0 0.0
    %3548 = vmatprep.subr.mxu0 0.0
    %3549 = vmatpush1.msra.mxu0 0.0
    %3550 = vmatprep.mubr.f32.mxu0 0.0
    %v3551 = vand.u32 %v2673, 4294901760
    %3552 = vmatmul.mubr.f32.gmra.mrb[0].mxu0 %v3551
    %v3553 = vpop.f32.mrb[0].mxu0
    %v3554 = vadd.f32 %v3403, %v3553
    %v3555 = vpop.f32.mrb[0].mxu0
    %3556 = vdwg.mxu0
    %3557 = vmatprep.subr.mxu0 0.0
    %v3558 = vand.u32 %v80, 4294901760
    %v3559 = vsub.f32 %v80, %v3558
    %3560 = vmatpush1.msra.mxu0 %v3559
    %3561 = vmatprep.subr.mxu0 0.0
    %v3562 = vand.u32 %v81, 4294901760
    %v3563 = vsub.f32 %v81, %v3562
    %3564 = vmatpush1.msra.mxu0 %v3563
    %3565 = vmatprep.subr.mxu0 0.0
    %v3566 = vand.u32 %v82, 4294901760
    %v3567 = vsub.f32 %v82, %v3566
    %3568 = vmatpush1.msra.mxu0 %v3567
    %3569 = vmatprep.subr.mxu0 0.0
    %v3570 = vand.u32 %v83, 4294901760
    %v3571 = vsub.f32 %v83, %v3570
    %3572 = vmatpush1.msra.mxu0 %v3571
    %3573 = vmatprep.subr.mxu0 0.0
    %v3574 = vand.u32 %v84, 4294901760
    %v3575 = vsub.f32 %v84, %v3574
    %3576 = vmatpush1.msra.mxu0 %v3575
    %3577 = vmatprep.subr.mxu0 0.0
    %v3578 = vand.u32 %v85, 4294901760
    %v3579 = vsub.f32 %v85, %v3578
    %3580 = vmatpush1.msra.mxu0 %v3579
    %3581 = vmatprep.subr.mxu0 0.0
    %v3582 = vand.u32 %v86, 4294901760
    %v3583 = vsub.f32 %v86, %v3582
    %3584 = vmatpush1.msra.mxu0 %v3583
    %3585 = vmatprep.subr.mxu0 0.0
    %v3586 = vand.u32 %v87, 4294901760
    %v3587 = vsub.f32 %v87, %v3586
    %3588 = vmatpush1.msra.mxu0 %v3587
    %3589 = vmatprep.subr.mxu0 0.0
    %v3590 = vand.u32 %v88, 4294901760
    %v3591 = vsub.f32 %v88, %v3590
    %3592 = vmatpush1.msra.mxu0 %v3591
    %3593 = vmatprep.subr.mxu0 0.0
    %v3594 = vand.u32 %v89, 4294901760
    %v3595 = vsub.f32 %v89, %v3594
    %3596 = vmatpush1.msra.mxu0 %v3595
    %3597 = vmatprep.subr.mxu0 0.0
    %v3598 = vand.u32 %v90, 4294901760
    %v3599 = vsub.f32 %v90, %v3598
    %3600 = vmatpush1.msra.mxu0 %v3599
    %3601 = vmatprep.subr.mxu0 0.0
    %v3602 = vand.u32 %v91, 4294901760
    %v3603 = vsub.f32 %v91, %v3602
    %3604 = vmatpush1.msra.mxu0 %v3603
    %3605 = vmatprep.subr.mxu0 0.0
    %v3606 = vand.u32 %v92, 4294901760
    %v3607 = vsub.f32 %v92, %v3606
    %3608 = vmatpush1.msra.mxu0 %v3607
    %3609 = vmatprep.subr.mxu0 0.0
    %v3610 = vand.u32 %v93, 4294901760
    %v3611 = vsub.f32 %v93, %v3610
    %3612 = vmatpush1.msra.mxu0 %v3611
    %3613 = vmatprep.subr.mxu0 0.0
    %v3614 = vand.u32 %v94, 4294901760
    %v3615 = vsub.f32 %v94, %v3614
    %3616 = vmatpush1.msra.mxu0 %v3615
    %3617 = vmatprep.subr.mxu0 0.0
    %v3618 = vand.u32 %v95, 4294901760
    %v3619 = vsub.f32 %v95, %v3618
    %3620 = vmatpush1.msra.mxu0 %v3619
    %3621 = vmatprep.subr.mxu0 0.0
    %3622 = vmatpush1.msra.mxu0 0.0
    %3623 = vmatprep.subr.mxu0 0.0
    %3624 = vmatpush1.msra.mxu0 0.0
    %3625 = vmatprep.subr.mxu0 0.0
    %3626 = vmatpush1.msra.mxu0 0.0
    %3627 = vmatprep.subr.mxu0 0.0
    %3628 = vmatpush1.msra.mxu0 0.0
    %3629 = vmatprep.subr.mxu0 0.0
    %3630 = vmatpush1.msra.mxu0 0.0
    %3631 = vmatprep.subr.mxu0 0.0
    %3632 = vmatpush1.msra.mxu0 0.0
    %3633 = vmatprep.subr.mxu0 0.0
    %3634 = vmatpush1.msra.mxu0 0.0
    %3635 = vmatprep.subr.mxu0 0.0
    %3636 = vmatpush1.msra.mxu0 0.0
    %3637 = vmatprep.subr.mxu0 0.0
    %3638 = vmatpush1.msra.mxu0 0.0
    %3639 = vmatprep.subr.mxu0 0.0
    %3640 = vmatpush1.msra.mxu0 0.0
    %3641 = vmatprep.subr.mxu0 0.0
    %3642 = vmatpush1.msra.mxu0 0.0
    %3643 = vmatprep.subr.mxu0 0.0
    %3644 = vmatpush1.msra.mxu0 0.0
    %3645 = vmatprep.subr.mxu0 0.0
    %3646 = vmatpush1.msra.mxu0 0.0
    %3647 = vmatprep.subr.mxu0 0.0
    %3648 = vmatpush1.msra.mxu0 0.0
    %3649 = vmatprep.subr.mxu0 0.0
    %3650 = vmatpush1.msra.mxu0 0.0
    %3651 = vmatprep.subr.mxu0 0.0
    %3652 = vmatpush1.msra.mxu0 0.0
    %3653 = vmatprep.mubr.f32.mxu0 0.0
    %v3654 = vand.u32 %v2673, 4294901760
    %v3655 = vsub.f32 %v2673, %v3654
    %3656 = vmatmul.mubr.f32.gmra.mrb[0].mxu0 %v3655
    %v3657 = vpop.f32.mrb[0].mxu0
    %v3658 = vadd.f32 %v3554, %v3657
    %v3659 = vpop.f32.mrb[0].mxu0
    %3660 = vdwg.mxu0
    %3661 = vmatprep.subr.mxu0 0.0
    %v3662 = vand.u32 %v80, 4294901760
    %3663 = vmatpush1.msra.mxu0 %v3662
    %3664 = vmatprep.subr.mxu0 0.0
    %v3665 = vand.u32 %v81, 4294901760
    %3666 = vmatpush1.msra.mxu0 %v3665
    %3667 = vmatprep.subr.mxu0 0.0
    %v3668 = vand.u32 %v82, 4294901760
    %3669 = vmatpush1.msra.mxu0 %v3668
    %3670 = vmatprep.subr.mxu0 0.0
    %v3671 = vand.u32 %v83, 4294901760
    %3672 = vmatpush1.msra.mxu0 %v3671
    %3673 = vmatprep.subr.mxu0 0.0
    %v3674 = vand.u32 %v84, 4294901760
    %3675 = vmatpush1.msra.mxu0 %v3674
    %3676 = vmatprep.subr.mxu0 0.0
    %v3677 = vand.u32 %v85, 4294901760
    %3678 = vmatpush1.msra.mxu0 %v3677
    %3679 = vmatprep.subr.mxu0 0.0
    %v3680 = vand.u32 %v86, 4294901760
    %3681 = vmatpush1.msra.mxu0 %v3680
    %3682 = vmatprep.subr.mxu0 0.0
    %v3683 = vand.u32 %v87, 4294901760
    %3684 = vmatpush1.msra.mxu0 %v3683
    %3685 = vmatprep.subr.mxu0 0.0
    %v3686 = vand.u32 %v88, 4294901760
    %3687 = vmatpush1.msra.mxu0 %v3686
    %3688 = vmatprep.subr.mxu0 0.0
    %v3689 = vand.u32 %v89, 4294901760
    %3690 = vmatpush1.msra.mxu0 %v3689
    %3691 = vmatprep.subr.mxu0 0.0
    %v3692 = vand.u32 %v90, 4294901760
    %3693 = vmatpush1.msra.mxu0 %v3692
    %3694 = vmatprep.subr.mxu0 0.0
    %v3695 = vand.u32 %v91, 4294901760
    %3696 = vmatpush1.msra.mxu0 %v3695
    %3697 = vmatprep.subr.mxu0 0.0
    %v3698 = vand.u32 %v92, 4294901760
    %3699 = vmatpush1.msra.mxu0 %v3698
    %3700 = vmatprep.subr.mxu0 0.0
    %v3701 = vand.u32 %v93, 4294901760
    %3702 = vmatpush1.msra.mxu0 %v3701
    %3703 = vmatprep.subr.mxu0 0.0
    %v3704 = vand.u32 %v94, 4294901760
    %3705 = vmatpush1.msra.mxu0 %v3704
    %3706 = vmatprep.subr.mxu0 0.0
    %v3707 = vand.u32 %v95, 4294901760
    %3708 = vmatpush1.msra.mxu0 %v3707
    %3709 = vmatprep.subr.mxu0 0.0
    %3710 = vmatpush1.msra.mxu0 0.0
    %3711 = vmatprep.subr.mxu0 0.0
    %3712 = vmatpush1.msra.mxu0 0.0
    %3713 = vmatprep.subr.mxu0 0.0
    %3714 = vmatpush1.msra.mxu0 0.0
    %3715 = vmatprep.subr.mxu0 0.0
    %3716 = vmatpush1.msra.mxu0 0.0
    %3717 = vmatprep.subr.mxu0 0.0
    %3718 = vmatpush1.msra.mxu0 0.0
    %3719 = vmatprep.subr.mxu0 0.0
    %3720 = vmatpush1.msra.mxu0 0.0
    %3721 = vmatprep.subr.mxu0 0.0
    %3722 = vmatpush1.msra.mxu0 0.0
    %3723 = vmatprep.subr.mxu0 0.0
    %3724 = vmatpush1.msra.mxu0 0.0
    %3725 = vmatprep.subr.mxu0 0.0
    %3726 = vmatpush1.msra.mxu0 0.0
    %3727 = vmatprep.subr.mxu0 0.0
    %3728 = vmatpush1.msra.mxu0 0.0
    %3729 = vmatprep.subr.mxu0 0.0
    %3730 = vmatpush1.msra.mxu0 0.0
    %3731 = vmatprep.subr.mxu0 0.0
    %3732 = vmatpush1.msra.mxu0 0.0
    %3733 = vmatprep.subr.mxu0 0.0
    %3734 = vmatpush1.msra.mxu0 0.0
    %3735 = vmatprep.subr.mxu0 0.0
    %3736 = vmatpush1.msra.mxu0 0.0
    %3737 = vmatprep.subr.mxu0 0.0
    %3738 = vmatpush1.msra.mxu0 0.0
    %3739 = vmatprep.subr.mxu0 0.0
    %3740 = vmatpush1.msra.mxu0 0.0
    %3741 = vmatprep.mubr.f32.mxu0 0.0
    %v3742 = vand.u32 %v2673, 4294901760
    %v3743 = vsub.f32 %v2673, %v3742
    %v3744 = vand.u32 %v3743, 4294901760
    %3745 = vmatmul.mubr.f32.gmra.mrb[0].mxu0 %v3744
    %v3746 = vpop.f32.mrb[0].mxu0
    %v3747 = vadd.f32 %v3658, %v3746
    %v3748 = vpop.f32.mrb[0].mxu0
    %3749 = vdwg.mxu0
    %3750 = vmatprep.subr.mxu0 0.0
    %v3751 = vand.u32 %v80, 4294901760
    %v3752 = vsub.f32 %v80, %v3751
    %v3753 = vand.u32 %v3752, 4294901760
    %3754 = vmatpush1.msra.mxu0 %v3753
    %3755 = vmatprep.subr.mxu0 0.0
    %v3756 = vand.u32 %v81, 4294901760
    %v3757 = vsub.f32 %v81, %v3756
    %v3758 = vand.u32 %v3757, 4294901760
    %3759 = vmatpush1.msra.mxu0 %v3758
    %3760 = vmatprep.subr.mxu0 0.0
    %v3761 = vand.u32 %v82, 4294901760
    %v3762 = vsub.f32 %v82, %v3761
    %v3763 = vand.u32 %v3762, 4294901760
    %3764 = vmatpush1.msra.mxu0 %v3763
    %3765 = vmatprep.subr.mxu0 0.0
    %v3766 = vand.u32 %v83, 4294901760
    %v3767 = vsub.f32 %v83, %v3766
    %v3768 = vand.u32 %v3767, 4294901760
    %3769 = vmatpush1.msra.mxu0 %v3768
    %3770 = vmatprep.subr.mxu0 0.0
    %v3771 = vand.u32 %v84, 4294901760
    %v3772 = vsub.f32 %v84, %v3771
    %v3773 = vand.u32 %v3772, 4294901760
    %3774 = vmatpush1.msra.mxu0 %v3773
    %3775 = vmatprep.subr.mxu0 0.0
    %v3776 = vand.u32 %v85, 4294901760
    %v3777 = vsub.f32 %v85, %v3776
    %v3778 = vand.u32 %v3777, 4294901760
    %3779 = vmatpush1.msra.mxu0 %v3778
    %3780 = vmatprep.subr.mxu0 0.0
    %v3781 = vand.u32 %v86, 4294901760
    %v3782 = vsub.f32 %v86, %v3781
    %v3783 = vand.u32 %v3782, 4294901760
    %3784 = vmatpush1.msra.mxu0 %v3783
    %3785 = vmatprep.subr.mxu0 0.0
    %v3786 = vand.u32 %v87, 4294901760
    %v3787 = vsub.f32 %v87, %v3786
    %v3788 = vand.u32 %v3787, 4294901760
    %3789 = vmatpush1.msra.mxu0 %v3788
    %3790 = vmatprep.subr.mxu0 0.0
    %v3791 = vand.u32 %v88, 4294901760
    %v3792 = vsub.f32 %v88, %v3791
    %v3793 = vand.u32 %v3792, 4294901760
    %3794 = vmatpush1.msra.mxu0 %v3793
    %3795 = vmatprep.subr.mxu0 0.0
    %v3796 = vand.u32 %v89, 4294901760
    %v3797 = vsub.f32 %v89, %v3796
    %v3798 = vand.u32 %v3797, 4294901760
    %3799 = vmatpush1.msra.mxu0 %v3798
    %3800 = vmatprep.subr.mxu0 0.0
    %v3801 = vand.u32 %v90, 4294901760
    %v3802 = vsub.f32 %v90, %v3801
    %v3803 = vand.u32 %v3802, 4294901760
    %3804 = vmatpush1.msra.mxu0 %v3803
    %3805 = vmatprep.subr.mxu0 0.0
    %v3806 = vand.u32 %v91, 4294901760
    %v3807 = vsub.f32 %v91, %v3806
    %v3808 = vand.u32 %v3807, 4294901760
    %3809 = vmatpush1.msra.mxu0 %v3808
    %3810 = vmatprep.subr.mxu0 0.0
    %v3811 = vand.u32 %v92, 4294901760
    %v3812 = vsub.f32 %v92, %v3811
    %v3813 = vand.u32 %v3812, 4294901760
    %3814 = vmatpush1.msra.mxu0 %v3813
    %3815 = vmatprep.subr.mxu0 0.0
    %v3816 = vand.u32 %v93, 4294901760
    %v3817 = vsub.f32 %v93, %v3816
    %v3818 = vand.u32 %v3817, 4294901760
    %3819 = vmatpush1.msra.mxu0 %v3818
    %3820 = vmatprep.subr.mxu0 0.0
    %v3821 = vand.u32 %v94, 4294901760
    %v3822 = vsub.f32 %v94, %v3821
    %v3823 = vand.u32 %v3822, 4294901760
    %3824 = vmatpush1.msra.mxu0 %v3823
    %3825 = vmatprep.subr.mxu0 0.0
    %v3826 = vand.u32 %v95, 4294901760
    %v3827 = vsub.f32 %v95, %v3826
    %v3828 = vand.u32 %v3827, 4294901760
    %3829 = vmatpush1.msra.mxu0 %v3828
    %3830 = vmatprep.subr.mxu0 0.0
    %3831 = vmatpush1.msra.mxu0 0.0
    %3832 = vmatprep.subr.mxu0 0.0
    %3833 = vmatpush1.msra.mxu0 0.0
    %3834 = vmatprep.subr.mxu0 0.0
    %3835 = vmatpush1.msra.mxu0 0.0
    %3836 = vmatprep.subr.mxu0 0.0
    %3837 = vmatpush1.msra.mxu0 0.0
    %3838 = vmatprep.subr.mxu0 0.0
    %3839 = vmatpush1.msra.mxu0 0.0
    %3840 = vmatprep.subr.mxu0 0.0
    %3841 = vmatpush1.msra.mxu0 0.0
    %3842 = vmatprep.subr.mxu0 0.0
    %3843 = vmatpush1.msra.mxu0 0.0
    %3844 = vmatprep.subr.mxu0 0.0
    %3845 = vmatpush1.msra.mxu0 0.0
    %3846 = vmatprep.subr.mxu0 0.0
    %3847 = vmatpush1.msra.mxu0 0.0
    %3848 = vmatprep.subr.mxu0 0.0
    %3849 = vmatpush1.msra.mxu0 0.0
    %3850 = vmatprep.subr.mxu0 0.0
    %3851 = vmatpush1.msra.mxu0 0.0
    %3852 = vmatprep.subr.mxu0 0.0
    %3853 = vmatpush1.msra.mxu0 0.0
    %3854 = vmatprep.subr.mxu0 0.0
    %3855 = vmatpush1.msra.mxu0 0.0
    %3856 = vmatprep.subr.mxu0 0.0
    %3857 = vmatpush1.msra.mxu0 0.0
    %3858 = vmatprep.subr.mxu0 0.0
    %3859 = vmatpush1.msra.mxu0 0.0
    %3860 = vmatprep.subr.mxu0 0.0
    %3861 = vmatpush1.msra.mxu0 0.0
    %3862 = vmatprep.mubr.f32.mxu0 0.0
    %v3863 = vand.u32 %v2673, 4294901760
    %3864 = vmatmul.mubr.f32.gmra.mrb[0].mxu0 %v3863
    %v3865 = vpop.f32.mrb[0].mxu0
    %v3866 = vadd.f32 %v3747, %v3865
    %v3867 = vpop.f32.mrb[0].mxu0
    %3868 = vdwg.mxu0
    %3869 = vmatprep.subr.mxu0 0.0
    %v3870 = vand.u32 %v80, 4294901760
    %3871 = vmatpush1.msra.mxu0 %v3870
    %3872 = vmatprep.subr.mxu0 0.0
    %v3873 = vand.u32 %v81, 4294901760
    %3874 = vmatpush1.msra.mxu0 %v3873
    %3875 = vmatprep.subr.mxu0 0.0
    %v3876 = vand.u32 %v82, 4294901760
    %3877 = vmatpush1.msra.mxu0 %v3876
    %3878 = vmatprep.subr.mxu0 0.0
    %v3879 = vand.u32 %v83, 4294901760
    %3880 = vmatpush1.msra.mxu0 %v3879
    %3881 = vmatprep.subr.mxu0 0.0
    %v3882 = vand.u32 %v84, 4294901760
    %3883 = vmatpush1.msra.mxu0 %v3882
    %3884 = vmatprep.subr.mxu0 0.0
    %v3885 = vand.u32 %v85, 4294901760
    %3886 = vmatpush1.msra.mxu0 %v3885
    %3887 = vmatprep.subr.mxu0 0.0
    %v3888 = vand.u32 %v86, 4294901760
    %3889 = vmatpush1.msra.mxu0 %v3888
    %3890 = vmatprep.subr.mxu0 0.0
    %v3891 = vand.u32 %v87, 4294901760
    %3892 = vmatpush1.msra.mxu0 %v3891
    %3893 = vmatprep.subr.mxu0 0.0
    %v3894 = vand.u32 %v88, 4294901760
    %3895 = vmatpush1.msra.mxu0 %v3894
    %3896 = vmatprep.subr.mxu0 0.0
    %v3897 = vand.u32 %v89, 4294901760
    %3898 = vmatpush1.msra.mxu0 %v3897
    %3899 = vmatprep.subr.mxu0 0.0
    %v3900 = vand.u32 %v90, 4294901760
    %3901 = vmatpush1.msra.mxu0 %v3900
    %3902 = vmatprep.subr.mxu0 0.0
    %v3903 = vand.u32 %v91, 4294901760
    %3904 = vmatpush1.msra.mxu0 %v3903
    %3905 = vmatprep.subr.mxu0 0.0
    %v3906 = vand.u32 %v92, 4294901760
    %3907 = vmatpush1.msra.mxu0 %v3906
    %3908 = vmatprep.subr.mxu0 0.0
    %v3909 = vand.u32 %v93, 4294901760
    %3910 = vmatpush1.msra.mxu0 %v3909
    %3911 = vmatprep.subr.mxu0 0.0
    %v3912 = vand.u32 %v94, 4294901760
    %3913 = vmatpush1.msra.mxu0 %v3912
    %3914 = vmatprep.subr.mxu0 0.0
    %v3915 = vand.u32 %v95, 4294901760
    %3916 = vmatpush1.msra.mxu0 %v3915
    %3917 = vmatprep.subr.mxu0 0.0
    %3918 = vmatpush1.msra.mxu0 0.0
    %3919 = vmatprep.subr.mxu0 0.0
    %3920 = vmatpush1.msra.mxu0 0.0
    %3921 = vmatprep.subr.mxu0 0.0
    %3922 = vmatpush1.msra.mxu0 0.0
    %3923 = vmatprep.subr.mxu0 0.0
    %3924 = vmatpush1.msra.mxu0 0.0
    %3925 = vmatprep.subr.mxu0 0.0
    %3926 = vmatpush1.msra.mxu0 0.0
    %3927 = vmatprep.subr.mxu0 0.0
    %3928 = vmatpush1.msra.mxu0 0.0
    %3929 = vmatprep.subr.mxu0 0.0
    %3930 = vmatpush1.msra.mxu0 0.0
    %3931 = vmatprep.subr.mxu0 0.0
    %3932 = vmatpush1.msra.mxu0 0.0
    %3933 = vmatprep.subr.mxu0 0.0
    %3934 = vmatpush1.msra.mxu0 0.0
    %3935 = vmatprep.subr.mxu0 0.0
    %3936 = vmatpush1.msra.mxu0 0.0
    %3937 = vmatprep.subr.mxu0 0.0
    %3938 = vmatpush1.msra.mxu0 0.0
    %3939 = vmatprep.subr.mxu0 0.0
    %3940 = vmatpush1.msra.mxu0 0.0
    %3941 = vmatprep.subr.mxu0 0.0
    %3942 = vmatpush1.msra.mxu0 0.0
    %3943 = vmatprep.subr.mxu0 0.0
    %3944 = vmatpush1.msra.mxu0 0.0
    %3945 = vmatprep.subr.mxu0 0.0
    %3946 = vmatpush1.msra.mxu0 0.0
    %3947 = vmatprep.subr.mxu0 0.0
    %3948 = vmatpush1.msra.mxu0 0.0
    %3949 = vmatprep.mubr.f32.mxu0 0.0
    %v3950 = vand.u32 %v2673, 4294901760
    %3951 = vmatmul.mubr.f32.gmra.mrb[0].mxu0 %v3950
    %v3952 = vpop.f32.mrb[0].mxu0
    %v3953 = vadd.f32 %v3866, %v3952
    %v3954 = vpop.f32.mrb[0].mxu0
    %3955 = vdwg.mxu0
    %v3956 = vmul.f32 %v3312, %v62
    %v3957 = vmul.f32 %v3953, %v63
    %v3958 = vadd.f32 %v3956, %v3957
    %s3959 = scalar_lea.vmem [#allocation8], 4
    %3960 = vst [vmem:[%s3959] sm:$0x3] %v3958
    %s3961 = scalar_lea.vmem [#allocation2], 6
    %v3962 = vld [vmem:[%s3961] sm:$0x3]
    %3963 = vmatprep.subr.mxu0 0.0
    %v3964 = vand.u32 %v64, 4294901760
    %3965 = vmatpush1.msra.mxu0 %v3964
    %3966 = vmatprep.subr.mxu0 0.0
    %v3967 = vand.u32 %v65, 4294901760
    %3968 = vmatpush1.msra.mxu0 %v3967
    %3969 = vmatprep.subr.mxu0 0.0
    %v3970 = vand.u32 %v66, 4294901760
    %3971 = vmatpush1.msra.mxu0 %v3970
    %3972 = vmatprep.subr.mxu0 0.0
    %v3973 = vand.u32 %v67, 4294901760
    %3974 = vmatpush1.msra.mxu0 %v3973
    %3975 = vmatprep.subr.mxu0 0.0
    %v3976 = vand.u32 %v68, 4294901760
    %3977 = vmatpush1.msra.mxu0 %v3976
    %3978 = vmatprep.subr.mxu0 0.0
    %v3979 = vand.u32 %v69, 4294901760
    %3980 = vmatpush1.msra.mxu0 %v3979
    %3981 = vmatprep.subr.mxu0 0.0
    %v3982 = vand.u32 %v70, 4294901760
    %3983 = vmatpush1.msra.mxu0 %v3982
    %3984 = vmatprep.subr.mxu0 0.0
    %v3985 = vand.u32 %v71, 4294901760
    %3986 = vmatpush1.msra.mxu0 %v3985
    %3987 = vmatprep.subr.mxu0 0.0
    %v3988 = vand.u32 %v72, 4294901760
    %3989 = vmatpush1.msra.mxu0 %v3988
    %3990 = vmatprep.subr.mxu0 0.0
    %v3991 = vand.u32 %v73, 4294901760
    %3992 = vmatpush1.msra.mxu0 %v3991
    %3993 = vmatprep.subr.mxu0 0.0
    %v3994 = vand.u32 %v74, 4294901760
    %3995 = vmatpush1.msra.mxu0 %v3994
    %3996 = vmatprep.subr.mxu0 0.0
    %v3997 = vand.u32 %v75, 4294901760
    %3998 = vmatpush1.msra.mxu0 %v3997
    %3999 = vmatprep.subr.mxu0 0.0
    %v4000 = vand.u32 %v76, 4294901760
    %4001 = vmatpush1.msra.mxu0 %v4000
    %4002 = vmatprep.subr.mxu0 0.0
    %v4003 = vand.u32 %v77, 4294901760
    %4004 = vmatpush1.msra.mxu0 %v4003
    %4005 = vmatprep.subr.mxu0 0.0
    %v4006 = vand.u32 %v78, 4294901760
    %4007 = vmatpush1.msra.mxu0 %v4006
    %4008 = vmatprep.subr.mxu0 0.0
    %v4009 = vand.u32 %v79, 4294901760
    %4010 = vmatpush1.msra.mxu0 %v4009
    %4011 = vmatprep.subr.mxu0 0.0
    %4012 = vmatpush1.msra.mxu0 0.0
    %4013 = vmatprep.subr.mxu0 0.0
    %4014 = vmatpush1.msra.mxu0 0.0
    %4015 = vmatprep.subr.mxu0 0.0
    %4016 = vmatpush1.msra.mxu0 0.0
    %4017 = vmatprep.subr.mxu0 0.0
    %4018 = vmatpush1.msra.mxu0 0.0
    %4019 = vmatprep.subr.mxu0 0.0
    %4020 = vmatpush1.msra.mxu0 0.0
    %4021 = vmatprep.subr.mxu0 0.0
    %4022 = vmatpush1.msra.mxu0 0.0
    %4023 = vmatprep.subr.mxu0 0.0
    %4024 = vmatpush1.msra.mxu0 0.0
    %4025 = vmatprep.subr.mxu0 0.0
    %4026 = vmatpush1.msra.mxu0 0.0
    %4027 = vmatprep.subr.mxu0 0.0
    %4028 = vmatpush1.msra.mxu0 0.0
    %4029 = vmatprep.subr.mxu0 0.0
    %4030 = vmatpush1.msra.mxu0 0.0
    %4031 = vmatprep.subr.mxu0 0.0
    %4032 = vmatpush1.msra.mxu0 0.0
    %4033 = vmatprep.subr.mxu0 0.0
    %4034 = vmatpush1.msra.mxu0 0.0
    %4035 = vmatprep.subr.mxu0 0.0
    %4036 = vmatpush1.msra.mxu0 0.0
    %4037 = vmatprep.subr.mxu0 0.0
    %4038 = vmatpush1.msra.mxu0 0.0
    %4039 = vmatprep.subr.mxu0 0.0
    %4040 = vmatpush1.msra.mxu0 0.0
    %4041 = vmatprep.subr.mxu0 0.0
    %4042 = vmatpush1.msra.mxu0 0.0
    %4043 = vmatprep.mubr.f32.mxu0 0.0
    %v4044 = vand.u32 %v3962, 4294901760
    %v4045 = vsub.f32 %v3962, %v4044
    %v4046 = vand.u32 %v4045, 4294901760
    %v4047 = vsub.f32 %v4045, %v4046
    %v4048 = vand.u32 %v4047, 4294901760
    %4049 = vmatmul.mubr.f32.gmra.mrb[0].mxu0 %v4048
    %v4050 = vpop.f32.mrb[0].mxu0
    %v4051 = vadd.f32 0.0, %v4050
    %v4052 = vpop.f32.mrb[0].mxu0
    %4053 = vdwg.mxu0
    %4054 = vmatprep.subr.mxu0 0.0
    %v4055 = vand.u32 %v64, 4294901760
    %v4056 = vsub.f32 %v64, %v4055
    %v4057 = vand.u32 %v4056, 4294901760
    %v4058 = vsub.f32 %v4056, %v4057
    %v4059 = vand.u32 %v4058, 4294901760
    %4060 = vmatpush1.msra.mxu0 %v4059
    %4061 = vmatprep.subr.mxu0 0.0
    %v4062 = vand.u32 %v65, 4294901760
    %v4063 = vsub.f32 %v65, %v4062
    %v4064 = vand.u32 %v4063, 4294901760
    %v4065 = vsub.f32 %v4063, %v4064
    %v4066 = vand.u32 %v4065, 4294901760
    %4067 = vmatpush1.msra.mxu0 %v4066
    %4068 = vmatprep.subr.mxu0 0.0
    %v4069 = vand.u32 %v66, 4294901760
    %v4070 = vsub.f32 %v66, %v4069
    %v4071 = vand.u32 %v4070, 4294901760
    %v4072 = vsub.f32 %v4070, %v4071
    %v4073 = vand.u32 %v4072, 4294901760
    %4074 = vmatpush1.msra.mxu0 %v4073
    %4075 = vmatprep.subr.mxu0 0.0
    %v4076 = vand.u32 %v67, 4294901760
    %v4077 = vsub.f32 %v67, %v4076
    %v4078 = vand.u32 %v4077, 4294901760
    %v4079 = vsub.f32 %v4077, %v4078
    %v4080 = vand.u32 %v4079, 4294901760
    %4081 = vmatpush1.msra.mxu0 %v4080
    %4082 = vmatprep.subr.mxu0 0.0
    %v4083 = vand.u32 %v68, 4294901760
    %v4084 = vsub.f32 %v68, %v4083
    %v4085 = vand.u32 %v4084, 4294901760
    %v4086 = vsub.f32 %v4084, %v4085
    %v4087 = vand.u32 %v4086, 4294901760
    %4088 = vmatpush1.msra.mxu0 %v4087
    %4089 = vmatprep.subr.mxu0 0.0
    %v4090 = vand.u32 %v69, 4294901760
    %v4091 = vsub.f32 %v69, %v4090
    %v4092 = vand.u32 %v4091, 4294901760
    %v4093 = vsub.f32 %v4091, %v4092
    %v4094 = vand.u32 %v4093, 4294901760
    %4095 = vmatpush1.msra.mxu0 %v4094
    %4096 = vmatprep.subr.mxu0 0.0
    %v4097 = vand.u32 %v70, 4294901760
    %v4098 = vsub.f32 %v70, %v4097
    %v4099 = vand.u32 %v4098, 4294901760
    %v4100 = vsub.f32 %v4098, %v4099
    %v4101 = vand.u32 %v4100, 4294901760
    %4102 = vmatpush1.msra.mxu0 %v4101
    %4103 = vmatprep.subr.mxu0 0.0
    %v4104 = vand.u32 %v71, 4294901760
    %v4105 = vsub.f32 %v71, %v4104
    %v4106 = vand.u32 %v4105, 4294901760
    %v4107 = vsub.f32 %v4105, %v4106
    %v4108 = vand.u32 %v4107, 4294901760
    %4109 = vmatpush1.msra.mxu0 %v4108
    %4110 = vmatprep.subr.mxu0 0.0
    %v4111 = vand.u32 %v72, 4294901760
    %v4112 = vsub.f32 %v72, %v4111
    %v4113 = vand.u32 %v4112, 4294901760
    %v4114 = vsub.f32 %v4112, %v4113
    %v4115 = vand.u32 %v4114, 4294901760
    %4116 = vmatpush1.msra.mxu0 %v4115
    %4117 = vmatprep.subr.mxu0 0.0
    %v4118 = vand.u32 %v73, 4294901760
    %v4119 = vsub.f32 %v73, %v4118
    %v4120 = vand.u32 %v4119, 4294901760
    %v4121 = vsub.f32 %v4119, %v4120
    %v4122 = vand.u32 %v4121, 4294901760
    %4123 = vmatpush1.msra.mxu0 %v4122
    %4124 = vmatprep.subr.mxu0 0.0
    %v4125 = vand.u32 %v74, 4294901760
    %v4126 = vsub.f32 %v74, %v4125
    %v4127 = vand.u32 %v4126, 4294901760
    %v4128 = vsub.f32 %v4126, %v4127
    %v4129 = vand.u32 %v4128, 4294901760
    %4130 = vmatpush1.msra.mxu0 %v4129
    %4131 = vmatprep.subr.mxu0 0.0
    %v4132 = vand.u32 %v75, 4294901760
    %v4133 = vsub.f32 %v75, %v4132
    %v4134 = vand.u32 %v4133, 4294901760
    %v4135 = vsub.f32 %v4133, %v4134
    %v4136 = vand.u32 %v4135, 4294901760
    %4137 = vmatpush1.msra.mxu0 %v4136
    %4138 = vmatprep.subr.mxu0 0.0
    %v4139 = vand.u32 %v76, 4294901760
    %v4140 = vsub.f32 %v76, %v4139
    %v4141 = vand.u32 %v4140, 4294901760
    %v4142 = vsub.f32 %v4140, %v4141
    %v4143 = vand.u32 %v4142, 4294901760
    %4144 = vmatpush1.msra.mxu0 %v4143
    %4145 = vmatprep.subr.mxu0 0.0
    %v4146 = vand.u32 %v77, 4294901760
    %v4147 = vsub.f32 %v77, %v4146
    %v4148 = vand.u32 %v4147, 4294901760
    %v4149 = vsub.f32 %v4147, %v4148
    %v4150 = vand.u32 %v4149, 4294901760
    %4151 = vmatpush1.msra.mxu0 %v4150
    %4152 = vmatprep.subr.mxu0 0.0
    %v4153 = vand.u32 %v78, 4294901760
    %v4154 = vsub.f32 %v78, %v4153
    %v4155 = vand.u32 %v4154, 4294901760
    %v4156 = vsub.f32 %v4154, %v4155
    %v4157 = vand.u32 %v4156, 4294901760
    %4158 = vmatpush1.msra.mxu0 %v4157
    %4159 = vmatprep.subr.mxu0 0.0
    %v4160 = vand.u32 %v79, 4294901760
    %v4161 = vsub.f32 %v79, %v4160
    %v4162 = vand.u32 %v4161, 4294901760
    %v4163 = vsub.f32 %v4161, %v4162
    %v4164 = vand.u32 %v4163, 4294901760
    %4165 = vmatpush1.msra.mxu0 %v4164
    %4166 = vmatprep.subr.mxu0 0.0
    %4167 = vmatpush1.msra.mxu0 0.0
    %4168 = vmatprep.subr.mxu0 0.0
    %4169 = vmatpush1.msra.mxu0 0.0
    %4170 = vmatprep.subr.mxu0 0.0
    %4171 = vmatpush1.msra.mxu0 0.0
    %4172 = vmatprep.subr.mxu0 0.0
    %4173 = vmatpush1.msra.mxu0 0.0
    %4174 = vmatprep.subr.mxu0 0.0
    %4175 = vmatpush1.msra.mxu0 0.0
    %4176 = vmatprep.subr.mxu0 0.0
    %4177 = vmatpush1.msra.mxu0 0.0
    %4178 = vmatprep.subr.mxu0 0.0
    %4179 = vmatpush1.msra.mxu0 0.0
    %4180 = vmatprep.subr.mxu0 0.0
    %4181 = vmatpush1.msra.mxu0 0.0
    %4182 = vmatprep.subr.mxu0 0.0
    %4183 = vmatpush1.msra.mxu0 0.0
    %4184 = vmatprep.subr.mxu0 0.0
    %4185 = vmatpush1.msra.mxu0 0.0
    %4186 = vmatprep.subr.mxu0 0.0
    %4187 = vmatpush1.msra.mxu0 0.0
    %4188 = vmatprep.subr.mxu0 0.0
    %4189 = vmatpush1.msra.mxu0 0.0
    %4190 = vmatprep.subr.mxu0 0.0
    %4191 = vmatpush1.msra.mxu0 0.0
    %4192 = vmatprep.subr.mxu0 0.0
    %4193 = vmatpush1.msra.mxu0 0.0
    %4194 = vmatprep.subr.mxu0 0.0
    %4195 = vmatpush1.msra.mxu0 0.0
    %4196 = vmatprep.subr.mxu0 0.0
    %4197 = vmatpush1.msra.mxu0 0.0
    %4198 = vmatprep.mubr.f32.mxu0 0.0
    %v4199 = vand.u32 %v3962, 4294901760
    %4200 = vmatmul.mubr.f32.gmra.mrb[0].mxu0 %v4199
    %v4201 = vpop.f32.mrb[0].mxu0
    %v4202 = vadd.f32 %v4051, %v4201
    %v4203 = vpop.f32.mrb[0].mxu0
    %4204 = vdwg.mxu0
    %4205 = vmatprep.subr.mxu0 0.0
    %v4206 = vand.u32 %v64, 4294901760
    %v4207 = vsub.f32 %v64, %v4206
    %4208 = vmatpush1.msra.mxu0 %v4207
    %4209 = vmatprep.subr.mxu0 0.0
    %v4210 = vand.u32 %v65, 4294901760
    %v4211 = vsub.f32 %v65, %v4210
    %4212 = vmatpush1.msra.mxu0 %v4211
    %4213 = vmatprep.subr.mxu0 0.0
    %v4214 = vand.u32 %v66, 4294901760
    %v4215 = vsub.f32 %v66, %v4214
    %4216 = vmatpush1.msra.mxu0 %v4215
    %4217 = vmatprep.subr.mxu0 0.0
    %v4218 = vand.u32 %v67, 4294901760
    %v4219 = vsub.f32 %v67, %v4218
    %4220 = vmatpush1.msra.mxu0 %v4219
    %4221 = vmatprep.subr.mxu0 0.0
    %v4222 = vand.u32 %v68, 4294901760
    %v4223 = vsub.f32 %v68, %v4222
    %4224 = vmatpush1.msra.mxu0 %v4223
    %4225 = vmatprep.subr.mxu0 0.0
    %v4226 = vand.u32 %v69, 4294901760
    %v4227 = vsub.f32 %v69, %v4226
    %4228 = vmatpush1.msra.mxu0 %v4227
    %4229 = vmatprep.subr.mxu0 0.0
    %v4230 = vand.u32 %v70, 4294901760
    %v4231 = vsub.f32 %v70, %v4230
    %4232 = vmatpush1.msra.mxu0 %v4231
    %4233 = vmatprep.subr.mxu0 0.0
    %v4234 = vand.u32 %v71, 4294901760
    %v4235 = vsub.f32 %v71, %v4234
    %4236 = vmatpush1.msra.mxu0 %v4235
    %4237 = vmatprep.subr.mxu0 0.0
    %v4238 = vand.u32 %v72, 4294901760
    %v4239 = vsub.f32 %v72, %v4238
    %4240 = vmatpush1.msra.mxu0 %v4239
    %4241 = vmatprep.subr.mxu0 0.0
    %v4242 = vand.u32 %v73, 4294901760
    %v4243 = vsub.f32 %v73, %v4242
    %4244 = vmatpush1.msra.mxu0 %v4243
    %4245 = vmatprep.subr.mxu0 0.0
    %v4246 = vand.u32 %v74, 4294901760
    %v4247 = vsub.f32 %v74, %v4246
    %4248 = vmatpush1.msra.mxu0 %v4247
    %4249 = vmatprep.subr.mxu0 0.0
    %v4250 = vand.u32 %v75, 4294901760
    %v4251 = vsub.f32 %v75, %v4250
    %4252 = vmatpush1.msra.mxu0 %v4251
    %4253 = vmatprep.subr.mxu0 0.0
    %v4254 = vand.u32 %v76, 4294901760
    %v4255 = vsub.f32 %v76, %v4254
    %4256 = vmatpush1.msra.mxu0 %v4255
    %4257 = vmatprep.subr.mxu0 0.0
    %v4258 = vand.u32 %v77, 4294901760
    %v4259 = vsub.f32 %v77, %v4258
    %4260 = vmatpush1.msra.mxu0 %v4259
    %4261 = vmatprep.subr.mxu0 0.0
    %v4262 = vand.u32 %v78, 4294901760
    %v4263 = vsub.f32 %v78, %v4262
    %4264 = vmatpush1.msra.mxu0 %v4263
    %4265 = vmatprep.subr.mxu0 0.0
    %v4266 = vand.u32 %v79, 4294901760
    %v4267 = vsub.f32 %v79, %v4266
    %4268 = vmatpush1.msra.mxu0 %v4267
    %4269 = vmatprep.subr.mxu0 0.0
    %4270 = vmatpush1.msra.mxu0 0.0
    %4271 = vmatprep.subr.mxu0 0.0
    %4272 = vmatpush1.msra.mxu0 0.0
    %4273 = vmatprep.subr.mxu0 0.0
    %4274 = vmatpush1.msra.mxu0 0.0
    %4275 = vmatprep.subr.mxu0 0.0
    %4276 = vmatpush1.msra.mxu0 0.0
    %4277 = vmatprep.subr.mxu0 0.0
    %4278 = vmatpush1.msra.mxu0 0.0
    %4279 = vmatprep.subr.mxu0 0.0
    %4280 = vmatpush1.msra.mxu0 0.0
    %4281 = vmatprep.subr.mxu0 0.0
    %4282 = vmatpush1.msra.mxu0 0.0
    %4283 = vmatprep.subr.mxu0 0.0
    %4284 = vmatpush1.msra.mxu0 0.0
    %4285 = vmatprep.subr.mxu0 0.0
    %4286 = vmatpush1.msra.mxu0 0.0
    %4287 = vmatprep.subr.mxu0 0.0
    %4288 = vmatpush1.msra.mxu0 0.0
    %4289 = vmatprep.subr.mxu0 0.0
    %4290 = vmatpush1.msra.mxu0 0.0
    %4291 = vmatprep.subr.mxu0 0.0
    %4292 = vmatpush1.msra.mxu0 0.0
    %4293 = vmatprep.subr.mxu0 0.0
    %4294 = vmatpush1.msra.mxu0 0.0
    %4295 = vmatprep.subr.mxu0 0.0
    %4296 = vmatpush1.msra.mxu0 0.0
    %4297 = vmatprep.subr.mxu0 0.0
    %4298 = vmatpush1.msra.mxu0 0.0
    %4299 = vmatprep.subr.mxu0 0.0
    %4300 = vmatpush1.msra.mxu0 0.0
    %4301 = vmatprep.mubr.f32.mxu0 0.0
    %v4302 = vand.u32 %v3962, 4294901760
    %v4303 = vsub.f32 %v3962, %v4302
    %4304 = vmatmul.mubr.f32.gmra.mrb[0].mxu0 %v4303
    %v4305 = vpop.f32.mrb[0].mxu0
    %v4306 = vadd.f32 %v4202, %v4305
    %v4307 = vpop.f32.mrb[0].mxu0
    %4308 = vdwg.mxu0
    %4309 = vmatprep.subr.mxu0 0.0
    %v4310 = vand.u32 %v64, 4294901760
    %4311 = vmatpush1.msra.mxu0 %v4310
    %4312 = vmatprep.subr.mxu0 0.0
    %v4313 = vand.u32 %v65, 4294901760
    %4314 = vmatpush1.msra.mxu0 %v4313
    %4315 = vmatprep.subr.mxu0 0.0
    %v4316 = vand.u32 %v66, 4294901760
    %4317 = vmatpush1.msra.mxu0 %v4316
    %4318 = vmatprep.subr.mxu0 0.0
    %v4319 = vand.u32 %v67, 4294901760
    %4320 = vmatpush1.msra.mxu0 %v4319
    %4321 = vmatprep.subr.mxu0 0.0
    %v4322 = vand.u32 %v68, 4294901760
    %4323 = vmatpush1.msra.mxu0 %v4322
    %4324 = vmatprep.subr.mxu0 0.0
    %v4325 = vand.u32 %v69, 4294901760
    %4326 = vmatpush1.msra.mxu0 %v4325
    %4327 = vmatprep.subr.mxu0 0.0
    %v4328 = vand.u32 %v70, 4294901760
    %4329 = vmatpush1.msra.mxu0 %v4328
    %4330 = vmatprep.subr.mxu0 0.0
    %v4331 = vand.u32 %v71, 4294901760
    %4332 = vmatpush1.msra.mxu0 %v4331
    %4333 = vmatprep.subr.mxu0 0.0
    %v4334 = vand.u32 %v72, 4294901760
    %4335 = vmatpush1.msra.mxu0 %v4334
    %4336 = vmatprep.subr.mxu0 0.0
    %v4337 = vand.u32 %v73, 4294901760
    %4338 = vmatpush1.msra.mxu0 %v4337
    %4339 = vmatprep.subr.mxu0 0.0
    %v4340 = vand.u32 %v74, 4294901760
    %4341 = vmatpush1.msra.mxu0 %v4340
    %4342 = vmatprep.subr.mxu0 0.0
    %v4343 = vand.u32 %v75, 4294901760
    %4344 = vmatpush1.msra.mxu0 %v4343
    %4345 = vmatprep.subr.mxu0 0.0
    %v4346 = vand.u32 %v76, 4294901760
    %4347 = vmatpush1.msra.mxu0 %v4346
    %4348 = vmatprep.subr.mxu0 0.0
    %v4349 = vand.u32 %v77, 4294901760
    %4350 = vmatpush1.msra.mxu0 %v4349
    %4351 = vmatprep.subr.mxu0 0.0
    %v4352 = vand.u32 %v78, 4294901760
    %4353 = vmatpush1.msra.mxu0 %v4352
    %4354 = vmatprep.subr.mxu0 0.0
    %v4355 = vand.u32 %v79, 4294901760
    %4356 = vmatpush1.msra.mxu0 %v4355
    %4357 = vmatprep.subr.mxu0 0.0
    %4358 = vmatpush1.msra.mxu0 0.0
    %4359 = vmatprep.subr.mxu0 0.0
    %4360 = vmatpush1.msra.mxu0 0.0
    %4361 = vmatprep.subr.mxu0 0.0
    %4362 = vmatpush1.msra.mxu0 0.0
    %4363 = vmatprep.subr.mxu0 0.0
    %4364 = vmatpush1.msra.mxu0 0.0
    %4365 = vmatprep.subr.mxu0 0.0
    %4366 = vmatpush1.msra.mxu0 0.0
    %4367 = vmatprep.subr.mxu0 0.0
    %4368 = vmatpush1.msra.mxu0 0.0
    %4369 = vmatprep.subr.mxu0 0.0
    %4370 = vmatpush1.msra.mxu0 0.0
    %4371 = vmatprep.subr.mxu0 0.0
    %4372 = vmatpush1.msra.mxu0 0.0
    %4373 = vmatprep.subr.mxu0 0.0
    %4374 = vmatpush1.msra.mxu0 0.0
    %4375 = vmatprep.subr.mxu0 0.0
    %4376 = vmatpush1.msra.mxu0 0.0
    %4377 = vmatprep.subr.mxu0 0.0
    %4378 = vmatpush1.msra.mxu0 0.0
    %4379 = vmatprep.subr.mxu0 0.0
    %4380 = vmatpush1.msra.mxu0 0.0
    %4381 = vmatprep.subr.mxu0 0.0
    %4382 = vmatpush1.msra.mxu0 0.0
    %4383 = vmatprep.subr.mxu0 0.0
    %4384 = vmatpush1.msra.mxu0 0.0
    %4385 = vmatprep.subr.mxu0 0.0
    %4386 = vmatpush1.msra.mxu0 0.0
    %4387 = vmatprep.subr.mxu0 0.0
    %4388 = vmatpush1.msra.mxu0 0.0
    %4389 = vmatprep.mubr.f32.mxu0 0.0
    %v4390 = vand.u32 %v3962, 4294901760
    %v4391 = vsub.f32 %v3962, %v4390
    %v4392 = vand.u32 %v4391, 4294901760
    %4393 = vmatmul.mubr.f32.gmra.mrb[0].mxu0 %v4392
    %v4394 = vpop.f32.mrb[0].mxu0
    %v4395 = vadd.f32 %v4306, %v4394
    %v4396 = vpop.f32.mrb[0].mxu0
    %4397 = vdwg.mxu0
    %4398 = vmatprep.subr.mxu0 0.0
    %v4399 = vand.u32 %v64, 4294901760
    %v4400 = vsub.f32 %v64, %v4399
    %v4401 = vand.u32 %v4400, 4294901760
    %4402 = vmatpush1.msra.mxu0 %v4401
    %4403 = vmatprep.subr.mxu0 0.0
    %v4404 = vand.u32 %v65, 4294901760
    %v4405 = vsub.f32 %v65, %v4404
    %v4406 = vand.u32 %v4405, 4294901760
    %4407 = vmatpush1.msra.mxu0 %v4406
    %4408 = vmatprep.subr.mxu0 0.0
    %v4409 = vand.u32 %v66, 4294901760
    %v4410 = vsub.f32 %v66, %v4409
    %v4411 = vand.u32 %v4410, 4294901760
    %4412 = vmatpush1.msra.mxu0 %v4411
    %4413 = vmatprep.subr.mxu0 0.0
    %v4414 = vand.u32 %v67, 4294901760
    %v4415 = vsub.f32 %v67, %v4414
    %v4416 = vand.u32 %v4415, 4294901760
    %4417 = vmatpush1.msra.mxu0 %v4416
    %4418 = vmatprep.subr.mxu0 0.0
    %v4419 = vand.u32 %v68, 4294901760
    %v4420 = vsub.f32 %v68, %v4419
    %v4421 = vand.u32 %v4420, 4294901760
    %4422 = vmatpush1.msra.mxu0 %v4421
    %4423 = vmatprep.subr.mxu0 0.0
    %v4424 = vand.u32 %v69, 4294901760
    %v4425 = vsub.f32 %v69, %v4424
    %v4426 = vand.u32 %v4425, 4294901760
    %4427 = vmatpush1.msra.mxu0 %v4426
    %4428 = vmatprep.subr.mxu0 0.0
    %v4429 = vand.u32 %v70, 4294901760
    %v4430 = vsub.f32 %v70, %v4429
    %v4431 = vand.u32 %v4430, 4294901760
    %4432 = vmatpush1.msra.mxu0 %v4431
    %4433 = vmatprep.subr.mxu0 0.0
    %v4434 = vand.u32 %v71, 4294901760
    %v4435 = vsub.f32 %v71, %v4434
    %v4436 = vand.u32 %v4435, 4294901760
    %4437 = vmatpush1.msra.mxu0 %v4436
    %4438 = vmatprep.subr.mxu0 0.0
    %v4439 = vand.u32 %v72, 4294901760
    %v4440 = vsub.f32 %v72, %v4439
    %v4441 = vand.u32 %v4440, 4294901760
    %4442 = vmatpush1.msra.mxu0 %v4441
    %4443 = vmatprep.subr.mxu0 0.0
    %v4444 = vand.u32 %v73, 4294901760
    %v4445 = vsub.f32 %v73, %v4444
    %v4446 = vand.u32 %v4445, 4294901760
    %4447 = vmatpush1.msra.mxu0 %v4446
    %4448 = vmatprep.subr.mxu0 0.0
    %v4449 = vand.u32 %v74, 4294901760
    %v4450 = vsub.f32 %v74, %v4449
    %v4451 = vand.u32 %v4450, 4294901760
    %4452 = vmatpush1.msra.mxu0 %v4451
    %4453 = vmatprep.subr.mxu0 0.0
    %v4454 = vand.u32 %v75, 4294901760
    %v4455 = vsub.f32 %v75, %v4454
    %v4456 = vand.u32 %v4455, 4294901760
    %4457 = vmatpush1.msra.mxu0 %v4456
    %4458 = vmatprep.subr.mxu0 0.0
    %v4459 = vand.u32 %v76, 4294901760
    %v4460 = vsub.f32 %v76, %v4459
    %v4461 = vand.u32 %v4460, 4294901760
    %4462 = vmatpush1.msra.mxu0 %v4461
    %4463 = vmatprep.subr.mxu0 0.0
    %v4464 = vand.u32 %v77, 4294901760
    %v4465 = vsub.f32 %v77, %v4464
    %v4466 = vand.u32 %v4465, 4294901760
    %4467 = vmatpush1.msra.mxu0 %v4466
    %4468 = vmatprep.subr.mxu0 0.0
    %v4469 = vand.u32 %v78, 4294901760
    %v4470 = vsub.f32 %v78, %v4469
    %v4471 = vand.u32 %v4470, 4294901760
    %4472 = vmatpush1.msra.mxu0 %v4471
    %4473 = vmatprep.subr.mxu0 0.0
    %v4474 = vand.u32 %v79, 4294901760
    %v4475 = vsub.f32 %v79, %v4474
    %v4476 = vand.u32 %v4475, 4294901760
    %4477 = vmatpush1.msra.mxu0 %v4476
    %4478 = vmatprep.subr.mxu0 0.0
    %4479 = vmatpush1.msra.mxu0 0.0
    %4480 = vmatprep.subr.mxu0 0.0
    %4481 = vmatpush1.msra.mxu0 0.0
    %4482 = vmatprep.subr.mxu0 0.0
    %4483 = vmatpush1.msra.mxu0 0.0
    %4484 = vmatprep.subr.mxu0 0.0
    %4485 = vmatpush1.msra.mxu0 0.0
    %4486 = vmatprep.subr.mxu0 0.0
    %4487 = vmatpush1.msra.mxu0 0.0
    %4488 = vmatprep.subr.mxu0 0.0
    %4489 = vmatpush1.msra.mxu0 0.0
    %4490 = vmatprep.subr.mxu0 0.0
    %4491 = vmatpush1.msra.mxu0 0.0
    %4492 = vmatprep.subr.mxu0 0.0
    %4493 = vmatpush1.msra.mxu0 0.0
    %4494 = vmatprep.subr.mxu0 0.0
    %4495 = vmatpush1.msra.mxu0 0.0
    %4496 = vmatprep.subr.mxu0 0.0
    %4497 = vmatpush1.msra.mxu0 0.0
    %4498 = vmatprep.subr.mxu0 0.0
    %4499 = vmatpush1.msra.mxu0 0.0
    %4500 = vmatprep.subr.mxu0 0.0
    %4501 = vmatpush1.msra.mxu0 0.0
    %4502 = vmatprep.subr.mxu0 0.0
    %4503 = vmatpush1.msra.mxu0 0.0
    %4504 = vmatprep.subr.mxu0 0.0
    %4505 = vmatpush1.msra.mxu0 0.0
    %4506 = vmatprep.subr.mxu0 0.0
    %4507 = vmatpush1.msra.mxu0 0.0
    %4508 = vmatprep.subr.mxu0 0.0
    %4509 = vmatpush1.msra.mxu0 0.0
    %4510 = vmatprep.mubr.f32.mxu0 0.0
    %v4511 = vand.u32 %v3962, 4294901760
    %4512 = vmatmul.mubr.f32.gmra.mrb[0].mxu0 %v4511
    %v4513 = vpop.f32.mrb[0].mxu0
    %v4514 = vadd.f32 %v4395, %v4513
    %v4515 = vpop.f32.mrb[0].mxu0
    %4516 = vdwg.mxu0
    %4517 = vmatprep.subr.mxu0 0.0
    %v4518 = vand.u32 %v64, 4294901760
    %4519 = vmatpush1.msra.mxu0 %v4518
    %4520 = vmatprep.subr.mxu0 0.0
    %v4521 = vand.u32 %v65, 4294901760
    %4522 = vmatpush1.msra.mxu0 %v4521
    %4523 = vmatprep.subr.mxu0 0.0
    %v4524 = vand.u32 %v66, 4294901760
    %4525 = vmatpush1.msra.mxu0 %v4524
    %4526 = vmatprep.subr.mxu0 0.0
    %v4527 = vand.u32 %v67, 4294901760
    %4528 = vmatpush1.msra.mxu0 %v4527
    %4529 = vmatprep.subr.mxu0 0.0
    %v4530 = vand.u32 %v68, 4294901760
    %4531 = vmatpush1.msra.mxu0 %v4530
    %4532 = vmatprep.subr.mxu0 0.0
    %v4533 = vand.u32 %v69, 4294901760
    %4534 = vmatpush1.msra.mxu0 %v4533
    %4535 = vmatprep.subr.mxu0 0.0
    %v4536 = vand.u32 %v70, 4294901760
    %4537 = vmatpush1.msra.mxu0 %v4536
    %4538 = vmatprep.subr.mxu0 0.0
    %v4539 = vand.u32 %v71, 4294901760
    %4540 = vmatpush1.msra.mxu0 %v4539
    %4541 = vmatprep.subr.mxu0 0.0
    %v4542 = vand.u32 %v72, 4294901760
    %4543 = vmatpush1.msra.mxu0 %v4542
    %4544 = vmatprep.subr.mxu0 0.0
    %v4545 = vand.u32 %v73, 4294901760
    %4546 = vmatpush1.msra.mxu0 %v4545
    %4547 = vmatprep.subr.mxu0 0.0
    %v4548 = vand.u32 %v74, 4294901760
    %4549 = vmatpush1.msra.mxu0 %v4548
    %4550 = vmatprep.subr.mxu0 0.0
    %v4551 = vand.u32 %v75, 4294901760
    %4552 = vmatpush1.msra.mxu0 %v4551
    %4553 = vmatprep.subr.mxu0 0.0
    %v4554 = vand.u32 %v76, 4294901760
    %4555 = vmatpush1.msra.mxu0 %v4554
    %4556 = vmatprep.subr.mxu0 0.0
    %v4557 = vand.u32 %v77, 4294901760
    %4558 = vmatpush1.msra.mxu0 %v4557
    %4559 = vmatprep.subr.mxu0 0.0
    %v4560 = vand.u32 %v78, 4294901760
    %4561 = vmatpush1.msra.mxu0 %v4560
    %4562 = vmatprep.subr.mxu0 0.0
    %v4563 = vand.u32 %v79, 4294901760
    %4564 = vmatpush1.msra.mxu0 %v4563
    %4565 = vmatprep.subr.mxu0 0.0
    %4566 = vmatpush1.msra.mxu0 0.0
    %4567 = vmatprep.subr.mxu0 0.0
    %4568 = vmatpush1.msra.mxu0 0.0
    %4569 = vmatprep.subr.mxu0 0.0
    %4570 = vmatpush1.msra.mxu0 0.0
    %4571 = vmatprep.subr.mxu0 0.0
    %4572 = vmatpush1.msra.mxu0 0.0
    %4573 = vmatprep.subr.mxu0 0.0
    %4574 = vmatpush1.msra.mxu0 0.0
    %4575 = vmatprep.subr.mxu0 0.0
    %4576 = vmatpush1.msra.mxu0 0.0
    %4577 = vmatprep.subr.mxu0 0.0
    %4578 = vmatpush1.msra.mxu0 0.0
    %4579 = vmatprep.subr.mxu0 0.0
    %4580 = vmatpush1.msra.mxu0 0.0
    %4581 = vmatprep.subr.mxu0 0.0
    %4582 = vmatpush1.msra.mxu0 0.0
    %4583 = vmatprep.subr.mxu0 0.0
    %4584 = vmatpush1.msra.mxu0 0.0
    %4585 = vmatprep.subr.mxu0 0.0
    %4586 = vmatpush1.msra.mxu0 0.0
    %4587 = vmatprep.subr.mxu0 0.0
    %4588 = vmatpush1.msra.mxu0 0.0
    %4589 = vmatprep.subr.mxu0 0.0
    %4590 = vmatpush1.msra.mxu0 0.0
    %4591 = vmatprep.subr.mxu0 0.0
    %4592 = vmatpush1.msra.mxu0 0.0
    %4593 = vmatprep.subr.mxu0 0.0
    %4594 = vmatpush1.msra.mxu0 0.0
    %4595 = vmatprep.subr.mxu0 0.0
    %4596 = vmatpush1.msra.mxu0 0.0
    %4597 = vmatprep.mubr.f32.mxu0 0.0
    %v4598 = vand.u32 %v3962, 4294901760
    %4599 = vmatmul.mubr.f32.gmra.mrb[0].mxu0 %v4598
    %v4600 = vpop.f32.mrb[0].mxu0
    %v4601 = vadd.f32 %v4514, %v4600
    %v4602 = vpop.f32.mrb[0].mxu0
    %4603 = vdwg.mxu0
    %4604 = vmatprep.subr.mxu0 0.0
    %v4605 = vand.u32 %v80, 4294901760
    %4606 = vmatpush1.msra.mxu0 %v4605
    %4607 = vmatprep.subr.mxu0 0.0
    %v4608 = vand.u32 %v81, 4294901760
    %4609 = vmatpush1.msra.mxu0 %v4608
    %4610 = vmatprep.subr.mxu0 0.0
    %v4611 = vand.u32 %v82, 4294901760
    %4612 = vmatpush1.msra.mxu0 %v4611
    %4613 = vmatprep.subr.mxu0 0.0
    %v4614 = vand.u32 %v83, 4294901760
    %4615 = vmatpush1.msra.mxu0 %v4614
    %4616 = vmatprep.subr.mxu0 0.0
    %v4617 = vand.u32 %v84, 4294901760
    %4618 = vmatpush1.msra.mxu0 %v4617
    %4619 = vmatprep.subr.mxu0 0.0
    %v4620 = vand.u32 %v85, 4294901760
    %4621 = vmatpush1.msra.mxu0 %v4620
    %4622 = vmatprep.subr.mxu0 0.0
    %v4623 = vand.u32 %v86, 4294901760
    %4624 = vmatpush1.msra.mxu0 %v4623
    %4625 = vmatprep.subr.mxu0 0.0
    %v4626 = vand.u32 %v87, 4294901760
    %4627 = vmatpush1.msra.mxu0 %v4626
    %4628 = vmatprep.subr.mxu0 0.0
    %v4629 = vand.u32 %v88, 4294901760
    %4630 = vmatpush1.msra.mxu0 %v4629
    %4631 = vmatprep.subr.mxu0 0.0
    %v4632 = vand.u32 %v89, 4294901760
    %4633 = vmatpush1.msra.mxu0 %v4632
    %4634 = vmatprep.subr.mxu0 0.0
    %v4635 = vand.u32 %v90, 4294901760
    %4636 = vmatpush1.msra.mxu0 %v4635
    %4637 = vmatprep.subr.mxu0 0.0
    %v4638 = vand.u32 %v91, 4294901760
    %4639 = vmatpush1.msra.mxu0 %v4638
    %4640 = vmatprep.subr.mxu0 0.0
    %v4641 = vand.u32 %v92, 4294901760
    %4642 = vmatpush1.msra.mxu0 %v4641
    %4643 = vmatprep.subr.mxu0 0.0
    %v4644 = vand.u32 %v93, 4294901760
    %4645 = vmatpush1.msra.mxu0 %v4644
    %4646 = vmatprep.subr.mxu0 0.0
    %v4647 = vand.u32 %v94, 4294901760
    %4648 = vmatpush1.msra.mxu0 %v4647
    %4649 = vmatprep.subr.mxu0 0.0
    %v4650 = vand.u32 %v95, 4294901760
    %4651 = vmatpush1.msra.mxu0 %v4650
    %4652 = vmatprep.subr.mxu0 0.0
    %4653 = vmatpush1.msra.mxu0 0.0
    %4654 = vmatprep.subr.mxu0 0.0
    %4655 = vmatpush1.msra.mxu0 0.0
    %4656 = vmatprep.subr.mxu0 0.0
    %4657 = vmatpush1.msra.mxu0 0.0
    %4658 = vmatprep.subr.mxu0 0.0
    %4659 = vmatpush1.msra.mxu0 0.0
    %4660 = vmatprep.subr.mxu0 0.0
    %4661 = vmatpush1.msra.mxu0 0.0
    %4662 = vmatprep.subr.mxu0 0.0
    %4663 = vmatpush1.msra.mxu0 0.0
    %4664 = vmatprep.subr.mxu0 0.0
    %4665 = vmatpush1.msra.mxu0 0.0
    %4666 = vmatprep.subr.mxu0 0.0
    %4667 = vmatpush1.msra.mxu0 0.0
    %4668 = vmatprep.subr.mxu0 0.0
    %4669 = vmatpush1.msra.mxu0 0.0
    %4670 = vmatprep.subr.mxu0 0.0
    %4671 = vmatpush1.msra.mxu0 0.0
    %4672 = vmatprep.subr.mxu0 0.0
    %4673 = vmatpush1.msra.mxu0 0.0
    %4674 = vmatprep.subr.mxu0 0.0
    %4675 = vmatpush1.msra.mxu0 0.0
    %4676 = vmatprep.subr.mxu0 0.0
    %4677 = vmatpush1.msra.mxu0 0.0
    %4678 = vmatprep.subr.mxu0 0.0
    %4679 = vmatpush1.msra.mxu0 0.0
    %4680 = vmatprep.subr.mxu0 0.0
    %4681 = vmatpush1.msra.mxu0 0.0
    %4682 = vmatprep.subr.mxu0 0.0
    %4683 = vmatpush1.msra.mxu0 0.0
    %4684 = vmatprep.mubr.f32.mxu0 0.0
    %v4685 = vand.u32 %v3962, 4294901760
    %v4686 = vsub.f32 %v3962, %v4685
    %v4687 = vand.u32 %v4686, 4294901760
    %v4688 = vsub.f32 %v4686, %v4687
    %v4689 = vand.u32 %v4688, 4294901760
    %4690 = vmatmul.mubr.f32.gmra.mrb[0].mxu0 %v4689
    %v4691 = vpop.f32.mrb[0].mxu0
    %v4692 = vadd.f32 0.0, %v4691
    %v4693 = vpop.f32.mrb[0].mxu0
    %4694 = vdwg.mxu0
    %4695 = vmatprep.subr.mxu0 0.0
    %v4696 = vand.u32 %v80, 4294901760
    %v4697 = vsub.f32 %v80, %v4696
    %v4698 = vand.u32 %v4697, 4294901760
    %v4699 = vsub.f32 %v4697, %v4698
    %v4700 = vand.u32 %v4699, 4294901760
    %4701 = vmatpush1.msra.mxu0 %v4700
    %4702 = vmatprep.subr.mxu0 0.0
    %v4703 = vand.u32 %v81, 4294901760
    %v4704 = vsub.f32 %v81, %v4703
    %v4705 = vand.u32 %v4704, 4294901760
    %v4706 = vsub.f32 %v4704, %v4705
    %v4707 = vand.u32 %v4706, 4294901760
    %4708 = vmatpush1.msra.mxu0 %v4707
    %4709 = vmatprep.subr.mxu0 0.0
    %v4710 = vand.u32 %v82, 4294901760
    %v4711 = vsub.f32 %v82, %v4710
    %v4712 = vand.u32 %v4711, 4294901760
    %v4713 = vsub.f32 %v4711, %v4712
    %v4714 = vand.u32 %v4713, 4294901760
    %4715 = vmatpush1.msra.mxu0 %v4714
    %4716 = vmatprep.subr.mxu0 0.0
    %v4717 = vand.u32 %v83, 4294901760
    %v4718 = vsub.f32 %v83, %v4717
    %v4719 = vand.u32 %v4718, 4294901760
    %v4720 = vsub.f32 %v4718, %v4719
    %v4721 = vand.u32 %v4720, 4294901760
    %4722 = vmatpush1.msra.mxu0 %v4721
    %4723 = vmatprep.subr.mxu0 0.0
    %v4724 = vand.u32 %v84, 4294901760
    %v4725 = vsub.f32 %v84, %v4724
    %v4726 = vand.u32 %v4725, 4294901760
    %v4727 = vsub.f32 %v4725, %v4726
    %v4728 = vand.u32 %v4727, 4294901760
    %4729 = vmatpush1.msra.mxu0 %v4728
    %4730 = vmatprep.subr.mxu0 0.0
    %v4731 = vand.u32 %v85, 4294901760
    %v4732 = vsub.f32 %v85, %v4731
    %v4733 = vand.u32 %v4732, 4294901760
    %v4734 = vsub.f32 %v4732, %v4733
    %v4735 = vand.u32 %v4734, 4294901760
    %4736 = vmatpush1.msra.mxu0 %v4735
    %4737 = vmatprep.subr.mxu0 0.0
    %v4738 = vand.u32 %v86, 4294901760
    %v4739 = vsub.f32 %v86, %v4738
    %v4740 = vand.u32 %v4739, 4294901760
    %v4741 = vsub.f32 %v4739, %v4740
    %v4742 = vand.u32 %v4741, 4294901760
    %4743 = vmatpush1.msra.mxu0 %v4742
    %4744 = vmatprep.subr.mxu0 0.0
    %v4745 = vand.u32 %v87, 4294901760
    %v4746 = vsub.f32 %v87, %v4745
    %v4747 = vand.u32 %v4746, 4294901760
    %v4748 = vsub.f32 %v4746, %v4747
    %v4749 = vand.u32 %v4748, 4294901760
    %4750 = vmatpush1.msra.mxu0 %v4749
    %4751 = vmatprep.subr.mxu0 0.0
    %v4752 = vand.u32 %v88, 4294901760
    %v4753 = vsub.f32 %v88, %v4752
    %v4754 = vand.u32 %v4753, 4294901760
    %v4755 = vsub.f32 %v4753, %v4754
    %v4756 = vand.u32 %v4755, 4294901760
    %4757 = vmatpush1.msra.mxu0 %v4756
    %4758 = vmatprep.subr.mxu0 0.0
    %v4759 = vand.u32 %v89, 4294901760
    %v4760 = vsub.f32 %v89, %v4759
    %v4761 = vand.u32 %v4760, 4294901760
    %v4762 = vsub.f32 %v4760, %v4761
    %v4763 = vand.u32 %v4762, 4294901760
    %4764 = vmatpush1.msra.mxu0 %v4763
    %4765 = vmatprep.subr.mxu0 0.0
    %v4766 = vand.u32 %v90, 4294901760
    %v4767 = vsub.f32 %v90, %v4766
    %v4768 = vand.u32 %v4767, 4294901760
    %v4769 = vsub.f32 %v4767, %v4768
    %v4770 = vand.u32 %v4769, 4294901760
    %4771 = vmatpush1.msra.mxu0 %v4770
    %4772 = vmatprep.subr.mxu0 0.0
    %v4773 = vand.u32 %v91, 4294901760
    %v4774 = vsub.f32 %v91, %v4773
    %v4775 = vand.u32 %v4774, 4294901760
    %v4776 = vsub.f32 %v4774, %v4775
    %v4777 = vand.u32 %v4776, 4294901760
    %4778 = vmatpush1.msra.mxu0 %v4777
    %4779 = vmatprep.subr.mxu0 0.0
    %v4780 = vand.u32 %v92, 4294901760
    %v4781 = vsub.f32 %v92, %v4780
    %v4782 = vand.u32 %v4781, 4294901760
    %v4783 = vsub.f32 %v4781, %v4782
    %v4784 = vand.u32 %v4783, 4294901760
    %4785 = vmatpush1.msra.mxu0 %v4784
    %4786 = vmatprep.subr.mxu0 0.0
    %v4787 = vand.u32 %v93, 4294901760
    %v4788 = vsub.f32 %v93, %v4787
    %v4789 = vand.u32 %v4788, 4294901760
    %v4790 = vsub.f32 %v4788, %v4789
    %v4791 = vand.u32 %v4790, 4294901760
    %4792 = vmatpush1.msra.mxu0 %v4791
    %4793 = vmatprep.subr.mxu0 0.0
    %v4794 = vand.u32 %v94, 4294901760
    %v4795 = vsub.f32 %v94, %v4794
    %v4796 = vand.u32 %v4795, 4294901760
    %v4797 = vsub.f32 %v4795, %v4796
    %v4798 = vand.u32 %v4797, 4294901760
    %4799 = vmatpush1.msra.mxu0 %v4798
    %4800 = vmatprep.subr.mxu0 0.0
    %v4801 = vand.u32 %v95, 4294901760
    %v4802 = vsub.f32 %v95, %v4801
    %v4803 = vand.u32 %v4802, 4294901760
    %v4804 = vsub.f32 %v4802, %v4803
    %v4805 = vand.u32 %v4804, 4294901760
    %4806 = vmatpush1.msra.mxu0 %v4805
    %4807 = vmatprep.subr.mxu0 0.0
    %4808 = vmatpush1.msra.mxu0 0.0
    %4809 = vmatprep.subr.mxu0 0.0
    %4810 = vmatpush1.msra.mxu0 0.0
    %4811 = vmatprep.subr.mxu0 0.0
    %4812 = vmatpush1.msra.mxu0 0.0
    %4813 = vmatprep.subr.mxu0 0.0
    %4814 = vmatpush1.msra.mxu0 0.0
    %4815 = vmatprep.subr.mxu0 0.0
    %4816 = vmatpush1.msra.mxu0 0.0
    %4817 = vmatprep.subr.mxu0 0.0
    %4818 = vmatpush1.msra.mxu0 0.0
    %4819 = vmatprep.subr.mxu0 0.0
    %4820 = vmatpush1.msra.mxu0 0.0
    %4821 = vmatprep.subr.mxu0 0.0
    %4822 = vmatpush1.msra.mxu0 0.0
    %4823 = vmatprep.subr.mxu0 0.0
    %4824 = vmatpush1.msra.mxu0 0.0
    %4825 = vmatprep.subr.mxu0 0.0
    %4826 = vmatpush1.msra.mxu0 0.0
    %4827 = vmatprep.subr.mxu0 0.0
    %4828 = vmatpush1.msra.mxu0 0.0
    %4829 = vmatprep.subr.mxu0 0.0
    %4830 = vmatpush1.msra.mxu0 0.0
    %4831 = vmatprep.subr.mxu0 0.0
    %4832 = vmatpush1.msra.mxu0 0.0
    %4833 = vmatprep.subr.mxu0 0.0
    %4834 = vmatpush1.msra.mxu0 0.0
    %4835 = vmatprep.subr.mxu0 0.0
    %4836 = vmatpush1.msra.mxu0 0.0
    %4837 = vmatprep.subr.mxu0 0.0
    %4838 = vmatpush1.msra.mxu0 0.0
    %4839 = vmatprep.mubr.f32.mxu0 0.0
    %v4840 = vand.u32 %v3962, 4294901760
    %4841 = vmatmul.mubr.f32.gmra.mrb[0].mxu0 %v4840
    %v4842 = vpop.f32.mrb[0].mxu0
    %v4843 = vadd.f32 %v4692, %v4842
    %v4844 = vpop.f32.mrb[0].mxu0
    %4845 = vdwg.mxu0
    %4846 = vmatprep.subr.mxu0 0.0
    %v4847 = vand.u32 %v80, 4294901760
    %v4848 = vsub.f32 %v80, %v4847
    %4849 = vmatpush1.msra.mxu0 %v4848
    %4850 = vmatprep.subr.mxu0 0.0
    %v4851 = vand.u32 %v81, 4294901760
    %v4852 = vsub.f32 %v81, %v4851
    %4853 = vmatpush1.msra.mxu0 %v4852
    %4854 = vmatprep.subr.mxu0 0.0
    %v4855 = vand.u32 %v82, 4294901760
    %v4856 = vsub.f32 %v82, %v4855
    %4857 = vmatpush1.msra.mxu0 %v4856
    %4858 = vmatprep.subr.mxu0 0.0
    %v4859 = vand.u32 %v83, 4294901760
    %v4860 = vsub.f32 %v83, %v4859
    %4861 = vmatpush1.msra.mxu0 %v4860
    %4862 = vmatprep.subr.mxu0 0.0
    %v4863 = vand.u32 %v84, 4294901760
    %v4864 = vsub.f32 %v84, %v4863
    %4865 = vmatpush1.msra.mxu0 %v4864
    %4866 = vmatprep.subr.mxu0 0.0
    %v4867 = vand.u32 %v85, 4294901760
    %v4868 = vsub.f32 %v85, %v4867
    %4869 = vmatpush1.msra.mxu0 %v4868
    %4870 = vmatprep.subr.mxu0 0.0
    %v4871 = vand.u32 %v86, 4294901760
    %v4872 = vsub.f32 %v86, %v4871
    %4873 = vmatpush1.msra.mxu0 %v4872
    %4874 = vmatprep.subr.mxu0 0.0
    %v4875 = vand.u32 %v87, 4294901760
    %v4876 = vsub.f32 %v87, %v4875
    %4877 = vmatpush1.msra.mxu0 %v4876
    %4878 = vmatprep.subr.mxu0 0.0
    %v4879 = vand.u32 %v88, 4294901760
    %v4880 = vsub.f32 %v88, %v4879
    %4881 = vmatpush1.msra.mxu0 %v4880
    %4882 = vmatprep.subr.mxu0 0.0
    %v4883 = vand.u32 %v89, 4294901760
    %v4884 = vsub.f32 %v89, %v4883
    %4885 = vmatpush1.msra.mxu0 %v4884
    %4886 = vmatprep.subr.mxu0 0.0
    %v4887 = vand.u32 %v90, 4294901760
    %v4888 = vsub.f32 %v90, %v4887
    %4889 = vmatpush1.msra.mxu0 %v4888
    %4890 = vmatprep.subr.mxu0 0.0
    %v4891 = vand.u32 %v91, 4294901760
    %v4892 = vsub.f32 %v91, %v4891
    %4893 = vmatpush1.msra.mxu0 %v4892
    %4894 = vmatprep.subr.mxu0 0.0
    %v4895 = vand.u32 %v92, 4294901760
    %v4896 = vsub.f32 %v92, %v4895
    %4897 = vmatpush1.msra.mxu0 %v4896
    %4898 = vmatprep.subr.mxu0 0.0
    %v4899 = vand.u32 %v93, 4294901760
    %v4900 = vsub.f32 %v93, %v4899
    %4901 = vmatpush1.msra.mxu0 %v4900
    %4902 = vmatprep.subr.mxu0 0.0
    %v4903 = vand.u32 %v94, 4294901760
    %v4904 = vsub.f32 %v94, %v4903
    %4905 = vmatpush1.msra.mxu0 %v4904
    %4906 = vmatprep.subr.mxu0 0.0
    %v4907 = vand.u32 %v95, 4294901760
    %v4908 = vsub.f32 %v95, %v4907
    %4909 = vmatpush1.msra.mxu0 %v4908
    %4910 = vmatprep.subr.mxu0 0.0
    %4911 = vmatpush1.msra.mxu0 0.0
    %4912 = vmatprep.subr.mxu0 0.0
    %4913 = vmatpush1.msra.mxu0 0.0
    %4914 = vmatprep.subr.mxu0 0.0
    %4915 = vmatpush1.msra.mxu0 0.0
    %4916 = vmatprep.subr.mxu0 0.0
    %4917 = vmatpush1.msra.mxu0 0.0
    %4918 = vmatprep.subr.mxu0 0.0
    %4919 = vmatpush1.msra.mxu0 0.0
    %4920 = vmatprep.subr.mxu0 0.0
    %4921 = vmatpush1.msra.mxu0 0.0
    %4922 = vmatprep.subr.mxu0 0.0
    %4923 = vmatpush1.msra.mxu0 0.0
    %4924 = vmatprep.subr.mxu0 0.0
    %4925 = vmatpush1.msra.mxu0 0.0
    %4926 = vmatprep.subr.mxu0 0.0
    %4927 = vmatpush1.msra.mxu0 0.0
    %4928 = vmatprep.subr.mxu0 0.0
    %4929 = vmatpush1.msra.mxu0 0.0
    %4930 = vmatprep.subr.mxu0 0.0
    %4931 = vmatpush1.msra.mxu0 0.0
    %4932 = vmatprep.subr.mxu0 0.0
    %4933 = vmatpush1.msra.mxu0 0.0
    %4934 = vmatprep.subr.mxu0 0.0
    %4935 = vmatpush1.msra.mxu0 0.0
    %4936 = vmatprep.subr.mxu0 0.0
    %4937 = vmatpush1.msra.mxu0 0.0
    %4938 = vmatprep.subr.mxu0 0.0
    %4939 = vmatpush1.msra.mxu0 0.0
    %4940 = vmatprep.subr.mxu0 0.0
    %4941 = vmatpush1.msra.mxu0 0.0
    %4942 = vmatprep.mubr.f32.mxu0 0.0
    %v4943 = vand.u32 %v3962, 4294901760
    %v4944 = vsub.f32 %v3962, %v4943
    %4945 = vmatmul.mubr.f32.gmra.mrb[0].mxu0 %v4944
    %v4946 = vpop.f32.mrb[0].mxu0
    %v4947 = vadd.f32 %v4843, %v4946
    %v4948 = vpop.f32.mrb[0].mxu0
    %4949 = vdwg.mxu0
    %4950 = vmatprep.subr.mxu0 0.0
    %v4951 = vand.u32 %v80, 4294901760
    %4952 = vmatpush1.msra.mxu0 %v4951
    %4953 = vmatprep.subr.mxu0 0.0
    %v4954 = vand.u32 %v81, 4294901760
    %4955 = vmatpush1.msra.mxu0 %v4954
    %4956 = vmatprep.subr.mxu0 0.0
    %v4957 = vand.u32 %v82, 4294901760
    %4958 = vmatpush1.msra.mxu0 %v4957
    %4959 = vmatprep.subr.mxu0 0.0
    %v4960 = vand.u32 %v83, 4294901760
    %4961 = vmatpush1.msra.mxu0 %v4960
    %4962 = vmatprep.subr.mxu0 0.0
    %v4963 = vand.u32 %v84, 4294901760
    %4964 = vmatpush1.msra.mxu0 %v4963
    %4965 = vmatprep.subr.mxu0 0.0
    %v4966 = vand.u32 %v85, 4294901760
    %4967 = vmatpush1.msra.mxu0 %v4966
    %4968 = vmatprep.subr.mxu0 0.0
    %v4969 = vand.u32 %v86, 4294901760
    %4970 = vmatpush1.msra.mxu0 %v4969
    %4971 = vmatprep.subr.mxu0 0.0
    %v4972 = vand.u32 %v87, 4294901760
    %4973 = vmatpush1.msra.mxu0 %v4972
    %4974 = vmatprep.subr.mxu0 0.0
    %v4975 = vand.u32 %v88, 4294901760
    %4976 = vmatpush1.msra.mxu0 %v4975
    %4977 = vmatprep.subr.mxu0 0.0
    %v4978 = vand.u32 %v89, 4294901760
    %4979 = vmatpush1.msra.mxu0 %v4978
    %4980 = vmatprep.subr.mxu0 0.0
    %v4981 = vand.u32 %v90, 4294901760
    %4982 = vmatpush1.msra.mxu0 %v4981
    %4983 = vmatprep.subr.mxu0 0.0
    %v4984 = vand.u32 %v91, 4294901760
    %4985 = vmatpush1.msra.mxu0 %v4984
    %4986 = vmatprep.subr.mxu0 0.0
    %v4987 = vand.u32 %v92, 4294901760
    %4988 = vmatpush1.msra.mxu0 %v4987
    %4989 = vmatprep.subr.mxu0 0.0
    %v4990 = vand.u32 %v93, 4294901760
    %4991 = vmatpush1.msra.mxu0 %v4990
    %4992 = vmatprep.subr.mxu0 0.0
    %v4993 = vand.u32 %v94, 4294901760
    %4994 = vmatpush1.msra.mxu0 %v4993
    %4995 = vmatprep.subr.mxu0 0.0
    %v4996 = vand.u32 %v95, 4294901760
    %4997 = vmatpush1.msra.mxu0 %v4996
    %4998 = vmatprep.subr.mxu0 0.0
    %4999 = vmatpush1.msra.mxu0 0.0
    %5000 = vmatprep.subr.mxu0 0.0
    %5001 = vmatpush1.msra.mxu0 0.0
    %5002 = vmatprep.subr.mxu0 0.0
    %5003 = vmatpush1.msra.mxu0 0.0
    %5004 = vmatprep.subr.mxu0 0.0
    %5005 = vmatpush1.msra.mxu0 0.0
    %5006 = vmatprep.subr.mxu0 0.0
    %5007 = vmatpush1.msra.mxu0 0.0
    %5008 = vmatprep.subr.mxu0 0.0
    %5009 = vmatpush1.msra.mxu0 0.0
    %5010 = vmatprep.subr.mxu0 0.0
    %5011 = vmatpush1.msra.mxu0 0.0
    %5012 = vmatprep.subr.mxu0 0.0
    %5013 = vmatpush1.msra.mxu0 0.0
    %5014 = vmatprep.subr.mxu0 0.0
    %5015 = vmatpush1.msra.mxu0 0.0
    %5016 = vmatprep.subr.mxu0 0.0
    %5017 = vmatpush1.msra.mxu0 0.0
    %5018 = vmatprep.subr.mxu0 0.0
    %5019 = vmatpush1.msra.mxu0 0.0
    %5020 = vmatprep.subr.mxu0 0.0
    %5021 = vmatpush1.msra.mxu0 0.0
    %5022 = vmatprep.subr.mxu0 0.0
    %5023 = vmatpush1.msra.mxu0 0.0
    %5024 = vmatprep.subr.mxu0 0.0
    %5025 = vmatpush1.msra.mxu0 0.0
    %5026 = vmatprep.subr.mxu0 0.0
    %5027 = vmatpush1.msra.mxu0 0.0
    %5028 = vmatprep.subr.mxu0 0.0
    %5029 = vmatpush1.msra.mxu0 0.0
    %5030 = vmatprep.mubr.f32.mxu0 0.0
    %v5031 = vand.u32 %v3962, 4294901760
    %v5032 = vsub.f32 %v3962, %v5031
    %v5033 = vand.u32 %v5032, 4294901760
    %5034 = vmatmul.mubr.f32.gmra.mrb[0].mxu0 %v5033
    %v5035 = vpop.f32.mrb[0].mxu0
    %v5036 = vadd.f32 %v4947, %v5035
    %v5037 = vpop.f32.mrb[0].mxu0
    %5038 = vdwg.mxu0
    %5039 = vmatprep.subr.mxu0 0.0
    %v5040 = vand.u32 %v80, 4294901760
    %v5041 = vsub.f32 %v80, %v5040
    %v5042 = vand.u32 %v5041, 4294901760
    %5043 = vmatpush1.msra.mxu0 %v5042
    %5044 = vmatprep.subr.mxu0 0.0
    %v5045 = vand.u32 %v81, 4294901760
    %v5046 = vsub.f32 %v81, %v5045
    %v5047 = vand.u32 %v5046, 4294901760
    %5048 = vmatpush1.msra.mxu0 %v5047
    %5049 = vmatprep.subr.mxu0 0.0
    %v5050 = vand.u32 %v82, 4294901760
    %v5051 = vsub.f32 %v82, %v5050
    %v5052 = vand.u32 %v5051, 4294901760
    %5053 = vmatpush1.msra.mxu0 %v5052
    %5054 = vmatprep.subr.mxu0 0.0
    %v5055 = vand.u32 %v83, 4294901760
    %v5056 = vsub.f32 %v83, %v5055
    %v5057 = vand.u32 %v5056, 4294901760
    %5058 = vmatpush1.msra.mxu0 %v5057
    %5059 = vmatprep.subr.mxu0 0.0
    %v5060 = vand.u32 %v84, 4294901760
    %v5061 = vsub.f32 %v84, %v5060
    %v5062 = vand.u32 %v5061, 4294901760
    %5063 = vmatpush1.msra.mxu0 %v5062
    %5064 = vmatprep.subr.mxu0 0.0
    %v5065 = vand.u32 %v85, 4294901760
    %v5066 = vsub.f32 %v85, %v5065
    %v5067 = vand.u32 %v5066, 4294901760
    %5068 = vmatpush1.msra.mxu0 %v5067
    %5069 = vmatprep.subr.mxu0 0.0
    %v5070 = vand.u32 %v86, 4294901760
    %v5071 = vsub.f32 %v86, %v5070
    %v5072 = vand.u32 %v5071, 4294901760
    %5073 = vmatpush1.msra.mxu0 %v5072
    %5074 = vmatprep.subr.mxu0 0.0
    %v5075 = vand.u32 %v87, 4294901760
    %v5076 = vsub.f32 %v87, %v5075
    %v5077 = vand.u32 %v5076, 4294901760
    %5078 = vmatpush1.msra.mxu0 %v5077
    %5079 = vmatprep.subr.mxu0 0.0
    %v5080 = vand.u32 %v88, 4294901760
    %v5081 = vsub.f32 %v88, %v5080
    %v5082 = vand.u32 %v5081, 4294901760
    %5083 = vmatpush1.msra.mxu0 %v5082
    %5084 = vmatprep.subr.mxu0 0.0
    %v5085 = vand.u32 %v89, 4294901760
    %v5086 = vsub.f32 %v89, %v5085
    %v5087 = vand.u32 %v5086, 4294901760
    %5088 = vmatpush1.msra.mxu0 %v5087
    %5089 = vmatprep.subr.mxu0 0.0
    %v5090 = vand.u32 %v90, 4294901760
    %v5091 = vsub.f32 %v90, %v5090
    %v5092 = vand.u32 %v5091, 4294901760
    %5093 = vmatpush1.msra.mxu0 %v5092
    %5094 = vmatprep.subr.mxu0 0.0
    %v5095 = vand.u32 %v91, 4294901760
    %v5096 = vsub.f32 %v91, %v5095
    %v5097 = vand.u32 %v5096, 4294901760
    %5098 = vmatpush1.msra.mxu0 %v5097
    %5099 = vmatprep.subr.mxu0 0.0
    %v5100 = vand.u32 %v92, 4294901760
    %v5101 = vsub.f32 %v92, %v5100
    %v5102 = vand.u32 %v5101, 4294901760
    %5103 = vmatpush1.msra.mxu0 %v5102
    %5104 = vmatprep.subr.mxu0 0.0
    %v5105 = vand.u32 %v93, 4294901760
    %v5106 = vsub.f32 %v93, %v5105
    %v5107 = vand.u32 %v5106, 4294901760
    %5108 = vmatpush1.msra.mxu0 %v5107
    %5109 = vmatprep.subr.mxu0 0.0
    %v5110 = vand.u32 %v94, 4294901760
    %v5111 = vsub.f32 %v94, %v5110
    %v5112 = vand.u32 %v5111, 4294901760
    %5113 = vmatpush1.msra.mxu0 %v5112
    %5114 = vmatprep.subr.mxu0 0.0
    %v5115 = vand.u32 %v95, 4294901760
    %v5116 = vsub.f32 %v95, %v5115
    %v5117 = vand.u32 %v5116, 4294901760
    %5118 = vmatpush1.msra.mxu0 %v5117
    %5119 = vmatprep.subr.mxu0 0.0
    %5120 = vmatpush1.msra.mxu0 0.0
    %5121 = vmatprep.subr.mxu0 0.0
    %5122 = vmatpush1.msra.mxu0 0.0
    %5123 = vmatprep.subr.mxu0 0.0
    %5124 = vmatpush1.msra.mxu0 0.0
    %5125 = vmatprep.subr.mxu0 0.0
    %5126 = vmatpush1.msra.mxu0 0.0
    %5127 = vmatprep.subr.mxu0 0.0
    %5128 = vmatpush1.msra.mxu0 0.0
    %5129 = vmatprep.subr.mxu0 0.0
    %5130 = vmatpush1.msra.mxu0 0.0
    %5131 = vmatprep.subr.mxu0 0.0
    %5132 = vmatpush1.msra.mxu0 0.0
    %5133 = vmatprep.subr.mxu0 0.0
    %5134 = vmatpush1.msra.mxu0 0.0
    %5135 = vmatprep.subr.mxu0 0.0
    %5136 = vmatpush1.msra.mxu0 0.0
    %5137 = vmatprep.subr.mxu0 0.0
    %5138 = vmatpush1.msra.mxu0 0.0
    %5139 = vmatprep.subr.mxu0 0.0
    %5140 = vmatpush1.msra.mxu0 0.0
    %5141 = vmatprep.subr.mxu0 0.0
    %5142 = vmatpush1.msra.mxu0 0.0
    %5143 = vmatprep.subr.mxu0 0.0
    %5144 = vmatpush1.msra.mxu0 0.0
    %5145 = vmatprep.subr.mxu0 0.0
    %5146 = vmatpush1.msra.mxu0 0.0
    %5147 = vmatprep.subr.mxu0 0.0
    %5148 = vmatpush1.msra.mxu0 0.0
    %5149 = vmatprep.subr.mxu0 0.0
    %5150 = vmatpush1.msra.mxu0 0.0
    %5151 = vmatprep.mubr.f32.mxu0 0.0
    %v5152 = vand.u32 %v3962, 4294901760
    %5153 = vmatmul.mubr.f32.gmra.mrb[0].mxu0 %v5152
    %v5154 = vpop.f32.mrb[0].mxu0
    %v5155 = vadd.f32 %v5036, %v5154
    %v5156 = vpop.f32.mrb[0].mxu0
    %5157 = vdwg.mxu0
    %5158 = vmatprep.subr.mxu0 0.0
    %v5159 = vand.u32 %v80, 4294901760
    %5160 = vmatpush1.msra.mxu0 %v5159
    %5161 = vmatprep.subr.mxu0 0.0
    %v5162 = vand.u32 %v81, 4294901760
    %5163 = vmatpush1.msra.mxu0 %v5162
    %5164 = vmatprep.subr.mxu0 0.0
    %v5165 = vand.u32 %v82, 4294901760
    %5166 = vmatpush1.msra.mxu0 %v5165
    %5167 = vmatprep.subr.mxu0 0.0
    %v5168 = vand.u32 %v83, 4294901760
    %5169 = vmatpush1.msra.mxu0 %v5168
    %5170 = vmatprep.subr.mxu0 0.0
    %v5171 = vand.u32 %v84, 4294901760
    %5172 = vmatpush1.msra.mxu0 %v5171
    %5173 = vmatprep.subr.mxu0 0.0
    %v5174 = vand.u32 %v85, 4294901760
    %5175 = vmatpush1.msra.mxu0 %v5174
    %5176 = vmatprep.subr.mxu0 0.0
    %v5177 = vand.u32 %v86, 4294901760
    %5178 = vmatpush1.msra.mxu0 %v5177
    %5179 = vmatprep.subr.mxu0 0.0
    %v5180 = vand.u32 %v87, 4294901760
    %5181 = vmatpush1.msra.mxu0 %v5180
    %5182 = vmatprep.subr.mxu0 0.0
    %v5183 = vand.u32 %v88, 4294901760
    %5184 = vmatpush1.msra.mxu0 %v5183
    %5185 = vmatprep.subr.mxu0 0.0
    %v5186 = vand.u32 %v89, 4294901760
    %5187 = vmatpush1.msra.mxu0 %v5186
    %5188 = vmatprep.subr.mxu0 0.0
    %v5189 = vand.u32 %v90, 4294901760
    %5190 = vmatpush1.msra.mxu0 %v5189
    %5191 = vmatprep.subr.mxu0 0.0
    %v5192 = vand.u32 %v91, 4294901760
    %5193 = vmatpush1.msra.mxu0 %v5192
    %5194 = vmatprep.subr.mxu0 0.0
    %v5195 = vand.u32 %v92, 4294901760
    %5196 = vmatpush1.msra.mxu0 %v5195
    %5197 = vmatprep.subr.mxu0 0.0
    %v5198 = vand.u32 %v93, 4294901760
    %5199 = vmatpush1.msra.mxu0 %v5198
    %5200 = vmatprep.subr.mxu0 0.0
    %v5201 = vand.u32 %v94, 4294901760
    %5202 = vmatpush1.msra.mxu0 %v5201
    %5203 = vmatprep.subr.mxu0 0.0
    %v5204 = vand.u32 %v95, 4294901760
    %5205 = vmatpush1.msra.mxu0 %v5204
    %5206 = vmatprep.subr.mxu0 0.0
    %5207 = vmatpush1.msra.mxu0 0.0
    %5208 = vmatprep.subr.mxu0 0.0
    %5209 = vmatpush1.msra.mxu0 0.0
    %5210 = vmatprep.subr.mxu0 0.0
    %5211 = vmatpush1.msra.mxu0 0.0
    %5212 = vmatprep.subr.mxu0 0.0
    %5213 = vmatpush1.msra.mxu0 0.0
    %5214 = vmatprep.subr.mxu0 0.0
    %5215 = vmatpush1.msra.mxu0 0.0
    %5216 = vmatprep.subr.mxu0 0.0
    %5217 = vmatpush1.msra.mxu0 0.0
    %5218 = vmatprep.subr.mxu0 0.0
    %5219 = vmatpush1.msra.mxu0 0.0
    %5220 = vmatprep.subr.mxu0 0.0
    %5221 = vmatpush1.msra.mxu0 0.0
    %5222 = vmatprep.subr.mxu0 0.0
    %5223 = vmatpush1.msra.mxu0 0.0
    %5224 = vmatprep.subr.mxu0 0.0
    %5225 = vmatpush1.msra.mxu0 0.0
    %5226 = vmatprep.subr.mxu0 0.0
    %5227 = vmatpush1.msra.mxu0 0.0
    %5228 = vmatprep.subr.mxu0 0.0
    %5229 = vmatpush1.msra.mxu0 0.0
    %5230 = vmatprep.subr.mxu0 0.0
    %5231 = vmatpush1.msra.mxu0 0.0
    %5232 = vmatprep.subr.mxu0 0.0
    %5233 = vmatpush1.msra.mxu0 0.0
    %5234 = vmatprep.subr.mxu0 0.0
    %5235 = vmatpush1.msra.mxu0 0.0
    %5236 = vmatprep.subr.mxu0 0.0
    %5237 = vmatpush1.msra.mxu0 0.0
    %5238 = vmatprep.mubr.f32.mxu0 0.0
    %v5239 = vand.u32 %v3962, 4294901760
    %5240 = vmatmul.mubr.f32.gmra.mrb[0].mxu0 %v5239
    %v5241 = vpop.f32.mrb[0].mxu0
    %v5242 = vadd.f32 %v5155, %v5241
    %v5243 = vpop.f32.mrb[0].mxu0
    %5244 = vdwg.mxu0
    %v5245 = vmul.f32 %v4601, %v62
    %v5246 = vmul.f32 %v5242, %v63
    %v5247 = vadd.f32 %v5245, %v5246
    %s5248 = scalar_lea.vmem [#allocation8], 6
    %5249 = vst [vmem:[%s5248] sm:$0x3] %v5247
    %s5250 = scalar_lea.vmem [#allocation2], 8
    %v5251 = vld [vmem:[%s5250] sm:$0x3]
    %5252 = vmatprep.subr.mxu0 0.0
    %v5253 = vand.u32 %v64, 4294901760
    %5254 = vmatpush1.msra.mxu0 %v5253
    %5255 = vmatprep.subr.mxu0 0.0
    %v5256 = vand.u32 %v65, 4294901760
    %5257 = vmatpush1.msra.mxu0 %v5256
    %5258 = vmatprep.subr.mxu0 0.0
    %v5259 = vand.u32 %v66, 4294901760
    %5260 = vmatpush1.msra.mxu0 %v5259
    %5261 = vmatprep.subr.mxu0 0.0
    %v5262 = vand.u32 %v67, 4294901760
    %5263 = vmatpush1.msra.mxu0 %v5262
    %5264 = vmatprep.subr.mxu0 0.0
    %v5265 = vand.u32 %v68, 4294901760
    %5266 = vmatpush1.msra.mxu0 %v5265
    %5267 = vmatprep.subr.mxu0 0.0
    %v5268 = vand.u32 %v69, 4294901760
    %5269 = vmatpush1.msra.mxu0 %v5268
    %5270 = vmatprep.subr.mxu0 0.0
    %v5271 = vand.u32 %v70, 4294901760
    %5272 = vmatpush1.msra.mxu0 %v5271
    %5273 = vmatprep.subr.mxu0 0.0
    %v5274 = vand.u32 %v71, 4294901760
    %5275 = vmatpush1.msra.mxu0 %v5274
    %5276 = vmatprep.subr.mxu0 0.0
    %v5277 = vand.u32 %v72, 4294901760
    %5278 = vmatpush1.msra.mxu0 %v5277
    %5279 = vmatprep.subr.mxu0 0.0
    %v5280 = vand.u32 %v73, 4294901760
    %5281 = vmatpush1.msra.mxu0 %v5280
    %5282 = vmatprep.subr.mxu0 0.0
    %v5283 = vand.u32 %v74, 4294901760
    %5284 = vmatpush1.msra.mxu0 %v5283
    %5285 = vmatprep.subr.mxu0 0.0
    %v5286 = vand.u32 %v75, 4294901760
    %5287 = vmatpush1.msra.mxu0 %v5286
    %5288 = vmatprep.subr.mxu0 0.0
    %v5289 = vand.u32 %v76, 4294901760
    %5290 = vmatpush1.msra.mxu0 %v5289
    %5291 = vmatprep.subr.mxu0 0.0
    %v5292 = vand.u32 %v77, 4294901760
    %5293 = vmatpush1.msra.mxu0 %v5292
    %5294 = vmatprep.subr.mxu0 0.0
    %v5295 = vand.u32 %v78, 4294901760
    %5296 = vmatpush1.msra.mxu0 %v5295
    %5297 = vmatprep.subr.mxu0 0.0
    %v5298 = vand.u32 %v79, 4294901760
    %5299 = vmatpush1.msra.mxu0 %v5298
    %5300 = vmatprep.subr.mxu0 0.0
    %5301 = vmatpush1.msra.mxu0 0.0
    %5302 = vmatprep.subr.mxu0 0.0
    %5303 = vmatpush1.msra.mxu0 0.0
    %5304 = vmatprep.subr.mxu0 0.0
    %5305 = vmatpush1.msra.mxu0 0.0
    %5306 = vmatprep.subr.mxu0 0.0
    %5307 = vmatpush1.msra.mxu0 0.0
    %5308 = vmatprep.subr.mxu0 0.0
    %5309 = vmatpush1.msra.mxu0 0.0
    %5310 = vmatprep.subr.mxu0 0.0
    %5311 = vmatpush1.msra.mxu0 0.0
    %5312 = vmatprep.subr.mxu0 0.0
    %5313 = vmatpush1.msra.mxu0 0.0
    %5314 = vmatprep.subr.mxu0 0.0
    %5315 = vmatpush1.msra.mxu0 0.0
    %5316 = vmatprep.subr.mxu0 0.0
    %5317 = vmatpush1.msra.mxu0 0.0
    %5318 = vmatprep.subr.mxu0 0.0
    %5319 = vmatpush1.msra.mxu0 0.0
    %5320 = vmatprep.subr.mxu0 0.0
    %5321 = vmatpush1.msra.mxu0 0.0
    %5322 = vmatprep.subr.mxu0 0.0
    %5323 = vmatpush1.msra.mxu0 0.0
    %5324 = vmatprep.subr.mxu0 0.0
    %5325 = vmatpush1.msra.mxu0 0.0
    %5326 = vmatprep.subr.mxu0 0.0
    %5327 = vmatpush1.msra.mxu0 0.0
    %5328 = vmatprep.subr.mxu0 0.0
    %5329 = vmatpush1.msra.mxu0 0.0
    %5330 = vmatprep.subr.mxu0 0.0
    %5331 = vmatpush1.msra.mxu0 0.0
    %5332 = vmatprep.mubr.f32.mxu0 0.0
    %v5333 = vand.u32 %v5251, 4294901760
    %v5334 = vsub.f32 %v5251, %v5333
    %v5335 = vand.u32 %v5334, 4294901760
    %v5336 = vsub.f32 %v5334, %v5335
    %v5337 = vand.u32 %v5336, 4294901760
    %5338 = vmatmul.mubr.f32.gmra.mrb[0].mxu0 %v5337
    %v5339 = vpop.f32.mrb[0].mxu0
    %v5340 = vadd.f32 0.0, %v5339
    %v5341 = vpop.f32.mrb[0].mxu0
    %5342 = vdwg.mxu0
    %5343 = vmatprep.subr.mxu0 0.0
    %v5344 = vand.u32 %v64, 4294901760
    %v5345 = vsub.f32 %v64, %v5344
    %v5346 = vand.u32 %v5345, 4294901760
    %v5347 = vsub.f32 %v5345, %v5346
    %v5348 = vand.u32 %v5347, 4294901760
    %5349 = vmatpush1.msra.mxu0 %v5348
    %5350 = vmatprep.subr.mxu0 0.0
    %v5351 = vand.u32 %v65, 4294901760
    %v5352 = vsub.f32 %v65, %v5351
    %v5353 = vand.u32 %v5352, 4294901760
    %v5354 = vsub.f32 %v5352, %v5353
    %v5355 = vand.u32 %v5354, 4294901760
    %5356 = vmatpush1.msra.mxu0 %v5355
    %5357 = vmatprep.subr.mxu0 0.0
    %v5358 = vand.u32 %v66, 4294901760
    %v5359 = vsub.f32 %v66, %v5358
    %v5360 = vand.u32 %v5359, 4294901760
    %v5361 = vsub.f32 %v5359, %v5360
    %v5362 = vand.u32 %v5361, 4294901760
    %5363 = vmatpush1.msra.mxu0 %v5362
    %5364 = vmatprep.subr.mxu0 0.0
    %v5365 = vand.u32 %v67, 4294901760
    %v5366 = vsub.f32 %v67, %v5365
    %v5367 = vand.u32 %v5366, 4294901760
    %v5368 = vsub.f32 %v5366, %v5367
    %v5369 = vand.u32 %v5368, 4294901760
    %5370 = vmatpush1.msra.mxu0 %v5369
    %5371 = vmatprep.subr.mxu0 0.0
    %v5372 = vand.u32 %v68, 4294901760
    %v5373 = vsub.f32 %v68, %v5372
    %v5374 = vand.u32 %v5373, 4294901760
    %v5375 = vsub.f32 %v5373, %v5374
    %v5376 = vand.u32 %v5375, 4294901760
    %5377 = vmatpush1.msra.mxu0 %v5376
    %5378 = vmatprep.subr.mxu0 0.0
    %v5379 = vand.u32 %v69, 4294901760
    %v5380 = vsub.f32 %v69, %v5379
    %v5381 = vand.u32 %v5380, 4294901760
    %v5382 = vsub.f32 %v5380, %v5381
    %v5383 = vand.u32 %v5382, 4294901760
    %5384 = vmatpush1.msra.mxu0 %v5383
    %5385 = vmatprep.subr.mxu0 0.0
    %v5386 = vand.u32 %v70, 4294901760
    %v5387 = vsub.f32 %v70, %v5386
    %v5388 = vand.u32 %v5387, 4294901760
    %v5389 = vsub.f32 %v5387, %v5388
    %v5390 = vand.u32 %v5389, 4294901760
    %5391 = vmatpush1.msra.mxu0 %v5390
    %5392 = vmatprep.subr.mxu0 0.0
    %v5393 = vand.u32 %v71, 4294901760
    %v5394 = vsub.f32 %v71, %v5393
    %v5395 = vand.u32 %v5394, 4294901760
    %v5396 = vsub.f32 %v5394, %v5395
    %v5397 = vand.u32 %v5396, 4294901760
    %5398 = vmatpush1.msra.mxu0 %v5397
    %5399 = vmatprep.subr.mxu0 0.0
    %v5400 = vand.u32 %v72, 4294901760
    %v5401 = vsub.f32 %v72, %v5400
    %v5402 = vand.u32 %v5401, 4294901760
    %v5403 = vsub.f32 %v5401, %v5402
    %v5404 = vand.u32 %v5403, 4294901760
    %5405 = vmatpush1.msra.mxu0 %v5404
    %5406 = vmatprep.subr.mxu0 0.0
    %v5407 = vand.u32 %v73, 4294901760
    %v5408 = vsub.f32 %v73, %v5407
    %v5409 = vand.u32 %v5408, 4294901760
    %v5410 = vsub.f32 %v5408, %v5409
    %v5411 = vand.u32 %v5410, 4294901760
    %5412 = vmatpush1.msra.mxu0 %v5411
    %5413 = vmatprep.subr.mxu0 0.0
    %v5414 = vand.u32 %v74, 4294901760
    %v5415 = vsub.f32 %v74, %v5414
    %v5416 = vand.u32 %v5415, 4294901760
    %v5417 = vsub.f32 %v5415, %v5416
    %v5418 = vand.u32 %v5417, 4294901760
    %5419 = vmatpush1.msra.mxu0 %v5418
    %5420 = vmatprep.subr.mxu0 0.0
    %v5421 = vand.u32 %v75, 4294901760
    %v5422 = vsub.f32 %v75, %v5421
    %v5423 = vand.u32 %v5422, 4294901760
    %v5424 = vsub.f32 %v5422, %v5423
    %v5425 = vand.u32 %v5424, 4294901760
    %5426 = vmatpush1.msra.mxu0 %v5425
    %5427 = vmatprep.subr.mxu0 0.0
    %v5428 = vand.u32 %v76, 4294901760
    %v5429 = vsub.f32 %v76, %v5428
    %v5430 = vand.u32 %v5429, 4294901760
    %v5431 = vsub.f32 %v5429, %v5430
    %v5432 = vand.u32 %v5431, 4294901760
    %5433 = vmatpush1.msra.mxu0 %v5432
    %5434 = vmatprep.subr.mxu0 0.0
    %v5435 = vand.u32 %v77, 4294901760
    %v5436 = vsub.f32 %v77, %v5435
    %v5437 = vand.u32 %v5436, 4294901760
    %v5438 = vsub.f32 %v5436, %v5437
    %v5439 = vand.u32 %v5438, 4294901760
    %5440 = vmatpush1.msra.mxu0 %v5439
    %5441 = vmatprep.subr.mxu0 0.0
    %v5442 = vand.u32 %v78, 4294901760
    %v5443 = vsub.f32 %v78, %v5442
    %v5444 = vand.u32 %v5443, 4294901760
    %v5445 = vsub.f32 %v5443, %v5444
    %v5446 = vand.u32 %v5445, 4294901760
    %5447 = vmatpush1.msra.mxu0 %v5446
    %5448 = vmatprep.subr.mxu0 0.0
    %v5449 = vand.u32 %v79, 4294901760
    %v5450 = vsub.f32 %v79, %v5449
    %v5451 = vand.u32 %v5450, 4294901760
    %v5452 = vsub.f32 %v5450, %v5451
    %v5453 = vand.u32 %v5452, 4294901760
    %5454 = vmatpush1.msra.mxu0 %v5453
    %5455 = vmatprep.subr.mxu0 0.0
    %5456 = vmatpush1.msra.mxu0 0.0
    %5457 = vmatprep.subr.mxu0 0.0
    %5458 = vmatpush1.msra.mxu0 0.0
    %5459 = vmatprep.subr.mxu0 0.0
    %5460 = vmatpush1.msra.mxu0 0.0
    %5461 = vmatprep.subr.mxu0 0.0
    %5462 = vmatpush1.msra.mxu0 0.0
    %5463 = vmatprep.subr.mxu0 0.0
    %5464 = vmatpush1.msra.mxu0 0.0
    %5465 = vmatprep.subr.mxu0 0.0
    %5466 = vmatpush1.msra.mxu0 0.0
    %5467 = vmatprep.subr.mxu0 0.0
    %5468 = vmatpush1.msra.mxu0 0.0
    %5469 = vmatprep.subr.mxu0 0.0
    %5470 = vmatpush1.msra.mxu0 0.0
    %5471 = vmatprep.subr.mxu0 0.0
    %5472 = vmatpush1.msra.mxu0 0.0
    %5473 = vmatprep.subr.mxu0 0.0
    %5474 = vmatpush1.msra.mxu0 0.0
    %5475 = vmatprep.subr.mxu0 0.0
    %5476 = vmatpush1.msra.mxu0 0.0
    %5477 = vmatprep.subr.mxu0 0.0
    %5478 = vmatpush1.msra.mxu0 0.0
    %5479 = vmatprep.subr.mxu0 0.0
    %5480 = vmatpush1.msra.mxu0 0.0
    %5481 = vmatprep.subr.mxu0 0.0
    %5482 = vmatpush1.msra.mxu0 0.0
    %5483 = vmatprep.subr.mxu0 0.0
    %5484 = vmatpush1.msra.mxu0 0.0
    %5485 = vmatprep.subr.mxu0 0.0
    %5486 = vmatpush1.msra.mxu0 0.0
    %5487 = vmatprep.mubr.f32.mxu0 0.0
    %v5488 = vand.u32 %v5251, 4294901760
    %5489 = vmatmul.mubr.f32.gmra.mrb[0].mxu0 %v5488
    %v5490 = vpop.f32.mrb[0].mxu0
    %v5491 = vadd.f32 %v5340, %v5490
    %v5492 = vpop.f32.mrb[0].mxu0
    %5493 = vdwg.mxu0
    %5494 = vmatprep.subr.mxu0 0.0
    %v5495 = vand.u32 %v64, 4294901760
    %v5496 = vsub.f32 %v64, %v5495
    %5497 = vmatpush1.msra.mxu0 %v5496
    %5498 = vmatprep.subr.mxu0 0.0
    %v5499 = vand.u32 %v65, 4294901760
    %v5500 = vsub.f32 %v65, %v5499
    %5501 = vmatpush1.msra.mxu0 %v5500
    %5502 = vmatprep.subr.mxu0 0.0
    %v5503 = vand.u32 %v66, 4294901760
    %v5504 = vsub.f32 %v66, %v5503
    %5505 = vmatpush1.msra.mxu0 %v5504
    %5506 = vmatprep.subr.mxu0 0.0
    %v5507 = vand.u32 %v67, 4294901760
    %v5508 = vsub.f32 %v67, %v5507
    %5509 = vmatpush1.msra.mxu0 %v5508
    %5510 = vmatprep.subr.mxu0 0.0
    %v5511 = vand.u32 %v68, 4294901760
    %v5512 = vsub.f32 %v68, %v5511
    %5513 = vmatpush1.msra.mxu0 %v5512
    %5514 = vmatprep.subr.mxu0 0.0
    %v5515 = vand.u32 %v69, 4294901760
    %v5516 = vsub.f32 %v69, %v5515
    %5517 = vmatpush1.msra.mxu0 %v5516
    %5518 = vmatprep.subr.mxu0 0.0
    %v5519 = vand.u32 %v70, 4294901760
    %v5520 = vsub.f32 %v70, %v5519
    %5521 = vmatpush1.msra.mxu0 %v5520
    %5522 = vmatprep.subr.mxu0 0.0
    %v5523 = vand.u32 %v71, 4294901760
    %v5524 = vsub.f32 %v71, %v5523
    %5525 = vmatpush1.msra.mxu0 %v5524
    %5526 = vmatprep.subr.mxu0 0.0
    %v5527 = vand.u32 %v72, 4294901760
    %v5528 = vsub.f32 %v72, %v5527
    %5529 = vmatpush1.msra.mxu0 %v5528
    %5530 = vmatprep.subr.mxu0 0.0
    %v5531 = vand.u32 %v73, 4294901760
    %v5532 = vsub.f32 %v73, %v5531
    %5533 = vmatpush1.msra.mxu0 %v5532
    %5534 = vmatprep.subr.mxu0 0.0
    %v5535 = vand.u32 %v74, 4294901760
    %v5536 = vsub.f32 %v74, %v5535
    %5537 = vmatpush1.msra.mxu0 %v5536
    %5538 = vmatprep.subr.mxu0 0.0
    %v5539 = vand.u32 %v75, 4294901760
    %v5540 = vsub.f32 %v75, %v5539
    %5541 = vmatpush1.msra.mxu0 %v5540
    %5542 = vmatprep.subr.mxu0 0.0
    %v5543 = vand.u32 %v76, 4294901760
    %v5544 = vsub.f32 %v76, %v5543
    %5545 = vmatpush1.msra.mxu0 %v5544
    %5546 = vmatprep.subr.mxu0 0.0
    %v5547 = vand.u32 %v77, 4294901760
    %v5548 = vsub.f32 %v77, %v5547
    %5549 = vmatpush1.msra.mxu0 %v5548
    %5550 = vmatprep.subr.mxu0 0.0
    %v5551 = vand.u32 %v78, 4294901760
    %v5552 = vsub.f32 %v78, %v5551
    %5553 = vmatpush1.msra.mxu0 %v5552
    %5554 = vmatprep.subr.mxu0 0.0
    %v5555 = vand.u32 %v79, 4294901760
    %v5556 = vsub.f32 %v79, %v5555
    %5557 = vmatpush1.msra.mxu0 %v5556
    %5558 = vmatprep.subr.mxu0 0.0
    %5559 = vmatpush1.msra.mxu0 0.0
    %5560 = vmatprep.subr.mxu0 0.0
    %5561 = vmatpush1.msra.mxu0 0.0
    %5562 = vmatprep.subr.mxu0 0.0
    %5563 = vmatpush1.msra.mxu0 0.0
    %5564 = vmatprep.subr.mxu0 0.0
    %5565 = vmatpush1.msra.mxu0 0.0
    %5566 = vmatprep.subr.mxu0 0.0
    %5567 = vmatpush1.msra.mxu0 0.0
    %5568 = vmatprep.subr.mxu0 0.0
    %5569 = vmatpush1.msra.mxu0 0.0
    %5570 = vmatprep.subr.mxu0 0.0
    %5571 = vmatpush1.msra.mxu0 0.0
    %5572 = vmatprep.subr.mxu0 0.0
    %5573 = vmatpush1.msra.mxu0 0.0
    %5574 = vmatprep.subr.mxu0 0.0
    %5575 = vmatpush1.msra.mxu0 0.0
    %5576 = vmatprep.subr.mxu0 0.0
    %5577 = vmatpush1.msra.mxu0 0.0
    %5578 = vmatprep.subr.mxu0 0.0
    %5579 = vmatpush1.msra.mxu0 0.0
    %5580 = vmatprep.subr.mxu0 0.0
    %5581 = vmatpush1.msra.mxu0 0.0
    %5582 = vmatprep.subr.mxu0 0.0
    %5583 = vmatpush1.msra.mxu0 0.0
    %5584 = vmatprep.subr.mxu0 0.0
    %5585 = vmatpush1.msra.mxu0 0.0
    %5586 = vmatprep.subr.mxu0 0.0
    %5587 = vmatpush1.msra.mxu0 0.0
    %5588 = vmatprep.subr.mxu0 0.0
    %5589 = vmatpush1.msra.mxu0 0.0
    %5590 = vmatprep.mubr.f32.mxu0 0.0
    %v5591 = vand.u32 %v5251, 4294901760
    %v5592 = vsub.f32 %v5251, %v5591
    %5593 = vmatmul.mubr.f32.gmra.mrb[0].mxu0 %v5592
    %v5594 = vpop.f32.mrb[0].mxu0
    %v5595 = vadd.f32 %v5491, %v5594
    %v5596 = vpop.f32.mrb[0].mxu0
    %5597 = vdwg.mxu0
    %5598 = vmatprep.subr.mxu0 0.0
    %v5599 = vand.u32 %v64, 4294901760
    %5600 = vmatpush1.msra.mxu0 %v5599
    %5601 = vmatprep.subr.mxu0 0.0
    %v5602 = vand.u32 %v65, 4294901760
    %5603 = vmatpush1.msra.mxu0 %v5602
    %5604 = vmatprep.subr.mxu0 0.0
    %v5605 = vand.u32 %v66, 4294901760
    %5606 = vmatpush1.msra.mxu0 %v5605
    %5607 = vmatprep.subr.mxu0 0.0
    %v5608 = vand.u32 %v67, 4294901760
    %5609 = vmatpush1.msra.mxu0 %v5608
    %5610 = vmatprep.subr.mxu0 0.0
    %v5611 = vand.u32 %v68, 4294901760
    %5612 = vmatpush1.msra.mxu0 %v5611
    %5613 = vmatprep.subr.mxu0 0.0
    %v5614 = vand.u32 %v69, 4294901760
    %5615 = vmatpush1.msra.mxu0 %v5614
    %5616 = vmatprep.subr.mxu0 0.0
    %v5617 = vand.u32 %v70, 4294901760
    %5618 = vmatpush1.msra.mxu0 %v5617
    %5619 = vmatprep.subr.mxu0 0.0
    %v5620 = vand.u32 %v71, 4294901760
    %5621 = vmatpush1.msra.mxu0 %v5620
    %5622 = vmatprep.subr.mxu0 0.0
    %v5623 = vand.u32 %v72, 4294901760
    %5624 = vmatpush1.msra.mxu0 %v5623
    %5625 = vmatprep.subr.mxu0 0.0
    %v5626 = vand.u32 %v73, 4294901760
    %5627 = vmatpush1.msra.mxu0 %v5626
    %5628 = vmatprep.subr.mxu0 0.0
    %v5629 = vand.u32 %v74, 4294901760
    %5630 = vmatpush1.msra.mxu0 %v5629
    %5631 = vmatprep.subr.mxu0 0.0
    %v5632 = vand.u32 %v75, 4294901760
    %5633 = vmatpush1.msra.mxu0 %v5632
    %5634 = vmatprep.subr.mxu0 0.0
    %v5635 = vand.u32 %v76, 4294901760
    %5636 = vmatpush1.msra.mxu0 %v5635
    %5637 = vmatprep.subr.mxu0 0.0
    %v5638 = vand.u32 %v77, 4294901760
    %5639 = vmatpush1.msra.mxu0 %v5638
    %5640 = vmatprep.subr.mxu0 0.0
    %v5641 = vand.u32 %v78, 4294901760
    %5642 = vmatpush1.msra.mxu0 %v5641
    %5643 = vmatprep.subr.mxu0 0.0
    %v5644 = vand.u32 %v79, 4294901760
    %5645 = vmatpush1.msra.mxu0 %v5644
    %5646 = vmatprep.subr.mxu0 0.0
    %5647 = vmatpush1.msra.mxu0 0.0
    %5648 = vmatprep.subr.mxu0 0.0
    %5649 = vmatpush1.msra.mxu0 0.0
    %5650 = vmatprep.subr.mxu0 0.0
    %5651 = vmatpush1.msra.mxu0 0.0
    %5652 = vmatprep.subr.mxu0 0.0
    %5653 = vmatpush1.msra.mxu0 0.0
    %5654 = vmatprep.subr.mxu0 0.0
    %5655 = vmatpush1.msra.mxu0 0.0
    %5656 = vmatprep.subr.mxu0 0.0
    %5657 = vmatpush1.msra.mxu0 0.0
    %5658 = vmatprep.subr.mxu0 0.0
    %5659 = vmatpush1.msra.mxu0 0.0
    %5660 = vmatprep.subr.mxu0 0.0
    %5661 = vmatpush1.msra.mxu0 0.0
    %5662 = vmatprep.subr.mxu0 0.0
    %5663 = vmatpush1.msra.mxu0 0.0
    %5664 = vmatprep.subr.mxu0 0.0
    %5665 = vmatpush1.msra.mxu0 0.0
    %5666 = vmatprep.subr.mxu0 0.0
    %5667 = vmatpush1.msra.mxu0 0.0
    %5668 = vmatprep.subr.mxu0 0.0
    %5669 = vmatpush1.msra.mxu0 0.0
    %5670 = vmatprep.subr.mxu0 0.0
    %5671 = vmatpush1.msra.mxu0 0.0
    %5672 = vmatprep.subr.mxu0 0.0
    %5673 = vmatpush1.msra.mxu0 0.0
    %5674 = vmatprep.subr.mxu0 0.0
    %5675 = vmatpush1.msra.mxu0 0.0
    %5676 = vmatprep.subr.mxu0 0.0
    %5677 = vmatpush1.msra.mxu0 0.0
    %5678 = vmatprep.mubr.f32.mxu0 0.0
    %v5679 = vand.u32 %v5251, 4294901760
    %v5680 = vsub.f32 %v5251, %v5679
    %v5681 = vand.u32 %v5680, 4294901760
    %5682 = vmatmul.mubr.f32.gmra.mrb[0].mxu0 %v5681
    %v5683 = vpop.f32.mrb[0].mxu0
    %v5684 = vadd.f32 %v5595, %v5683
    %v5685 = vpop.f32.mrb[0].mxu0
    %5686 = vdwg.mxu0
    %5687 = vmatprep.subr.mxu0 0.0
    %v5688 = vand.u32 %v64, 4294901760
    %v5689 = vsub.f32 %v64, %v5688
    %v5690 = vand.u32 %v5689, 4294901760
    %5691 = vmatpush1.msra.mxu0 %v5690
    %5692 = vmatprep.subr.mxu0 0.0
    %v5693 = vand.u32 %v65, 4294901760
    %v5694 = vsub.f32 %v65, %v5693
    %v5695 = vand.u32 %v5694, 4294901760
    %5696 = vmatpush1.msra.mxu0 %v5695
    %5697 = vmatprep.subr.mxu0 0.0
    %v5698 = vand.u32 %v66, 4294901760
    %v5699 = vsub.f32 %v66, %v5698
    %v5700 = vand.u32 %v5699, 4294901760
    %5701 = vmatpush1.msra.mxu0 %v5700
    %5702 = vmatprep.subr.mxu0 0.0
    %v5703 = vand.u32 %v67, 4294901760
    %v5704 = vsub.f32 %v67, %v5703
    %v5705 = vand.u32 %v5704, 4294901760
    %5706 = vmatpush1.msra.mxu0 %v5705
    %5707 = vmatprep.subr.mxu0 0.0
    %v5708 = vand.u32 %v68, 4294901760
    %v5709 = vsub.f32 %v68, %v5708
    %v5710 = vand.u32 %v5709, 4294901760
    %5711 = vmatpush1.msra.mxu0 %v5710
    %5712 = vmatprep.subr.mxu0 0.0
    %v5713 = vand.u32 %v69, 4294901760
    %v5714 = vsub.f32 %v69, %v5713
    %v5715 = vand.u32 %v5714, 4294901760
    %5716 = vmatpush1.msra.mxu0 %v5715
    %5717 = vmatprep.subr.mxu0 0.0
    %v5718 = vand.u32 %v70, 4294901760
    %v5719 = vsub.f32 %v70, %v5718
    %v5720 = vand.u32 %v5719, 4294901760
    %5721 = vmatpush1.msra.mxu0 %v5720
    %5722 = vmatprep.subr.mxu0 0.0
    %v5723 = vand.u32 %v71, 4294901760
    %v5724 = vsub.f32 %v71, %v5723
    %v5725 = vand.u32 %v5724, 4294901760
    %5726 = vmatpush1.msra.mxu0 %v5725
    %5727 = vmatprep.subr.mxu0 0.0
    %v5728 = vand.u32 %v72, 4294901760
    %v5729 = vsub.f32 %v72, %v5728
    %v5730 = vand.u32 %v5729, 4294901760
    %5731 = vmatpush1.msra.mxu0 %v5730
    %5732 = vmatprep.subr.mxu0 0.0
    %v5733 = vand.u32 %v73, 4294901760
    %v5734 = vsub.f32 %v73, %v5733
    %v5735 = vand.u32 %v5734, 4294901760
    %5736 = vmatpush1.msra.mxu0 %v5735
    %5737 = vmatprep.subr.mxu0 0.0
    %v5738 = vand.u32 %v74, 4294901760
    %v5739 = vsub.f32 %v74, %v5738
    %v5740 = vand.u32 %v5739, 4294901760
    %5741 = vmatpush1.msra.mxu0 %v5740
    %5742 = vmatprep.subr.mxu0 0.0
    %v5743 = vand.u32 %v75, 4294901760
    %v5744 = vsub.f32 %v75, %v5743
    %v5745 = vand.u32 %v5744, 4294901760
    %5746 = vmatpush1.msra.mxu0 %v5745
    %5747 = vmatprep.subr.mxu0 0.0
    %v5748 = vand.u32 %v76, 4294901760
    %v5749 = vsub.f32 %v76, %v5748
    %v5750 = vand.u32 %v5749, 4294901760
    %5751 = vmatpush1.msra.mxu0 %v5750
    %5752 = vmatprep.subr.mxu0 0.0
    %v5753 = vand.u32 %v77, 4294901760
    %v5754 = vsub.f32 %v77, %v5753
    %v5755 = vand.u32 %v5754, 4294901760
    %5756 = vmatpush1.msra.mxu0 %v5755
    %5757 = vmatprep.subr.mxu0 0.0
    %v5758 = vand.u32 %v78, 4294901760
    %v5759 = vsub.f32 %v78, %v5758
    %v5760 = vand.u32 %v5759, 4294901760
    %5761 = vmatpush1.msra.mxu0 %v5760
    %5762 = vmatprep.subr.mxu0 0.0
    %v5763 = vand.u32 %v79, 4294901760
    %v5764 = vsub.f32 %v79, %v5763
    %v5765 = vand.u32 %v5764, 4294901760
    %5766 = vmatpush1.msra.mxu0 %v5765
    %5767 = vmatprep.subr.mxu0 0.0
    %5768 = vmatpush1.msra.mxu0 0.0
    %5769 = vmatprep.subr.mxu0 0.0
    %5770 = vmatpush1.msra.mxu0 0.0
    %5771 = vmatprep.subr.mxu0 0.0
    %5772 = vmatpush1.msra.mxu0 0.0
    %5773 = vmatprep.subr.mxu0 0.0
    %5774 = vmatpush1.msra.mxu0 0.0
    %5775 = vmatprep.subr.mxu0 0.0
    %5776 = vmatpush1.msra.mxu0 0.0
    %5777 = vmatprep.subr.mxu0 0.0
    %5778 = vmatpush1.msra.mxu0 0.0
    %5779 = vmatprep.subr.mxu0 0.0
    %5780 = vmatpush1.msra.mxu0 0.0
    %5781 = vmatprep.subr.mxu0 0.0
    %5782 = vmatpush1.msra.mxu0 0.0
    %5783 = vmatprep.subr.mxu0 0.0
    %5784 = vmatpush1.msra.mxu0 0.0
    %5785 = vmatprep.subr.mxu0 0.0
    %5786 = vmatpush1.msra.mxu0 0.0
    %5787 = vmatprep.subr.mxu0 0.0
    %5788 = vmatpush1.msra.mxu0 0.0
    %5789 = vmatprep.subr.mxu0 0.0
    %5790 = vmatpush1.msra.mxu0 0.0
    %5791 = vmatprep.subr.mxu0 0.0
    %5792 = vmatpush1.msra.mxu0 0.0
    %5793 = vmatprep.subr.mxu0 0.0
    %5794 = vmatpush1.msra.mxu0 0.0
    %5795 = vmatprep.subr.mxu0 0.0
    %5796 = vmatpush1.msra.mxu0 0.0
    %5797 = vmatprep.subr.mxu0 0.0
    %5798 = vmatpush1.msra.mxu0 0.0
    %5799 = vmatprep.mubr.f32.mxu0 0.0
    %v5800 = vand.u32 %v5251, 4294901760
    %5801 = vmatmul.mubr.f32.gmra.mrb[0].mxu0 %v5800
    %v5802 = vpop.f32.mrb[0].mxu0
    %v5803 = vadd.f32 %v5684, %v5802
    %v5804 = vpop.f32.mrb[0].mxu0
    %5805 = vdwg.mxu0
    %5806 = vmatprep.subr.mxu0 0.0
    %v5807 = vand.u32 %v64, 4294901760
    %5808 = vmatpush1.msra.mxu0 %v5807
    %5809 = vmatprep.subr.mxu0 0.0
    %v5810 = vand.u32 %v65, 4294901760
    %5811 = vmatpush1.msra.mxu0 %v5810
    %5812 = vmatprep.subr.mxu0 0.0
    %v5813 = vand.u32 %v66, 4294901760
    %5814 = vmatpush1.msra.mxu0 %v5813
    %5815 = vmatprep.subr.mxu0 0.0
    %v5816 = vand.u32 %v67, 4294901760
    %5817 = vmatpush1.msra.mxu0 %v5816
    %5818 = vmatprep.subr.mxu0 0.0
    %v5819 = vand.u32 %v68, 4294901760
    %5820 = vmatpush1.msra.mxu0 %v5819
    %5821 = vmatprep.subr.mxu0 0.0
    %v5822 = vand.u32 %v69, 4294901760
    %5823 = vmatpush1.msra.mxu0 %v5822
    %5824 = vmatprep.subr.mxu0 0.0
    %v5825 = vand.u32 %v70, 4294901760
    %5826 = vmatpush1.msra.mxu0 %v5825
    %5827 = vmatprep.subr.mxu0 0.0
    %v5828 = vand.u32 %v71, 4294901760
    %5829 = vmatpush1.msra.mxu0 %v5828
    %5830 = vmatprep.subr.mxu0 0.0
    %v5831 = vand.u32 %v72, 4294901760
    %5832 = vmatpush1.msra.mxu0 %v5831
    %5833 = vmatprep.subr.mxu0 0.0
    %v5834 = vand.u32 %v73, 4294901760
    %5835 = vmatpush1.msra.mxu0 %v5834
    %5836 = vmatprep.subr.mxu0 0.0
    %v5837 = vand.u32 %v74, 4294901760
    %5838 = vmatpush1.msra.mxu0 %v5837
    %5839 = vmatprep.subr.mxu0 0.0
    %v5840 = vand.u32 %v75, 4294901760
    %5841 = vmatpush1.msra.mxu0 %v5840
    %5842 = vmatprep.subr.mxu0 0.0
    %v5843 = vand.u32 %v76, 4294901760
    %5844 = vmatpush1.msra.mxu0 %v5843
    %5845 = vmatprep.subr.mxu0 0.0
    %v5846 = vand.u32 %v77, 4294901760
    %5847 = vmatpush1.msra.mxu0 %v5846
    %5848 = vmatprep.subr.mxu0 0.0
    %v5849 = vand.u32 %v78, 4294901760
    %5850 = vmatpush1.msra.mxu0 %v5849
    %5851 = vmatprep.subr.mxu0 0.0
    %v5852 = vand.u32 %v79, 4294901760
    %5853 = vmatpush1.msra.mxu0 %v5852
    %5854 = vmatprep.subr.mxu0 0.0
    %5855 = vmatpush1.msra.mxu0 0.0
    %5856 = vmatprep.subr.mxu0 0.0
    %5857 = vmatpush1.msra.mxu0 0.0
    %5858 = vmatprep.subr.mxu0 0.0
    %5859 = vmatpush1.msra.mxu0 0.0
    %5860 = vmatprep.subr.mxu0 0.0
    %5861 = vmatpush1.msra.mxu0 0.0
    %5862 = vmatprep.subr.mxu0 0.0
    %5863 = vmatpush1.msra.mxu0 0.0
    %5864 = vmatprep.subr.mxu0 0.0
    %5865 = vmatpush1.msra.mxu0 0.0
    %5866 = vmatprep.subr.mxu0 0.0
    %5867 = vmatpush1.msra.mxu0 0.0
    %5868 = vmatprep.subr.mxu0 0.0
    %5869 = vmatpush1.msra.mxu0 0.0
    %5870 = vmatprep.subr.mxu0 0.0
    %5871 = vmatpush1.msra.mxu0 0.0
    %5872 = vmatprep.subr.mxu0 0.0
    %5873 = vmatpush1.msra.mxu0 0.0
    %5874 = vmatprep.subr.mxu0 0.0
    %5875 = vmatpush1.msra.mxu0 0.0
    %5876 = vmatprep.subr.mxu0 0.0
    %5877 = vmatpush1.msra.mxu0 0.0
    %5878 = vmatprep.subr.mxu0 0.0
    %5879 = vmatpush1.msra.mxu0 0.0
    %5880 = vmatprep.subr.mxu0 0.0
    %5881 = vmatpush1.msra.mxu0 0.0
    %5882 = vmatprep.subr.mxu0 0.0
    %5883 = vmatpush1.msra.mxu0 0.0
    %5884 = vmatprep.subr.mxu0 0.0
    %5885 = vmatpush1.msra.mxu0 0.0
    %5886 = vmatprep.mubr.f32.mxu0 0.0
    %v5887 = vand.u32 %v5251, 4294901760
    %5888 = vmatmul.mubr.f32.gmra.mrb[0].mxu0 %v5887
    %v5889 = vpop.f32.mrb[0].mxu0
    %v5890 = vadd.f32 %v5803, %v5889
    %v5891 = vpop.f32.mrb[0].mxu0
    %5892 = vdwg.mxu0
    %5893 = vmatprep.subr.mxu0 0.0
    %v5894 = vand.u32 %v80, 4294901760
    %5895 = vmatpush1.msra.mxu0 %v5894
    %5896 = vmatprep.subr.mxu0 0.0
    %v5897 = vand.u32 %v81, 4294901760
    %5898 = vmatpush1.msra.mxu0 %v5897
    %5899 = vmatprep.subr.mxu0 0.0
    %v5900 = vand.u32 %v82, 4294901760
    %5901 = vmatpush1.msra.mxu0 %v5900
    %5902 = vmatprep.subr.mxu0 0.0
    %v5903 = vand.u32 %v83, 4294901760
    %5904 = vmatpush1.msra.mxu0 %v5903
    %5905 = vmatprep.subr.mxu0 0.0
    %v5906 = vand.u32 %v84, 4294901760
    %5907 = vmatpush1.msra.mxu0 %v5906
    %5908 = vmatprep.subr.mxu0 0.0
    %v5909 = vand.u32 %v85, 4294901760
    %5910 = vmatpush1.msra.mxu0 %v5909
    %5911 = vmatprep.subr.mxu0 0.0
    %v5912 = vand.u32 %v86, 4294901760
    %5913 = vmatpush1.msra.mxu0 %v5912
    %5914 = vmatprep.subr.mxu0 0.0
    %v5915 = vand.u32 %v87, 4294901760
    %5916 = vmatpush1.msra.mxu0 %v5915
    %5917 = vmatprep.subr.mxu0 0.0
    %v5918 = vand.u32 %v88, 4294901760
    %5919 = vmatpush1.msra.mxu0 %v5918
    %5920 = vmatprep.subr.mxu0 0.0
    %v5921 = vand.u32 %v89, 4294901760
    %5922 = vmatpush1.msra.mxu0 %v5921
    %5923 = vmatprep.subr.mxu0 0.0
    %v5924 = vand.u32 %v90, 4294901760
    %5925 = vmatpush1.msra.mxu0 %v5924
    %5926 = vmatprep.subr.mxu0 0.0
    %v5927 = vand.u32 %v91, 4294901760
    %5928 = vmatpush1.msra.mxu0 %v5927
    %5929 = vmatprep.subr.mxu0 0.0
    %v5930 = vand.u32 %v92, 4294901760
    %5931 = vmatpush1.msra.mxu0 %v5930
    %5932 = vmatprep.subr.mxu0 0.0
    %v5933 = vand.u32 %v93, 4294901760
    %5934 = vmatpush1.msra.mxu0 %v5933
    %5935 = vmatprep.subr.mxu0 0.0
    %v5936 = vand.u32 %v94, 4294901760
    %5937 = vmatpush1.msra.mxu0 %v5936
    %5938 = vmatprep.subr.mxu0 0.0
    %v5939 = vand.u32 %v95, 4294901760
    %5940 = vmatpush1.msra.mxu0 %v5939
    %5941 = vmatprep.subr.mxu0 0.0
    %5942 = vmatpush1.msra.mxu0 0.0
    %5943 = vmatprep.subr.mxu0 0.0
    %5944 = vmatpush1.msra.mxu0 0.0
    %5945 = vmatprep.subr.mxu0 0.0
    %5946 = vmatpush1.msra.mxu0 0.0
    %5947 = vmatprep.subr.mxu0 0.0
    %5948 = vmatpush1.msra.mxu0 0.0
    %5949 = vmatprep.subr.mxu0 0.0
    %5950 = vmatpush1.msra.mxu0 0.0
    %5951 = vmatprep.subr.mxu0 0.0
    %5952 = vmatpush1.msra.mxu0 0.0
    %5953 = vmatprep.subr.mxu0 0.0
    %5954 = vmatpush1.msra.mxu0 0.0
    %5955 = vmatprep.subr.mxu0 0.0
    %5956 = vmatpush1.msra.mxu0 0.0
    %5957 = vmatprep.subr.mxu0 0.0
    %5958 = vmatpush1.msra.mxu0 0.0
    %5959 = vmatprep.subr.mxu0 0.0
    %5960 = vmatpush1.msra.mxu0 0.0
    %5961 = vmatprep.subr.mxu0 0.0
    %5962 = vmatpush1.msra.mxu0 0.0
    %5963 = vmatprep.subr.mxu0 0.0
    %5964 = vmatpush1.msra.mxu0 0.0
    %5965 = vmatprep.subr.mxu0 0.0
    %5966 = vmatpush1.msra.mxu0 0.0
    %5967 = vmatprep.subr.mxu0 0.0
    %5968 = vmatpush1.msra.mxu0 0.0
    %5969 = vmatprep.subr.mxu0 0.0
    %5970 = vmatpush1.msra.mxu0 0.0
    %5971 = vmatprep.subr.mxu0 0.0
    %5972 = vmatpush1.msra.mxu0 0.0
    %5973 = vmatprep.mubr.f32.mxu0 0.0
    %v5974 = vand.u32 %v5251, 4294901760
    %v5975 = vsub.f32 %v5251, %v5974
    %v5976 = vand.u32 %v5975, 4294901760
    %v5977 = vsub.f32 %v5975, %v5976
    %v5978 = vand.u32 %v5977, 4294901760
    %5979 = vmatmul.mubr.f32.gmra.mrb[0].mxu0 %v5978
    %v5980 = vpop.f32.mrb[0].mxu0
    %v5981 = vadd.f32 0.0, %v5980
    %v5982 = vpop.f32.mrb[0].mxu0
    %5983 = vdwg.mxu0
    %5984 = vmatprep.subr.mxu0 0.0
    %v5985 = vand.u32 %v80, 4294901760
    %v5986 = vsub.f32 %v80, %v5985
    %v5987 = vand.u32 %v5986, 4294901760
    %v5988 = vsub.f32 %v5986, %v5987
    %v5989 = vand.u32 %v5988, 4294901760
    %5990 = vmatpush1.msra.mxu0 %v5989
    %5991 = vmatprep.subr.mxu0 0.0
    %v5992 = vand.u32 %v81, 4294901760
    %v5993 = vsub.f32 %v81, %v5992
    %v5994 = vand.u32 %v5993, 4294901760
    %v5995 = vsub.f32 %v5993, %v5994
    %v5996 = vand.u32 %v5995, 4294901760
    %5997 = vmatpush1.msra.mxu0 %v5996
    %5998 = vmatprep.subr.mxu0 0.0
    %v5999 = vand.u32 %v82, 4294901760
    %v6000 = vsub.f32 %v82, %v5999
    %v6001 = vand.u32 %v6000, 4294901760
    %v6002 = vsub.f32 %v6000, %v6001
    %v6003 = vand.u32 %v6002, 4294901760
    %6004 = vmatpush1.msra.mxu0 %v6003
    %6005 = vmatprep.subr.mxu0 0.0
    %v6006 = vand.u32 %v83, 4294901760
    %v6007 = vsub.f32 %v83, %v6006
    %v6008 = vand.u32 %v6007, 4294901760
    %v6009 = vsub.f32 %v6007, %v6008
    %v6010 = vand.u32 %v6009, 4294901760
    %6011 = vmatpush1.msra.mxu0 %v6010
    %6012 = vmatprep.subr.mxu0 0.0
    %v6013 = vand.u32 %v84, 4294901760
    %v6014 = vsub.f32 %v84, %v6013
    %v6015 = vand.u32 %v6014, 4294901760
    %v6016 = vsub.f32 %v6014, %v6015
    %v6017 = vand.u32 %v6016, 4294901760
    %6018 = vmatpush1.msra.mxu0 %v6017
    %6019 = vmatprep.subr.mxu0 0.0
    %v6020 = vand.u32 %v85, 4294901760
    %v6021 = vsub.f32 %v85, %v6020
    %v6022 = vand.u32 %v6021, 4294901760
    %v6023 = vsub.f32 %v6021, %v6022
    %v6024 = vand.u32 %v6023, 4294901760
    %6025 = vmatpush1.msra.mxu0 %v6024
    %6026 = vmatprep.subr.mxu0 0.0
    %v6027 = vand.u32 %v86, 4294901760
    %v6028 = vsub.f32 %v86, %v6027
    %v6029 = vand.u32 %v6028, 4294901760
    %v6030 = vsub.f32 %v6028, %v6029
    %v6031 = vand.u32 %v6030, 4294901760
    %6032 = vmatpush1.msra.mxu0 %v6031
    %6033 = vmatprep.subr.mxu0 0.0
    %v6034 = vand.u32 %v87, 4294901760
    %v6035 = vsub.f32 %v87, %v6034
    %v6036 = vand.u32 %v6035, 4294901760
    %v6037 = vsub.f32 %v6035, %v6036
    %v6038 = vand.u32 %v6037, 4294901760
    %6039 = vmatpush1.msra.mxu0 %v6038
    %6040 = vmatprep.subr.mxu0 0.0
    %v6041 = vand.u32 %v88, 4294901760
    %v6042 = vsub.f32 %v88, %v6041
    %v6043 = vand.u32 %v6042, 4294901760
    %v6044 = vsub.f32 %v6042, %v6043
    %v6045 = vand.u32 %v6044, 4294901760
    %6046 = vmatpush1.msra.mxu0 %v6045
    %6047 = vmatprep.subr.mxu0 0.0
    %v6048 = vand.u32 %v89, 4294901760
    %v6049 = vsub.f32 %v89, %v6048
    %v6050 = vand.u32 %v6049, 4294901760
    %v6051 = vsub.f32 %v6049, %v6050
    %v6052 = vand.u32 %v6051, 4294901760
    %6053 = vmatpush1.msra.mxu0 %v6052
    %6054 = vmatprep.subr.mxu0 0.0
    %v6055 = vand.u32 %v90, 4294901760
    %v6056 = vsub.f32 %v90, %v6055
    %v6057 = vand.u32 %v6056, 4294901760
    %v6058 = vsub.f32 %v6056, %v6057
    %v6059 = vand.u32 %v6058, 4294901760
    %6060 = vmatpush1.msra.mxu0 %v6059
    %6061 = vmatprep.subr.mxu0 0.0
    %v6062 = vand.u32 %v91, 4294901760
    %v6063 = vsub.f32 %v91, %v6062
    %v6064 = vand.u32 %v6063, 4294901760
    %v6065 = vsub.f32 %v6063, %v6064
    %v6066 = vand.u32 %v6065, 4294901760
    %6067 = vmatpush1.msra.mxu0 %v6066
    %6068 = vmatprep.subr.mxu0 0.0
    %v6069 = vand.u32 %v92, 4294901760
    %v6070 = vsub.f32 %v92, %v6069
    %v6071 = vand.u32 %v6070, 4294901760
    %v6072 = vsub.f32 %v6070, %v6071
    %v6073 = vand.u32 %v6072, 4294901760
    %6074 = vmatpush1.msra.mxu0 %v6073
    %6075 = vmatprep.subr.mxu0 0.0
    %v6076 = vand.u32 %v93, 4294901760
    %v6077 = vsub.f32 %v93, %v6076
    %v6078 = vand.u32 %v6077, 4294901760
    %v6079 = vsub.f32 %v6077, %v6078
    %v6080 = vand.u32 %v6079, 4294901760
    %6081 = vmatpush1.msra.mxu0 %v6080
    %6082 = vmatprep.subr.mxu0 0.0
    %v6083 = vand.u32 %v94, 4294901760
    %v6084 = vsub.f32 %v94, %v6083
    %v6085 = vand.u32 %v6084, 4294901760
    %v6086 = vsub.f32 %v6084, %v6085
    %v6087 = vand.u32 %v6086, 4294901760
    %6088 = vmatpush1.msra.mxu0 %v6087
    %6089 = vmatprep.subr.mxu0 0.0
    %v6090 = vand.u32 %v95, 4294901760
    %v6091 = vsub.f32 %v95, %v6090
    %v6092 = vand.u32 %v6091, 4294901760
    %v6093 = vsub.f32 %v6091, %v6092
    %v6094 = vand.u32 %v6093, 4294901760
    %6095 = vmatpush1.msra.mxu0 %v6094
    %6096 = vmatprep.subr.mxu0 0.0
    %6097 = vmatpush1.msra.mxu0 0.0
    %6098 = vmatprep.subr.mxu0 0.0
    %6099 = vmatpush1.msra.mxu0 0.0
    %6100 = vmatprep.subr.mxu0 0.0
    %6101 = vmatpush1.msra.mxu0 0.0
    %6102 = vmatprep.subr.mxu0 0.0
    %6103 = vmatpush1.msra.mxu0 0.0
    %6104 = vmatprep.subr.mxu0 0.0
    %6105 = vmatpush1.msra.mxu0 0.0
    %6106 = vmatprep.subr.mxu0 0.0
    %6107 = vmatpush1.msra.mxu0 0.0
    %6108 = vmatprep.subr.mxu0 0.0
    %6109 = vmatpush1.msra.mxu0 0.0
    %6110 = vmatprep.subr.mxu0 0.0
    %6111 = vmatpush1.msra.mxu0 0.0
    %6112 = vmatprep.subr.mxu0 0.0
    %6113 = vmatpush1.msra.mxu0 0.0
    %6114 = vmatprep.subr.mxu0 0.0
    %6115 = vmatpush1.msra.mxu0 0.0
    %6116 = vmatprep.subr.mxu0 0.0
    %6117 = vmatpush1.msra.mxu0 0.0
    %6118 = vmatprep.subr.mxu0 0.0
    %6119 = vmatpush1.msra.mxu0 0.0
    %6120 = vmatprep.subr.mxu0 0.0
    %6121 = vmatpush1.msra.mxu0 0.0
    %6122 = vmatprep.subr.mxu0 0.0
    %6123 = vmatpush1.msra.mxu0 0.0
    %6124 = vmatprep.subr.mxu0 0.0
    %6125 = vmatpush1.msra.mxu0 0.0
    %6126 = vmatprep.subr.mxu0 0.0
    %6127 = vmatpush1.msra.mxu0 0.0
    %6128 = vmatprep.mubr.f32.mxu0 0.0
    %v6129 = vand.u32 %v5251, 4294901760
    %6130 = vmatmul.mubr.f32.gmra.mrb[0].mxu0 %v6129
    %v6131 = vpop.f32.mrb[0].mxu0
    %v6132 = vadd.f32 %v5981, %v6131
    %v6133 = vpop.f32.mrb[0].mxu0
    %6134 = vdwg.mxu0
    %6135 = vmatprep.subr.mxu0 0.0
    %v6136 = vand.u32 %v80, 4294901760
    %v6137 = vsub.f32 %v80, %v6136
    %6138 = vmatpush1.msra.mxu0 %v6137
    %6139 = vmatprep.subr.mxu0 0.0
    %v6140 = vand.u32 %v81, 4294901760
    %v6141 = vsub.f32 %v81, %v6140
    %6142 = vmatpush1.msra.mxu0 %v6141
    %6143 = vmatprep.subr.mxu0 0.0
    %v6144 = vand.u32 %v82, 4294901760
    %v6145 = vsub.f32 %v82, %v6144
    %6146 = vmatpush1.msra.mxu0 %v6145
    %6147 = vmatprep.subr.mxu0 0.0
    %v6148 = vand.u32 %v83, 4294901760
    %v6149 = vsub.f32 %v83, %v6148
    %6150 = vmatpush1.msra.mxu0 %v6149
    %6151 = vmatprep.subr.mxu0 0.0
    %v6152 = vand.u32 %v84, 4294901760
    %v6153 = vsub.f32 %v84, %v6152
    %6154 = vmatpush1.msra.mxu0 %v6153
    %6155 = vmatprep.subr.mxu0 0.0
    %v6156 = vand.u32 %v85, 4294901760
    %v6157 = vsub.f32 %v85, %v6156
    %6158 = vmatpush1.msra.mxu0 %v6157
    %6159 = vmatprep.subr.mxu0 0.0
    %v6160 = vand.u32 %v86, 4294901760
    %v6161 = vsub.f32 %v86, %v6160
    %6162 = vmatpush1.msra.mxu0 %v6161
    %6163 = vmatprep.subr.mxu0 0.0
    %v6164 = vand.u32 %v87, 4294901760
    %v6165 = vsub.f32 %v87, %v6164
    %6166 = vmatpush1.msra.mxu0 %v6165
    %6167 = vmatprep.subr.mxu0 0.0
    %v6168 = vand.u32 %v88, 4294901760
    %v6169 = vsub.f32 %v88, %v6168
    %6170 = vmatpush1.msra.mxu0 %v6169
    %6171 = vmatprep.subr.mxu0 0.0
    %v6172 = vand.u32 %v89, 4294901760
    %v6173 = vsub.f32 %v89, %v6172
    %6174 = vmatpush1.msra.mxu0 %v6173
    %6175 = vmatprep.subr.mxu0 0.0
    %v6176 = vand.u32 %v90, 4294901760
    %v6177 = vsub.f32 %v90, %v6176
    %6178 = vmatpush1.msra.mxu0 %v6177
    %6179 = vmatprep.subr.mxu0 0.0
    %v6180 = vand.u32 %v91, 4294901760
    %v6181 = vsub.f32 %v91, %v6180
    %6182 = vmatpush1.msra.mxu0 %v6181
    %6183 = vmatprep.subr.mxu0 0.0
    %v6184 = vand.u32 %v92, 4294901760
    %v6185 = vsub.f32 %v92, %v6184
    %6186 = vmatpush1.msra.mxu0 %v6185
    %6187 = vmatprep.subr.mxu0 0.0
    %v6188 = vand.u32 %v93, 4294901760
    %v6189 = vsub.f32 %v93, %v6188
    %6190 = vmatpush1.msra.mxu0 %v6189
    %6191 = vmatprep.subr.mxu0 0.0
    %v6192 = vand.u32 %v94, 4294901760
    %v6193 = vsub.f32 %v94, %v6192
    %6194 = vmatpush1.msra.mxu0 %v6193
    %6195 = vmatprep.subr.mxu0 0.0
    %v6196 = vand.u32 %v95, 4294901760
    %v6197 = vsub.f32 %v95, %v6196
    %6198 = vmatpush1.msra.mxu0 %v6197
    %6199 = vmatprep.subr.mxu0 0.0
    %6200 = vmatpush1.msra.mxu0 0.0
    %6201 = vmatprep.subr.mxu0 0.0
    %6202 = vmatpush1.msra.mxu0 0.0
    %6203 = vmatprep.subr.mxu0 0.0
    %6204 = vmatpush1.msra.mxu0 0.0
    %6205 = vmatprep.subr.mxu0 0.0
    %6206 = vmatpush1.msra.mxu0 0.0
    %6207 = vmatprep.subr.mxu0 0.0
    %6208 = vmatpush1.msra.mxu0 0.0
    %6209 = vmatprep.subr.mxu0 0.0
    %6210 = vmatpush1.msra.mxu0 0.0
    %6211 = vmatprep.subr.mxu0 0.0
    %6212 = vmatpush1.msra.mxu0 0.0
    %6213 = vmatprep.subr.mxu0 0.0
    %6214 = vmatpush1.msra.mxu0 0.0
    %6215 = vmatprep.subr.mxu0 0.0
    %6216 = vmatpush1.msra.mxu0 0.0
    %6217 = vmatprep.subr.mxu0 0.0
    %6218 = vmatpush1.msra.mxu0 0.0
    %6219 = vmatprep.subr.mxu0 0.0
    %6220 = vmatpush1.msra.mxu0 0.0
    %6221 = vmatprep.subr.mxu0 0.0
    %6222 = vmatpush1.msra.mxu0 0.0
    %6223 = vmatprep.subr.mxu0 0.0
    %6224 = vmatpush1.msra.mxu0 0.0
    %6225 = vmatprep.subr.mxu0 0.0
    %6226 = vmatpush1.msra.mxu0 0.0
    %6227 = vmatprep.subr.mxu0 0.0
    %6228 = vmatpush1.msra.mxu0 0.0
    %6229 = vmatprep.subr.mxu0 0.0
    %6230 = vmatpush1.msra.mxu0 0.0
    %6231 = vmatprep.mubr.f32.mxu0 0.0
    %v6232 = vand.u32 %v5251, 4294901760
    %v6233 = vsub.f32 %v5251, %v6232
    %6234 = vmatmul.mubr.f32.gmra.mrb[0].mxu0 %v6233
    %v6235 = vpop.f32.mrb[0].mxu0
    %v6236 = vadd.f32 %v6132, %v6235
    %v6237 = vpop.f32.mrb[0].mxu0
    %6238 = vdwg.mxu0
    %6239 = vmatprep.subr.mxu0 0.0
    %v6240 = vand.u32 %v80, 4294901760
    %6241 = vmatpush1.msra.mxu0 %v6240
    %6242 = vmatprep.subr.mxu0 0.0
    %v6243 = vand.u32 %v81, 4294901760
    %6244 = vmatpush1.msra.mxu0 %v6243
    %6245 = vmatprep.subr.mxu0 0.0
    %v6246 = vand.u32 %v82, 4294901760
    %6247 = vmatpush1.msra.mxu0 %v6246
    %6248 = vmatprep.subr.mxu0 0.0
    %v6249 = vand.u32 %v83, 4294901760
    %6250 = vmatpush1.msra.mxu0 %v6249
    %6251 = vmatprep.subr.mxu0 0.0
    %v6252 = vand.u32 %v84, 4294901760
    %6253 = vmatpush1.msra.mxu0 %v6252
    %6254 = vmatprep.subr.mxu0 0.0
    %v6255 = vand.u32 %v85, 4294901760
    %6256 = vmatpush1.msra.mxu0 %v6255
    %6257 = vmatprep.subr.mxu0 0.0
    %v6258 = vand.u32 %v86, 4294901760
    %6259 = vmatpush1.msra.mxu0 %v6258
    %6260 = vmatprep.subr.mxu0 0.0
    %v6261 = vand.u32 %v87, 4294901760
    %6262 = vmatpush1.msra.mxu0 %v6261
    %6263 = vmatprep.subr.mxu0 0.0
    %v6264 = vand.u32 %v88, 4294901760
    %6265 = vmatpush1.msra.mxu0 %v6264
    %6266 = vmatprep.subr.mxu0 0.0
    %v6267 = vand.u32 %v89, 4294901760
    %6268 = vmatpush1.msra.mxu0 %v6267
    %6269 = vmatprep.subr.mxu0 0.0
    %v6270 = vand.u32 %v90, 4294901760
    %6271 = vmatpush1.msra.mxu0 %v6270
    %6272 = vmatprep.subr.mxu0 0.0
    %v6273 = vand.u32 %v91, 4294901760
    %6274 = vmatpush1.msra.mxu0 %v6273
    %6275 = vmatprep.subr.mxu0 0.0
    %v6276 = vand.u32 %v92, 4294901760
    %6277 = vmatpush1.msra.mxu0 %v6276
    %6278 = vmatprep.subr.mxu0 0.0
    %v6279 = vand.u32 %v93, 4294901760
    %6280 = vmatpush1.msra.mxu0 %v6279
    %6281 = vmatprep.subr.mxu0 0.0
    %v6282 = vand.u32 %v94, 4294901760
    %6283 = vmatpush1.msra.mxu0 %v6282
    %6284 = vmatprep.subr.mxu0 0.0
    %v6285 = vand.u32 %v95, 4294901760
    %6286 = vmatpush1.msra.mxu0 %v6285
    %6287 = vmatprep.subr.mxu0 0.0
    %6288 = vmatpush1.msra.mxu0 0.0
    %6289 = vmatprep.subr.mxu0 0.0
    %6290 = vmatpush1.msra.mxu0 0.0
    %6291 = vmatprep.subr.mxu0 0.0
    %6292 = vmatpush1.msra.mxu0 0.0
    %6293 = vmatprep.subr.mxu0 0.0
    %6294 = vmatpush1.msra.mxu0 0.0
    %6295 = vmatprep.subr.mxu0 0.0
    %6296 = vmatpush1.msra.mxu0 0.0
    %6297 = vmatprep.subr.mxu0 0.0
    %6298 = vmatpush1.msra.mxu0 0.0
    %6299 = vmatprep.subr.mxu0 0.0
    %6300 = vmatpush1.msra.mxu0 0.0
    %6301 = vmatprep.subr.mxu0 0.0
    %6302 = vmatpush1.msra.mxu0 0.0
    %6303 = vmatprep.subr.mxu0 0.0
    %6304 = vmatpush1.msra.mxu0 0.0
    %6305 = vmatprep.subr.mxu0 0.0
    %6306 = vmatpush1.msra.mxu0 0.0
    %6307 = vmatprep.subr.mxu0 0.0
    %6308 = vmatpush1.msra.mxu0 0.0
    %6309 = vmatprep.subr.mxu0 0.0
    %6310 = vmatpush1.msra.mxu0 0.0
    %6311 = vmatprep.subr.mxu0 0.0
    %6312 = vmatpush1.msra.mxu0 0.0
    %6313 = vmatprep.subr.mxu0 0.0
    %6314 = vmatpush1.msra.mxu0 0.0
    %6315 = vmatprep.subr.mxu0 0.0
    %6316 = vmatpush1.msra.mxu0 0.0
    %6317 = vmatprep.subr.mxu0 0.0
    %6318 = vmatpush1.msra.mxu0 0.0
    %6319 = vmatprep.mubr.f32.mxu0 0.0
    %v6320 = vand.u32 %v5251, 4294901760
    %v6321 = vsub.f32 %v5251, %v6320
    %v6322 = vand.u32 %v6321, 4294901760
    %6323 = vmatmul.mubr.f32.gmra.mrb[0].mxu0 %v6322
    %v6324 = vpop.f32.mrb[0].mxu0
    %v6325 = vadd.f32 %v6236, %v6324
    %v6326 = vpop.f32.mrb[0].mxu0
    %6327 = vdwg.mxu0
    %6328 = vmatprep.subr.mxu0 0.0
    %v6329 = vand.u32 %v80, 4294901760
    %v6330 = vsub.f32 %v80, %v6329
    %v6331 = vand.u32 %v6330, 4294901760
    %6332 = vmatpush1.msra.mxu0 %v6331
    %6333 = vmatprep.subr.mxu0 0.0
    %v6334 = vand.u32 %v81, 4294901760
    %v6335 = vsub.f32 %v81, %v6334
    %v6336 = vand.u32 %v6335, 4294901760
    %6337 = vmatpush1.msra.mxu0 %v6336
    %6338 = vmatprep.subr.mxu0 0.0
    %v6339 = vand.u32 %v82, 4294901760
    %v6340 = vsub.f32 %v82, %v6339
    %v6341 = vand.u32 %v6340, 4294901760
    %6342 = vmatpush1.msra.mxu0 %v6341
    %6343 = vmatprep.subr.mxu0 0.0
    %v6344 = vand.u32 %v83, 4294901760
    %v6345 = vsub.f32 %v83, %v6344
    %v6346 = vand.u32 %v6345, 4294901760
    %6347 = vmatpush1.msra.mxu0 %v6346
    %6348 = vmatprep.subr.mxu0 0.0
    %v6349 = vand.u32 %v84, 4294901760
    %v6350 = vsub.f32 %v84, %v6349
    %v6351 = vand.u32 %v6350, 4294901760
    %6352 = vmatpush1.msra.mxu0 %v6351
    %6353 = vmatprep.subr.mxu0 0.0
    %v6354 = vand.u32 %v85, 4294901760
    %v6355 = vsub.f32 %v85, %v6354
    %v6356 = vand.u32 %v6355, 4294901760
    %6357 = vmatpush1.msra.mxu0 %v6356
    %6358 = vmatprep.subr.mxu0 0.0
    %v6359 = vand.u32 %v86, 4294901760
    %v6360 = vsub.f32 %v86, %v6359
    %v6361 = vand.u32 %v6360, 4294901760
    %6362 = vmatpush1.msra.mxu0 %v6361
    %6363 = vmatprep.subr.mxu0 0.0
    %v6364 = vand.u32 %v87, 4294901760
    %v6365 = vsub.f32 %v87, %v6364
    %v6366 = vand.u32 %v6365, 4294901760
    %6367 = vmatpush1.msra.mxu0 %v6366
    %6368 = vmatprep.subr.mxu0 0.0
    %v6369 = vand.u32 %v88, 4294901760
    %v6370 = vsub.f32 %v88, %v6369
    %v6371 = vand.u32 %v6370, 4294901760
    %6372 = vmatpush1.msra.mxu0 %v6371
    %6373 = vmatprep.subr.mxu0 0.0
    %v6374 = vand.u32 %v89, 4294901760
    %v6375 = vsub.f32 %v89, %v6374
    %v6376 = vand.u32 %v6375, 4294901760
    %6377 = vmatpush1.msra.mxu0 %v6376
    %6378 = vmatprep.subr.mxu0 0.0
    %v6379 = vand.u32 %v90, 4294901760
    %v6380 = vsub.f32 %v90, %v6379
    %v6381 = vand.u32 %v6380, 4294901760
    %6382 = vmatpush1.msra.mxu0 %v6381
    %6383 = vmatprep.subr.mxu0 0.0
    %v6384 = vand.u32 %v91, 4294901760
    %v6385 = vsub.f32 %v91, %v6384
    %v6386 = vand.u32 %v6385, 4294901760
    %6387 = vmatpush1.msra.mxu0 %v6386
    %6388 = vmatprep.subr.mxu0 0.0
    %v6389 = vand.u32 %v92, 4294901760
    %v6390 = vsub.f32 %v92, %v6389
    %v6391 = vand.u32 %v6390, 4294901760
    %6392 = vmatpush1.msra.mxu0 %v6391
    %6393 = vmatprep.subr.mxu0 0.0
    %v6394 = vand.u32 %v93, 4294901760
    %v6395 = vsub.f32 %v93, %v6394
    %v6396 = vand.u32 %v6395, 4294901760
    %6397 = vmatpush1.msra.mxu0 %v6396
    %6398 = vmatprep.subr.mxu0 0.0
    %v6399 = vand.u32 %v94, 4294901760
    %v6400 = vsub.f32 %v94, %v6399
    %v6401 = vand.u32 %v6400, 4294901760
    %6402 = vmatpush1.msra.mxu0 %v6401
    %6403 = vmatprep.subr.mxu0 0.0
    %v6404 = vand.u32 %v95, 4294901760
    %v6405 = vsub.f32 %v95, %v6404
    %v6406 = vand.u32 %v6405, 4294901760
    %6407 = vmatpush1.msra.mxu0 %v6406
    %6408 = vmatprep.subr.mxu0 0.0
    %6409 = vmatpush1.msra.mxu0 0.0
    %6410 = vmatprep.subr.mxu0 0.0
    %6411 = vmatpush1.msra.mxu0 0.0
    %6412 = vmatprep.subr.mxu0 0.0
    %6413 = vmatpush1.msra.mxu0 0.0
    %6414 = vmatprep.subr.mxu0 0.0
    %6415 = vmatpush1.msra.mxu0 0.0
    %6416 = vmatprep.subr.mxu0 0.0
    %6417 = vmatpush1.msra.mxu0 0.0
    %6418 = vmatprep.subr.mxu0 0.0
    %6419 = vmatpush1.msra.mxu0 0.0
    %6420 = vmatprep.subr.mxu0 0.0
    %6421 = vmatpush1.msra.mxu0 0.0
    %6422 = vmatprep.subr.mxu0 0.0
    %6423 = vmatpush1.msra.mxu0 0.0
    %6424 = vmatprep.subr.mxu0 0.0
    %6425 = vmatpush1.msra.mxu0 0.0
    %6426 = vmatprep.subr.mxu0 0.0
    %6427 = vmatpush1.msra.mxu0 0.0
    %6428 = vmatprep.subr.mxu0 0.0
    %6429 = vmatpush1.msra.mxu0 0.0
    %6430 = vmatprep.subr.mxu0 0.0
    %6431 = vmatpush1.msra.mxu0 0.0
    %6432 = vmatprep.subr.mxu0 0.0
    %6433 = vmatpush1.msra.mxu0 0.0
    %6434 = vmatprep.subr.mxu0 0.0
    %6435 = vmatpush1.msra.mxu0 0.0
    %6436 = vmatprep.subr.mxu0 0.0
    %6437 = vmatpush1.msra.mxu0 0.0
    %6438 = vmatprep.subr.mxu0 0.0
    %6439 = vmatpush1.msra.mxu0 0.0
    %6440 = vmatprep.mubr.f32.mxu0 0.0
    %v6441 = vand.u32 %v5251, 4294901760
    %6442 = vmatmul.mubr.f32.gmra.mrb[0].mxu0 %v6441
    %v6443 = vpop.f32.mrb[0].mxu0
    %v6444 = vadd.f32 %v6325, %v6443
    %v6445 = vpop.f32.mrb[0].mxu0
    %6446 = vdwg.mxu0
    %6447 = vmatprep.subr.mxu0 0.0
    %v6448 = vand.u32 %v80, 4294901760
    %6449 = vmatpush1.msra.mxu0 %v6448
    %6450 = vmatprep.subr.mxu0 0.0
    %v6451 = vand.u32 %v81, 4294901760
    %6452 = vmatpush1.msra.mxu0 %v6451
    %6453 = vmatprep.subr.mxu0 0.0
    %v6454 = vand.u32 %v82, 4294901760
    %6455 = vmatpush1.msra.mxu0 %v6454
    %6456 = vmatprep.subr.mxu0 0.0
    %v6457 = vand.u32 %v83, 4294901760
    %6458 = vmatpush1.msra.mxu0 %v6457
    %6459 = vmatprep.subr.mxu0 0.0
    %v6460 = vand.u32 %v84, 4294901760
    %6461 = vmatpush1.msra.mxu0 %v6460
    %6462 = vmatprep.subr.mxu0 0.0
    %v6463 = vand.u32 %v85, 4294901760
    %6464 = vmatpush1.msra.mxu0 %v6463
    %6465 = vmatprep.subr.mxu0 0.0
    %v6466 = vand.u32 %v86, 4294901760
    %6467 = vmatpush1.msra.mxu0 %v6466
    %6468 = vmatprep.subr.mxu0 0.0
    %v6469 = vand.u32 %v87, 4294901760
    %6470 = vmatpush1.msra.mxu0 %v6469
    %6471 = vmatprep.subr.mxu0 0.0
    %v6472 = vand.u32 %v88, 4294901760
    %6473 = vmatpush1.msra.mxu0 %v6472
    %6474 = vmatprep.subr.mxu0 0.0
    %v6475 = vand.u32 %v89, 4294901760
    %6476 = vmatpush1.msra.mxu0 %v6475
    %6477 = vmatprep.subr.mxu0 0.0
    %v6478 = vand.u32 %v90, 4294901760
    %6479 = vmatpush1.msra.mxu0 %v6478
    %6480 = vmatprep.subr.mxu0 0.0
    %v6481 = vand.u32 %v91, 4294901760
    %6482 = vmatpush1.msra.mxu0 %v6481
    %6483 = vmatprep.subr.mxu0 0.0
    %v6484 = vand.u32 %v92, 4294901760
    %6485 = vmatpush1.msra.mxu0 %v6484
    %6486 = vmatprep.subr.mxu0 0.0
    %v6487 = vand.u32 %v93, 4294901760
    %6488 = vmatpush1.msra.mxu0 %v6487
    %6489 = vmatprep.subr.mxu0 0.0
    %v6490 = vand.u32 %v94, 4294901760
    %6491 = vmatpush1.msra.mxu0 %v6490
    %6492 = vmatprep.subr.mxu0 0.0
    %v6493 = vand.u32 %v95, 4294901760
    %6494 = vmatpush1.msra.mxu0 %v6493
    %6495 = vmatprep.subr.mxu0 0.0
    %6496 = vmatpush1.msra.mxu0 0.0
    %6497 = vmatprep.subr.mxu0 0.0
    %6498 = vmatpush1.msra.mxu0 0.0
    %6499 = vmatprep.subr.mxu0 0.0
    %6500 = vmatpush1.msra.mxu0 0.0
    %6501 = vmatprep.subr.mxu0 0.0
    %6502 = vmatpush1.msra.mxu0 0.0
    %6503 = vmatprep.subr.mxu0 0.0
    %6504 = vmatpush1.msra.mxu0 0.0
    %6505 = vmatprep.subr.mxu0 0.0
    %6506 = vmatpush1.msra.mxu0 0.0
    %6507 = vmatprep.subr.mxu0 0.0
    %6508 = vmatpush1.msra.mxu0 0.0
    %6509 = vmatprep.subr.mxu0 0.0
    %6510 = vmatpush1.msra.mxu0 0.0
    %6511 = vmatprep.subr.mxu0 0.0
    %6512 = vmatpush1.msra.mxu0 0.0
    %6513 = vmatprep.subr.mxu0 0.0
    %6514 = vmatpush1.msra.mxu0 0.0
    %6515 = vmatprep.subr.mxu0 0.0
    %6516 = vmatpush1.msra.mxu0 0.0
    %6517 = vmatprep.subr.mxu0 0.0
    %6518 = vmatpush1.msra.mxu0 0.0
    %6519 = vmatprep.subr.mxu0 0.0
    %6520 = vmatpush1.msra.mxu0 0.0
    %6521 = vmatprep.subr.mxu0 0.0
    %6522 = vmatpush1.msra.mxu0 0.0
    %6523 = vmatprep.subr.mxu0 0.0
    %6524 = vmatpush1.msra.mxu0 0.0
    %6525 = vmatprep.subr.mxu0 0.0
    %6526 = vmatpush1.msra.mxu0 0.0
    %6527 = vmatprep.mubr.f32.mxu0 0.0
    %v6528 = vand.u32 %v5251, 4294901760
    %6529 = vmatmul.mubr.f32.gmra.mrb[0].mxu0 %v6528
    %v6530 = vpop.f32.mrb[0].mxu0
    %v6531 = vadd.f32 %v6444, %v6530
    %v6532 = vpop.f32.mrb[0].mxu0
    %6533 = vdwg.mxu0
    %v6534 = vmul.f32 %v5890, %v62
    %v6535 = vmul.f32 %v6531, %v63
    %v6536 = vadd.f32 %v6534, %v6535
    %s6537 = scalar_lea.vmem [#allocation8], 8
    %6538 = vst [vmem:[%s6537] sm:$0x3] %v6536
    %s6539 = scalar_lea.vmem [#allocation2], 10
    %v6540 = vld [vmem:[%s6539] sm:$0x3]
    %6541 = vmatprep.subr.mxu0 0.0
    %v6542 = vand.u32 %v64, 4294901760
    %6543 = vmatpush1.msra.mxu0 %v6542
    %6544 = vmatprep.subr.mxu0 0.0
    %v6545 = vand.u32 %v65, 4294901760
    %6546 = vmatpush1.msra.mxu0 %v6545
    %6547 = vmatprep.subr.mxu0 0.0
    %v6548 = vand.u32 %v66, 4294901760
    %6549 = vmatpush1.msra.mxu0 %v6548
    %6550 = vmatprep.subr.mxu0 0.0
    %v6551 = vand.u32 %v67, 4294901760
    %6552 = vmatpush1.msra.mxu0 %v6551
    %6553 = vmatprep.subr.mxu0 0.0
    %v6554 = vand.u32 %v68, 4294901760
    %6555 = vmatpush1.msra.mxu0 %v6554
    %6556 = vmatprep.subr.mxu0 0.0
    %v6557 = vand.u32 %v69, 4294901760
    %6558 = vmatpush1.msra.mxu0 %v6557
    %6559 = vmatprep.subr.mxu0 0.0
    %v6560 = vand.u32 %v70, 4294901760
    %6561 = vmatpush1.msra.mxu0 %v6560
    %6562 = vmatprep.subr.mxu0 0.0
    %v6563 = vand.u32 %v71, 4294901760
    %6564 = vmatpush1.msra.mxu0 %v6563
    %6565 = vmatprep.subr.mxu0 0.0
    %v6566 = vand.u32 %v72, 4294901760
    %6567 = vmatpush1.msra.mxu0 %v6566
    %6568 = vmatprep.subr.mxu0 0.0
    %v6569 = vand.u32 %v73, 4294901760
    %6570 = vmatpush1.msra.mxu0 %v6569
    %6571 = vmatprep.subr.mxu0 0.0
    %v6572 = vand.u32 %v74, 4294901760
    %6573 = vmatpush1.msra.mxu0 %v6572
    %6574 = vmatprep.subr.mxu0 0.0
    %v6575 = vand.u32 %v75, 4294901760
    %6576 = vmatpush1.msra.mxu0 %v6575
    %6577 = vmatprep.subr.mxu0 0.0
    %v6578 = vand.u32 %v76, 4294901760
    %6579 = vmatpush1.msra.mxu0 %v6578
    %6580 = vmatprep.subr.mxu0 0.0
    %v6581 = vand.u32 %v77, 4294901760
    %6582 = vmatpush1.msra.mxu0 %v6581
    %6583 = vmatprep.subr.mxu0 0.0
    %v6584 = vand.u32 %v78, 4294901760
    %6585 = vmatpush1.msra.mxu0 %v6584
    %6586 = vmatprep.subr.mxu0 0.0
    %v6587 = vand.u32 %v79, 4294901760
    %6588 = vmatpush1.msra.mxu0 %v6587
    %6589 = vmatprep.subr.mxu0 0.0
    %6590 = vmatpush1.msra.mxu0 0.0
    %6591 = vmatprep.subr.mxu0 0.0
    %6592 = vmatpush1.msra.mxu0 0.0
    %6593 = vmatprep.subr.mxu0 0.0
    %6594 = vmatpush1.msra.mxu0 0.0
    %6595 = vmatprep.subr.mxu0 0.0
    %6596 = vmatpush1.msra.mxu0 0.0
    %6597 = vmatprep.subr.mxu0 0.0
    %6598 = vmatpush1.msra.mxu0 0.0
    %6599 = vmatprep.subr.mxu0 0.0
    %6600 = vmatpush1.msra.mxu0 0.0
    %6601 = vmatprep.subr.mxu0 0.0
    %6602 = vmatpush1.msra.mxu0 0.0
    %6603 = vmatprep.subr.mxu0 0.0
    %6604 = vmatpush1.msra.mxu0 0.0
    %6605 = vmatprep.subr.mxu0 0.0
    %6606 = vmatpush1.msra.mxu0 0.0
    %6607 = vmatprep.subr.mxu0 0.0
    %6608 = vmatpush1.msra.mxu0 0.0
    %6609 = vmatprep.subr.mxu0 0.0
    %6610 = vmatpush1.msra.mxu0 0.0
    %6611 = vmatprep.subr.mxu0 0.0
    %6612 = vmatpush1.msra.mxu0 0.0
    %6613 = vmatprep.subr.mxu0 0.0
    %6614 = vmatpush1.msra.mxu0 0.0
    %6615 = vmatprep.subr.mxu0 0.0
    %6616 = vmatpush1.msra.mxu0 0.0
    %6617 = vmatprep.subr.mxu0 0.0
    %6618 = vmatpush1.msra.mxu0 0.0
    %6619 = vmatprep.subr.mxu0 0.0
    %6620 = vmatpush1.msra.mxu0 0.0
    %6621 = vmatprep.mubr.f32.mxu0 0.0
    %v6622 = vand.u32 %v6540, 4294901760
    %v6623 = vsub.f32 %v6540, %v6622
    %v6624 = vand.u32 %v6623, 4294901760
    %v6625 = vsub.f32 %v6623, %v6624
    %v6626 = vand.u32 %v6625, 4294901760
    %6627 = vmatmul.mubr.f32.gmra.mrb[0].mxu0 %v6626
    %v6628 = vpop.f32.mrb[0].mxu0
    %v6629 = vadd.f32 0.0, %v6628
    %v6630 = vpop.f32.mrb[0].mxu0
    %6631 = vdwg.mxu0
    %6632 = vmatprep.subr.mxu0 0.0
    %v6633 = vand.u32 %v64, 4294901760
    %v6634 = vsub.f32 %v64, %v6633
    %v6635 = vand.u32 %v6634, 4294901760
    %v6636 = vsub.f32 %v6634, %v6635
    %v6637 = vand.u32 %v6636, 4294901760
    %6638 = vmatpush1.msra.mxu0 %v6637
    %6639 = vmatprep.subr.mxu0 0.0
    %v6640 = vand.u32 %v65, 4294901760
    %v6641 = vsub.f32 %v65, %v6640
    %v6642 = vand.u32 %v6641, 4294901760
    %v6643 = vsub.f32 %v6641, %v6642
    %v6644 = vand.u32 %v6643, 4294901760
    %6645 = vmatpush1.msra.mxu0 %v6644
    %6646 = vmatprep.subr.mxu0 0.0
    %v6647 = vand.u32 %v66, 4294901760
    %v6648 = vsub.f32 %v66, %v6647
    %v6649 = vand.u32 %v6648, 4294901760
    %v6650 = vsub.f32 %v6648, %v6649
    %v6651 = vand.u32 %v6650, 4294901760
    %6652 = vmatpush1.msra.mxu0 %v6651
    %6653 = vmatprep.subr.mxu0 0.0
    %v6654 = vand.u32 %v67, 4294901760
    %v6655 = vsub.f32 %v67, %v6654
    %v6656 = vand.u32 %v6655, 4294901760
    %v6657 = vsub.f32 %v6655, %v6656
    %v6658 = vand.u32 %v6657, 4294901760
    %6659 = vmatpush1.msra.mxu0 %v6658
    %6660 = vmatprep.subr.mxu0 0.0
    %v6661 = vand.u32 %v68, 4294901760
    %v6662 = vsub.f32 %v68, %v6661
    %v6663 = vand.u32 %v6662, 4294901760
    %v6664 = vsub.f32 %v6662, %v6663
    %v6665 = vand.u32 %v6664, 4294901760
    %6666 = vmatpush1.msra.mxu0 %v6665
    %6667 = vmatprep.subr.mxu0 0.0
    %v6668 = vand.u32 %v69, 4294901760
    %v6669 = vsub.f32 %v69, %v6668
    %v6670 = vand.u32 %v6669, 4294901760
    %v6671 = vsub.f32 %v6669, %v6670
    %v6672 = vand.u32 %v6671, 4294901760
    %6673 = vmatpush1.msra.mxu0 %v6672
    %6674 = vmatprep.subr.mxu0 0.0
    %v6675 = vand.u32 %v70, 4294901760
    %v6676 = vsub.f32 %v70, %v6675
    %v6677 = vand.u32 %v6676, 4294901760
    %v6678 = vsub.f32 %v6676, %v6677
    %v6679 = vand.u32 %v6678, 4294901760
    %6680 = vmatpush1.msra.mxu0 %v6679
    %6681 = vmatprep.subr.mxu0 0.0
    %v6682 = vand.u32 %v71, 4294901760
    %v6683 = vsub.f32 %v71, %v6682
    %v6684 = vand.u32 %v6683, 4294901760
    %v6685 = vsub.f32 %v6683, %v6684
    %v6686 = vand.u32 %v6685, 4294901760
    %6687 = vmatpush1.msra.mxu0 %v6686
    %6688 = vmatprep.subr.mxu0 0.0
    %v6689 = vand.u32 %v72, 4294901760
    %v6690 = vsub.f32 %v72, %v6689
    %v6691 = vand.u32 %v6690, 4294901760
    %v6692 = vsub.f32 %v6690, %v6691
    %v6693 = vand.u32 %v6692, 4294901760
    %6694 = vmatpush1.msra.mxu0 %v6693
    %6695 = vmatprep.subr.mxu0 0.0
    %v6696 = vand.u32 %v73, 4294901760
    %v6697 = vsub.f32 %v73, %v6696
    %v6698 = vand.u32 %v6697, 4294901760
    %v6699 = vsub.f32 %v6697, %v6698
    %v6700 = vand.u32 %v6699, 4294901760
    %6701 = vmatpush1.msra.mxu0 %v6700
    %6702 = vmatprep.subr.mxu0 0.0
    %v6703 = vand.u32 %v74, 4294901760
    %v6704 = vsub.f32 %v74, %v6703
    %v6705 = vand.u32 %v6704, 4294901760
    %v6706 = vsub.f32 %v6704, %v6705
    %v6707 = vand.u32 %v6706, 4294901760
    %6708 = vmatpush1.msra.mxu0 %v6707
    %6709 = vmatprep.subr.mxu0 0.0
    %v6710 = vand.u32 %v75, 4294901760
    %v6711 = vsub.f32 %v75, %v6710
    %v6712 = vand.u32 %v6711, 4294901760
    %v6713 = vsub.f32 %v6711, %v6712
    %v6714 = vand.u32 %v6713, 4294901760
    %6715 = vmatpush1.msra.mxu0 %v6714
    %6716 = vmatprep.subr.mxu0 0.0
    %v6717 = vand.u32 %v76, 4294901760
    %v6718 = vsub.f32 %v76, %v6717
    %v6719 = vand.u32 %v6718, 4294901760
    %v6720 = vsub.f32 %v6718, %v6719
    %v6721 = vand.u32 %v6720, 4294901760
    %6722 = vmatpush1.msra.mxu0 %v6721
    %6723 = vmatprep.subr.mxu0 0.0
    %v6724 = vand.u32 %v77, 4294901760
    %v6725 = vsub.f32 %v77, %v6724
    %v6726 = vand.u32 %v6725, 4294901760
    %v6727 = vsub.f32 %v6725, %v6726
    %v6728 = vand.u32 %v6727, 4294901760
    %6729 = vmatpush1.msra.mxu0 %v6728
    %6730 = vmatprep.subr.mxu0 0.0
    %v6731 = vand.u32 %v78, 4294901760
    %v6732 = vsub.f32 %v78, %v6731
    %v6733 = vand.u32 %v6732, 4294901760
    %v6734 = vsub.f32 %v6732, %v6733
    %v6735 = vand.u32 %v6734, 4294901760
    %6736 = vmatpush1.msra.mxu0 %v6735
    %6737 = vmatprep.subr.mxu0 0.0
    %v6738 = vand.u32 %v79, 4294901760
    %v6739 = vsub.f32 %v79, %v6738
    %v6740 = vand.u32 %v6739, 4294901760
    %v6741 = vsub.f32 %v6739, %v6740
    %v6742 = vand.u32 %v6741, 4294901760
    %6743 = vmatpush1.msra.mxu0 %v6742
    %6744 = vmatprep.subr.mxu0 0.0
    %6745 = vmatpush1.msra.mxu0 0.0
    %6746 = vmatprep.subr.mxu0 0.0
    %6747 = vmatpush1.msra.mxu0 0.0
    %6748 = vmatprep.subr.mxu0 0.0
    %6749 = vmatpush1.msra.mxu0 0.0
    %6750 = vmatprep.subr.mxu0 0.0
    %6751 = vmatpush1.msra.mxu0 0.0
    %6752 = vmatprep.subr.mxu0 0.0
    %6753 = vmatpush1.msra.mxu0 0.0
    %6754 = vmatprep.subr.mxu0 0.0
    %6755 = vmatpush1.msra.mxu0 0.0
    %6756 = vmatprep.subr.mxu0 0.0
    %6757 = vmatpush1.msra.mxu0 0.0
    %6758 = vmatprep.subr.mxu0 0.0
    %6759 = vmatpush1.msra.mxu0 0.0
    %6760 = vmatprep.subr.mxu0 0.0
    %6761 = vmatpush1.msra.mxu0 0.0
    %6762 = vmatprep.subr.mxu0 0.0
    %6763 = vmatpush1.msra.mxu0 0.0
    %6764 = vmatprep.subr.mxu0 0.0
    %6765 = vmatpush1.msra.mxu0 0.0
    %6766 = vmatprep.subr.mxu0 0.0
    %6767 = vmatpush1.msra.mxu0 0.0
    %6768 = vmatprep.subr.mxu0 0.0
    %6769 = vmatpush1.msra.mxu0 0.0
    %6770 = vmatprep.subr.mxu0 0.0
    %6771 = vmatpush1.msra.mxu0 0.0
    %6772 = vmatprep.subr.mxu0 0.0
    %6773 = vmatpush1.msra.mxu0 0.0
    %6774 = vmatprep.subr.mxu0 0.0
    %6775 = vmatpush1.msra.mxu0 0.0
    %6776 = vmatprep.mubr.f32.mxu0 0.0
    %v6777 = vand.u32 %v6540, 4294901760
    %6778 = vmatmul.mubr.f32.gmra.mrb[0].mxu0 %v6777
    %v6779 = vpop.f32.mrb[0].mxu0
    %v6780 = vadd.f32 %v6629, %v6779
    %v6781 = vpop.f32.mrb[0].mxu0
    %6782 = vdwg.mxu0
    %6783 = vmatprep.subr.mxu0 0.0
    %v6784 = vand.u32 %v64, 4294901760
    %v6785 = vsub.f32 %v64, %v6784
    %6786 = vmatpush1.msra.mxu0 %v6785
    %6787 = vmatprep.subr.mxu0 0.0
    %v6788 = vand.u32 %v65, 4294901760
    %v6789 = vsub.f32 %v65, %v6788
    %6790 = vmatpush1.msra.mxu0 %v6789
    %6791 = vmatprep.subr.mxu0 0.0
    %v6792 = vand.u32 %v66, 4294901760
    %v6793 = vsub.f32 %v66, %v6792
    %6794 = vmatpush1.msra.mxu0 %v6793
    %6795 = vmatprep.subr.mxu0 0.0
    %v6796 = vand.u32 %v67, 4294901760
    %v6797 = vsub.f32 %v67, %v6796
    %6798 = vmatpush1.msra.mxu0 %v6797
    %6799 = vmatprep.subr.mxu0 0.0
    %v6800 = vand.u32 %v68, 4294901760
    %v6801 = vsub.f32 %v68, %v6800
    %6802 = vmatpush1.msra.mxu0 %v6801
    %6803 = vmatprep.subr.mxu0 0.0
    %v6804 = vand.u32 %v69, 4294901760
    %v6805 = vsub.f32 %v69, %v6804
    %6806 = vmatpush1.msra.mxu0 %v6805
    %6807 = vmatprep.subr.mxu0 0.0
    %v6808 = vand.u32 %v70, 4294901760
    %v6809 = vsub.f32 %v70, %v6808
    %6810 = vmatpush1.msra.mxu0 %v6809
    %6811 = vmatprep.subr.mxu0 0.0
    %v6812 = vand.u32 %v71, 4294901760
    %v6813 = vsub.f32 %v71, %v6812
    %6814 = vmatpush1.msra.mxu0 %v6813
    %6815 = vmatprep.subr.mxu0 0.0
    %v6816 = vand.u32 %v72, 4294901760
    %v6817 = vsub.f32 %v72, %v6816
    %6818 = vmatpush1.msra.mxu0 %v6817
    %6819 = vmatprep.subr.mxu0 0.0
    %v6820 = vand.u32 %v73, 4294901760
    %v6821 = vsub.f32 %v73, %v6820
    %6822 = vmatpush1.msra.mxu0 %v6821
    %6823 = vmatprep.subr.mxu0 0.0
    %v6824 = vand.u32 %v74, 4294901760
    %v6825 = vsub.f32 %v74, %v6824
    %6826 = vmatpush1.msra.mxu0 %v6825
    %6827 = vmatprep.subr.mxu0 0.0
    %v6828 = vand.u32 %v75, 4294901760
    %v6829 = vsub.f32 %v75, %v6828
    %6830 = vmatpush1.msra.mxu0 %v6829
    %6831 = vmatprep.subr.mxu0 0.0
    %v6832 = vand.u32 %v76, 4294901760
    %v6833 = vsub.f32 %v76, %v6832
    %6834 = vmatpush1.msra.mxu0 %v6833
    %6835 = vmatprep.subr.mxu0 0.0
    %v6836 = vand.u32 %v77, 4294901760
    %v6837 = vsub.f32 %v77, %v6836
    %6838 = vmatpush1.msra.mxu0 %v6837
    %6839 = vmatprep.subr.mxu0 0.0
    %v6840 = vand.u32 %v78, 4294901760
    %v6841 = vsub.f32 %v78, %v6840
    %6842 = vmatpush1.msra.mxu0 %v6841
    %6843 = vmatprep.subr.mxu0 0.0
    %v6844 = vand.u32 %v79, 4294901760
    %v6845 = vsub.f32 %v79, %v6844
    %6846 = vmatpush1.msra.mxu0 %v6845
    %6847 = vmatprep.subr.mxu0 0.0
    %6848 = vmatpush1.msra.mxu0 0.0
    %6849 = vmatprep.subr.mxu0 0.0
    %6850 = vmatpush1.msra.mxu0 0.0
    %6851 = vmatprep.subr.mxu0 0.0
    %6852 = vmatpush1.msra.mxu0 0.0
    %6853 = vmatprep.subr.mxu0 0.0
    %6854 = vmatpush1.msra.mxu0 0.0
    %6855 = vmatprep.subr.mxu0 0.0
    %6856 = vmatpush1.msra.mxu0 0.0
    %6857 = vmatprep.subr.mxu0 0.0
    %6858 = vmatpush1.msra.mxu0 0.0
    %6859 = vmatprep.subr.mxu0 0.0
    %6860 = vmatpush1.msra.mxu0 0.0
    %6861 = vmatprep.subr.mxu0 0.0
    %6862 = vmatpush1.msra.mxu0 0.0
    %6863 = vmatprep.subr.mxu0 0.0
    %6864 = vmatpush1.msra.mxu0 0.0
    %6865 = vmatprep.subr.mxu0 0.0
    %6866 = vmatpush1.msra.mxu0 0.0
    %6867 = vmatprep.subr.mxu0 0.0
    %6868 = vmatpush1.msra.mxu0 0.0
    %6869 = vmatprep.subr.mxu0 0.0
    %6870 = vmatpush1.msra.mxu0 0.0
    %6871 = vmatprep.subr.mxu0 0.0
    %6872 = vmatpush1.msra.mxu0 0.0
    %6873 = vmatprep.subr.mxu0 0.0
    %6874 = vmatpush1.msra.mxu0 0.0
    %6875 = vmatprep.subr.mxu0 0.0
    %6876 = vmatpush1.msra.mxu0 0.0
    %6877 = vmatprep.subr.mxu0 0.0
    %6878 = vmatpush1.msra.mxu0 0.0
    %6879 = vmatprep.mubr.f32.mxu0 0.0
    %v6880 = vand.u32 %v6540, 4294901760
    %v6881 = vsub.f32 %v6540, %v6880
    %6882 = vmatmul.mubr.f32.gmra.mrb[0].mxu0 %v6881
    %v6883 = vpop.f32.mrb[0].mxu0
    %v6884 = vadd.f32 %v6780, %v6883
    %v6885 = vpop.f32.mrb[0].mxu0
    %6886 = vdwg.mxu0
    %6887 = vmatprep.subr.mxu0 0.0
    %v6888 = vand.u32 %v64, 4294901760
    %6889 = vmatpush1.msra.mxu0 %v6888
    %6890 = vmatprep.subr.mxu0 0.0
    %v6891 = vand.u32 %v65, 4294901760
    %6892 = vmatpush1.msra.mxu0 %v6891
    %6893 = vmatprep.subr.mxu0 0.0
    %v6894 = vand.u32 %v66, 4294901760
    %6895 = vmatpush1.msra.mxu0 %v6894
    %6896 = vmatprep.subr.mxu0 0.0
    %v6897 = vand.u32 %v67, 4294901760
    %6898 = vmatpush1.msra.mxu0 %v6897
    %6899 = vmatprep.subr.mxu0 0.0
    %v6900 = vand.u32 %v68, 4294901760
    %6901 = vmatpush1.msra.mxu0 %v6900
    %6902 = vmatprep.subr.mxu0 0.0
    %v6903 = vand.u32 %v69, 4294901760
    %6904 = vmatpush1.msra.mxu0 %v6903
    %6905 = vmatprep.subr.mxu0 0.0
    %v6906 = vand.u32 %v70, 4294901760
    %6907 = vmatpush1.msra.mxu0 %v6906
    %6908 = vmatprep.subr.mxu0 0.0
    %v6909 = vand.u32 %v71, 4294901760
    %6910 = vmatpush1.msra.mxu0 %v6909
    %6911 = vmatprep.subr.mxu0 0.0
    %v6912 = vand.u32 %v72, 4294901760
    %6913 = vmatpush1.msra.mxu0 %v6912
    %6914 = vmatprep.subr.mxu0 0.0
    %v6915 = vand.u32 %v73, 4294901760
    %6916 = vmatpush1.msra.mxu0 %v6915
    %6917 = vmatprep.subr.mxu0 0.0
    %v6918 = vand.u32 %v74, 4294901760
    %6919 = vmatpush1.msra.mxu0 %v6918
    %6920 = vmatprep.subr.mxu0 0.0
    %v6921 = vand.u32 %v75, 4294901760
    %6922 = vmatpush1.msra.mxu0 %v6921
    %6923 = vmatprep.subr.mxu0 0.0
    %v6924 = vand.u32 %v76, 4294901760
    %6925 = vmatpush1.msra.mxu0 %v6924
    %6926 = vmatprep.subr.mxu0 0.0
    %v6927 = vand.u32 %v77, 4294901760
    %6928 = vmatpush1.msra.mxu0 %v6927
    %6929 = vmatprep.subr.mxu0 0.0
    %v6930 = vand.u32 %v78, 4294901760
    %6931 = vmatpush1.msra.mxu0 %v6930
    %6932 = vmatprep.subr.mxu0 0.0
    %v6933 = vand.u32 %v79, 4294901760
    %6934 = vmatpush1.msra.mxu0 %v6933
    %6935 = vmatprep.subr.mxu0 0.0
    %6936 = vmatpush1.msra.mxu0 0.0
    %6937 = vmatprep.subr.mxu0 0.0
    %6938 = vmatpush1.msra.mxu0 0.0
    %6939 = vmatprep.subr.mxu0 0.0
    %6940 = vmatpush1.msra.mxu0 0.0
    %6941 = vmatprep.subr.mxu0 0.0
    %6942 = vmatpush1.msra.mxu0 0.0
    %6943 = vmatprep.subr.mxu0 0.0
    %6944 = vmatpush1.msra.mxu0 0.0
    %6945 = vmatprep.subr.mxu0 0.0
    %6946 = vmatpush1.msra.mxu0 0.0
    %6947 = vmatprep.subr.mxu0 0.0
    %6948 = vmatpush1.msra.mxu0 0.0
    %6949 = vmatprep.subr.mxu0 0.0
    %6950 = vmatpush1.msra.mxu0 0.0
    %6951 = vmatprep.subr.mxu0 0.0
    %6952 = vmatpush1.msra.mxu0 0.0
    %6953 = vmatprep.subr.mxu0 0.0
    %6954 = vmatpush1.msra.mxu0 0.0
    %6955 = vmatprep.subr.mxu0 0.0
    %6956 = vmatpush1.msra.mxu0 0.0
    %6957 = vmatprep.subr.mxu0 0.0
    %6958 = vmatpush1.msra.mxu0 0.0
    %6959 = vmatprep.subr.mxu0 0.0
    %6960 = vmatpush1.msra.mxu0 0.0
    %6961 = vmatprep.subr.mxu0 0.0
    %6962 = vmatpush1.msra.mxu0 0.0
    %6963 = vmatprep.subr.mxu0 0.0
    %6964 = vmatpush1.msra.mxu0 0.0
    %6965 = vmatprep.subr.mxu0 0.0
    %6966 = vmatpush1.msra.mxu0 0.0
    %6967 = vmatprep.mubr.f32.mxu0 0.0
    %v6968 = vand.u32 %v6540, 4294901760
    %v6969 = vsub.f32 %v6540, %v6968
    %v6970 = vand.u32 %v6969, 4294901760
    %6971 = vmatmul.mubr.f32.gmra.mrb[0].mxu0 %v6970
    %v6972 = vpop.f32.mrb[0].mxu0
    %v6973 = vadd.f32 %v6884, %v6972
    %v6974 = vpop.f32.mrb[0].mxu0
    %6975 = vdwg.mxu0
    %6976 = vmatprep.subr.mxu0 0.0
    %v6977 = vand.u32 %v64, 4294901760
    %v6978 = vsub.f32 %v64, %v6977
    %v6979 = vand.u32 %v6978, 4294901760
    %6980 = vmatpush1.msra.mxu0 %v6979
    %6981 = vmatprep.subr.mxu0 0.0
    %v6982 = vand.u32 %v65, 4294901760
    %v6983 = vsub.f32 %v65, %v6982
    %v6984 = vand.u32 %v6983, 4294901760
    %6985 = vmatpush1.msra.mxu0 %v6984
    %6986 = vmatprep.subr.mxu0 0.0
    %v6987 = vand.u32 %v66, 4294901760
    %v6988 = vsub.f32 %v66, %v6987
    %v6989 = vand.u32 %v6988, 4294901760
    %6990 = vmatpush1.msra.mxu0 %v6989
    %6991 = vmatprep.subr.mxu0 0.0
    %v6992 = vand.u32 %v67, 4294901760
    %v6993 = vsub.f32 %v67, %v6992
    %v6994 = vand.u32 %v6993, 4294901760
    %6995 = vmatpush1.msra.mxu0 %v6994
    %6996 = vmatprep.subr.mxu0 0.0
    %v6997 = vand.u32 %v68, 4294901760
    %v6998 = vsub.f32 %v68, %v6997
    %v6999 = vand.u32 %v6998, 4294901760
    %7000 = vmatpush1.msra.mxu0 %v6999
    %7001 = vmatprep.subr.mxu0 0.0
    %v7002 = vand.u32 %v69, 4294901760
    %v7003 = vsub.f32 %v69, %v7002
    %v7004 = vand.u32 %v7003, 4294901760
    %7005 = vmatpush1.msra.mxu0 %v7004
    %7006 = vmatprep.subr.mxu0 0.0
    %v7007 = vand.u32 %v70, 4294901760
    %v7008 = vsub.f32 %v70, %v7007
    %v7009 = vand.u32 %v7008, 4294901760
    %7010 = vmatpush1.msra.mxu0 %v7009
    %7011 = vmatprep.subr.mxu0 0.0
    %v7012 = vand.u32 %v71, 4294901760
    %v7013 = vsub.f32 %v71, %v7012
    %v7014 = vand.u32 %v7013, 4294901760
    %7015 = vmatpush1.msra.mxu0 %v7014
    %7016 = vmatprep.subr.mxu0 0.0
    %v7017 = vand.u32 %v72, 4294901760
    %v7018 = vsub.f32 %v72, %v7017
    %v7019 = vand.u32 %v7018, 4294901760
    %7020 = vmatpush1.msra.mxu0 %v7019
    %7021 = vmatprep.subr.mxu0 0.0
    %v7022 = vand.u32 %v73, 4294901760
    %v7023 = vsub.f32 %v73, %v7022
    %v7024 = vand.u32 %v7023, 4294901760
    %7025 = vmatpush1.msra.mxu0 %v7024
    %7026 = vmatprep.subr.mxu0 0.0
    %v7027 = vand.u32 %v74, 4294901760
    %v7028 = vsub.f32 %v74, %v7027
    %v7029 = vand.u32 %v7028, 4294901760
    %7030 = vmatpush1.msra.mxu0 %v7029
    %7031 = vmatprep.subr.mxu0 0.0
    %v7032 = vand.u32 %v75, 4294901760
    %v7033 = vsub.f32 %v75, %v7032
    %v7034 = vand.u32 %v7033, 4294901760
    %7035 = vmatpush1.msra.mxu0 %v7034
    %7036 = vmatprep.subr.mxu0 0.0
    %v7037 = vand.u32 %v76, 4294901760
    %v7038 = vsub.f32 %v76, %v7037
    %v7039 = vand.u32 %v7038, 4294901760
    %7040 = vmatpush1.msra.mxu0 %v7039
    %7041 = vmatprep.subr.mxu0 0.0
    %v7042 = vand.u32 %v77, 4294901760
    %v7043 = vsub.f32 %v77, %v7042
    %v7044 = vand.u32 %v7043, 4294901760
    %7045 = vmatpush1.msra.mxu0 %v7044
    %7046 = vmatprep.subr.mxu0 0.0
    %v7047 = vand.u32 %v78, 4294901760
    %v7048 = vsub.f32 %v78, %v7047
    %v7049 = vand.u32 %v7048, 4294901760
    %7050 = vmatpush1.msra.mxu0 %v7049
    %7051 = vmatprep.subr.mxu0 0.0
    %v7052 = vand.u32 %v79, 4294901760
    %v7053 = vsub.f32 %v79, %v7052
    %v7054 = vand.u32 %v7053, 4294901760
    %7055 = vmatpush1.msra.mxu0 %v7054
    %7056 = vmatprep.subr.mxu0 0.0
    %7057 = vmatpush1.msra.mxu0 0.0
    %7058 = vmatprep.subr.mxu0 0.0
    %7059 = vmatpush1.msra.mxu0 0.0
    %7060 = vmatprep.subr.mxu0 0.0
    %7061 = vmatpush1.msra.mxu0 0.0
    %7062 = vmatprep.subr.mxu0 0.0
    %7063 = vmatpush1.msra.mxu0 0.0
    %7064 = vmatprep.subr.mxu0 0.0
    %7065 = vmatpush1.msra.mxu0 0.0
    %7066 = vmatprep.subr.mxu0 0.0
    %7067 = vmatpush1.msra.mxu0 0.0
    %7068 = vmatprep.subr.mxu0 0.0
    %7069 = vmatpush1.msra.mxu0 0.0
    %7070 = vmatprep.subr.mxu0 0.0
    %7071 = vmatpush1.msra.mxu0 0.0
    %7072 = vmatprep.subr.mxu0 0.0
    %7073 = vmatpush1.msra.mxu0 0.0
    %7074 = vmatprep.subr.mxu0 0.0
    %7075 = vmatpush1.msra.mxu0 0.0
    %7076 = vmatprep.subr.mxu0 0.0
    %7077 = vmatpush1.msra.mxu0 0.0
    %7078 = vmatprep.subr.mxu0 0.0
    %7079 = vmatpush1.msra.mxu0 0.0
    %7080 = vmatprep.subr.mxu0 0.0
    %7081 = vmatpush1.msra.mxu0 0.0
    %7082 = vmatprep.subr.mxu0 0.0
    %7083 = vmatpush1.msra.mxu0 0.0
    %7084 = vmatprep.subr.mxu0 0.0
    %7085 = vmatpush1.msra.mxu0 0.0
    %7086 = vmatprep.subr.mxu0 0.0
    %7087 = vmatpush1.msra.mxu0 0.0
    %7088 = vmatprep.mubr.f32.mxu0 0.0
    %v7089 = vand.u32 %v6540, 4294901760
    %7090 = vmatmul.mubr.f32.gmra.mrb[0].mxu0 %v7089
    %v7091 = vpop.f32.mrb[0].mxu0
    %v7092 = vadd.f32 %v6973, %v7091
    %v7093 = vpop.f32.mrb[0].mxu0
    %7094 = vdwg.mxu0
    %7095 = vmatprep.subr.mxu0 0.0
    %v7096 = vand.u32 %v64, 4294901760
    %7097 = vmatpush1.msra.mxu0 %v7096
    %7098 = vmatprep.subr.mxu0 0.0
    %v7099 = vand.u32 %v65, 4294901760
    %7100 = vmatpush1.msra.mxu0 %v7099
    %7101 = vmatprep.subr.mxu0 0.0
    %v7102 = vand.u32 %v66, 4294901760
    %7103 = vmatpush1.msra.mxu0 %v7102
    %7104 = vmatprep.subr.mxu0 0.0
    %v7105 = vand.u32 %v67, 4294901760
    %7106 = vmatpush1.msra.mxu0 %v7105
    %7107 = vmatprep.subr.mxu0 0.0
    %v7108 = vand.u32 %v68, 4294901760
    %7109 = vmatpush1.msra.mxu0 %v7108
    %7110 = vmatprep.subr.mxu0 0.0
    %v7111 = vand.u32 %v69, 4294901760
    %7112 = vmatpush1.msra.mxu0 %v7111
    %7113 = vmatprep.subr.mxu0 0.0
    %v7114 = vand.u32 %v70, 4294901760
    %7115 = vmatpush1.msra.mxu0 %v7114
    %7116 = vmatprep.subr.mxu0 0.0
    %v7117 = vand.u32 %v71, 4294901760
    %7118 = vmatpush1.msra.mxu0 %v7117
    %7119 = vmatprep.subr.mxu0 0.0
    %v7120 = vand.u32 %v72, 4294901760
    %7121 = vmatpush1.msra.mxu0 %v7120
    %7122 = vmatprep.subr.mxu0 0.0
    %v7123 = vand.u32 %v73, 4294901760
    %7124 = vmatpush1.msra.mxu0 %v7123
    %7125 = vmatprep.subr.mxu0 0.0
    %v7126 = vand.u32 %v74, 4294901760
    %7127 = vmatpush1.msra.mxu0 %v7126
    %7128 = vmatprep.subr.mxu0 0.0
    %v7129 = vand.u32 %v75, 4294901760
    %7130 = vmatpush1.msra.mxu0 %v7129
    %7131 = vmatprep.subr.mxu0 0.0
    %v7132 = vand.u32 %v76, 4294901760
    %7133 = vmatpush1.msra.mxu0 %v7132
    %7134 = vmatprep.subr.mxu0 0.0
    %v7135 = vand.u32 %v77, 4294901760
    %7136 = vmatpush1.msra.mxu0 %v7135
    %7137 = vmatprep.subr.mxu0 0.0
    %v7138 = vand.u32 %v78, 4294901760
    %7139 = vmatpush1.msra.mxu0 %v7138
    %7140 = vmatprep.subr.mxu0 0.0
    %v7141 = vand.u32 %v79, 4294901760
    %7142 = vmatpush1.msra.mxu0 %v7141
    %7143 = vmatprep.subr.mxu0 0.0
    %7144 = vmatpush1.msra.mxu0 0.0
    %7145 = vmatprep.subr.mxu0 0.0
    %7146 = vmatpush1.msra.mxu0 0.0
    %7147 = vmatprep.subr.mxu0 0.0
    %7148 = vmatpush1.msra.mxu0 0.0
    %7149 = vmatprep.subr.mxu0 0.0
    %7150 = vmatpush1.msra.mxu0 0.0
    %7151 = vmatprep.subr.mxu0 0.0
    %7152 = vmatpush1.msra.mxu0 0.0
    %7153 = vmatprep.subr.mxu0 0.0
    %7154 = vmatpush1.msra.mxu0 0.0
    %7155 = vmatprep.subr.mxu0 0.0
    %7156 = vmatpush1.msra.mxu0 0.0
    %7157 = vmatprep.subr.mxu0 0.0
    %7158 = vmatpush1.msra.mxu0 0.0
    %7159 = vmatprep.subr.mxu0 0.0
    %7160 = vmatpush1.msra.mxu0 0.0
    %7161 = vmatprep.subr.mxu0 0.0
    %7162 = vmatpush1.msra.mxu0 0.0
    %7163 = vmatprep.subr.mxu0 0.0
    %7164 = vmatpush1.msra.mxu0 0.0
    %7165 = vmatprep.subr.mxu0 0.0
    %7166 = vmatpush1.msra.mxu0 0.0
    %7167 = vmatprep.subr.mxu0 0.0
    %7168 = vmatpush1.msra.mxu0 0.0
    %7169 = vmatprep.subr.mxu0 0.0
    %7170 = vmatpush1.msra.mxu0 0.0
    %7171 = vmatprep.subr.mxu0 0.0
    %7172 = vmatpush1.msra.mxu0 0.0
    %7173 = vmatprep.subr.mxu0 0.0
    %7174 = vmatpush1.msra.mxu0 0.0
    %7175 = vmatprep.mubr.f32.mxu0 0.0
    %v7176 = vand.u32 %v6540, 4294901760
    %7177 = vmatmul.mubr.f32.gmra.mrb[0].mxu0 %v7176
    %v7178 = vpop.f32.mrb[0].mxu0
    %v7179 = vadd.f32 %v7092, %v7178
    %v7180 = vpop.f32.mrb[0].mxu0
    %7181 = vdwg.mxu0
    %7182 = vmatprep.subr.mxu0 0.0
    %v7183 = vand.u32 %v80, 4294901760
    %7184 = vmatpush1.msra.mxu0 %v7183
    %7185 = vmatprep.subr.mxu0 0.0
    %v7186 = vand.u32 %v81, 4294901760
    %7187 = vmatpush1.msra.mxu0 %v7186
    %7188 = vmatprep.subr.mxu0 0.0
    %v7189 = vand.u32 %v82, 4294901760
    %7190 = vmatpush1.msra.mxu0 %v7189
    %7191 = vmatprep.subr.mxu0 0.0
    %v7192 = vand.u32 %v83, 4294901760
    %7193 = vmatpush1.msra.mxu0 %v7192
    %7194 = vmatprep.subr.mxu0 0.0
    %v7195 = vand.u32 %v84, 4294901760
    %7196 = vmatpush1.msra.mxu0 %v7195
    %7197 = vmatprep.subr.mxu0 0.0
    %v7198 = vand.u32 %v85, 4294901760
    %7199 = vmatpush1.msra.mxu0 %v7198
    %7200 = vmatprep.subr.mxu0 0.0
    %v7201 = vand.u32 %v86, 4294901760
    %7202 = vmatpush1.msra.mxu0 %v7201
    %7203 = vmatprep.subr.mxu0 0.0
    %v7204 = vand.u32 %v87, 4294901760
    %7205 = vmatpush1.msra.mxu0 %v7204
    %7206 = vmatprep.subr.mxu0 0.0
    %v7207 = vand.u32 %v88, 4294901760
    %7208 = vmatpush1.msra.mxu0 %v7207
    %7209 = vmatprep.subr.mxu0 0.0
    %v7210 = vand.u32 %v89, 4294901760
    %7211 = vmatpush1.msra.mxu0 %v7210
    %7212 = vmatprep.subr.mxu0 0.0
    %v7213 = vand.u32 %v90, 4294901760
    %7214 = vmatpush1.msra.mxu0 %v7213
    %7215 = vmatprep.subr.mxu0 0.0
    %v7216 = vand.u32 %v91, 4294901760
    %7217 = vmatpush1.msra.mxu0 %v7216
    %7218 = vmatprep.subr.mxu0 0.0
    %v7219 = vand.u32 %v92, 4294901760
    %7220 = vmatpush1.msra.mxu0 %v7219
    %7221 = vmatprep.subr.mxu0 0.0
    %v7222 = vand.u32 %v93, 4294901760
    %7223 = vmatpush1.msra.mxu0 %v7222
    %7224 = vmatprep.subr.mxu0 0.0
    %v7225 = vand.u32 %v94, 4294901760
    %7226 = vmatpush1.msra.mxu0 %v7225
    %7227 = vmatprep.subr.mxu0 0.0
    %v7228 = vand.u32 %v95, 4294901760
    %7229 = vmatpush1.msra.mxu0 %v7228
    %7230 = vmatprep.subr.mxu0 0.0
    %7231 = vmatpush1.msra.mxu0 0.0
    %7232 = vmatprep.subr.mxu0 0.0
    %7233 = vmatpush1.msra.mxu0 0.0
    %7234 = vmatprep.subr.mxu0 0.0
    %7235 = vmatpush1.msra.mxu0 0.0
    %7236 = vmatprep.subr.mxu0 0.0
    %7237 = vmatpush1.msra.mxu0 0.0
    %7238 = vmatprep.subr.mxu0 0.0
    %7239 = vmatpush1.msra.mxu0 0.0
    %7240 = vmatprep.subr.mxu0 0.0
    %7241 = vmatpush1.msra.mxu0 0.0
    %7242 = vmatprep.subr.mxu0 0.0
    %7243 = vmatpush1.msra.mxu0 0.0
    %7244 = vmatprep.subr.mxu0 0.0
    %7245 = vmatpush1.msra.mxu0 0.0
    %7246 = vmatprep.subr.mxu0 0.0
    %7247 = vmatpush1.msra.mxu0 0.0
    %7248 = vmatprep.subr.mxu0 0.0
    %7249 = vmatpush1.msra.mxu0 0.0
    %7250 = vmatprep.subr.mxu0 0.0
    %7251 = vmatpush1.msra.mxu0 0.0
    %7252 = vmatprep.subr.mxu0 0.0
    %7253 = vmatpush1.msra.mxu0 0.0
    %7254 = vmatprep.subr.mxu0 0.0
    %7255 = vmatpush1.msra.mxu0 0.0
    %7256 = vmatprep.subr.mxu0 0.0
    %7257 = vmatpush1.msra.mxu0 0.0
    %7258 = vmatprep.subr.mxu0 0.0
    %7259 = vmatpush1.msra.mxu0 0.0
    %7260 = vmatprep.subr.mxu0 0.0
    %7261 = vmatpush1.msra.mxu0 0.0
    %7262 = vmatprep.mubr.f32.mxu0 0.0
    %v7263 = vand.u32 %v6540, 4294901760
    %v7264 = vsub.f32 %v6540, %v7263
    %v7265 = vand.u32 %v7264, 4294901760
    %v7266 = vsub.f32 %v7264, %v7265
    %v7267 = vand.u32 %v7266, 4294901760
    %7268 = vmatmul.mubr.f32.gmra.mrb[0].mxu0 %v7267
    %v7269 = vpop.f32.mrb[0].mxu0
    %v7270 = vadd.f32 0.0, %v7269
    %v7271 = vpop.f32.mrb[0].mxu0
    %7272 = vdwg.mxu0
    %7273 = vmatprep.subr.mxu0 0.0
    %v7274 = vand.u32 %v80, 4294901760
    %v7275 = vsub.f32 %v80, %v7274
    %v7276 = vand.u32 %v7275, 4294901760
    %v7277 = vsub.f32 %v7275, %v7276
    %v7278 = vand.u32 %v7277, 4294901760
    %7279 = vmatpush1.msra.mxu0 %v7278
    %7280 = vmatprep.subr.mxu0 0.0
    %v7281 = vand.u32 %v81, 4294901760
    %v7282 = vsub.f32 %v81, %v7281
    %v7283 = vand.u32 %v7282, 4294901760
    %v7284 = vsub.f32 %v7282, %v7283
    %v7285 = vand.u32 %v7284, 4294901760
    %7286 = vmatpush1.msra.mxu0 %v7285
    %7287 = vmatprep.subr.mxu0 0.0
    %v7288 = vand.u32 %v82, 4294901760
    %v7289 = vsub.f32 %v82, %v7288
    %v7290 = vand.u32 %v7289, 4294901760
    %v7291 = vsub.f32 %v7289, %v7290
    %v7292 = vand.u32 %v7291, 4294901760
    %7293 = vmatpush1.msra.mxu0 %v7292
    %7294 = vmatprep.subr.mxu0 0.0
    %v7295 = vand.u32 %v83, 4294901760
    %v7296 = vsub.f32 %v83, %v7295
    %v7297 = vand.u32 %v7296, 4294901760
    %v7298 = vsub.f32 %v7296, %v7297
    %v7299 = vand.u32 %v7298, 4294901760
    %7300 = vmatpush1.msra.mxu0 %v7299
    %7301 = vmatprep.subr.mxu0 0.0
    %v7302 = vand.u32 %v84, 4294901760
    %v7303 = vsub.f32 %v84, %v7302
    %v7304 = vand.u32 %v7303, 4294901760
    %v7305 = vsub.f32 %v7303, %v7304
    %v7306 = vand.u32 %v7305, 4294901760
    %7307 = vmatpush1.msra.mxu0 %v7306
    %7308 = vmatprep.subr.mxu0 0.0
    %v7309 = vand.u32 %v85, 4294901760
    %v7310 = vsub.f32 %v85, %v7309
    %v7311 = vand.u32 %v7310, 4294901760
    %v7312 = vsub.f32 %v7310, %v7311
    %v7313 = vand.u32 %v7312, 4294901760
    %7314 = vmatpush1.msra.mxu0 %v7313
    %7315 = vmatprep.subr.mxu0 0.0
    %v7316 = vand.u32 %v86, 4294901760
    %v7317 = vsub.f32 %v86, %v7316
    %v7318 = vand.u32 %v7317, 4294901760
    %v7319 = vsub.f32 %v7317, %v7318
    %v7320 = vand.u32 %v7319, 4294901760
    %7321 = vmatpush1.msra.mxu0 %v7320
    %7322 = vmatprep.subr.mxu0 0.0
    %v7323 = vand.u32 %v87, 4294901760
    %v7324 = vsub.f32 %v87, %v7323
    %v7325 = vand.u32 %v7324, 4294901760
    %v7326 = vsub.f32 %v7324, %v7325
    %v7327 = vand.u32 %v7326, 4294901760
    %7328 = vmatpush1.msra.mxu0 %v7327
    %7329 = vmatprep.subr.mxu0 0.0
    %v7330 = vand.u32 %v88, 4294901760
    %v7331 = vsub.f32 %v88, %v7330
    %v7332 = vand.u32 %v7331, 4294901760
    %v7333 = vsub.f32 %v7331, %v7332
    %v7334 = vand.u32 %v7333, 4294901760
    %7335 = vmatpush1.msra.mxu0 %v7334
    %7336 = vmatprep.subr.mxu0 0.0
    %v7337 = vand.u32 %v89, 4294901760
    %v7338 = vsub.f32 %v89, %v7337
    %v7339 = vand.u32 %v7338, 4294901760
    %v7340 = vsub.f32 %v7338, %v7339
    %v7341 = vand.u32 %v7340, 4294901760
    %7342 = vmatpush1.msra.mxu0 %v7341
    %7343 = vmatprep.subr.mxu0 0.0
    %v7344 = vand.u32 %v90, 4294901760
    %v7345 = vsub.f32 %v90, %v7344
    %v7346 = vand.u32 %v7345, 4294901760
    %v7347 = vsub.f32 %v7345, %v7346
    %v7348 = vand.u32 %v7347, 4294901760
    %7349 = vmatpush1.msra.mxu0 %v7348
    %7350 = vmatprep.subr.mxu0 0.0
    %v7351 = vand.u32 %v91, 4294901760
    %v7352 = vsub.f32 %v91, %v7351
    %v7353 = vand.u32 %v7352, 4294901760
    %v7354 = vsub.f32 %v7352, %v7353
    %v7355 = vand.u32 %v7354, 4294901760
    %7356 = vmatpush1.msra.mxu0 %v7355
    %7357 = vmatprep.subr.mxu0 0.0
    %v7358 = vand.u32 %v92, 4294901760
    %v7359 = vsub.f32 %v92, %v7358
    %v7360 = vand.u32 %v7359, 4294901760
    %v7361 = vsub.f32 %v7359, %v7360
    %v7362 = vand.u32 %v7361, 4294901760
    %7363 = vmatpush1.msra.mxu0 %v7362
    %7364 = vmatprep.subr.mxu0 0.0
    %v7365 = vand.u32 %v93, 4294901760
    %v7366 = vsub.f32 %v93, %v7365
    %v7367 = vand.u32 %v7366, 4294901760
    %v7368 = vsub.f32 %v7366, %v7367
    %v7369 = vand.u32 %v7368, 4294901760
    %7370 = vmatpush1.msra.mxu0 %v7369
    %7371 = vmatprep.subr.mxu0 0.0
    %v7372 = vand.u32 %v94, 4294901760
    %v7373 = vsub.f32 %v94, %v7372
    %v7374 = vand.u32 %v7373, 4294901760
    %v7375 = vsub.f32 %v7373, %v7374
    %v7376 = vand.u32 %v7375, 4294901760
    %7377 = vmatpush1.msra.mxu0 %v7376
    %7378 = vmatprep.subr.mxu0 0.0
    %v7379 = vand.u32 %v95, 4294901760
    %v7380 = vsub.f32 %v95, %v7379
    %v7381 = vand.u32 %v7380, 4294901760
    %v7382 = vsub.f32 %v7380, %v7381
    %v7383 = vand.u32 %v7382, 4294901760
    %7384 = vmatpush1.msra.mxu0 %v7383
    %7385 = vmatprep.subr.mxu0 0.0
    %7386 = vmatpush1.msra.mxu0 0.0
    %7387 = vmatprep.subr.mxu0 0.0
    %7388 = vmatpush1.msra.mxu0 0.0
    %7389 = vmatprep.subr.mxu0 0.0
    %7390 = vmatpush1.msra.mxu0 0.0
    %7391 = vmatprep.subr.mxu0 0.0
    %7392 = vmatpush1.msra.mxu0 0.0
    %7393 = vmatprep.subr.mxu0 0.0
    %7394 = vmatpush1.msra.mxu0 0.0
    %7395 = vmatprep.subr.mxu0 0.0
    %7396 = vmatpush1.msra.mxu0 0.0
    %7397 = vmatprep.subr.mxu0 0.0
    %7398 = vmatpush1.msra.mxu0 0.0
    %7399 = vmatprep.subr.mxu0 0.0
    %7400 = vmatpush1.msra.mxu0 0.0
    %7401 = vmatprep.subr.mxu0 0.0
    %7402 = vmatpush1.msra.mxu0 0.0
    %7403 = vmatprep.subr.mxu0 0.0
    %7404 = vmatpush1.msra.mxu0 0.0
    %7405 = vmatprep.subr.mxu0 0.0
    %7406 = vmatpush1.msra.mxu0 0.0
    %7407 = vmatprep.subr.mxu0 0.0
    %7408 = vmatpush1.msra.mxu0 0.0
    %7409 = vmatprep.subr.mxu0 0.0
    %7410 = vmatpush1.msra.mxu0 0.0
    %7411 = vmatprep.subr.mxu0 0.0
    %7412 = vmatpush1.msra.mxu0 0.0
    %7413 = vmatprep.subr.mxu0 0.0
    %7414 = vmatpush1.msra.mxu0 0.0
    %7415 = vmatprep.subr.mxu0 0.0
    %7416 = vmatpush1.msra.mxu0 0.0
    %7417 = vmatprep.mubr.f32.mxu0 0.0
    %v7418 = vand.u32 %v6540, 4294901760
    %7419 = vmatmul.mubr.f32.gmra.mrb[0].mxu0 %v7418
    %v7420 = vpop.f32.mrb[0].mxu0
    %v7421 = vadd.f32 %v7270, %v7420
    %v7422 = vpop.f32.mrb[0].mxu0
    %7423 = vdwg.mxu0
    %7424 = vmatprep.subr.mxu0 0.0
    %v7425 = vand.u32 %v80, 4294901760
    %v7426 = vsub.f32 %v80, %v7425
    %7427 = vmatpush1.msra.mxu0 %v7426
    %7428 = vmatprep.subr.mxu0 0.0
    %v7429 = vand.u32 %v81, 4294901760
    %v7430 = vsub.f32 %v81, %v7429
    %7431 = vmatpush1.msra.mxu0 %v7430
    %7432 = vmatprep.subr.mxu0 0.0
    %v7433 = vand.u32 %v82, 4294901760
    %v7434 = vsub.f32 %v82, %v7433
    %7435 = vmatpush1.msra.mxu0 %v7434
    %7436 = vmatprep.subr.mxu0 0.0
    %v7437 = vand.u32 %v83, 4294901760
    %v7438 = vsub.f32 %v83, %v7437
    %7439 = vmatpush1.msra.mxu0 %v7438
    %7440 = vmatprep.subr.mxu0 0.0
    %v7441 = vand.u32 %v84, 4294901760
    %v7442 = vsub.f32 %v84, %v7441
    %7443 = vmatpush1.msra.mxu0 %v7442
    %7444 = vmatprep.subr.mxu0 0.0
    %v7445 = vand.u32 %v85, 4294901760
    %v7446 = vsub.f32 %v85, %v7445
    %7447 = vmatpush1.msra.mxu0 %v7446
    %7448 = vmatprep.subr.mxu0 0.0
    %v7449 = vand.u32 %v86, 4294901760
    %v7450 = vsub.f32 %v86, %v7449
    %7451 = vmatpush1.msra.mxu0 %v7450
    %7452 = vmatprep.subr.mxu0 0.0
    %v7453 = vand.u32 %v87, 4294901760
    %v7454 = vsub.f32 %v87, %v7453
    %7455 = vmatpush1.msra.mxu0 %v7454
    %7456 = vmatprep.subr.mxu0 0.0
    %v7457 = vand.u32 %v88, 4294901760
    %v7458 = vsub.f32 %v88, %v7457
    %7459 = vmatpush1.msra.mxu0 %v7458
    %7460 = vmatprep.subr.mxu0 0.0
    %v7461 = vand.u32 %v89, 4294901760
    %v7462 = vsub.f32 %v89, %v7461
    %7463 = vmatpush1.msra.mxu0 %v7462
    %7464 = vmatprep.subr.mxu0 0.0
    %v7465 = vand.u32 %v90, 4294901760
    %v7466 = vsub.f32 %v90, %v7465
    %7467 = vmatpush1.msra.mxu0 %v7466
    %7468 = vmatprep.subr.mxu0 0.0
    %v7469 = vand.u32 %v91, 4294901760
    %v7470 = vsub.f32 %v91, %v7469
    %7471 = vmatpush1.msra.mxu0 %v7470
    %7472 = vmatprep.subr.mxu0 0.0
    %v7473 = vand.u32 %v92, 4294901760
    %v7474 = vsub.f32 %v92, %v7473
    %7475 = vmatpush1.msra.mxu0 %v7474
    %7476 = vmatprep.subr.mxu0 0.0
    %v7477 = vand.u32 %v93, 4294901760
    %v7478 = vsub.f32 %v93, %v7477
    %7479 = vmatpush1.msra.mxu0 %v7478
    %7480 = vmatprep.subr.mxu0 0.0
    %v7481 = vand.u32 %v94, 4294901760
    %v7482 = vsub.f32 %v94, %v7481
    %7483 = vmatpush1.msra.mxu0 %v7482
    %7484 = vmatprep.subr.mxu0 0.0
    %v7485 = vand.u32 %v95, 4294901760
    %v7486 = vsub.f32 %v95, %v7485
    %7487 = vmatpush1.msra.mxu0 %v7486
    %7488 = vmatprep.subr.mxu0 0.0
    %7489 = vmatpush1.msra.mxu0 0.0
    %7490 = vmatprep.subr.mxu0 0.0
    %7491 = vmatpush1.msra.mxu0 0.0
    %7492 = vmatprep.subr.mxu0 0.0
    %7493 = vmatpush1.msra.mxu0 0.0
    %7494 = vmatprep.subr.mxu0 0.0
    %7495 = vmatpush1.msra.mxu0 0.0
    %7496 = vmatprep.subr.mxu0 0.0
    %7497 = vmatpush1.msra.mxu0 0.0
    %7498 = vmatprep.subr.mxu0 0.0
    %7499 = vmatpush1.msra.mxu0 0.0
    %7500 = vmatprep.subr.mxu0 0.0
    %7501 = vmatpush1.msra.mxu0 0.0
    %7502 = vmatprep.subr.mxu0 0.0
    %7503 = vmatpush1.msra.mxu0 0.0
    %7504 = vmatprep.subr.mxu0 0.0
    %7505 = vmatpush1.msra.mxu0 0.0
    %7506 = vmatprep.subr.mxu0 0.0
    %7507 = vmatpush1.msra.mxu0 0.0
    %7508 = vmatprep.subr.mxu0 0.0
    %7509 = vmatpush1.msra.mxu0 0.0
    %7510 = vmatprep.subr.mxu0 0.0
    %7511 = vmatpush1.msra.mxu0 0.0
    %7512 = vmatprep.subr.mxu0 0.0
    %7513 = vmatpush1.msra.mxu0 0.0
    %7514 = vmatprep.subr.mxu0 0.0
    %7515 = vmatpush1.msra.mxu0 0.0
    %7516 = vmatprep.subr.mxu0 0.0
    %7517 = vmatpush1.msra.mxu0 0.0
    %7518 = vmatprep.subr.mxu0 0.0
    %7519 = vmatpush1.msra.mxu0 0.0
    %7520 = vmatprep.mubr.f32.mxu0 0.0
    %v7521 = vand.u32 %v6540, 4294901760
    %v7522 = vsub.f32 %v6540, %v7521
    %7523 = vmatmul.mubr.f32.gmra.mrb[0].mxu0 %v7522
    %v7524 = vpop.f32.mrb[0].mxu0
    %v7525 = vadd.f32 %v7421, %v7524
    %v7526 = vpop.f32.mrb[0].mxu0
    %7527 = vdwg.mxu0
    %7528 = vmatprep.subr.mxu0 0.0
    %v7529 = vand.u32 %v80, 4294901760
    %7530 = vmatpush1.msra.mxu0 %v7529
    %7531 = vmatprep.subr.mxu0 0.0
    %v7532 = vand.u32 %v81, 4294901760
    %7533 = vmatpush1.msra.mxu0 %v7532
    %7534 = vmatprep.subr.mxu0 0.0
    %v7535 = vand.u32 %v82, 4294901760
    %7536 = vmatpush1.msra.mxu0 %v7535
    %7537 = vmatprep.subr.mxu0 0.0
    %v7538 = vand.u32 %v83, 4294901760
    %7539 = vmatpush1.msra.mxu0 %v7538
    %7540 = vmatprep.subr.mxu0 0.0
    %v7541 = vand.u32 %v84, 4294901760
    %7542 = vmatpush1.msra.mxu0 %v7541
    %7543 = vmatprep.subr.mxu0 0.0
    %v7544 = vand.u32 %v85, 4294901760
    %7545 = vmatpush1.msra.mxu0 %v7544
    %7546 = vmatprep.subr.mxu0 0.0
    %v7547 = vand.u32 %v86, 4294901760
    %7548 = vmatpush1.msra.mxu0 %v7547
    %7549 = vmatprep.subr.mxu0 0.0
    %v7550 = vand.u32 %v87, 4294901760
    %7551 = vmatpush1.msra.mxu0 %v7550
    %7552 = vmatprep.subr.mxu0 0.0
    %v7553 = vand.u32 %v88, 4294901760
    %7554 = vmatpush1.msra.mxu0 %v7553
    %7555 = vmatprep.subr.mxu0 0.0
    %v7556 = vand.u32 %v89, 4294901760
    %7557 = vmatpush1.msra.mxu0 %v7556
    %7558 = vmatprep.subr.mxu0 0.0
    %v7559 = vand.u32 %v90, 4294901760
    %7560 = vmatpush1.msra.mxu0 %v7559
    %7561 = vmatprep.subr.mxu0 0.0
    %v7562 = vand.u32 %v91, 4294901760
    %7563 = vmatpush1.msra.mxu0 %v7562
    %7564 = vmatprep.subr.mxu0 0.0
    %v7565 = vand.u32 %v92, 4294901760
    %7566 = vmatpush1.msra.mxu0 %v7565
    %7567 = vmatprep.subr.mxu0 0.0
    %v7568 = vand.u32 %v93, 4294901760
    %7569 = vmatpush1.msra.mxu0 %v7568
    %7570 = vmatprep.subr.mxu0 0.0
    %v7571 = vand.u32 %v94, 4294901760
    %7572 = vmatpush1.msra.mxu0 %v7571
    %7573 = vmatprep.subr.mxu0 0.0
    %v7574 = vand.u32 %v95, 4294901760
    %7575 = vmatpush1.msra.mxu0 %v7574
    %7576 = vmatprep.subr.mxu0 0.0
    %7577 = vmatpush1.msra.mxu0 0.0
    %7578 = vmatprep.subr.mxu0 0.0
    %7579 = vmatpush1.msra.mxu0 0.0
    %7580 = vmatprep.subr.mxu0 0.0
    %7581 = vmatpush1.msra.mxu0 0.0
    %7582 = vmatprep.subr.mxu0 0.0
    %7583 = vmatpush1.msra.mxu0 0.0
    %7584 = vmatprep.subr.mxu0 0.0
    %7585 = vmatpush1.msra.mxu0 0.0
    %7586 = vmatprep.subr.mxu0 0.0
    %7587 = vmatpush1.msra.mxu0 0.0
    %7588 = vmatprep.subr.mxu0 0.0
    %7589 = vmatpush1.msra.mxu0 0.0
    %7590 = vmatprep.subr.mxu0 0.0
    %7591 = vmatpush1.msra.mxu0 0.0
    %7592 = vmatprep.subr.mxu0 0.0
    %7593 = vmatpush1.msra.mxu0 0.0
    %7594 = vmatprep.subr.mxu0 0.0
    %7595 = vmatpush1.msra.mxu0 0.0
    %7596 = vmatprep.subr.mxu0 0.0
    %7597 = vmatpush1.msra.mxu0 0.0
    %7598 = vmatprep.subr.mxu0 0.0
    %7599 = vmatpush1.msra.mxu0 0.0
    %7600 = vmatprep.subr.mxu0 0.0
    %7601 = vmatpush1.msra.mxu0 0.0
    %7602 = vmatprep.subr.mxu0 0.0
    %7603 = vmatpush1.msra.mxu0 0.0
    %7604 = vmatprep.subr.mxu0 0.0
    %7605 = vmatpush1.msra.mxu0 0.0
    %7606 = vmatprep.subr.mxu0 0.0
    %7607 = vmatpush1.msra.mxu0 0.0
    %7608 = vmatprep.mubr.f32.mxu0 0.0
    %v7609 = vand.u32 %v6540, 4294901760
    %v7610 = vsub.f32 %v6540, %v7609
    %v7611 = vand.u32 %v7610, 4294901760
    %7612 = vmatmul.mubr.f32.gmra.mrb[0].mxu0 %v7611
    %v7613 = vpop.f32.mrb[0].mxu0
    %v7614 = vadd.f32 %v7525, %v7613
    %v7615 = vpop.f32.mrb[0].mxu0
    %7616 = vdwg.mxu0
    %7617 = vmatprep.subr.mxu0 0.0
    %v7618 = vand.u32 %v80, 4294901760
    %v7619 = vsub.f32 %v80, %v7618
    %v7620 = vand.u32 %v7619, 4294901760
    %7621 = vmatpush1.msra.mxu0 %v7620
    %7622 = vmatprep.subr.mxu0 0.0
    %v7623 = vand.u32 %v81, 4294901760
    %v7624 = vsub.f32 %v81, %v7623
    %v7625 = vand.u32 %v7624, 4294901760
    %7626 = vmatpush1.msra.mxu0 %v7625
    %7627 = vmatprep.subr.mxu0 0.0
    %v7628 = vand.u32 %v82, 4294901760
    %v7629 = vsub.f32 %v82, %v7628
    %v7630 = vand.u32 %v7629, 4294901760
    %7631 = vmatpush1.msra.mxu0 %v7630
    %7632 = vmatprep.subr.mxu0 0.0
    %v7633 = vand.u32 %v83, 4294901760
    %v7634 = vsub.f32 %v83, %v7633
    %v7635 = vand.u32 %v7634, 4294901760
    %7636 = vmatpush1.msra.mxu0 %v7635
    %7637 = vmatprep.subr.mxu0 0.0
    %v7638 = vand.u32 %v84, 4294901760
    %v7639 = vsub.f32 %v84, %v7638
    %v7640 = vand.u32 %v7639, 4294901760
    %7641 = vmatpush1.msra.mxu0 %v7640
    %7642 = vmatprep.subr.mxu0 0.0
    %v7643 = vand.u32 %v85, 4294901760
    %v7644 = vsub.f32 %v85, %v7643
    %v7645 = vand.u32 %v7644, 4294901760
    %7646 = vmatpush1.msra.mxu0 %v7645
    %7647 = vmatprep.subr.mxu0 0.0
    %v7648 = vand.u32 %v86, 4294901760
    %v7649 = vsub.f32 %v86, %v7648
    %v7650 = vand.u32 %v7649, 4294901760
    %7651 = vmatpush1.msra.mxu0 %v7650
    %7652 = vmatprep.subr.mxu0 0.0
    %v7653 = vand.u32 %v87, 4294901760
    %v7654 = vsub.f32 %v87, %v7653
    %v7655 = vand.u32 %v7654, 4294901760
    %7656 = vmatpush1.msra.mxu0 %v7655
    %7657 = vmatprep.subr.mxu0 0.0
    %v7658 = vand.u32 %v88, 4294901760
    %v7659 = vsub.f32 %v88, %v7658
    %v7660 = vand.u32 %v7659, 4294901760
    %7661 = vmatpush1.msra.mxu0 %v7660
    %7662 = vmatprep.subr.mxu0 0.0
    %v7663 = vand.u32 %v89, 4294901760
    %v7664 = vsub.f32 %v89, %v7663
    %v7665 = vand.u32 %v7664, 4294901760
    %7666 = vmatpush1.msra.mxu0 %v7665
    %7667 = vmatprep.subr.mxu0 0.0
    %v7668 = vand.u32 %v90, 4294901760
    %v7669 = vsub.f32 %v90, %v7668
    %v7670 = vand.u32 %v7669, 4294901760
    %7671 = vmatpush1.msra.mxu0 %v7670
    %7672 = vmatprep.subr.mxu0 0.0
    %v7673 = vand.u32 %v91, 4294901760
    %v7674 = vsub.f32 %v91, %v7673
    %v7675 = vand.u32 %v7674, 4294901760
    %7676 = vmatpush1.msra.mxu0 %v7675
    %7677 = vmatprep.subr.mxu0 0.0
    %v7678 = vand.u32 %v92, 4294901760
    %v7679 = vsub.f32 %v92, %v7678
    %v7680 = vand.u32 %v7679, 4294901760
    %7681 = vmatpush1.msra.mxu0 %v7680
    %7682 = vmatprep.subr.mxu0 0.0
    %v7683 = vand.u32 %v93, 4294901760
    %v7684 = vsub.f32 %v93, %v7683
    %v7685 = vand.u32 %v7684, 4294901760
    %7686 = vmatpush1.msra.mxu0 %v7685
    %7687 = vmatprep.subr.mxu0 0.0
    %v7688 = vand.u32 %v94, 4294901760
    %v7689 = vsub.f32 %v94, %v7688
    %v7690 = vand.u32 %v7689, 4294901760
    %7691 = vmatpush1.msra.mxu0 %v7690
    %7692 = vmatprep.subr.mxu0 0.0
    %v7693 = vand.u32 %v95, 4294901760
    %v7694 = vsub.f32 %v95, %v7693
    %v7695 = vand.u32 %v7694, 4294901760
    %7696 = vmatpush1.msra.mxu0 %v7695
    %7697 = vmatprep.subr.mxu0 0.0
    %7698 = vmatpush1.msra.mxu0 0.0
    %7699 = vmatprep.subr.mxu0 0.0
    %7700 = vmatpush1.msra.mxu0 0.0
    %7701 = vmatprep.subr.mxu0 0.0
    %7702 = vmatpush1.msra.mxu0 0.0
    %7703 = vmatprep.subr.mxu0 0.0
    %7704 = vmatpush1.msra.mxu0 0.0
    %7705 = vmatprep.subr.mxu0 0.0
    %7706 = vmatpush1.msra.mxu0 0.0
    %7707 = vmatprep.subr.mxu0 0.0
    %7708 = vmatpush1.msra.mxu0 0.0
    %7709 = vmatprep.subr.mxu0 0.0
    %7710 = vmatpush1.msra.mxu0 0.0
    %7711 = vmatprep.subr.mxu0 0.0
    %7712 = vmatpush1.msra.mxu0 0.0
    %7713 = vmatprep.subr.mxu0 0.0
    %7714 = vmatpush1.msra.mxu0 0.0
    %7715 = vmatprep.subr.mxu0 0.0
    %7716 = vmatpush1.msra.mxu0 0.0
    %7717 = vmatprep.subr.mxu0 0.0
    %7718 = vmatpush1.msra.mxu0 0.0
    %7719 = vmatprep.subr.mxu0 0.0
    %7720 = vmatpush1.msra.mxu0 0.0
    %7721 = vmatprep.subr.mxu0 0.0
    %7722 = vmatpush1.msra.mxu0 0.0
    %7723 = vmatprep.subr.mxu0 0.0
    %7724 = vmatpush1.msra.mxu0 0.0
    %7725 = vmatprep.subr.mxu0 0.0
    %7726 = vmatpush1.msra.mxu0 0.0
    %7727 = vmatprep.subr.mxu0 0.0
    %7728 = vmatpush1.msra.mxu0 0.0
    %7729 = vmatprep.mubr.f32.mxu0 0.0
    %v7730 = vand.u32 %v6540, 4294901760
    %7731 = vmatmul.mubr.f32.gmra.mrb[0].mxu0 %v7730
    %v7732 = vpop.f32.mrb[0].mxu0
    %v7733 = vadd.f32 %v7614, %v7732
    %v7734 = vpop.f32.mrb[0].mxu0
    %7735 = vdwg.mxu0
    %7736 = vmatprep.subr.mxu0 0.0
    %v7737 = vand.u32 %v80, 4294901760
    %7738 = vmatpush1.msra.mxu0 %v7737
    %7739 = vmatprep.subr.mxu0 0.0
    %v7740 = vand.u32 %v81, 4294901760
    %7741 = vmatpush1.msra.mxu0 %v7740
    %7742 = vmatprep.subr.mxu0 0.0
    %v7743 = vand.u32 %v82, 4294901760
    %7744 = vmatpush1.msra.mxu0 %v7743
    %7745 = vmatprep.subr.mxu0 0.0
    %v7746 = vand.u32 %v83, 4294901760
    %7747 = vmatpush1.msra.mxu0 %v7746
    %7748 = vmatprep.subr.mxu0 0.0
    %v7749 = vand.u32 %v84, 4294901760
    %7750 = vmatpush1.msra.mxu0 %v7749
    %7751 = vmatprep.subr.mxu0 0.0
    %v7752 = vand.u32 %v85, 4294901760
    %7753 = vmatpush1.msra.mxu0 %v7752
    %7754 = vmatprep.subr.mxu0 0.0
    %v7755 = vand.u32 %v86, 4294901760
    %7756 = vmatpush1.msra.mxu0 %v7755
    %7757 = vmatprep.subr.mxu0 0.0
    %v7758 = vand.u32 %v87, 4294901760
    %7759 = vmatpush1.msra.mxu0 %v7758
    %7760 = vmatprep.subr.mxu0 0.0
    %v7761 = vand.u32 %v88, 4294901760
    %7762 = vmatpush1.msra.mxu0 %v7761
    %7763 = vmatprep.subr.mxu0 0.0
    %v7764 = vand.u32 %v89, 4294901760
    %7765 = vmatpush1.msra.mxu0 %v7764
    %7766 = vmatprep.subr.mxu0 0.0
    %v7767 = vand.u32 %v90, 4294901760
    %7768 = vmatpush1.msra.mxu0 %v7767
    %7769 = vmatprep.subr.mxu0 0.0
    %v7770 = vand.u32 %v91, 4294901760
    %7771 = vmatpush1.msra.mxu0 %v7770
    %7772 = vmatprep.subr.mxu0 0.0
    %v7773 = vand.u32 %v92, 4294901760
    %7774 = vmatpush1.msra.mxu0 %v7773
    %7775 = vmatprep.subr.mxu0 0.0
    %v7776 = vand.u32 %v93, 4294901760
    %7777 = vmatpush1.msra.mxu0 %v7776
    %7778 = vmatprep.subr.mxu0 0.0
    %v7779 = vand.u32 %v94, 4294901760
    %7780 = vmatpush1.msra.mxu0 %v7779
    %7781 = vmatprep.subr.mxu0 0.0
    %v7782 = vand.u32 %v95, 4294901760
    %7783 = vmatpush1.msra.mxu0 %v7782
    %7784 = vmatprep.subr.mxu0 0.0
    %7785 = vmatpush1.msra.mxu0 0.0
    %7786 = vmatprep.subr.mxu0 0.0
    %7787 = vmatpush1.msra.mxu0 0.0
    %7788 = vmatprep.subr.mxu0 0.0
    %7789 = vmatpush1.msra.mxu0 0.0
    %7790 = vmatprep.subr.mxu0 0.0
    %7791 = vmatpush1.msra.mxu0 0.0
    %7792 = vmatprep.subr.mxu0 0.0
    %7793 = vmatpush1.msra.mxu0 0.0
    %7794 = vmatprep.subr.mxu0 0.0
    %7795 = vmatpush1.msra.mxu0 0.0
    %7796 = vmatprep.subr.mxu0 0.0
    %7797 = vmatpush1.msra.mxu0 0.0
    %7798 = vmatprep.subr.mxu0 0.0
    %7799 = vmatpush1.msra.mxu0 0.0
    %7800 = vmatprep.subr.mxu0 0.0
    %7801 = vmatpush1.msra.mxu0 0.0
    %7802 = vmatprep.subr.mxu0 0.0
    %7803 = vmatpush1.msra.mxu0 0.0
    %7804 = vmatprep.subr.mxu0 0.0
    %7805 = vmatpush1.msra.mxu0 0.0
    %7806 = vmatprep.subr.mxu0 0.0
    %7807 = vmatpush1.msra.mxu0 0.0
    %7808 = vmatprep.subr.mxu0 0.0
    %7809 = vmatpush1.msra.mxu0 0.0
    %7810 = vmatprep.subr.mxu0 0.0
    %7811 = vmatpush1.msra.mxu0 0.0
    %7812 = vmatprep.subr.mxu0 0.0
    %7813 = vmatpush1.msra.mxu0 0.0
    %7814 = vmatprep.subr.mxu0 0.0
    %7815 = vmatpush1.msra.mxu0 0.0
    %7816 = vmatprep.mubr.f32.mxu0 0.0
    %v7817 = vand.u32 %v6540, 4294901760
    %7818 = vmatmul.mubr.f32.gmra.mrb[0].mxu0 %v7817
    %v7819 = vpop.f32.mrb[0].mxu0
    %v7820 = vadd.f32 %v7733, %v7819
    %v7821 = vpop.f32.mrb[0].mxu0
    %7822 = vdwg.mxu0
    %v7823 = vmul.f32 %v7179, %v62
    %v7824 = vmul.f32 %v7820, %v63
    %v7825 = vadd.f32 %v7823, %v7824
    %s7826 = scalar_lea.vmem [#allocation8], 10
    %7827 = vst [vmem:[%s7826] sm:$0x3] %v7825
    %s7828 = scalar_lea.vmem [#allocation2], 12
    %v7829 = vld [vmem:[%s7828] sm:$0x3]
    %7830 = vmatprep.subr.mxu0 0.0
    %v7831 = vand.u32 %v64, 4294901760
    %7832 = vmatpush1.msra.mxu0 %v7831
    %7833 = vmatprep.subr.mxu0 0.0
    %v7834 = vand.u32 %v65, 4294901760
    %7835 = vmatpush1.msra.mxu0 %v7834
    %7836 = vmatprep.subr.mxu0 0.0
    %v7837 = vand.u32 %v66, 4294901760
    %7838 = vmatpush1.msra.mxu0 %v7837
    %7839 = vmatprep.subr.mxu0 0.0
    %v7840 = vand.u32 %v67, 4294901760
    %7841 = vmatpush1.msra.mxu0 %v7840
    %7842 = vmatprep.subr.mxu0 0.0
    %v7843 = vand.u32 %v68, 4294901760
    %7844 = vmatpush1.msra.mxu0 %v7843
    %7845 = vmatprep.subr.mxu0 0.0
    %v7846 = vand.u32 %v69, 4294901760
    %7847 = vmatpush1.msra.mxu0 %v7846
    %7848 = vmatprep.subr.mxu0 0.0
    %v7849 = vand.u32 %v70, 4294901760
    %7850 = vmatpush1.msra.mxu0 %v7849
    %7851 = vmatprep.subr.mxu0 0.0
    %v7852 = vand.u32 %v71, 4294901760
    %7853 = vmatpush1.msra.mxu0 %v7852
    %7854 = vmatprep.subr.mxu0 0.0
    %v7855 = vand.u32 %v72, 4294901760
    %7856 = vmatpush1.msra.mxu0 %v7855
    %7857 = vmatprep.subr.mxu0 0.0
    %v7858 = vand.u32 %v73, 4294901760
    %7859 = vmatpush1.msra.mxu0 %v7858
    %7860 = vmatprep.subr.mxu0 0.0
    %v7861 = vand.u32 %v74, 4294901760
    %7862 = vmatpush1.msra.mxu0 %v7861
    %7863 = vmatprep.subr.mxu0 0.0
    %v7864 = vand.u32 %v75, 4294901760
    %7865 = vmatpush1.msra.mxu0 %v7864
    %7866 = vmatprep.subr.mxu0 0.0
    %v7867 = vand.u32 %v76, 4294901760
    %7868 = vmatpush1.msra.mxu0 %v7867
    %7869 = vmatprep.subr.mxu0 0.0
    %v7870 = vand.u32 %v77, 4294901760
    %7871 = vmatpush1.msra.mxu0 %v7870
    %7872 = vmatprep.subr.mxu0 0.0
    %v7873 = vand.u32 %v78, 4294901760
    %7874 = vmatpush1.msra.mxu0 %v7873
    %7875 = vmatprep.subr.mxu0 0.0
    %v7876 = vand.u32 %v79, 4294901760
    %7877 = vmatpush1.msra.mxu0 %v7876
    %7878 = vmatprep.subr.mxu0 0.0
    %7879 = vmatpush1.msra.mxu0 0.0
    %7880 = vmatprep.subr.mxu0 0.0
    %7881 = vmatpush1.msra.mxu0 0.0
    %7882 = vmatprep.subr.mxu0 0.0
    %7883 = vmatpush1.msra.mxu0 0.0
    %7884 = vmatprep.subr.mxu0 0.0
    %7885 = vmatpush1.msra.mxu0 0.0
    %7886 = vmatprep.subr.mxu0 0.0
    %7887 = vmatpush1.msra.mxu0 0.0
    %7888 = vmatprep.subr.mxu0 0.0
    %7889 = vmatpush1.msra.mxu0 0.0
    %7890 = vmatprep.subr.mxu0 0.0
    %7891 = vmatpush1.msra.mxu0 0.0
    %7892 = vmatprep.subr.mxu0 0.0
    %7893 = vmatpush1.msra.mxu0 0.0
    %7894 = vmatprep.subr.mxu0 0.0
    %7895 = vmatpush1.msra.mxu0 0.0
    %7896 = vmatprep.subr.mxu0 0.0
    %7897 = vmatpush1.msra.mxu0 0.0
    %7898 = vmatprep.subr.mxu0 0.0
    %7899 = vmatpush1.msra.mxu0 0.0
    %7900 = vmatprep.subr.mxu0 0.0
    %7901 = vmatpush1.msra.mxu0 0.0
    %7902 = vmatprep.subr.mxu0 0.0
    %7903 = vmatpush1.msra.mxu0 0.0
    %7904 = vmatprep.subr.mxu0 0.0
    %7905 = vmatpush1.msra.mxu0 0.0
    %7906 = vmatprep.subr.mxu0 0.0
    %7907 = vmatpush1.msra.mxu0 0.0
    %7908 = vmatprep.subr.mxu0 0.0
    %7909 = vmatpush1.msra.mxu0 0.0
    %7910 = vmatprep.mubr.f32.mxu0 0.0
    %v7911 = vand.u32 %v7829, 4294901760
    %v7912 = vsub.f32 %v7829, %v7911
    %v7913 = vand.u32 %v7912, 4294901760
    %v7914 = vsub.f32 %v7912, %v7913
    %v7915 = vand.u32 %v7914, 4294901760
    %7916 = vmatmul.mubr.f32.gmra.mrb[0].mxu0 %v7915
    %v7917 = vpop.f32.mrb[0].mxu0
    %v7918 = vadd.f32 0.0, %v7917
    %v7919 = vpop.f32.mrb[0].mxu0
    %7920 = vdwg.mxu0
    %7921 = vmatprep.subr.mxu0 0.0
    %v7922 = vand.u32 %v64, 4294901760
    %v7923 = vsub.f32 %v64, %v7922
    %v7924 = vand.u32 %v7923, 4294901760
    %v7925 = vsub.f32 %v7923, %v7924
    %v7926 = vand.u32 %v7925, 4294901760
    %7927 = vmatpush1.msra.mxu0 %v7926
    %7928 = vmatprep.subr.mxu0 0.0
    %v7929 = vand.u32 %v65, 4294901760
    %v7930 = vsub.f32 %v65, %v7929
    %v7931 = vand.u32 %v7930, 4294901760
    %v7932 = vsub.f32 %v7930, %v7931
    %v7933 = vand.u32 %v7932, 4294901760
    %7934 = vmatpush1.msra.mxu0 %v7933
    %7935 = vmatprep.subr.mxu0 0.0
    %v7936 = vand.u32 %v66, 4294901760
    %v7937 = vsub.f32 %v66, %v7936
    %v7938 = vand.u32 %v7937, 4294901760
    %v7939 = vsub.f32 %v7937, %v7938
    %v7940 = vand.u32 %v7939, 4294901760
    %7941 = vmatpush1.msra.mxu0 %v7940
    %7942 = vmatprep.subr.mxu0 0.0
    %v7943 = vand.u32 %v67, 4294901760
    %v7944 = vsub.f32 %v67, %v7943
    %v7945 = vand.u32 %v7944, 4294901760
    %v7946 = vsub.f32 %v7944, %v7945
    %v7947 = vand.u32 %v7946, 4294901760
    %7948 = vmatpush1.msra.mxu0 %v7947
    %7949 = vmatprep.subr.mxu0 0.0
    %v7950 = vand.u32 %v68, 4294901760
    %v7951 = vsub.f32 %v68, %v7950
    %v7952 = vand.u32 %v7951, 4294901760
    %v7953 = vsub.f32 %v7951, %v7952
    %v7954 = vand.u32 %v7953, 4294901760
    %7955 = vmatpush1.msra.mxu0 %v7954
    %7956 = vmatprep.subr.mxu0 0.0
    %v7957 = vand.u32 %v69, 4294901760
    %v7958 = vsub.f32 %v69, %v7957
    %v7959 = vand.u32 %v7958, 4294901760
    %v7960 = vsub.f32 %v7958, %v7959
    %v7961 = vand.u32 %v7960, 4294901760
    %7962 = vmatpush1.msra.mxu0 %v7961
    %7963 = vmatprep.subr.mxu0 0.0
    %v7964 = vand.u32 %v70, 4294901760
    %v7965 = vsub.f32 %v70, %v7964
    %v7966 = vand.u32 %v7965, 4294901760
    %v7967 = vsub.f32 %v7965, %v7966
    %v7968 = vand.u32 %v7967, 4294901760
    %7969 = vmatpush1.msra.mxu0 %v7968
    %7970 = vmatprep.subr.mxu0 0.0
    %v7971 = vand.u32 %v71, 4294901760
    %v7972 = vsub.f32 %v71, %v7971
    %v7973 = vand.u32 %v7972, 4294901760
    %v7974 = vsub.f32 %v7972, %v7973
    %v7975 = vand.u32 %v7974, 4294901760
    %7976 = vmatpush1.msra.mxu0 %v7975
    %7977 = vmatprep.subr.mxu0 0.0
    %v7978 = vand.u32 %v72, 4294901760
    %v7979 = vsub.f32 %v72, %v7978
    %v7980 = vand.u32 %v7979, 4294901760
    %v7981 = vsub.f32 %v7979, %v7980
    %v7982 = vand.u32 %v7981, 4294901760
    %7983 = vmatpush1.msra.mxu0 %v7982
    %7984 = vmatprep.subr.mxu0 0.0
    %v7985 = vand.u32 %v73, 4294901760
    %v7986 = vsub.f32 %v73, %v7985
    %v7987 = vand.u32 %v7986, 4294901760
    %v7988 = vsub.f32 %v7986, %v7987
    %v7989 = vand.u32 %v7988, 4294901760
    %7990 = vmatpush1.msra.mxu0 %v7989
    %7991 = vmatprep.subr.mxu0 0.0
    %v7992 = vand.u32 %v74, 4294901760
    %v7993 = vsub.f32 %v74, %v7992
    %v7994 = vand.u32 %v7993, 4294901760
    %v7995 = vsub.f32 %v7993, %v7994
    %v7996 = vand.u32 %v7995, 4294901760
    %7997 = vmatpush1.msra.mxu0 %v7996
    %7998 = vmatprep.subr.mxu0 0.0
    %v7999 = vand.u32 %v75, 4294901760
    %v8000 = vsub.f32 %v75, %v7999
    %v8001 = vand.u32 %v8000, 4294901760
    %v8002 = vsub.f32 %v8000, %v8001
    %v8003 = vand.u32 %v8002, 4294901760
    %8004 = vmatpush1.msra.mxu0 %v8003
    %8005 = vmatprep.subr.mxu0 0.0
    %v8006 = vand.u32 %v76, 4294901760
    %v8007 = vsub.f32 %v76, %v8006
    %v8008 = vand.u32 %v8007, 4294901760
    %v8009 = vsub.f32 %v8007, %v8008
    %v8010 = vand.u32 %v8009, 4294901760
    %8011 = vmatpush1.msra.mxu0 %v8010
    %8012 = vmatprep.subr.mxu0 0.0
    %v8013 = vand.u32 %v77, 4294901760
    %v8014 = vsub.f32 %v77, %v8013
    %v8015 = vand.u32 %v8014, 4294901760
    %v8016 = vsub.f32 %v8014, %v8015
    %v8017 = vand.u32 %v8016, 4294901760
    %8018 = vmatpush1.msra.mxu0 %v8017
    %8019 = vmatprep.subr.mxu0 0.0
    %v8020 = vand.u32 %v78, 4294901760
    %v8021 = vsub.f32 %v78, %v8020
    %v8022 = vand.u32 %v8021, 4294901760
    %v8023 = vsub.f32 %v8021, %v8022
    %v8024 = vand.u32 %v8023, 4294901760
    %8025 = vmatpush1.msra.mxu0 %v8024
    %8026 = vmatprep.subr.mxu0 0.0
    %v8027 = vand.u32 %v79, 4294901760
    %v8028 = vsub.f32 %v79, %v8027
    %v8029 = vand.u32 %v8028, 4294901760
    %v8030 = vsub.f32 %v8028, %v8029
    %v8031 = vand.u32 %v8030, 4294901760
    %8032 = vmatpush1.msra.mxu0 %v8031
    %8033 = vmatprep.subr.mxu0 0.0
    %8034 = vmatpush1.msra.mxu0 0.0
    %8035 = vmatprep.subr.mxu0 0.0
    %8036 = vmatpush1.msra.mxu0 0.0
    %8037 = vmatprep.subr.mxu0 0.0
    %8038 = vmatpush1.msra.mxu0 0.0
    %8039 = vmatprep.subr.mxu0 0.0
    %8040 = vmatpush1.msra.mxu0 0.0
    %8041 = vmatprep.subr.mxu0 0.0
    %8042 = vmatpush1.msra.mxu0 0.0
    %8043 = vmatprep.subr.mxu0 0.0
    %8044 = vmatpush1.msra.mxu0 0.0
    %8045 = vmatprep.subr.mxu0 0.0
    %8046 = vmatpush1.msra.mxu0 0.0
    %8047 = vmatprep.subr.mxu0 0.0
    %8048 = vmatpush1.msra.mxu0 0.0
    %8049 = vmatprep.subr.mxu0 0.0
    %8050 = vmatpush1.msra.mxu0 0.0
    %8051 = vmatprep.subr.mxu0 0.0
    %8052 = vmatpush1.msra.mxu0 0.0
    %8053 = vmatprep.subr.mxu0 0.0
    %8054 = vmatpush1.msra.mxu0 0.0
    %8055 = vmatprep.subr.mxu0 0.0
    %8056 = vmatpush1.msra.mxu0 0.0
    %8057 = vmatprep.subr.mxu0 0.0
    %8058 = vmatpush1.msra.mxu0 0.0
    %8059 = vmatprep.subr.mxu0 0.0
    %8060 = vmatpush1.msra.mxu0 0.0
    %8061 = vmatprep.subr.mxu0 0.0
    %8062 = vmatpush1.msra.mxu0 0.0
    %8063 = vmatprep.subr.mxu0 0.0
    %8064 = vmatpush1.msra.mxu0 0.0
    %8065 = vmatprep.mubr.f32.mxu0 0.0
    %v8066 = vand.u32 %v7829, 4294901760
    %8067 = vmatmul.mubr.f32.gmra.mrb[0].mxu0 %v8066
    %v8068 = vpop.f32.mrb[0].mxu0
    %v8069 = vadd.f32 %v7918, %v8068
    %v8070 = vpop.f32.mrb[0].mxu0
    %8071 = vdwg.mxu0
    %8072 = vmatprep.subr.mxu0 0.0
    %v8073 = vand.u32 %v64, 4294901760
    %v8074 = vsub.f32 %v64, %v8073
    %8075 = vmatpush1.msra.mxu0 %v8074
    %8076 = vmatprep.subr.mxu0 0.0
    %v8077 = vand.u32 %v65, 4294901760
    %v8078 = vsub.f32 %v65, %v8077
    %8079 = vmatpush1.msra.mxu0 %v8078
    %8080 = vmatprep.subr.mxu0 0.0
    %v8081 = vand.u32 %v66, 4294901760
    %v8082 = vsub.f32 %v66, %v8081
    %8083 = vmatpush1.msra.mxu0 %v8082
    %8084 = vmatprep.subr.mxu0 0.0
    %v8085 = vand.u32 %v67, 4294901760
    %v8086 = vsub.f32 %v67, %v8085
    %8087 = vmatpush1.msra.mxu0 %v8086
    %8088 = vmatprep.subr.mxu0 0.0
    %v8089 = vand.u32 %v68, 4294901760
    %v8090 = vsub.f32 %v68, %v8089
    %8091 = vmatpush1.msra.mxu0 %v8090
    %8092 = vmatprep.subr.mxu0 0.0
    %v8093 = vand.u32 %v69, 4294901760
    %v8094 = vsub.f32 %v69, %v8093
    %8095 = vmatpush1.msra.mxu0 %v8094
    %8096 = vmatprep.subr.mxu0 0.0
    %v8097 = vand.u32 %v70, 4294901760
    %v8098 = vsub.f32 %v70, %v8097
    %8099 = vmatpush1.msra.mxu0 %v8098
    %8100 = vmatprep.subr.mxu0 0.0
    %v8101 = vand.u32 %v71, 4294901760
    %v8102 = vsub.f32 %v71, %v8101
    %8103 = vmatpush1.msra.mxu0 %v8102
    %8104 = vmatprep.subr.mxu0 0.0
    %v8105 = vand.u32 %v72, 4294901760
    %v8106 = vsub.f32 %v72, %v8105
    %8107 = vmatpush1.msra.mxu0 %v8106
    %8108 = vmatprep.subr.mxu0 0.0
    %v8109 = vand.u32 %v73, 4294901760
    %v8110 = vsub.f32 %v73, %v8109
    %8111 = vmatpush1.msra.mxu0 %v8110
    %8112 = vmatprep.subr.mxu0 0.0
    %v8113 = vand.u32 %v74, 4294901760
    %v8114 = vsub.f32 %v74, %v8113
    %8115 = vmatpush1.msra.mxu0 %v8114
    %8116 = vmatprep.subr.mxu0 0.0
    %v8117 = vand.u32 %v75, 4294901760
    %v8118 = vsub.f32 %v75, %v8117
    %8119 = vmatpush1.msra.mxu0 %v8118
    %8120 = vmatprep.subr.mxu0 0.0
    %v8121 = vand.u32 %v76, 4294901760
    %v8122 = vsub.f32 %v76, %v8121
    %8123 = vmatpush1.msra.mxu0 %v8122
    %8124 = vmatprep.subr.mxu0 0.0
    %v8125 = vand.u32 %v77, 4294901760
    %v8126 = vsub.f32 %v77, %v8125
    %8127 = vmatpush1.msra.mxu0 %v8126
    %8128 = vmatprep.subr.mxu0 0.0
    %v8129 = vand.u32 %v78, 4294901760
    %v8130 = vsub.f32 %v78, %v8129
    %8131 = vmatpush1.msra.mxu0 %v8130
    %8132 = vmatprep.subr.mxu0 0.0
    %v8133 = vand.u32 %v79, 4294901760
    %v8134 = vsub.f32 %v79, %v8133
    %8135 = vmatpush1.msra.mxu0 %v8134
    %8136 = vmatprep.subr.mxu0 0.0
    %8137 = vmatpush1.msra.mxu0 0.0
    %8138 = vmatprep.subr.mxu0 0.0
    %8139 = vmatpush1.msra.mxu0 0.0
    %8140 = vmatprep.subr.mxu0 0.0
    %8141 = vmatpush1.msra.mxu0 0.0
    %8142 = vmatprep.subr.mxu0 0.0
    %8143 = vmatpush1.msra.mxu0 0.0
    %8144 = vmatprep.subr.mxu0 0.0
    %8145 = vmatpush1.msra.mxu0 0.0
    %8146 = vmatprep.subr.mxu0 0.0
    %8147 = vmatpush1.msra.mxu0 0.0
    %8148 = vmatprep.subr.mxu0 0.0
    %8149 = vmatpush1.msra.mxu0 0.0
    %8150 = vmatprep.subr.mxu0 0.0
    %8151 = vmatpush1.msra.mxu0 0.0
    %8152 = vmatprep.subr.mxu0 0.0
    %8153 = vmatpush1.msra.mxu0 0.0
    %8154 = vmatprep.subr.mxu0 0.0
    %8155 = vmatpush1.msra.mxu0 0.0
    %8156 = vmatprep.subr.mxu0 0.0
    %8157 = vmatpush1.msra.mxu0 0.0
    %8158 = vmatprep.subr.mxu0 0.0
    %8159 = vmatpush1.msra.mxu0 0.0
    %8160 = vmatprep.subr.mxu0 0.0
    %8161 = vmatpush1.msra.mxu0 0.0
    %8162 = vmatprep.subr.mxu0 0.0
    %8163 = vmatpush1.msra.mxu0 0.0
    %8164 = vmatprep.subr.mxu0 0.0
    %8165 = vmatpush1.msra.mxu0 0.0
    %8166 = vmatprep.subr.mxu0 0.0
    %8167 = vmatpush1.msra.mxu0 0.0
    %8168 = vmatprep.mubr.f32.mxu0 0.0
    %v8169 = vand.u32 %v7829, 4294901760
    %v8170 = vsub.f32 %v7829, %v8169
    %8171 = vmatmul.mubr.f32.gmra.mrb[0].mxu0 %v8170
    %v8172 = vpop.f32.mrb[0].mxu0
    %v8173 = vadd.f32 %v8069, %v8172
    %v8174 = vpop.f32.mrb[0].mxu0
    %8175 = vdwg.mxu0
    %8176 = vmatprep.subr.mxu0 0.0
    %v8177 = vand.u32 %v64, 4294901760
    %8178 = vmatpush1.msra.mxu0 %v8177
    %8179 = vmatprep.subr.mxu0 0.0
    %v8180 = vand.u32 %v65, 4294901760
    %8181 = vmatpush1.msra.mxu0 %v8180
    %8182 = vmatprep.subr.mxu0 0.0
    %v8183 = vand.u32 %v66, 4294901760
    %8184 = vmatpush1.msra.mxu0 %v8183
    %8185 = vmatprep.subr.mxu0 0.0
    %v8186 = vand.u32 %v67, 4294901760
    %8187 = vmatpush1.msra.mxu0 %v8186
    %8188 = vmatprep.subr.mxu0 0.0
    %v8189 = vand.u32 %v68, 4294901760
    %8190 = vmatpush1.msra.mxu0 %v8189
    %8191 = vmatprep.subr.mxu0 0.0
    %v8192 = vand.u32 %v69, 4294901760
    %8193 = vmatpush1.msra.mxu0 %v8192
    %8194 = vmatprep.subr.mxu0 0.0
    %v8195 = vand.u32 %v70, 4294901760
    %8196 = vmatpush1.msra.mxu0 %v8195
    %8197 = vmatprep.subr.mxu0 0.0
    %v8198 = vand.u32 %v71, 4294901760
    %8199 = vmatpush1.msra.mxu0 %v8198
    %8200 = vmatprep.subr.mxu0 0.0
    %v8201 = vand.u32 %v72, 4294901760
    %8202 = vmatpush1.msra.mxu0 %v8201
    %8203 = vmatprep.subr.mxu0 0.0
    %v8204 = vand.u32 %v73, 4294901760
    %8205 = vmatpush1.msra.mxu0 %v8204
    %8206 = vmatprep.subr.mxu0 0.0
    %v8207 = vand.u32 %v74, 4294901760
    %8208 = vmatpush1.msra.mxu0 %v8207
    %8209 = vmatprep.subr.mxu0 0.0
    %v8210 = vand.u32 %v75, 4294901760
    %8211 = vmatpush1.msra.mxu0 %v8210
    %8212 = vmatprep.subr.mxu0 0.0
    %v8213 = vand.u32 %v76, 4294901760
    %8214 = vmatpush1.msra.mxu0 %v8213
    %8215 = vmatprep.subr.mxu0 0.0
    %v8216 = vand.u32 %v77, 4294901760
    %8217 = vmatpush1.msra.mxu0 %v8216
    %8218 = vmatprep.subr.mxu0 0.0
    %v8219 = vand.u32 %v78, 4294901760
    %8220 = vmatpush1.msra.mxu0 %v8219
    %8221 = vmatprep.subr.mxu0 0.0
    %v8222 = vand.u32 %v79, 4294901760
    %8223 = vmatpush1.msra.mxu0 %v8222
    %8224 = vmatprep.subr.mxu0 0.0
    %8225 = vmatpush1.msra.mxu0 0.0
    %8226 = vmatprep.subr.mxu0 0.0
    %8227 = vmatpush1.msra.mxu0 0.0
    %8228 = vmatprep.subr.mxu0 0.0
    %8229 = vmatpush1.msra.mxu0 0.0
    %8230 = vmatprep.subr.mxu0 0.0
    %8231 = vmatpush1.msra.mxu0 0.0
    %8232 = vmatprep.subr.mxu0 0.0
    %8233 = vmatpush1.msra.mxu0 0.0
    %8234 = vmatprep.subr.mxu0 0.0
    %8235 = vmatpush1.msra.mxu0 0.0
    %8236 = vmatprep.subr.mxu0 0.0
    %8237 = vmatpush1.msra.mxu0 0.0
    %8238 = vmatprep.subr.mxu0 0.0
    %8239 = vmatpush1.msra.mxu0 0.0
    %8240 = vmatprep.subr.mxu0 0.0
    %8241 = vmatpush1.msra.mxu0 0.0
    %8242 = vmatprep.subr.mxu0 0.0
    %8243 = vmatpush1.msra.mxu0 0.0
    %8244 = vmatprep.subr.mxu0 0.0
    %8245 = vmatpush1.msra.mxu0 0.0
    %8246 = vmatprep.subr.mxu0 0.0
    %8247 = vmatpush1.msra.mxu0 0.0
    %8248 = vmatprep.subr.mxu0 0.0
    %8249 = vmatpush1.msra.mxu0 0.0
    %8250 = vmatprep.subr.mxu0 0.0
    %8251 = vmatpush1.msra.mxu0 0.0
    %8252 = vmatprep.subr.mxu0 0.0
    %8253 = vmatpush1.msra.mxu0 0.0
    %8254 = vmatprep.subr.mxu0 0.0
    %8255 = vmatpush1.msra.mxu0 0.0
    %8256 = vmatprep.mubr.f32.mxu0 0.0
    %v8257 = vand.u32 %v7829, 4294901760
    %v8258 = vsub.f32 %v7829, %v8257
    %v8259 = vand.u32 %v8258, 4294901760
    %8260 = vmatmul.mubr.f32.gmra.mrb[0].mxu0 %v8259
    %v8261 = vpop.f32.mrb[0].mxu0
    %v8262 = vadd.f32 %v8173, %v8261
    %v8263 = vpop.f32.mrb[0].mxu0
    %8264 = vdwg.mxu0
    %8265 = vmatprep.subr.mxu0 0.0
    %v8266 = vand.u32 %v64, 4294901760
    %v8267 = vsub.f32 %v64, %v8266
    %v8268 = vand.u32 %v8267, 4294901760
    %8269 = vmatpush1.msra.mxu0 %v8268
    %8270 = vmatprep.subr.mxu0 0.0
    %v8271 = vand.u32 %v65, 4294901760
    %v8272 = vsub.f32 %v65, %v8271
    %v8273 = vand.u32 %v8272, 4294901760
    %8274 = vmatpush1.msra.mxu0 %v8273
    %8275 = vmatprep.subr.mxu0 0.0
    %v8276 = vand.u32 %v66, 4294901760
    %v8277 = vsub.f32 %v66, %v8276
    %v8278 = vand.u32 %v8277, 4294901760
    %8279 = vmatpush1.msra.mxu0 %v8278
    %8280 = vmatprep.subr.mxu0 0.0
    %v8281 = vand.u32 %v67, 4294901760
    %v8282 = vsub.f32 %v67, %v8281
    %v8283 = vand.u32 %v8282, 4294901760
    %8284 = vmatpush1.msra.mxu0 %v8283
    %8285 = vmatprep.subr.mxu0 0.0
    %v8286 = vand.u32 %v68, 4294901760
    %v8287 = vsub.f32 %v68, %v8286
    %v8288 = vand.u32 %v8287, 4294901760
    %8289 = vmatpush1.msra.mxu0 %v8288
    %8290 = vmatprep.subr.mxu0 0.0
    %v8291 = vand.u32 %v69, 4294901760
    %v8292 = vsub.f32 %v69, %v8291
    %v8293 = vand.u32 %v8292, 4294901760
    %8294 = vmatpush1.msra.mxu0 %v8293
    %8295 = vmatprep.subr.mxu0 0.0
    %v8296 = vand.u32 %v70, 4294901760
    %v8297 = vsub.f32 %v70, %v8296
    %v8298 = vand.u32 %v8297, 4294901760
    %8299 = vmatpush1.msra.mxu0 %v8298
    %8300 = vmatprep.subr.mxu0 0.0
    %v8301 = vand.u32 %v71, 4294901760
    %v8302 = vsub.f32 %v71, %v8301
    %v8303 = vand.u32 %v8302, 4294901760
    %8304 = vmatpush1.msra.mxu0 %v8303
    %8305 = vmatprep.subr.mxu0 0.0
    %v8306 = vand.u32 %v72, 4294901760
    %v8307 = vsub.f32 %v72, %v8306
    %v8308 = vand.u32 %v8307, 4294901760
    %8309 = vmatpush1.msra.mxu0 %v8308
    %8310 = vmatprep.subr.mxu0 0.0
    %v8311 = vand.u32 %v73, 4294901760
    %v8312 = vsub.f32 %v73, %v8311
    %v8313 = vand.u32 %v8312, 4294901760
    %8314 = vmatpush1.msra.mxu0 %v8313
    %8315 = vmatprep.subr.mxu0 0.0
    %v8316 = vand.u32 %v74, 4294901760
    %v8317 = vsub.f32 %v74, %v8316
    %v8318 = vand.u32 %v8317, 4294901760
    %8319 = vmatpush1.msra.mxu0 %v8318
    %8320 = vmatprep.subr.mxu0 0.0
    %v8321 = vand.u32 %v75, 4294901760
    %v8322 = vsub.f32 %v75, %v8321
    %v8323 = vand.u32 %v8322, 4294901760
    %8324 = vmatpush1.msra.mxu0 %v8323
    %8325 = vmatprep.subr.mxu0 0.0
    %v8326 = vand.u32 %v76, 4294901760
    %v8327 = vsub.f32 %v76, %v8326
    %v8328 = vand.u32 %v8327, 4294901760
    %8329 = vmatpush1.msra.mxu0 %v8328
    %8330 = vmatprep.subr.mxu0 0.0
    %v8331 = vand.u32 %v77, 4294901760
    %v8332 = vsub.f32 %v77, %v8331
    %v8333 = vand.u32 %v8332, 4294901760
    %8334 = vmatpush1.msra.mxu0 %v8333
    %8335 = vmatprep.subr.mxu0 0.0
    %v8336 = vand.u32 %v78, 4294901760
    %v8337 = vsub.f32 %v78, %v8336
    %v8338 = vand.u32 %v8337, 4294901760
    %8339 = vmatpush1.msra.mxu0 %v8338
    %8340 = vmatprep.subr.mxu0 0.0
    %v8341 = vand.u32 %v79, 4294901760
    %v8342 = vsub.f32 %v79, %v8341
    %v8343 = vand.u32 %v8342, 4294901760
    %8344 = vmatpush1.msra.mxu0 %v8343
    %8345 = vmatprep.subr.mxu0 0.0
    %8346 = vmatpush1.msra.mxu0 0.0
    %8347 = vmatprep.subr.mxu0 0.0
    %8348 = vmatpush1.msra.mxu0 0.0
    %8349 = vmatprep.subr.mxu0 0.0
    %8350 = vmatpush1.msra.mxu0 0.0
    %8351 = vmatprep.subr.mxu0 0.0
    %8352 = vmatpush1.msra.mxu0 0.0
    %8353 = vmatprep.subr.mxu0 0.0
    %8354 = vmatpush1.msra.mxu0 0.0
    %8355 = vmatprep.subr.mxu0 0.0
    %8356 = vmatpush1.msra.mxu0 0.0
    %8357 = vmatprep.subr.mxu0 0.0
    %8358 = vmatpush1.msra.mxu0 0.0
    %8359 = vmatprep.subr.mxu0 0.0
    %8360 = vmatpush1.msra.mxu0 0.0
    %8361 = vmatprep.subr.mxu0 0.0
    %8362 = vmatpush1.msra.mxu0 0.0
    %8363 = vmatprep.subr.mxu0 0.0
    %8364 = vmatpush1.msra.mxu0 0.0
    %8365 = vmatprep.subr.mxu0 0.0
    %8366 = vmatpush1.msra.mxu0 0.0
    %8367 = vmatprep.subr.mxu0 0.0
    %8368 = vmatpush1.msra.mxu0 0.0
    %8369 = vmatprep.subr.mxu0 0.0
    %8370 = vmatpush1.msra.mxu0 0.0
    %8371 = vmatprep.subr.mxu0 0.0
    %8372 = vmatpush1.msra.mxu0 0.0
    %8373 = vmatprep.subr.mxu0 0.0
    %8374 = vmatpush1.msra.mxu0 0.0
    %8375 = vmatprep.subr.mxu0 0.0
    %8376 = vmatpush1.msra.mxu0 0.0
    %8377 = vmatprep.mubr.f32.mxu0 0.0
    %v8378 = vand.u32 %v7829, 4294901760
    %8379 = vmatmul.mubr.f32.gmra.mrb[0].mxu0 %v8378
    %v8380 = vpop.f32.mrb[0].mxu0
    %v8381 = vadd.f32 %v8262, %v8380
    %v8382 = vpop.f32.mrb[0].mxu0
    %8383 = vdwg.mxu0
    %8384 = vmatprep.subr.mxu0 0.0
    %v8385 = vand.u32 %v64, 4294901760
    %8386 = vmatpush1.msra.mxu0 %v8385
    %8387 = vmatprep.subr.mxu0 0.0
    %v8388 = vand.u32 %v65, 4294901760
    %8389 = vmatpush1.msra.mxu0 %v8388
    %8390 = vmatprep.subr.mxu0 0.0
    %v8391 = vand.u32 %v66, 4294901760
    %8392 = vmatpush1.msra.mxu0 %v8391
    %8393 = vmatprep.subr.mxu0 0.0
    %v8394 = vand.u32 %v67, 4294901760
    %8395 = vmatpush1.msra.mxu0 %v8394
    %8396 = vmatprep.subr.mxu0 0.0
    %v8397 = vand.u32 %v68, 4294901760
    %8398 = vmatpush1.msra.mxu0 %v8397
    %8399 = vmatprep.subr.mxu0 0.0
    %v8400 = vand.u32 %v69, 4294901760
    %8401 = vmatpush1.msra.mxu0 %v8400
    %8402 = vmatprep.subr.mxu0 0.0
    %v8403 = vand.u32 %v70, 4294901760
    %8404 = vmatpush1.msra.mxu0 %v8403
    %8405 = vmatprep.subr.mxu0 0.0
    %v8406 = vand.u32 %v71, 4294901760
    %8407 = vmatpush1.msra.mxu0 %v8406
    %8408 = vmatprep.subr.mxu0 0.0
    %v8409 = vand.u32 %v72, 4294901760
    %8410 = vmatpush1.msra.mxu0 %v8409
    %8411 = vmatprep.subr.mxu0 0.0
    %v8412 = vand.u32 %v73, 4294901760
    %8413 = vmatpush1.msra.mxu0 %v8412
    %8414 = vmatprep.subr.mxu0 0.0
    %v8415 = vand.u32 %v74, 4294901760
    %8416 = vmatpush1.msra.mxu0 %v8415
    %8417 = vmatprep.subr.mxu0 0.0
    %v8418 = vand.u32 %v75, 4294901760
    %8419 = vmatpush1.msra.mxu0 %v8418
    %8420 = vmatprep.subr.mxu0 0.0
    %v8421 = vand.u32 %v76, 4294901760
    %8422 = vmatpush1.msra.mxu0 %v8421
    %8423 = vmatprep.subr.mxu0 0.0
    %v8424 = vand.u32 %v77, 4294901760
    %8425 = vmatpush1.msra.mxu0 %v8424
    %8426 = vmatprep.subr.mxu0 0.0
    %v8427 = vand.u32 %v78, 4294901760
    %8428 = vmatpush1.msra.mxu0 %v8427
    %8429 = vmatprep.subr.mxu0 0.0
    %v8430 = vand.u32 %v79, 4294901760
    %8431 = vmatpush1.msra.mxu0 %v8430
    %8432 = vmatprep.subr.mxu0 0.0
    %8433 = vmatpush1.msra.mxu0 0.0
    %8434 = vmatprep.subr.mxu0 0.0
    %8435 = vmatpush1.msra.mxu0 0.0
    %8436 = vmatprep.subr.mxu0 0.0
    %8437 = vmatpush1.msra.mxu0 0.0
    %8438 = vmatprep.subr.mxu0 0.0
    %8439 = vmatpush1.msra.mxu0 0.0
    %8440 = vmatprep.subr.mxu0 0.0
    %8441 = vmatpush1.msra.mxu0 0.0
    %8442 = vmatprep.subr.mxu0 0.0
    %8443 = vmatpush1.msra.mxu0 0.0
    %8444 = vmatprep.subr.mxu0 0.0
    %8445 = vmatpush1.msra.mxu0 0.0
    %8446 = vmatprep.subr.mxu0 0.0
    %8447 = vmatpush1.msra.mxu0 0.0
    %8448 = vmatprep.subr.mxu0 0.0
    %8449 = vmatpush1.msra.mxu0 0.0
    %8450 = vmatprep.subr.mxu0 0.0
    %8451 = vmatpush1.msra.mxu0 0.0
    %8452 = vmatprep.subr.mxu0 0.0
    %8453 = vmatpush1.msra.mxu0 0.0
    %8454 = vmatprep.subr.mxu0 0.0
    %8455 = vmatpush1.msra.mxu0 0.0
    %8456 = vmatprep.subr.mxu0 0.0
    %8457 = vmatpush1.msra.mxu0 0.0
    %8458 = vmatprep.subr.mxu0 0.0
    %8459 = vmatpush1.msra.mxu0 0.0
    %8460 = vmatprep.subr.mxu0 0.0
    %8461 = vmatpush1.msra.mxu0 0.0
    %8462 = vmatprep.subr.mxu0 0.0
    %8463 = vmatpush1.msra.mxu0 0.0
    %8464 = vmatprep.mubr.f32.mxu0 0.0
    %v8465 = vand.u32 %v7829, 4294901760
    %8466 = vmatmul.mubr.f32.gmra.mrb[0].mxu0 %v8465
    %v8467 = vpop.f32.mrb[0].mxu0
    %v8468 = vadd.f32 %v8381, %v8467
    %v8469 = vpop.f32.mrb[0].mxu0
    %8470 = vdwg.mxu0
    %8471 = vmatprep.subr.mxu0 0.0
    %v8472 = vand.u32 %v80, 4294901760
    %8473 = vmatpush1.msra.mxu0 %v8472
    %8474 = vmatprep.subr.mxu0 0.0
    %v8475 = vand.u32 %v81, 4294901760
    %8476 = vmatpush1.msra.mxu0 %v8475
    %8477 = vmatprep.subr.mxu0 0.0
    %v8478 = vand.u32 %v82, 4294901760
    %8479 = vmatpush1.msra.mxu0 %v8478
    %8480 = vmatprep.subr.mxu0 0.0
    %v8481 = vand.u32 %v83, 4294901760
    %8482 = vmatpush1.msra.mxu0 %v8481
    %8483 = vmatprep.subr.mxu0 0.0
    %v8484 = vand.u32 %v84, 4294901760
    %8485 = vmatpush1.msra.mxu0 %v8484
    %8486 = vmatprep.subr.mxu0 0.0
    %v8487 = vand.u32 %v85, 4294901760
    %8488 = vmatpush1.msra.mxu0 %v8487
    %8489 = vmatprep.subr.mxu0 0.0
    %v8490 = vand.u32 %v86, 4294901760
    %8491 = vmatpush1.msra.mxu0 %v8490
    %8492 = vmatprep.subr.mxu0 0.0
    %v8493 = vand.u32 %v87, 4294901760
    %8494 = vmatpush1.msra.mxu0 %v8493
    %8495 = vmatprep.subr.mxu0 0.0
    %v8496 = vand.u32 %v88, 4294901760
    %8497 = vmatpush1.msra.mxu0 %v8496
    %8498 = vmatprep.subr.mxu0 0.0
    %v8499 = vand.u32 %v89, 4294901760
    %8500 = vmatpush1.msra.mxu0 %v8499
    %8501 = vmatprep.subr.mxu0 0.0
    %v8502 = vand.u32 %v90, 4294901760
    %8503 = vmatpush1.msra.mxu0 %v8502
    %8504 = vmatprep.subr.mxu0 0.0
    %v8505 = vand.u32 %v91, 4294901760
    %8506 = vmatpush1.msra.mxu0 %v8505
    %8507 = vmatprep.subr.mxu0 0.0
    %v8508 = vand.u32 %v92, 4294901760
    %8509 = vmatpush1.msra.mxu0 %v8508
    %8510 = vmatprep.subr.mxu0 0.0
    %v8511 = vand.u32 %v93, 4294901760
    %8512 = vmatpush1.msra.mxu0 %v8511
    %8513 = vmatprep.subr.mxu0 0.0
    %v8514 = vand.u32 %v94, 4294901760
    %8515 = vmatpush1.msra.mxu0 %v8514
    %8516 = vmatprep.subr.mxu0 0.0
    %v8517 = vand.u32 %v95, 4294901760
    %8518 = vmatpush1.msra.mxu0 %v8517
    %8519 = vmatprep.subr.mxu0 0.0
    %8520 = vmatpush1.msra.mxu0 0.0
    %8521 = vmatprep.subr.mxu0 0.0
    %8522 = vmatpush1.msra.mxu0 0.0
    %8523 = vmatprep.subr.mxu0 0.0
    %8524 = vmatpush1.msra.mxu0 0.0
    %8525 = vmatprep.subr.mxu0 0.0
    %8526 = vmatpush1.msra.mxu0 0.0
    %8527 = vmatprep.subr.mxu0 0.0
    %8528 = vmatpush1.msra.mxu0 0.0
    %8529 = vmatprep.subr.mxu0 0.0
    %8530 = vmatpush1.msra.mxu0 0.0
    %8531 = vmatprep.subr.mxu0 0.0
    %8532 = vmatpush1.msra.mxu0 0.0
    %8533 = vmatprep.subr.mxu0 0.0
    %8534 = vmatpush1.msra.mxu0 0.0
    %8535 = vmatprep.subr.mxu0 0.0
    %8536 = vmatpush1.msra.mxu0 0.0
    %8537 = vmatprep.subr.mxu0 0.0
    %8538 = vmatpush1.msra.mxu0 0.0
    %8539 = vmatprep.subr.mxu0 0.0
    %8540 = vmatpush1.msra.mxu0 0.0
    %8541 = vmatprep.subr.mxu0 0.0
    %8542 = vmatpush1.msra.mxu0 0.0
    %8543 = vmatprep.subr.mxu0 0.0
    %8544 = vmatpush1.msra.mxu0 0.0
    %8545 = vmatprep.subr.mxu0 0.0
    %8546 = vmatpush1.msra.mxu0 0.0
    %8547 = vmatprep.subr.mxu0 0.0
    %8548 = vmatpush1.msra.mxu0 0.0
    %8549 = vmatprep.subr.mxu0 0.0
    %8550 = vmatpush1.msra.mxu0 0.0
    %8551 = vmatprep.mubr.f32.mxu0 0.0
    %v8552 = vand.u32 %v7829, 4294901760
    %v8553 = vsub.f32 %v7829, %v8552
    %v8554 = vand.u32 %v8553, 4294901760
    %v8555 = vsub.f32 %v8553, %v8554
    %v8556 = vand.u32 %v8555, 4294901760
    %8557 = vmatmul.mubr.f32.gmra.mrb[0].mxu0 %v8556
    %v8558 = vpop.f32.mrb[0].mxu0
    %v8559 = vadd.f32 0.0, %v8558
    %v8560 = vpop.f32.mrb[0].mxu0
    %8561 = vdwg.mxu0
    %8562 = vmatprep.subr.mxu0 0.0
    %v8563 = vand.u32 %v80, 4294901760
    %v8564 = vsub.f32 %v80, %v8563
    %v8565 = vand.u32 %v8564, 4294901760
    %v8566 = vsub.f32 %v8564, %v8565
    %v8567 = vand.u32 %v8566, 4294901760
    %8568 = vmatpush1.msra.mxu0 %v8567
    %8569 = vmatprep.subr.mxu0 0.0
    %v8570 = vand.u32 %v81, 4294901760
    %v8571 = vsub.f32 %v81, %v8570
    %v8572 = vand.u32 %v8571, 4294901760
    %v8573 = vsub.f32 %v8571, %v8572
    %v8574 = vand.u32 %v8573, 4294901760
    %8575 = vmatpush1.msra.mxu0 %v8574
    %8576 = vmatprep.subr.mxu0 0.0
    %v8577 = vand.u32 %v82, 4294901760
    %v8578 = vsub.f32 %v82, %v8577
    %v8579 = vand.u32 %v8578, 4294901760
    %v8580 = vsub.f32 %v8578, %v8579
    %v8581 = vand.u32 %v8580, 4294901760
    %8582 = vmatpush1.msra.mxu0 %v8581
    %8583 = vmatprep.subr.mxu0 0.0
    %v8584 = vand.u32 %v83, 4294901760
    %v8585 = vsub.f32 %v83, %v8584
    %v8586 = vand.u32 %v8585, 4294901760
    %v8587 = vsub.f32 %v8585, %v8586
    %v8588 = vand.u32 %v8587, 4294901760
    %8589 = vmatpush1.msra.mxu0 %v8588
    %8590 = vmatprep.subr.mxu0 0.0
    %v8591 = vand.u32 %v84, 4294901760
    %v8592 = vsub.f32 %v84, %v8591
    %v8593 = vand.u32 %v8592, 4294901760
    %v8594 = vsub.f32 %v8592, %v8593
    %v8595 = vand.u32 %v8594, 4294901760
    %8596 = vmatpush1.msra.mxu0 %v8595
    %8597 = vmatprep.subr.mxu0 0.0
    %v8598 = vand.u32 %v85, 4294901760
    %v8599 = vsub.f32 %v85, %v8598
    %v8600 = vand.u32 %v8599, 4294901760
    %v8601 = vsub.f32 %v8599, %v8600
    %v8602 = vand.u32 %v8601, 4294901760
    %8603 = vmatpush1.msra.mxu0 %v8602
    %8604 = vmatprep.subr.mxu0 0.0
    %v8605 = vand.u32 %v86, 4294901760
    %v8606 = vsub.f32 %v86, %v8605
    %v8607 = vand.u32 %v8606, 4294901760
    %v8608 = vsub.f32 %v8606, %v8607
    %v8609 = vand.u32 %v8608, 4294901760
    %8610 = vmatpush1.msra.mxu0 %v8609
    %8611 = vmatprep.subr.mxu0 0.0
    %v8612 = vand.u32 %v87, 4294901760
    %v8613 = vsub.f32 %v87, %v8612
    %v8614 = vand.u32 %v8613, 4294901760
    %v8615 = vsub.f32 %v8613, %v8614
    %v8616 = vand.u32 %v8615, 4294901760
    %8617 = vmatpush1.msra.mxu0 %v8616
    %8618 = vmatprep.subr.mxu0 0.0
    %v8619 = vand.u32 %v88, 4294901760
    %v8620 = vsub.f32 %v88, %v8619
    %v8621 = vand.u32 %v8620, 4294901760
    %v8622 = vsub.f32 %v8620, %v8621
    %v8623 = vand.u32 %v8622, 4294901760
    %8624 = vmatpush1.msra.mxu0 %v8623
    %8625 = vmatprep.subr.mxu0 0.0
    %v8626 = vand.u32 %v89, 4294901760
    %v8627 = vsub.f32 %v89, %v8626
    %v8628 = vand.u32 %v8627, 4294901760
    %v8629 = vsub.f32 %v8627, %v8628
    %v8630 = vand.u32 %v8629, 4294901760
    %8631 = vmatpush1.msra.mxu0 %v8630
    %8632 = vmatprep.subr.mxu0 0.0
    %v8633 = vand.u32 %v90, 4294901760
    %v8634 = vsub.f32 %v90, %v8633
    %v8635 = vand.u32 %v8634, 4294901760
    %v8636 = vsub.f32 %v8634, %v8635
    %v8637 = vand.u32 %v8636, 4294901760
    %8638 = vmatpush1.msra.mxu0 %v8637
    %8639 = vmatprep.subr.mxu0 0.0
    %v8640 = vand.u32 %v91, 4294901760
    %v8641 = vsub.f32 %v91, %v8640
    %v8642 = vand.u32 %v8641, 4294901760
    %v8643 = vsub.f32 %v8641, %v8642
    %v8644 = vand.u32 %v8643, 4294901760
    %8645 = vmatpush1.msra.mxu0 %v8644
    %8646 = vmatprep.subr.mxu0 0.0
    %v8647 = vand.u32 %v92, 4294901760
    %v8648 = vsub.f32 %v92, %v8647
    %v8649 = vand.u32 %v8648, 4294901760
    %v8650 = vsub.f32 %v8648, %v8649
    %v8651 = vand.u32 %v8650, 4294901760
    %8652 = vmatpush1.msra.mxu0 %v8651
    %8653 = vmatprep.subr.mxu0 0.0
    %v8654 = vand.u32 %v93, 4294901760
    %v8655 = vsub.f32 %v93, %v8654
    %v8656 = vand.u32 %v8655, 4294901760
    %v8657 = vsub.f32 %v8655, %v8656
    %v8658 = vand.u32 %v8657, 4294901760
    %8659 = vmatpush1.msra.mxu0 %v8658
    %8660 = vmatprep.subr.mxu0 0.0
    %v8661 = vand.u32 %v94, 4294901760
    %v8662 = vsub.f32 %v94, %v8661
    %v8663 = vand.u32 %v8662, 4294901760
    %v8664 = vsub.f32 %v8662, %v8663
    %v8665 = vand.u32 %v8664, 4294901760
    %8666 = vmatpush1.msra.mxu0 %v8665
    %8667 = vmatprep.subr.mxu0 0.0
    %v8668 = vand.u32 %v95, 4294901760
    %v8669 = vsub.f32 %v95, %v8668
    %v8670 = vand.u32 %v8669, 4294901760
    %v8671 = vsub.f32 %v8669, %v8670
    %v8672 = vand.u32 %v8671, 4294901760
    %8673 = vmatpush1.msra.mxu0 %v8672
    %8674 = vmatprep.subr.mxu0 0.0
    %8675 = vmatpush1.msra.mxu0 0.0
    %8676 = vmatprep.subr.mxu0 0.0
    %8677 = vmatpush1.msra.mxu0 0.0
    %8678 = vmatprep.subr.mxu0 0.0
    %8679 = vmatpush1.msra.mxu0 0.0
    %8680 = vmatprep.subr.mxu0 0.0
    %8681 = vmatpush1.msra.mxu0 0.0
    %8682 = vmatprep.subr.mxu0 0.0
    %8683 = vmatpush1.msra.mxu0 0.0
    %8684 = vmatprep.subr.mxu0 0.0
    %8685 = vmatpush1.msra.mxu0 0.0
    %8686 = vmatprep.subr.mxu0 0.0
    %8687 = vmatpush1.msra.mxu0 0.0
    %8688 = vmatprep.subr.mxu0 0.0
    %8689 = vmatpush1.msra.mxu0 0.0
    %8690 = vmatprep.subr.mxu0 0.0
    %8691 = vmatpush1.msra.mxu0 0.0
    %8692 = vmatprep.subr.mxu0 0.0
    %8693 = vmatpush1.msra.mxu0 0.0
    %8694 = vmatprep.subr.mxu0 0.0
    %8695 = vmatpush1.msra.mxu0 0.0
    %8696 = vmatprep.subr.mxu0 0.0
    %8697 = vmatpush1.msra.mxu0 0.0
    %8698 = vmatprep.subr.mxu0 0.0
    %8699 = vmatpush1.msra.mxu0 0.0
    %8700 = vmatprep.subr.mxu0 0.0
    %8701 = vmatpush1.msra.mxu0 0.0
    %8702 = vmatprep.subr.mxu0 0.0
    %8703 = vmatpush1.msra.mxu0 0.0
    %8704 = vmatprep.subr.mxu0 0.0
    %8705 = vmatpush1.msra.mxu0 0.0
    %8706 = vmatprep.mubr.f32.mxu0 0.0
    %v8707 = vand.u32 %v7829, 4294901760
    %8708 = vmatmul.mubr.f32.gmra.mrb[0].mxu0 %v8707
    %v8709 = vpop.f32.mrb[0].mxu0
    %v8710 = vadd.f32 %v8559, %v8709
    %v8711 = vpop.f32.mrb[0].mxu0
    %8712 = vdwg.mxu0
    %8713 = vmatprep.subr.mxu0 0.0
    %v8714 = vand.u32 %v80, 4294901760
    %v8715 = vsub.f32 %v80, %v8714
    %8716 = vmatpush1.msra.mxu0 %v8715
    %8717 = vmatprep.subr.mxu0 0.0
    %v8718 = vand.u32 %v81, 4294901760
    %v8719 = vsub.f32 %v81, %v8718
    %8720 = vmatpush1.msra.mxu0 %v8719
    %8721 = vmatprep.subr.mxu0 0.0
    %v8722 = vand.u32 %v82, 4294901760
    %v8723 = vsub.f32 %v82, %v8722
    %8724 = vmatpush1.msra.mxu0 %v8723
    %8725 = vmatprep.subr.mxu0 0.0
    %v8726 = vand.u32 %v83, 4294901760
    %v8727 = vsub.f32 %v83, %v8726
    %8728 = vmatpush1.msra.mxu0 %v8727
    %8729 = vmatprep.subr.mxu0 0.0
    %v8730 = vand.u32 %v84, 4294901760
    %v8731 = vsub.f32 %v84, %v8730
    %8732 = vmatpush1.msra.mxu0 %v8731
    %8733 = vmatprep.subr.mxu0 0.0
    %v8734 = vand.u32 %v85, 4294901760
    %v8735 = vsub.f32 %v85, %v8734
    %8736 = vmatpush1.msra.mxu0 %v8735
    %8737 = vmatprep.subr.mxu0 0.0
    %v8738 = vand.u32 %v86, 4294901760
    %v8739 = vsub.f32 %v86, %v8738
    %8740 = vmatpush1.msra.mxu0 %v8739
    %8741 = vmatprep.subr.mxu0 0.0
    %v8742 = vand.u32 %v87, 4294901760
    %v8743 = vsub.f32 %v87, %v8742
    %8744 = vmatpush1.msra.mxu0 %v8743
    %8745 = vmatprep.subr.mxu0 0.0
    %v8746 = vand.u32 %v88, 4294901760
    %v8747 = vsub.f32 %v88, %v8746
    %8748 = vmatpush1.msra.mxu0 %v8747
    %8749 = vmatprep.subr.mxu0 0.0
    %v8750 = vand.u32 %v89, 4294901760
    %v8751 = vsub.f32 %v89, %v8750
    %8752 = vmatpush1.msra.mxu0 %v8751
    %8753 = vmatprep.subr.mxu0 0.0
    %v8754 = vand.u32 %v90, 4294901760
    %v8755 = vsub.f32 %v90, %v8754
    %8756 = vmatpush1.msra.mxu0 %v8755
    %8757 = vmatprep.subr.mxu0 0.0
    %v8758 = vand.u32 %v91, 4294901760
    %v8759 = vsub.f32 %v91, %v8758
    %8760 = vmatpush1.msra.mxu0 %v8759
    %8761 = vmatprep.subr.mxu0 0.0
    %v8762 = vand.u32 %v92, 4294901760
    %v8763 = vsub.f32 %v92, %v8762
    %8764 = vmatpush1.msra.mxu0 %v8763
    %8765 = vmatprep.subr.mxu0 0.0
    %v8766 = vand.u32 %v93, 4294901760
    %v8767 = vsub.f32 %v93, %v8766
    %8768 = vmatpush1.msra.mxu0 %v8767
    %8769 = vmatprep.subr.mxu0 0.0
    %v8770 = vand.u32 %v94, 4294901760
    %v8771 = vsub.f32 %v94, %v8770
    %8772 = vmatpush1.msra.mxu0 %v8771
    %8773 = vmatprep.subr.mxu0 0.0
    %v8774 = vand.u32 %v95, 4294901760
    %v8775 = vsub.f32 %v95, %v8774
    %8776 = vmatpush1.msra.mxu0 %v8775
    %8777 = vmatprep.subr.mxu0 0.0
    %8778 = vmatpush1.msra.mxu0 0.0
    %8779 = vmatprep.subr.mxu0 0.0
    %8780 = vmatpush1.msra.mxu0 0.0
    %8781 = vmatprep.subr.mxu0 0.0
    %8782 = vmatpush1.msra.mxu0 0.0
    %8783 = vmatprep.subr.mxu0 0.0
    %8784 = vmatpush1.msra.mxu0 0.0
    %8785 = vmatprep.subr.mxu0 0.0
    %8786 = vmatpush1.msra.mxu0 0.0
    %8787 = vmatprep.subr.mxu0 0.0
    %8788 = vmatpush1.msra.mxu0 0.0
    %8789 = vmatprep.subr.mxu0 0.0
    %8790 = vmatpush1.msra.mxu0 0.0
    %8791 = vmatprep.subr.mxu0 0.0
    %8792 = vmatpush1.msra.mxu0 0.0
    %8793 = vmatprep.subr.mxu0 0.0
    %8794 = vmatpush1.msra.mxu0 0.0
    %8795 = vmatprep.subr.mxu0 0.0
    %8796 = vmatpush1.msra.mxu0 0.0
    %8797 = vmatprep.subr.mxu0 0.0
    %8798 = vmatpush1.msra.mxu0 0.0
    %8799 = vmatprep.subr.mxu0 0.0
    %8800 = vmatpush1.msra.mxu0 0.0
    %8801 = vmatprep.subr.mxu0 0.0
    %8802 = vmatpush1.msra.mxu0 0.0
    %8803 = vmatprep.subr.mxu0 0.0
    %8804 = vmatpush1.msra.mxu0 0.0
    %8805 = vmatprep.subr.mxu0 0.0
    %8806 = vmatpush1.msra.mxu0 0.0
    %8807 = vmatprep.subr.mxu0 0.0
    %8808 = vmatpush1.msra.mxu0 0.0
    %8809 = vmatprep.mubr.f32.mxu0 0.0
    %v8810 = vand.u32 %v7829, 4294901760
    %v8811 = vsub.f32 %v7829, %v8810
    %8812 = vmatmul.mubr.f32.gmra.mrb[0].mxu0 %v8811
    %v8813 = vpop.f32.mrb[0].mxu0
    %v8814 = vadd.f32 %v8710, %v8813
    %v8815 = vpop.f32.mrb[0].mxu0
    %8816 = vdwg.mxu0
    %8817 = vmatprep.subr.mxu0 0.0
    %v8818 = vand.u32 %v80, 4294901760
    %8819 = vmatpush1.msra.mxu0 %v8818
    %8820 = vmatprep.subr.mxu0 0.0
    %v8821 = vand.u32 %v81, 4294901760
    %8822 = vmatpush1.msra.mxu0 %v8821
    %8823 = vmatprep.subr.mxu0 0.0
    %v8824 = vand.u32 %v82, 4294901760
    %8825 = vmatpush1.msra.mxu0 %v8824
    %8826 = vmatprep.subr.mxu0 0.0
    %v8827 = vand.u32 %v83, 4294901760
    %8828 = vmatpush1.msra.mxu0 %v8827
    %8829 = vmatprep.subr.mxu0 0.0
    %v8830 = vand.u32 %v84, 4294901760
    %8831 = vmatpush1.msra.mxu0 %v8830
    %8832 = vmatprep.subr.mxu0 0.0
    %v8833 = vand.u32 %v85, 4294901760
    %8834 = vmatpush1.msra.mxu0 %v8833
    %8835 = vmatprep.subr.mxu0 0.0
    %v8836 = vand.u32 %v86, 4294901760
    %8837 = vmatpush1.msra.mxu0 %v8836
    %8838 = vmatprep.subr.mxu0 0.0
    %v8839 = vand.u32 %v87, 4294901760
    %8840 = vmatpush1.msra.mxu0 %v8839
    %8841 = vmatprep.subr.mxu0 0.0
    %v8842 = vand.u32 %v88, 4294901760
    %8843 = vmatpush1.msra.mxu0 %v8842
    %8844 = vmatprep.subr.mxu0 0.0
    %v8845 = vand.u32 %v89, 4294901760
    %8846 = vmatpush1.msra.mxu0 %v8845
    %8847 = vmatprep.subr.mxu0 0.0
    %v8848 = vand.u32 %v90, 4294901760
    %8849 = vmatpush1.msra.mxu0 %v8848
    %8850 = vmatprep.subr.mxu0 0.0
    %v8851 = vand.u32 %v91, 4294901760
    %8852 = vmatpush1.msra.mxu0 %v8851
    %8853 = vmatprep.subr.mxu0 0.0
    %v8854 = vand.u32 %v92, 4294901760
    %8855 = vmatpush1.msra.mxu0 %v8854
    %8856 = vmatprep.subr.mxu0 0.0
    %v8857 = vand.u32 %v93, 4294901760
    %8858 = vmatpush1.msra.mxu0 %v8857
    %8859 = vmatprep.subr.mxu0 0.0
    %v8860 = vand.u32 %v94, 4294901760
    %8861 = vmatpush1.msra.mxu0 %v8860
    %8862 = vmatprep.subr.mxu0 0.0
    %v8863 = vand.u32 %v95, 4294901760
    %8864 = vmatpush1.msra.mxu0 %v8863
    %8865 = vmatprep.subr.mxu0 0.0
    %8866 = vmatpush1.msra.mxu0 0.0
    %8867 = vmatprep.subr.mxu0 0.0
    %8868 = vmatpush1.msra.mxu0 0.0
    %8869 = vmatprep.subr.mxu0 0.0
    %8870 = vmatpush1.msra.mxu0 0.0
    %8871 = vmatprep.subr.mxu0 0.0
    %8872 = vmatpush1.msra.mxu0 0.0
    %8873 = vmatprep.subr.mxu0 0.0
    %8874 = vmatpush1.msra.mxu0 0.0
    %8875 = vmatprep.subr.mxu0 0.0
    %8876 = vmatpush1.msra.mxu0 0.0
    %8877 = vmatprep.subr.mxu0 0.0
    %8878 = vmatpush1.msra.mxu0 0.0
    %8879 = vmatprep.subr.mxu0 0.0
    %8880 = vmatpush1.msra.mxu0 0.0
    %8881 = vmatprep.subr.mxu0 0.0
    %8882 = vmatpush1.msra.mxu0 0.0
    %8883 = vmatprep.subr.mxu0 0.0
    %8884 = vmatpush1.msra.mxu0 0.0
    %8885 = vmatprep.subr.mxu0 0.0
    %8886 = vmatpush1.msra.mxu0 0.0
    %8887 = vmatprep.subr.mxu0 0.0
    %8888 = vmatpush1.msra.mxu0 0.0
    %8889 = vmatprep.subr.mxu0 0.0
    %8890 = vmatpush1.msra.mxu0 0.0
    %8891 = vmatprep.subr.mxu0 0.0
    %8892 = vmatpush1.msra.mxu0 0.0
    %8893 = vmatprep.subr.mxu0 0.0
    %8894 = vmatpush1.msra.mxu0 0.0
    %8895 = vmatprep.subr.mxu0 0.0
    %8896 = vmatpush1.msra.mxu0 0.0
    %8897 = vmatprep.mubr.f32.mxu0 0.0
    %v8898 = vand.u32 %v7829, 4294901760
    %v8899 = vsub.f32 %v7829, %v8898
    %v8900 = vand.u32 %v8899, 4294901760
    %8901 = vmatmul.mubr.f32.gmra.mrb[0].mxu0 %v8900
    %v8902 = vpop.f32.mrb[0].mxu0
    %v8903 = vadd.f32 %v8814, %v8902
    %v8904 = vpop.f32.mrb[0].mxu0
    %8905 = vdwg.mxu0
    %8906 = vmatprep.subr.mxu0 0.0
    %v8907 = vand.u32 %v80, 4294901760
    %v8908 = vsub.f32 %v80, %v8907
    %v8909 = vand.u32 %v8908, 4294901760
    %8910 = vmatpush1.msra.mxu0 %v8909
    %8911 = vmatprep.subr.mxu0 0.0
    %v8912 = vand.u32 %v81, 4294901760
    %v8913 = vsub.f32 %v81, %v8912
    %v8914 = vand.u32 %v8913, 4294901760
    %8915 = vmatpush1.msra.mxu0 %v8914
    %8916 = vmatprep.subr.mxu0 0.0
    %v8917 = vand.u32 %v82, 4294901760
    %v8918 = vsub.f32 %v82, %v8917
    %v8919 = vand.u32 %v8918, 4294901760
    %8920 = vmatpush1.msra.mxu0 %v8919
    %8921 = vmatprep.subr.mxu0 0.0
    %v8922 = vand.u32 %v83, 4294901760
    %v8923 = vsub.f32 %v83, %v8922
    %v8924 = vand.u32 %v8923, 4294901760
    %8925 = vmatpush1.msra.mxu0 %v8924
    %8926 = vmatprep.subr.mxu0 0.0
    %v8927 = vand.u32 %v84, 4294901760
    %v8928 = vsub.f32 %v84, %v8927
    %v8929 = vand.u32 %v8928, 4294901760
    %8930 = vmatpush1.msra.mxu0 %v8929
    %8931 = vmatprep.subr.mxu0 0.0
    %v8932 = vand.u32 %v85, 4294901760
    %v8933 = vsub.f32 %v85, %v8932
    %v8934 = vand.u32 %v8933, 4294901760
    %8935 = vmatpush1.msra.mxu0 %v8934
    %8936 = vmatprep.subr.mxu0 0.0
    %v8937 = vand.u32 %v86, 4294901760
    %v8938 = vsub.f32 %v86, %v8937
    %v8939 = vand.u32 %v8938, 4294901760
    %8940 = vmatpush1.msra.mxu0 %v8939
    %8941 = vmatprep.subr.mxu0 0.0
    %v8942 = vand.u32 %v87, 4294901760
    %v8943 = vsub.f32 %v87, %v8942
    %v8944 = vand.u32 %v8943, 4294901760
    %8945 = vmatpush1.msra.mxu0 %v8944
    %8946 = vmatprep.subr.mxu0 0.0
    %v8947 = vand.u32 %v88, 4294901760
    %v8948 = vsub.f32 %v88, %v8947
    %v8949 = vand.u32 %v8948, 4294901760
    %8950 = vmatpush1.msra.mxu0 %v8949
    %8951 = vmatprep.subr.mxu0 0.0
    %v8952 = vand.u32 %v89, 4294901760
    %v8953 = vsub.f32 %v89, %v8952
    %v8954 = vand.u32 %v8953, 4294901760
    %8955 = vmatpush1.msra.mxu0 %v8954
    %8956 = vmatprep.subr.mxu0 0.0
    %v8957 = vand.u32 %v90, 4294901760
    %v8958 = vsub.f32 %v90, %v8957
    %v8959 = vand.u32 %v8958, 4294901760
    %8960 = vmatpush1.msra.mxu0 %v8959
    %8961 = vmatprep.subr.mxu0 0.0
    %v8962 = vand.u32 %v91, 4294901760
    %v8963 = vsub.f32 %v91, %v8962
    %v8964 = vand.u32 %v8963, 4294901760
    %8965 = vmatpush1.msra.mxu0 %v8964
    %8966 = vmatprep.subr.mxu0 0.0
    %v8967 = vand.u32 %v92, 4294901760
    %v8968 = vsub.f32 %v92, %v8967
    %v8969 = vand.u32 %v8968, 4294901760
    %8970 = vmatpush1.msra.mxu0 %v8969
    %8971 = vmatprep.subr.mxu0 0.0
    %v8972 = vand.u32 %v93, 4294901760
    %v8973 = vsub.f32 %v93, %v8972
    %v8974 = vand.u32 %v8973, 4294901760
    %8975 = vmatpush1.msra.mxu0 %v8974
    %8976 = vmatprep.subr.mxu0 0.0
    %v8977 = vand.u32 %v94, 4294901760
    %v8978 = vsub.f32 %v94, %v8977
    %v8979 = vand.u32 %v8978, 4294901760
    %8980 = vmatpush1.msra.mxu0 %v8979
    %8981 = vmatprep.subr.mxu0 0.0
    %v8982 = vand.u32 %v95, 4294901760
    %v8983 = vsub.f32 %v95, %v8982
    %v8984 = vand.u32 %v8983, 4294901760
    %8985 = vmatpush1.msra.mxu0 %v8984
    %8986 = vmatprep.subr.mxu0 0.0
    %8987 = vmatpush1.msra.mxu0 0.0
    %8988 = vmatprep.subr.mxu0 0.0
    %8989 = vmatpush1.msra.mxu0 0.0
    %8990 = vmatprep.subr.mxu0 0.0
    %8991 = vmatpush1.msra.mxu0 0.0
    %8992 = vmatprep.subr.mxu0 0.0
    %8993 = vmatpush1.msra.mxu0 0.0
    %8994 = vmatprep.subr.mxu0 0.0
    %8995 = vmatpush1.msra.mxu0 0.0
    %8996 = vmatprep.subr.mxu0 0.0
    %8997 = vmatpush1.msra.mxu0 0.0
    %8998 = vmatprep.subr.mxu0 0.0
    %8999 = vmatpush1.msra.mxu0 0.0
    %9000 = vmatprep.subr.mxu0 0.0
    %9001 = vmatpush1.msra.mxu0 0.0
    %9002 = vmatprep.subr.mxu0 0.0
    %9003 = vmatpush1.msra.mxu0 0.0
    %9004 = vmatprep.subr.mxu0 0.0
    %9005 = vmatpush1.msra.mxu0 0.0
    %9006 = vmatprep.subr.mxu0 0.0
    %9007 = vmatpush1.msra.mxu0 0.0
    %9008 = vmatprep.subr.mxu0 0.0
    %9009 = vmatpush1.msra.mxu0 0.0
    %9010 = vmatprep.subr.mxu0 0.0
    %9011 = vmatpush1.msra.mxu0 0.0
    %9012 = vmatprep.subr.mxu0 0.0
    %9013 = vmatpush1.msra.mxu0 0.0
    %9014 = vmatprep.subr.mxu0 0.0
    %9015 = vmatpush1.msra.mxu0 0.0
    %9016 = vmatprep.subr.mxu0 0.0
    %9017 = vmatpush1.msra.mxu0 0.0
    %9018 = vmatprep.mubr.f32.mxu0 0.0
    %v9019 = vand.u32 %v7829, 4294901760
    %9020 = vmatmul.mubr.f32.gmra.mrb[0].mxu0 %v9019
    %v9021 = vpop.f32.mrb[0].mxu0
    %v9022 = vadd.f32 %v8903, %v9021
    %v9023 = vpop.f32.mrb[0].mxu0
    %9024 = vdwg.mxu0
    %9025 = vmatprep.subr.mxu0 0.0
    %v9026 = vand.u32 %v80, 4294901760
    %9027 = vmatpush1.msra.mxu0 %v9026
    %9028 = vmatprep.subr.mxu0 0.0
    %v9029 = vand.u32 %v81, 4294901760
    %9030 = vmatpush1.msra.mxu0 %v9029
    %9031 = vmatprep.subr.mxu0 0.0
    %v9032 = vand.u32 %v82, 4294901760
    %9033 = vmatpush1.msra.mxu0 %v9032
    %9034 = vmatprep.subr.mxu0 0.0
    %v9035 = vand.u32 %v83, 4294901760
    %9036 = vmatpush1.msra.mxu0 %v9035
    %9037 = vmatprep.subr.mxu0 0.0
    %v9038 = vand.u32 %v84, 4294901760
    %9039 = vmatpush1.msra.mxu0 %v9038
    %9040 = vmatprep.subr.mxu0 0.0
    %v9041 = vand.u32 %v85, 4294901760
    %9042 = vmatpush1.msra.mxu0 %v9041
    %9043 = vmatprep.subr.mxu0 0.0
    %v9044 = vand.u32 %v86, 4294901760
    %9045 = vmatpush1.msra.mxu0 %v9044
    %9046 = vmatprep.subr.mxu0 0.0
    %v9047 = vand.u32 %v87, 4294901760
    %9048 = vmatpush1.msra.mxu0 %v9047
    %9049 = vmatprep.subr.mxu0 0.0
    %v9050 = vand.u32 %v88, 4294901760
    %9051 = vmatpush1.msra.mxu0 %v9050
    %9052 = vmatprep.subr.mxu0 0.0
    %v9053 = vand.u32 %v89, 4294901760
    %9054 = vmatpush1.msra.mxu0 %v9053
    %9055 = vmatprep.subr.mxu0 0.0
    %v9056 = vand.u32 %v90, 4294901760
    %9057 = vmatpush1.msra.mxu0 %v9056
    %9058 = vmatprep.subr.mxu0 0.0
    %v9059 = vand.u32 %v91, 4294901760
    %9060 = vmatpush1.msra.mxu0 %v9059
    %9061 = vmatprep.subr.mxu0 0.0
    %v9062 = vand.u32 %v92, 4294901760
    %9063 = vmatpush1.msra.mxu0 %v9062
    %9064 = vmatprep.subr.mxu0 0.0
    %v9065 = vand.u32 %v93, 4294901760
    %9066 = vmatpush1.msra.mxu0 %v9065
    %9067 = vmatprep.subr.mxu0 0.0
    %v9068 = vand.u32 %v94, 4294901760
    %9069 = vmatpush1.msra.mxu0 %v9068
    %9070 = vmatprep.subr.mxu0 0.0
    %v9071 = vand.u32 %v95, 4294901760
    %9072 = vmatpush1.msra.mxu0 %v9071
    %9073 = vmatprep.subr.mxu0 0.0
    %9074 = vmatpush1.msra.mxu0 0.0
    %9075 = vmatprep.subr.mxu0 0.0
    %9076 = vmatpush1.msra.mxu0 0.0
    %9077 = vmatprep.subr.mxu0 0.0
    %9078 = vmatpush1.msra.mxu0 0.0
    %9079 = vmatprep.subr.mxu0 0.0
    %9080 = vmatpush1.msra.mxu0 0.0
    %9081 = vmatprep.subr.mxu0 0.0
    %9082 = vmatpush1.msra.mxu0 0.0
    %9083 = vmatprep.subr.mxu0 0.0
    %9084 = vmatpush1.msra.mxu0 0.0
    %9085 = vmatprep.subr.mxu0 0.0
    %9086 = vmatpush1.msra.mxu0 0.0
    %9087 = vmatprep.subr.mxu0 0.0
    %9088 = vmatpush1.msra.mxu0 0.0
    %9089 = vmatprep.subr.mxu0 0.0
    %9090 = vmatpush1.msra.mxu0 0.0
    %9091 = vmatprep.subr.mxu0 0.0
    %9092 = vmatpush1.msra.mxu0 0.0
    %9093 = vmatprep.subr.mxu0 0.0
    %9094 = vmatpush1.msra.mxu0 0.0
    %9095 = vmatprep.subr.mxu0 0.0
    %9096 = vmatpush1.msra.mxu0 0.0
    %9097 = vmatprep.subr.mxu0 0.0
    %9098 = vmatpush1.msra.mxu0 0.0
    %9099 = vmatprep.subr.mxu0 0.0
    %9100 = vmatpush1.msra.mxu0 0.0
    %9101 = vmatprep.subr.mxu0 0.0
    %9102 = vmatpush1.msra.mxu0 0.0
    %9103 = vmatprep.subr.mxu0 0.0
    %9104 = vmatpush1.msra.mxu0 0.0
    %9105 = vmatprep.mubr.f32.mxu0 0.0
    %v9106 = vand.u32 %v7829, 4294901760
    %9107 = vmatmul.mubr.f32.gmra.mrb[0].mxu0 %v9106
    %v9108 = vpop.f32.mrb[0].mxu0
    %v9109 = vadd.f32 %v9022, %v9108
    %v9110 = vpop.f32.mrb[0].mxu0
    %9111 = vdwg.mxu0
    %v9112 = vmul.f32 %v8468, %v62
    %v9113 = vmul.f32 %v9109, %v63
    %v9114 = vadd.f32 %v9112, %v9113
    %s9115 = scalar_lea.vmem [#allocation8], 12
    %9116 = vst [vmem:[%s9115] sm:$0x3] %v9114
    %s9117 = scalar_lea.vmem [#allocation2], 14
    %v9118 = vld [vmem:[%s9117] sm:$0x3]
    %9119 = vmatprep.subr.mxu0 0.0
    %v9120 = vand.u32 %v64, 4294901760
    %9121 = vmatpush1.msra.mxu0 %v9120
    %9122 = vmatprep.subr.mxu0 0.0
    %v9123 = vand.u32 %v65, 4294901760
    %9124 = vmatpush1.msra.mxu0 %v9123
    %9125 = vmatprep.subr.mxu0 0.0
    %v9126 = vand.u32 %v66, 4294901760
    %9127 = vmatpush1.msra.mxu0 %v9126
    %9128 = vmatprep.subr.mxu0 0.0
    %v9129 = vand.u32 %v67, 4294901760
    %9130 = vmatpush1.msra.mxu0 %v9129
    %9131 = vmatprep.subr.mxu0 0.0
    %v9132 = vand.u32 %v68, 4294901760
    %9133 = vmatpush1.msra.mxu0 %v9132
    %9134 = vmatprep.subr.mxu0 0.0
    %v9135 = vand.u32 %v69, 4294901760
    %9136 = vmatpush1.msra.mxu0 %v9135
    %9137 = vmatprep.subr.mxu0 0.0
    %v9138 = vand.u32 %v70, 4294901760
    %9139 = vmatpush1.msra.mxu0 %v9138
    %9140 = vmatprep.subr.mxu0 0.0
    %v9141 = vand.u32 %v71, 4294901760
    %9142 = vmatpush1.msra.mxu0 %v9141
    %9143 = vmatprep.subr.mxu0 0.0
    %v9144 = vand.u32 %v72, 4294901760
    %9145 = vmatpush1.msra.mxu0 %v9144
    %9146 = vmatprep.subr.mxu0 0.0
    %v9147 = vand.u32 %v73, 4294901760
    %9148 = vmatpush1.msra.mxu0 %v9147
    %9149 = vmatprep.subr.mxu0 0.0
    %v9150 = vand.u32 %v74, 4294901760
    %9151 = vmatpush1.msra.mxu0 %v9150
    %9152 = vmatprep.subr.mxu0 0.0
    %v9153 = vand.u32 %v75, 4294901760
    %9154 = vmatpush1.msra.mxu0 %v9153
    %9155 = vmatprep.subr.mxu0 0.0
    %v9156 = vand.u32 %v76, 4294901760
    %9157 = vmatpush1.msra.mxu0 %v9156
    %9158 = vmatprep.subr.mxu0 0.0
    %v9159 = vand.u32 %v77, 4294901760
    %9160 = vmatpush1.msra.mxu0 %v9159
    %9161 = vmatprep.subr.mxu0 0.0
    %v9162 = vand.u32 %v78, 4294901760
    %9163 = vmatpush1.msra.mxu0 %v9162
    %9164 = vmatprep.subr.mxu0 0.0
    %v9165 = vand.u32 %v79, 4294901760
    %9166 = vmatpush1.msra.mxu0 %v9165
    %9167 = vmatprep.subr.mxu0 0.0
    %9168 = vmatpush1.msra.mxu0 0.0
    %9169 = vmatprep.subr.mxu0 0.0
    %9170 = vmatpush1.msra.mxu0 0.0
    %9171 = vmatprep.subr.mxu0 0.0
    %9172 = vmatpush1.msra.mxu0 0.0
    %9173 = vmatprep.subr.mxu0 0.0
    %9174 = vmatpush1.msra.mxu0 0.0
    %9175 = vmatprep.subr.mxu0 0.0
    %9176 = vmatpush1.msra.mxu0 0.0
    %9177 = vmatprep.subr.mxu0 0.0
    %9178 = vmatpush1.msra.mxu0 0.0
    %9179 = vmatprep.subr.mxu0 0.0
    %9180 = vmatpush1.msra.mxu0 0.0
    %9181 = vmatprep.subr.mxu0 0.0
    %9182 = vmatpush1.msra.mxu0 0.0
    %9183 = vmatprep.subr.mxu0 0.0
    %9184 = vmatpush1.msra.mxu0 0.0
    %9185 = vmatprep.subr.mxu0 0.0
    %9186 = vmatpush1.msra.mxu0 0.0
    %9187 = vmatprep.subr.mxu0 0.0
    %9188 = vmatpush1.msra.mxu0 0.0
    %9189 = vmatprep.subr.mxu0 0.0
    %9190 = vmatpush1.msra.mxu0 0.0
    %9191 = vmatprep.subr.mxu0 0.0
    %9192 = vmatpush1.msra.mxu0 0.0
    %9193 = vmatprep.subr.mxu0 0.0
    %9194 = vmatpush1.msra.mxu0 0.0
    %9195 = vmatprep.subr.mxu0 0.0
    %9196 = vmatpush1.msra.mxu0 0.0
    %9197 = vmatprep.subr.mxu0 0.0
    %9198 = vmatpush1.msra.mxu0 0.0
    %9199 = vmatprep.mubr.f32.mxu0 0.0
    %v9200 = vand.u32 %v9118, 4294901760
    %v9201 = vsub.f32 %v9118, %v9200
    %v9202 = vand.u32 %v9201, 4294901760
    %v9203 = vsub.f32 %v9201, %v9202
    %v9204 = vand.u32 %v9203, 4294901760
    %9205 = vmatmul.mubr.f32.gmra.mrb[0].mxu0 %v9204
    %v9206 = vpop.f32.mrb[0].mxu0
    %v9207 = vadd.f32 0.0, %v9206
    %v9208 = vpop.f32.mrb[0].mxu0
    %9209 = vdwg.mxu0
    %9210 = vmatprep.subr.mxu0 0.0
    %v9211 = vand.u32 %v64, 4294901760
    %v9212 = vsub.f32 %v64, %v9211
    %v9213 = vand.u32 %v9212, 4294901760
    %v9214 = vsub.f32 %v9212, %v9213
    %v9215 = vand.u32 %v9214, 4294901760
    %9216 = vmatpush1.msra.mxu0 %v9215
    %9217 = vmatprep.subr.mxu0 0.0
    %v9218 = vand.u32 %v65, 4294901760
    %v9219 = vsub.f32 %v65, %v9218
    %v9220 = vand.u32 %v9219, 4294901760
    %v9221 = vsub.f32 %v9219, %v9220
    %v9222 = vand.u32 %v9221, 4294901760
    %9223 = vmatpush1.msra.mxu0 %v9222
    %9224 = vmatprep.subr.mxu0 0.0
    %v9225 = vand.u32 %v66, 4294901760
    %v9226 = vsub.f32 %v66, %v9225
    %v9227 = vand.u32 %v9226, 4294901760
    %v9228 = vsub.f32 %v9226, %v9227
    %v9229 = vand.u32 %v9228, 4294901760
    %9230 = vmatpush1.msra.mxu0 %v9229
    %9231 = vmatprep.subr.mxu0 0.0
    %v9232 = vand.u32 %v67, 4294901760
    %v9233 = vsub.f32 %v67, %v9232
    %v9234 = vand.u32 %v9233, 4294901760
    %v9235 = vsub.f32 %v9233, %v9234
    %v9236 = vand.u32 %v9235, 4294901760
    %9237 = vmatpush1.msra.mxu0 %v9236
    %9238 = vmatprep.subr.mxu0 0.0
    %v9239 = vand.u32 %v68, 4294901760
    %v9240 = vsub.f32 %v68, %v9239
    %v9241 = vand.u32 %v9240, 4294901760
    %v9242 = vsub.f32 %v9240, %v9241
    %v9243 = vand.u32 %v9242, 4294901760
    %9244 = vmatpush1.msra.mxu0 %v9243
    %9245 = vmatprep.subr.mxu0 0.0
    %v9246 = vand.u32 %v69, 4294901760
    %v9247 = vsub.f32 %v69, %v9246
    %v9248 = vand.u32 %v9247, 4294901760
    %v9249 = vsub.f32 %v9247, %v9248
    %v9250 = vand.u32 %v9249, 4294901760
    %9251 = vmatpush1.msra.mxu0 %v9250
    %9252 = vmatprep.subr.mxu0 0.0
    %v9253 = vand.u32 %v70, 4294901760
    %v9254 = vsub.f32 %v70, %v9253
    %v9255 = vand.u32 %v9254, 4294901760
    %v9256 = vsub.f32 %v9254, %v9255
    %v9257 = vand.u32 %v9256, 4294901760
    %9258 = vmatpush1.msra.mxu0 %v9257
    %9259 = vmatprep.subr.mxu0 0.0
    %v9260 = vand.u32 %v71, 4294901760
    %v9261 = vsub.f32 %v71, %v9260
    %v9262 = vand.u32 %v9261, 4294901760
    %v9263 = vsub.f32 %v9261, %v9262
    %v9264 = vand.u32 %v9263, 4294901760
    %9265 = vmatpush1.msra.mxu0 %v9264
    %9266 = vmatprep.subr.mxu0 0.0
    %v9267 = vand.u32 %v72, 4294901760
    %v9268 = vsub.f32 %v72, %v9267
    %v9269 = vand.u32 %v9268, 4294901760
    %v9270 = vsub.f32 %v9268, %v9269
    %v9271 = vand.u32 %v9270, 4294901760
    %9272 = vmatpush1.msra.mxu0 %v9271
    %9273 = vmatprep.subr.mxu0 0.0
    %v9274 = vand.u32 %v73, 4294901760
    %v9275 = vsub.f32 %v73, %v9274
    %v9276 = vand.u32 %v9275, 4294901760
    %v9277 = vsub.f32 %v9275, %v9276
    %v9278 = vand.u32 %v9277, 4294901760
    %9279 = vmatpush1.msra.mxu0 %v9278
    %9280 = vmatprep.subr.mxu0 0.0
    %v9281 = vand.u32 %v74, 4294901760
    %v9282 = vsub.f32 %v74, %v9281
    %v9283 = vand.u32 %v9282, 4294901760
    %v9284 = vsub.f32 %v9282, %v9283
    %v9285 = vand.u32 %v9284, 4294901760
    %9286 = vmatpush1.msra.mxu0 %v9285
    %9287 = vmatprep.subr.mxu0 0.0
    %v9288 = vand.u32 %v75, 4294901760
    %v9289 = vsub.f32 %v75, %v9288
    %v9290 = vand.u32 %v9289, 4294901760
    %v9291 = vsub.f32 %v9289, %v9290
    %v9292 = vand.u32 %v9291, 4294901760
    %9293 = vmatpush1.msra.mxu0 %v9292
    %9294 = vmatprep.subr.mxu0 0.0
    %v9295 = vand.u32 %v76, 4294901760
    %v9296 = vsub.f32 %v76, %v9295
    %v9297 = vand.u32 %v9296, 4294901760
    %v9298 = vsub.f32 %v9296, %v9297
    %v9299 = vand.u32 %v9298, 4294901760
    %9300 = vmatpush1.msra.mxu0 %v9299
    %9301 = vmatprep.subr.mxu0 0.0
    %v9302 = vand.u32 %v77, 4294901760
    %v9303 = vsub.f32 %v77, %v9302
    %v9304 = vand.u32 %v9303, 4294901760
    %v9305 = vsub.f32 %v9303, %v9304
    %v9306 = vand.u32 %v9305, 4294901760
    %9307 = vmatpush1.msra.mxu0 %v9306
    %9308 = vmatprep.subr.mxu0 0.0
    %v9309 = vand.u32 %v78, 4294901760
    %v9310 = vsub.f32 %v78, %v9309
    %v9311 = vand.u32 %v9310, 4294901760
    %v9312 = vsub.f32 %v9310, %v9311
    %v9313 = vand.u32 %v9312, 4294901760
    %9314 = vmatpush1.msra.mxu0 %v9313
    %9315 = vmatprep.subr.mxu0 0.0
    %v9316 = vand.u32 %v79, 4294901760
    %v9317 = vsub.f32 %v79, %v9316
    %v9318 = vand.u32 %v9317, 4294901760
    %v9319 = vsub.f32 %v9317, %v9318
    %v9320 = vand.u32 %v9319, 4294901760
    %9321 = vmatpush1.msra.mxu0 %v9320
    %9322 = vmatprep.subr.mxu0 0.0
    %9323 = vmatpush1.msra.mxu0 0.0
    %9324 = vmatprep.subr.mxu0 0.0
    %9325 = vmatpush1.msra.mxu0 0.0
    %9326 = vmatprep.subr.mxu0 0.0
    %9327 = vmatpush1.msra.mxu0 0.0
    %9328 = vmatprep.subr.mxu0 0.0
    %9329 = vmatpush1.msra.mxu0 0.0
    %9330 = vmatprep.subr.mxu0 0.0
    %9331 = vmatpush1.msra.mxu0 0.0
    %9332 = vmatprep.subr.mxu0 0.0
    %9333 = vmatpush1.msra.mxu0 0.0
    %9334 = vmatprep.subr.mxu0 0.0
    %9335 = vmatpush1.msra.mxu0 0.0
    %9336 = vmatprep.subr.mxu0 0.0
    %9337 = vmatpush1.msra.mxu0 0.0
    %9338 = vmatprep.subr.mxu0 0.0
    %9339 = vmatpush1.msra.mxu0 0.0
    %9340 = vmatprep.subr.mxu0 0.0
    %9341 = vmatpush1.msra.mxu0 0.0
    %9342 = vmatprep.subr.mxu0 0.0
    %9343 = vmatpush1.msra.mxu0 0.0
    %9344 = vmatprep.subr.mxu0 0.0
    %9345 = vmatpush1.msra.mxu0 0.0
    %9346 = vmatprep.subr.mxu0 0.0
    %9347 = vmatpush1.msra.mxu0 0.0
    %9348 = vmatprep.subr.mxu0 0.0
    %9349 = vmatpush1.msra.mxu0 0.0
    %9350 = vmatprep.subr.mxu0 0.0
    %9351 = vmatpush1.msra.mxu0 0.0
    %9352 = vmatprep.subr.mxu0 0.0
    %9353 = vmatpush1.msra.mxu0 0.0
    %9354 = vmatprep.mubr.f32.mxu0 0.0
    %v9355 = vand.u32 %v9118, 4294901760
    %9356 = vmatmul.mubr.f32.gmra.mrb[0].mxu0 %v9355
    %v9357 = vpop.f32.mrb[0].mxu0
    %v9358 = vadd.f32 %v9207, %v9357
    %v9359 = vpop.f32.mrb[0].mxu0
    %9360 = vdwg.mxu0
    %9361 = vmatprep.subr.mxu0 0.0
    %v9362 = vand.u32 %v64, 4294901760
    %v9363 = vsub.f32 %v64, %v9362
    %9364 = vmatpush1.msra.mxu0 %v9363
    %9365 = vmatprep.subr.mxu0 0.0
    %v9366 = vand.u32 %v65, 4294901760
    %v9367 = vsub.f32 %v65, %v9366
    %9368 = vmatpush1.msra.mxu0 %v9367
    %9369 = vmatprep.subr.mxu0 0.0
    %v9370 = vand.u32 %v66, 4294901760
    %v9371 = vsub.f32 %v66, %v9370
    %9372 = vmatpush1.msra.mxu0 %v9371
    %9373 = vmatprep.subr.mxu0 0.0
    %v9374 = vand.u32 %v67, 4294901760
    %v9375 = vsub.f32 %v67, %v9374
    %9376 = vmatpush1.msra.mxu0 %v9375
    %9377 = vmatprep.subr.mxu0 0.0
    %v9378 = vand.u32 %v68, 4294901760
    %v9379 = vsub.f32 %v68, %v9378
    %9380 = vmatpush1.msra.mxu0 %v9379
    %9381 = vmatprep.subr.mxu0 0.0
    %v9382 = vand.u32 %v69, 4294901760
    %v9383 = vsub.f32 %v69, %v9382
    %9384 = vmatpush1.msra.mxu0 %v9383
    %9385 = vmatprep.subr.mxu0 0.0
    %v9386 = vand.u32 %v70, 4294901760
    %v9387 = vsub.f32 %v70, %v9386
    %9388 = vmatpush1.msra.mxu0 %v9387
    %9389 = vmatprep.subr.mxu0 0.0
    %v9390 = vand.u32 %v71, 4294901760
    %v9391 = vsub.f32 %v71, %v9390
    %9392 = vmatpush1.msra.mxu0 %v9391
    %9393 = vmatprep.subr.mxu0 0.0
    %v9394 = vand.u32 %v72, 4294901760
    %v9395 = vsub.f32 %v72, %v9394
    %9396 = vmatpush1.msra.mxu0 %v9395
    %9397 = vmatprep.subr.mxu0 0.0
    %v9398 = vand.u32 %v73, 4294901760
    %v9399 = vsub.f32 %v73, %v9398
    %9400 = vmatpush1.msra.mxu0 %v9399
    %9401 = vmatprep.subr.mxu0 0.0
    %v9402 = vand.u32 %v74, 4294901760
    %v9403 = vsub.f32 %v74, %v9402
    %9404 = vmatpush1.msra.mxu0 %v9403
    %9405 = vmatprep.subr.mxu0 0.0
    %v9406 = vand.u32 %v75, 4294901760
    %v9407 = vsub.f32 %v75, %v9406
    %9408 = vmatpush1.msra.mxu0 %v9407
    %9409 = vmatprep.subr.mxu0 0.0
    %v9410 = vand.u32 %v76, 4294901760
    %v9411 = vsub.f32 %v76, %v9410
    %9412 = vmatpush1.msra.mxu0 %v9411
    %9413 = vmatprep.subr.mxu0 0.0
    %v9414 = vand.u32 %v77, 4294901760
    %v9415 = vsub.f32 %v77, %v9414
    %9416 = vmatpush1.msra.mxu0 %v9415
    %9417 = vmatprep.subr.mxu0 0.0
    %v9418 = vand.u32 %v78, 4294901760
    %v9419 = vsub.f32 %v78, %v9418
    %9420 = vmatpush1.msra.mxu0 %v9419
    %9421 = vmatprep.subr.mxu0 0.0
    %v9422 = vand.u32 %v79, 4294901760
    %v9423 = vsub.f32 %v79, %v9422
    %9424 = vmatpush1.msra.mxu0 %v9423
    %9425 = vmatprep.subr.mxu0 0.0
    %9426 = vmatpush1.msra.mxu0 0.0
    %9427 = vmatprep.subr.mxu0 0.0
    %9428 = vmatpush1.msra.mxu0 0.0
    %9429 = vmatprep.subr.mxu0 0.0
    %9430 = vmatpush1.msra.mxu0 0.0
    %9431 = vmatprep.subr.mxu0 0.0
    %9432 = vmatpush1.msra.mxu0 0.0
    %9433 = vmatprep.subr.mxu0 0.0
    %9434 = vmatpush1.msra.mxu0 0.0
    %9435 = vmatprep.subr.mxu0 0.0
    %9436 = vmatpush1.msra.mxu0 0.0
    %9437 = vmatprep.subr.mxu0 0.0
    %9438 = vmatpush1.msra.mxu0 0.0
    %9439 = vmatprep.subr.mxu0 0.0
    %9440 = vmatpush1.msra.mxu0 0.0
    %9441 = vmatprep.subr.mxu0 0.0
    %9442 = vmatpush1.msra.mxu0 0.0
    %9443 = vmatprep.subr.mxu0 0.0
    %9444 = vmatpush1.msra.mxu0 0.0
    %9445 = vmatprep.subr.mxu0 0.0
    %9446 = vmatpush1.msra.mxu0 0.0
    %9447 = vmatprep.subr.mxu0 0.0
    %9448 = vmatpush1.msra.mxu0 0.0
    %9449 = vmatprep.subr.mxu0 0.0
    %9450 = vmatpush1.msra.mxu0 0.0
    %9451 = vmatprep.subr.mxu0 0.0
    %9452 = vmatpush1.msra.mxu0 0.0
    %9453 = vmatprep.subr.mxu0 0.0
    %9454 = vmatpush1.msra.mxu0 0.0
    %9455 = vmatprep.subr.mxu0 0.0
    %9456 = vmatpush1.msra.mxu0 0.0
    %9457 = vmatprep.mubr.f32.mxu0 0.0
    %v9458 = vand.u32 %v9118, 4294901760
    %v9459 = vsub.f32 %v9118, %v9458
    %9460 = vmatmul.mubr.f32.gmra.mrb[0].mxu0 %v9459
    %v9461 = vpop.f32.mrb[0].mxu0
    %v9462 = vadd.f32 %v9358, %v9461
    %v9463 = vpop.f32.mrb[0].mxu0
    %9464 = vdwg.mxu0
    %9465 = vmatprep.subr.mxu0 0.0
    %v9466 = vand.u32 %v64, 4294901760
    %9467 = vmatpush1.msra.mxu0 %v9466
    %9468 = vmatprep.subr.mxu0 0.0
    %v9469 = vand.u32 %v65, 4294901760
    %9470 = vmatpush1.msra.mxu0 %v9469
    %9471 = vmatprep.subr.mxu0 0.0
    %v9472 = vand.u32 %v66, 4294901760
    %9473 = vmatpush1.msra.mxu0 %v9472
    %9474 = vmatprep.subr.mxu0 0.0
    %v9475 = vand.u32 %v67, 4294901760
    %9476 = vmatpush1.msra.mxu0 %v9475
    %9477 = vmatprep.subr.mxu0 0.0
    %v9478 = vand.u32 %v68, 4294901760
    %9479 = vmatpush1.msra.mxu0 %v9478
    %9480 = vmatprep.subr.mxu0 0.0
    %v9481 = vand.u32 %v69, 4294901760
    %9482 = vmatpush1.msra.mxu0 %v9481
    %9483 = vmatprep.subr.mxu0 0.0
    %v9484 = vand.u32 %v70, 4294901760
    %9485 = vmatpush1.msra.mxu0 %v9484
    %9486 = vmatprep.subr.mxu0 0.0
    %v9487 = vand.u32 %v71, 4294901760
    %9488 = vmatpush1.msra.mxu0 %v9487
    %9489 = vmatprep.subr.mxu0 0.0
    %v9490 = vand.u32 %v72, 4294901760
    %9491 = vmatpush1.msra.mxu0 %v9490
    %9492 = vmatprep.subr.mxu0 0.0
    %v9493 = vand.u32 %v73, 4294901760
    %9494 = vmatpush1.msra.mxu0 %v9493
    %9495 = vmatprep.subr.mxu0 0.0
    %v9496 = vand.u32 %v74, 4294901760
    %9497 = vmatpush1.msra.mxu0 %v9496
    %9498 = vmatprep.subr.mxu0 0.0
    %v9499 = vand.u32 %v75, 4294901760
    %9500 = vmatpush1.msra.mxu0 %v9499
    %9501 = vmatprep.subr.mxu0 0.0
    %v9502 = vand.u32 %v76, 4294901760
    %9503 = vmatpush1.msra.mxu0 %v9502
    %9504 = vmatprep.subr.mxu0 0.0
    %v9505 = vand.u32 %v77, 4294901760
    %9506 = vmatpush1.msra.mxu0 %v9505
    %9507 = vmatprep.subr.mxu0 0.0
    %v9508 = vand.u32 %v78, 4294901760
    %9509 = vmatpush1.msra.mxu0 %v9508
    %9510 = vmatprep.subr.mxu0 0.0
    %v9511 = vand.u32 %v79, 4294901760
    %9512 = vmatpush1.msra.mxu0 %v9511
    %9513 = vmatprep.subr.mxu0 0.0
    %9514 = vmatpush1.msra.mxu0 0.0
    %9515 = vmatprep.subr.mxu0 0.0
    %9516 = vmatpush1.msra.mxu0 0.0
    %9517 = vmatprep.subr.mxu0 0.0
    %9518 = vmatpush1.msra.mxu0 0.0
    %9519 = vmatprep.subr.mxu0 0.0
    %9520 = vmatpush1.msra.mxu0 0.0
    %9521 = vmatprep.subr.mxu0 0.0
    %9522 = vmatpush1.msra.mxu0 0.0
    %9523 = vmatprep.subr.mxu0 0.0
    %9524 = vmatpush1.msra.mxu0 0.0
    %9525 = vmatprep.subr.mxu0 0.0
    %9526 = vmatpush1.msra.mxu0 0.0
    %9527 = vmatprep.subr.mxu0 0.0
    %9528 = vmatpush1.msra.mxu0 0.0
    %9529 = vmatprep.subr.mxu0 0.0
    %9530 = vmatpush1.msra.mxu0 0.0
    %9531 = vmatprep.subr.mxu0 0.0
    %9532 = vmatpush1.msra.mxu0 0.0
    %9533 = vmatprep.subr.mxu0 0.0
    %9534 = vmatpush1.msra.mxu0 0.0
    %9535 = vmatprep.subr.mxu0 0.0
    %9536 = vmatpush1.msra.mxu0 0.0
    %9537 = vmatprep.subr.mxu0 0.0
    %9538 = vmatpush1.msra.mxu0 0.0
    %9539 = vmatprep.subr.mxu0 0.0
    %9540 = vmatpush1.msra.mxu0 0.0
    %9541 = vmatprep.subr.mxu0 0.0
    %9542 = vmatpush1.msra.mxu0 0.0
    %9543 = vmatprep.subr.mxu0 0.0
    %9544 = vmatpush1.msra.mxu0 0.0
    %9545 = vmatprep.mubr.f32.mxu0 0.0
    %v9546 = vand.u32 %v9118, 4294901760
    %v9547 = vsub.f32 %v9118, %v9546
    %v9548 = vand.u32 %v9547, 4294901760
    %9549 = vmatmul.mubr.f32.gmra.mrb[0].mxu0 %v9548
    %v9550 = vpop.f32.mrb[0].mxu0
    %v9551 = vadd.f32 %v9462, %v9550
    %v9552 = vpop.f32.mrb[0].mxu0
    %9553 = vdwg.mxu0
    %9554 = vmatprep.subr.mxu0 0.0
    %v9555 = vand.u32 %v64, 4294901760
    %v9556 = vsub.f32 %v64, %v9555
    %v9557 = vand.u32 %v9556, 4294901760
    %9558 = vmatpush1.msra.mxu0 %v9557
    %9559 = vmatprep.subr.mxu0 0.0
    %v9560 = vand.u32 %v65, 4294901760
    %v9561 = vsub.f32 %v65, %v9560
    %v9562 = vand.u32 %v9561, 4294901760
    %9563 = vmatpush1.msra.mxu0 %v9562
    %9564 = vmatprep.subr.mxu0 0.0
    %v9565 = vand.u32 %v66, 4294901760
    %v9566 = vsub.f32 %v66, %v9565
    %v9567 = vand.u32 %v9566, 4294901760
    %9568 = vmatpush1.msra.mxu0 %v9567
    %9569 = vmatprep.subr.mxu0 0.0
    %v9570 = vand.u32 %v67, 4294901760
    %v9571 = vsub.f32 %v67, %v9570
    %v9572 = vand.u32 %v9571, 4294901760
    %9573 = vmatpush1.msra.mxu0 %v9572
    %9574 = vmatprep.subr.mxu0 0.0
    %v9575 = vand.u32 %v68, 4294901760
    %v9576 = vsub.f32 %v68, %v9575
    %v9577 = vand.u32 %v9576, 4294901760
    %9578 = vmatpush1.msra.mxu0 %v9577
    %9579 = vmatprep.subr.mxu0 0.0
    %v9580 = vand.u32 %v69, 4294901760
    %v9581 = vsub.f32 %v69, %v9580
    %v9582 = vand.u32 %v9581, 4294901760
    %9583 = vmatpush1.msra.mxu0 %v9582
    %9584 = vmatprep.subr.mxu0 0.0
    %v9585 = vand.u32 %v70, 4294901760
    %v9586 = vsub.f32 %v70, %v9585
    %v9587 = vand.u32 %v9586, 4294901760
    %9588 = vmatpush1.msra.mxu0 %v9587
    %9589 = vmatprep.subr.mxu0 0.0
    %v9590 = vand.u32 %v71, 4294901760
    %v9591 = vsub.f32 %v71, %v9590
    %v9592 = vand.u32 %v9591, 4294901760
    %9593 = vmatpush1.msra.mxu0 %v9592
    %9594 = vmatprep.subr.mxu0 0.0
    %v9595 = vand.u32 %v72, 4294901760
    %v9596 = vsub.f32 %v72, %v9595
    %v9597 = vand.u32 %v9596, 4294901760
    %9598 = vmatpush1.msra.mxu0 %v9597
    %9599 = vmatprep.subr.mxu0 0.0
    %v9600 = vand.u32 %v73, 4294901760
    %v9601 = vsub.f32 %v73, %v9600
    %v9602 = vand.u32 %v9601, 4294901760
    %9603 = vmatpush1.msra.mxu0 %v9602
    %9604 = vmatprep.subr.mxu0 0.0
    %v9605 = vand.u32 %v74, 4294901760
    %v9606 = vsub.f32 %v74, %v9605
    %v9607 = vand.u32 %v9606, 4294901760
    %9608 = vmatpush1.msra.mxu0 %v9607
    %9609 = vmatprep.subr.mxu0 0.0
    %v9610 = vand.u32 %v75, 4294901760
    %v9611 = vsub.f32 %v75, %v9610
    %v9612 = vand.u32 %v9611, 4294901760
    %9613 = vmatpush1.msra.mxu0 %v9612
    %9614 = vmatprep.subr.mxu0 0.0
    %v9615 = vand.u32 %v76, 4294901760
    %v9616 = vsub.f32 %v76, %v9615
    %v9617 = vand.u32 %v9616, 4294901760
    %9618 = vmatpush1.msra.mxu0 %v9617
    %9619 = vmatprep.subr.mxu0 0.0
    %v9620 = vand.u32 %v77, 4294901760
    %v9621 = vsub.f32 %v77, %v9620
    %v9622 = vand.u32 %v9621, 4294901760
    %9623 = vmatpush1.msra.mxu0 %v9622
    %9624 = vmatprep.subr.mxu0 0.0
    %v9625 = vand.u32 %v78, 4294901760
    %v9626 = vsub.f32 %v78, %v9625
    %v9627 = vand.u32 %v9626, 4294901760
    %9628 = vmatpush1.msra.mxu0 %v9627
    %9629 = vmatprep.subr.mxu0 0.0
    %v9630 = vand.u32 %v79, 4294901760
    %v9631 = vsub.f32 %v79, %v9630
    %v9632 = vand.u32 %v9631, 4294901760
    %9633 = vmatpush1.msra.mxu0 %v9632
    %9634 = vmatprep.subr.mxu0 0.0
    %9635 = vmatpush1.msra.mxu0 0.0
    %9636 = vmatprep.subr.mxu0 0.0
    %9637 = vmatpush1.msra.mxu0 0.0
    %9638 = vmatprep.subr.mxu0 0.0
    %9639 = vmatpush1.msra.mxu0 0.0
    %9640 = vmatprep.subr.mxu0 0.0
    %9641 = vmatpush1.msra.mxu0 0.0
    %9642 = vmatprep.subr.mxu0 0.0
    %9643 = vmatpush1.msra.mxu0 0.0
    %9644 = vmatprep.subr.mxu0 0.0
    %9645 = vmatpush1.msra.mxu0 0.0
    %9646 = vmatprep.subr.mxu0 0.0
    %9647 = vmatpush1.msra.mxu0 0.0
    %9648 = vmatprep.subr.mxu0 0.0
    %9649 = vmatpush1.msra.mxu0 0.0
    %9650 = vmatprep.subr.mxu0 0.0
    %9651 = vmatpush1.msra.mxu0 0.0
    %9652 = vmatprep.subr.mxu0 0.0
    %9653 = vmatpush1.msra.mxu0 0.0
    %9654 = vmatprep.subr.mxu0 0.0
    %9655 = vmatpush1.msra.mxu0 0.0
    %9656 = vmatprep.subr.mxu0 0.0
    %9657 = vmatpush1.msra.mxu0 0.0
    %9658 = vmatprep.subr.mxu0 0.0
    %9659 = vmatpush1.msra.mxu0 0.0
    %9660 = vmatprep.subr.mxu0 0.0
    %9661 = vmatpush1.msra.mxu0 0.0
    %9662 = vmatprep.subr.mxu0 0.0
    %9663 = vmatpush1.msra.mxu0 0.0
    %9664 = vmatprep.subr.mxu0 0.0
    %9665 = vmatpush1.msra.mxu0 0.0
    %9666 = vmatprep.mubr.f32.mxu0 0.0
    %v9667 = vand.u32 %v9118, 4294901760
    %9668 = vmatmul.mubr.f32.gmra.mrb[0].mxu0 %v9667
    %v9669 = vpop.f32.mrb[0].mxu0
    %v9670 = vadd.f32 %v9551, %v9669
    %v9671 = vpop.f32.mrb[0].mxu0
    %9672 = vdwg.mxu0
    %9673 = vmatprep.subr.mxu0 0.0
    %v9674 = vand.u32 %v64, 4294901760
    %9675 = vmatpush1.msra.mxu0 %v9674
    %9676 = vmatprep.subr.mxu0 0.0
    %v9677 = vand.u32 %v65, 4294901760
    %9678 = vmatpush1.msra.mxu0 %v9677
    %9679 = vmatprep.subr.mxu0 0.0
    %v9680 = vand.u32 %v66, 4294901760
    %9681 = vmatpush1.msra.mxu0 %v9680
    %9682 = vmatprep.subr.mxu0 0.0
    %v9683 = vand.u32 %v67, 4294901760
    %9684 = vmatpush1.msra.mxu0 %v9683
    %9685 = vmatprep.subr.mxu0 0.0
    %v9686 = vand.u32 %v68, 4294901760
    %9687 = vmatpush1.msra.mxu0 %v9686
    %9688 = vmatprep.subr.mxu0 0.0
    %v9689 = vand.u32 %v69, 4294901760
    %9690 = vmatpush1.msra.mxu0 %v9689
    %9691 = vmatprep.subr.mxu0 0.0
    %v9692 = vand.u32 %v70, 4294901760
    %9693 = vmatpush1.msra.mxu0 %v9692
    %9694 = vmatprep.subr.mxu0 0.0
    %v9695 = vand.u32 %v71, 4294901760
    %9696 = vmatpush1.msra.mxu0 %v9695
    %9697 = vmatprep.subr.mxu0 0.0
    %v9698 = vand.u32 %v72, 4294901760
    %9699 = vmatpush1.msra.mxu0 %v9698
    %9700 = vmatprep.subr.mxu0 0.0
    %v9701 = vand.u32 %v73, 4294901760
    %9702 = vmatpush1.msra.mxu0 %v9701
    %9703 = vmatprep.subr.mxu0 0.0
    %v9704 = vand.u32 %v74, 4294901760
    %9705 = vmatpush1.msra.mxu0 %v9704
    %9706 = vmatprep.subr.mxu0 0.0
    %v9707 = vand.u32 %v75, 4294901760
    %9708 = vmatpush1.msra.mxu0 %v9707
    %9709 = vmatprep.subr.mxu0 0.0
    %v9710 = vand.u32 %v76, 4294901760
    %9711 = vmatpush1.msra.mxu0 %v9710
    %9712 = vmatprep.subr.mxu0 0.0
    %v9713 = vand.u32 %v77, 4294901760
    %9714 = vmatpush1.msra.mxu0 %v9713
    %9715 = vmatprep.subr.mxu0 0.0
    %v9716 = vand.u32 %v78, 4294901760
    %9717 = vmatpush1.msra.mxu0 %v9716
    %9718 = vmatprep.subr.mxu0 0.0
    %v9719 = vand.u32 %v79, 4294901760
    %9720 = vmatpush1.msra.mxu0 %v9719
    %9721 = vmatprep.subr.mxu0 0.0
    %9722 = vmatpush1.msra.mxu0 0.0
    %9723 = vmatprep.subr.mxu0 0.0
    %9724 = vmatpush1.msra.mxu0 0.0
    %9725 = vmatprep.subr.mxu0 0.0
    %9726 = vmatpush1.msra.mxu0 0.0
    %9727 = vmatprep.subr.mxu0 0.0
    %9728 = vmatpush1.msra.mxu0 0.0
    %9729 = vmatprep.subr.mxu0 0.0
    %9730 = vmatpush1.msra.mxu0 0.0
    %9731 = vmatprep.subr.mxu0 0.0
    %9732 = vmatpush1.msra.mxu0 0.0
    %9733 = vmatprep.subr.mxu0 0.0
    %9734 = vmatpush1.msra.mxu0 0.0
    %9735 = vmatprep.subr.mxu0 0.0
    %9736 = vmatpush1.msra.mxu0 0.0
    %9737 = vmatprep.subr.mxu0 0.0
    %9738 = vmatpush1.msra.mxu0 0.0
    %9739 = vmatprep.subr.mxu0 0.0
    %9740 = vmatpush1.msra.mxu0 0.0
    %9741 = vmatprep.subr.mxu0 0.0
    %9742 = vmatpush1.msra.mxu0 0.0
    %9743 = vmatprep.subr.mxu0 0.0
    %9744 = vmatpush1.msra.mxu0 0.0
    %9745 = vmatprep.subr.mxu0 0.0
    %9746 = vmatpush1.msra.mxu0 0.0
    %9747 = vmatprep.subr.mxu0 0.0
    %9748 = vmatpush1.msra.mxu0 0.0
    %9749 = vmatprep.subr.mxu0 0.0
    %9750 = vmatpush1.msra.mxu0 0.0
    %9751 = vmatprep.subr.mxu0 0.0
    %9752 = vmatpush1.msra.mxu0 0.0
    %9753 = vmatprep.mubr.f32.mxu0 0.0
    %v9754 = vand.u32 %v9118, 4294901760
    %9755 = vmatmul.mubr.f32.gmra.mrb[0].mxu0 %v9754
    %v9756 = vpop.f32.mrb[0].mxu0
    %v9757 = vadd.f32 %v9670, %v9756
    %v9758 = vpop.f32.mrb[0].mxu0
    %9759 = vdwg.mxu0
    %9760 = vmatprep.subr.mxu0 0.0
    %v9761 = vand.u32 %v80, 4294901760
    %9762 = vmatpush1.msra.mxu0 %v9761
    %9763 = vmatprep.subr.mxu0 0.0
    %v9764 = vand.u32 %v81, 4294901760
    %9765 = vmatpush1.msra.mxu0 %v9764
    %9766 = vmatprep.subr.mxu0 0.0
    %v9767 = vand.u32 %v82, 4294901760
    %9768 = vmatpush1.msra.mxu0 %v9767
    %9769 = vmatprep.subr.mxu0 0.0
    %v9770 = vand.u32 %v83, 4294901760
    %9771 = vmatpush1.msra.mxu0 %v9770
    %9772 = vmatprep.subr.mxu0 0.0
    %v9773 = vand.u32 %v84, 4294901760
    %9774 = vmatpush1.msra.mxu0 %v9773
    %9775 = vmatprep.subr.mxu0 0.0
    %v9776 = vand.u32 %v85, 4294901760
    %9777 = vmatpush1.msra.mxu0 %v9776
    %9778 = vmatprep.subr.mxu0 0.0
    %v9779 = vand.u32 %v86, 4294901760
    %9780 = vmatpush1.msra.mxu0 %v9779
    %9781 = vmatprep.subr.mxu0 0.0
    %v9782 = vand.u32 %v87, 4294901760
    %9783 = vmatpush1.msra.mxu0 %v9782
    %9784 = vmatprep.subr.mxu0 0.0
    %v9785 = vand.u32 %v88, 4294901760
    %9786 = vmatpush1.msra.mxu0 %v9785
    %9787 = vmatprep.subr.mxu0 0.0
    %v9788 = vand.u32 %v89, 4294901760
    %9789 = vmatpush1.msra.mxu0 %v9788
    %9790 = vmatprep.subr.mxu0 0.0
    %v9791 = vand.u32 %v90, 4294901760
    %9792 = vmatpush1.msra.mxu0 %v9791
    %9793 = vmatprep.subr.mxu0 0.0
    %v9794 = vand.u32 %v91, 4294901760
    %9795 = vmatpush1.msra.mxu0 %v9794
    %9796 = vmatprep.subr.mxu0 0.0
    %v9797 = vand.u32 %v92, 4294901760
    %9798 = vmatpush1.msra.mxu0 %v9797
    %9799 = vmatprep.subr.mxu0 0.0
    %v9800 = vand.u32 %v93, 4294901760
    %9801 = vmatpush1.msra.mxu0 %v9800
    %9802 = vmatprep.subr.mxu0 0.0
    %v9803 = vand.u32 %v94, 4294901760
    %9804 = vmatpush1.msra.mxu0 %v9803
    %9805 = vmatprep.subr.mxu0 0.0
    %v9806 = vand.u32 %v95, 4294901760
    %9807 = vmatpush1.msra.mxu0 %v9806
    %9808 = vmatprep.subr.mxu0 0.0
    %9809 = vmatpush1.msra.mxu0 0.0
    %9810 = vmatprep.subr.mxu0 0.0
    %9811 = vmatpush1.msra.mxu0 0.0
    %9812 = vmatprep.subr.mxu0 0.0
    %9813 = vmatpush1.msra.mxu0 0.0
    %9814 = vmatprep.subr.mxu0 0.0
    %9815 = vmatpush1.msra.mxu0 0.0
    %9816 = vmatprep.subr.mxu0 0.0
    %9817 = vmatpush1.msra.mxu0 0.0
    %9818 = vmatprep.subr.mxu0 0.0
    %9819 = vmatpush1.msra.mxu0 0.0
    %9820 = vmatprep.subr.mxu0 0.0
    %9821 = vmatpush1.msra.mxu0 0.0
    %9822 = vmatprep.subr.mxu0 0.0
    %9823 = vmatpush1.msra.mxu0 0.0
    %9824 = vmatprep.subr.mxu0 0.0
    %9825 = vmatpush1.msra.mxu0 0.0
    %9826 = vmatprep.subr.mxu0 0.0
    %9827 = vmatpush1.msra.mxu0 0.0
    %9828 = vmatprep.subr.mxu0 0.0
    %9829 = vmatpush1.msra.mxu0 0.0
    %9830 = vmatprep.subr.mxu0 0.0
    %9831 = vmatpush1.msra.mxu0 0.0
    %9832 = vmatprep.subr.mxu0 0.0
    %9833 = vmatpush1.msra.mxu0 0.0
    %9834 = vmatprep.subr.mxu0 0.0
    %9835 = vmatpush1.msra.mxu0 0.0
    %9836 = vmatprep.subr.mxu0 0.0
    %9837 = vmatpush1.msra.mxu0 0.0
    %9838 = vmatprep.subr.mxu0 0.0
    %9839 = vmatpush1.msra.mxu0 0.0
    %9840 = vmatprep.mubr.f32.mxu0 0.0
    %v9841 = vand.u32 %v9118, 4294901760
    %v9842 = vsub.f32 %v9118, %v9841
    %v9843 = vand.u32 %v9842, 4294901760
    %v9844 = vsub.f32 %v9842, %v9843
    %v9845 = vand.u32 %v9844, 4294901760
    %9846 = vmatmul.mubr.f32.gmra.mrb[0].mxu0 %v9845
    %v9847 = vpop.f32.mrb[0].mxu0
    %v9848 = vadd.f32 0.0, %v9847
    %v9849 = vpop.f32.mrb[0].mxu0
    %9850 = vdwg.mxu0
    %9851 = vmatprep.subr.mxu0 0.0
    %v9852 = vand.u32 %v80, 4294901760
    %v9853 = vsub.f32 %v80, %v9852
    %v9854 = vand.u32 %v9853, 4294901760
    %v9855 = vsub.f32 %v9853, %v9854
    %v9856 = vand.u32 %v9855, 4294901760
    %9857 = vmatpush1.msra.mxu0 %v9856
    %9858 = vmatprep.subr.mxu0 0.0
    %v9859 = vand.u32 %v81, 4294901760
    %v9860 = vsub.f32 %v81, %v9859
    %v9861 = vand.u32 %v9860, 4294901760
    %v9862 = vsub.f32 %v9860, %v9861
    %v9863 = vand.u32 %v9862, 4294901760
    %9864 = vmatpush1.msra.mxu0 %v9863
    %9865 = vmatprep.subr.mxu0 0.0
    %v9866 = vand.u32 %v82, 4294901760
    %v9867 = vsub.f32 %v82, %v9866
    %v9868 = vand.u32 %v9867, 4294901760
    %v9869 = vsub.f32 %v9867, %v9868
    %v9870 = vand.u32 %v9869, 4294901760
    %9871 = vmatpush1.msra.mxu0 %v9870
    %9872 = vmatprep.subr.mxu0 0.0
    %v9873 = vand.u32 %v83, 4294901760
    %v9874 = vsub.f32 %v83, %v9873
    %v9875 = vand.u32 %v9874, 4294901760
    %v9876 = vsub.f32 %v9874, %v9875
    %v9877 = vand.u32 %v9876, 4294901760
    %9878 = vmatpush1.msra.mxu0 %v9877
    %9879 = vmatprep.subr.mxu0 0.0
    %v9880 = vand.u32 %v84, 4294901760
    %v9881 = vsub.f32 %v84, %v9880
    %v9882 = vand.u32 %v9881, 4294901760
    %v9883 = vsub.f32 %v9881, %v9882
    %v9884 = vand.u32 %v9883, 4294901760
    %9885 = vmatpush1.msra.mxu0 %v9884
    %9886 = vmatprep.subr.mxu0 0.0
    %v9887 = vand.u32 %v85, 4294901760
    %v9888 = vsub.f32 %v85, %v9887
    %v9889 = vand.u32 %v9888, 4294901760
    %v9890 = vsub.f32 %v9888, %v9889
    %v9891 = vand.u32 %v9890, 4294901760
    %9892 = vmatpush1.msra.mxu0 %v9891
    %9893 = vmatprep.subr.mxu0 0.0
    %v9894 = vand.u32 %v86, 4294901760
    %v9895 = vsub.f32 %v86, %v9894
    %v9896 = vand.u32 %v9895, 4294901760
    %v9897 = vsub.f32 %v9895, %v9896
    %v9898 = vand.u32 %v9897, 4294901760
    %9899 = vmatpush1.msra.mxu0 %v9898
    %9900 = vmatprep.subr.mxu0 0.0
    %v9901 = vand.u32 %v87, 4294901760
    %v9902 = vsub.f32 %v87, %v9901
    %v9903 = vand.u32 %v9902, 4294901760
    %v9904 = vsub.f32 %v9902, %v9903
    %v9905 = vand.u32 %v9904, 4294901760
    %9906 = vmatpush1.msra.mxu0 %v9905
    %9907 = vmatprep.subr.mxu0 0.0
    %v9908 = vand.u32 %v88, 4294901760
    %v9909 = vsub.f32 %v88, %v9908
    %v9910 = vand.u32 %v9909, 4294901760
    %v9911 = vsub.f32 %v9909, %v9910
    %v9912 = vand.u32 %v9911, 4294901760
    %9913 = vmatpush1.msra.mxu0 %v9912
    %9914 = vmatprep.subr.mxu0 0.0
    %v9915 = vand.u32 %v89, 4294901760
    %v9916 = vsub.f32 %v89, %v9915
    %v9917 = vand.u32 %v9916, 4294901760
    %v9918 = vsub.f32 %v9916, %v9917
    %v9919 = vand.u32 %v9918, 4294901760
    %9920 = vmatpush1.msra.mxu0 %v9919
    %9921 = vmatprep.subr.mxu0 0.0
    %v9922 = vand.u32 %v90, 4294901760
    %v9923 = vsub.f32 %v90, %v9922
    %v9924 = vand.u32 %v9923, 4294901760
    %v9925 = vsub.f32 %v9923, %v9924
    %v9926 = vand.u32 %v9925, 4294901760
    %9927 = vmatpush1.msra.mxu0 %v9926
    %9928 = vmatprep.subr.mxu0 0.0
    %v9929 = vand.u32 %v91, 4294901760
    %v9930 = vsub.f32 %v91, %v9929
    %v9931 = vand.u32 %v9930, 4294901760
    %v9932 = vsub.f32 %v9930, %v9931
    %v9933 = vand.u32 %v9932, 4294901760
    %9934 = vmatpush1.msra.mxu0 %v9933
    %9935 = vmatprep.subr.mxu0 0.0
    %v9936 = vand.u32 %v92, 4294901760
    %v9937 = vsub.f32 %v92, %v9936
    %v9938 = vand.u32 %v9937, 4294901760
    %v9939 = vsub.f32 %v9937, %v9938
    %v9940 = vand.u32 %v9939, 4294901760
    %9941 = vmatpush1.msra.mxu0 %v9940
    %9942 = vmatprep.subr.mxu0 0.0
    %v9943 = vand.u32 %v93, 4294901760
    %v9944 = vsub.f32 %v93, %v9943
    %v9945 = vand.u32 %v9944, 4294901760
    %v9946 = vsub.f32 %v9944, %v9945
    %v9947 = vand.u32 %v9946, 4294901760
    %9948 = vmatpush1.msra.mxu0 %v9947
    %9949 = vmatprep.subr.mxu0 0.0
    %v9950 = vand.u32 %v94, 4294901760
    %v9951 = vsub.f32 %v94, %v9950
    %v9952 = vand.u32 %v9951, 4294901760
    %v9953 = vsub.f32 %v9951, %v9952
    %v9954 = vand.u32 %v9953, 4294901760
    %9955 = vmatpush1.msra.mxu0 %v9954
    %9956 = vmatprep.subr.mxu0 0.0
    %v9957 = vand.u32 %v95, 4294901760
    %v9958 = vsub.f32 %v95, %v9957
    %v9959 = vand.u32 %v9958, 4294901760
    %v9960 = vsub.f32 %v9958, %v9959
    %v9961 = vand.u32 %v9960, 4294901760
    %9962 = vmatpush1.msra.mxu0 %v9961
    %9963 = vmatprep.subr.mxu0 0.0
    %9964 = vmatpush1.msra.mxu0 0.0
    %9965 = vmatprep.subr.mxu0 0.0
    %9966 = vmatpush1.msra.mxu0 0.0
    %9967 = vmatprep.subr.mxu0 0.0
    %9968 = vmatpush1.msra.mxu0 0.0
    %9969 = vmatprep.subr.mxu0 0.0
    %9970 = vmatpush1.msra.mxu0 0.0
    %9971 = vmatprep.subr.mxu0 0.0
    %9972 = vmatpush1.msra.mxu0 0.0
    %9973 = vmatprep.subr.mxu0 0.0
    %9974 = vmatpush1.msra.mxu0 0.0
    %9975 = vmatprep.subr.mxu0 0.0
    %9976 = vmatpush1.msra.mxu0 0.0
    %9977 = vmatprep.subr.mxu0 0.0
    %9978 = vmatpush1.msra.mxu0 0.0
    %9979 = vmatprep.subr.mxu0 0.0
    %9980 = vmatpush1.msra.mxu0 0.0
    %9981 = vmatprep.subr.mxu0 0.0
    %9982 = vmatpush1.msra.mxu0 0.0
    %9983 = vmatprep.subr.mxu0 0.0
    %9984 = vmatpush1.msra.mxu0 0.0
    %9985 = vmatprep.subr.mxu0 0.0
    %9986 = vmatpush1.msra.mxu0 0.0
    %9987 = vmatprep.subr.mxu0 0.0
    %9988 = vmatpush1.msra.mxu0 0.0
    %9989 = vmatprep.subr.mxu0 0.0
    %9990 = vmatpush1.msra.mxu0 0.0
    %9991 = vmatprep.subr.mxu0 0.0
    %9992 = vmatpush1.msra.mxu0 0.0
    %9993 = vmatprep.subr.mxu0 0.0
    %9994 = vmatpush1.msra.mxu0 0.0
    %9995 = vmatprep.mubr.f32.mxu0 0.0
    %v9996 = vand.u32 %v9118, 4294901760
    %9997 = vmatmul.mubr.f32.gmra.mrb[0].mxu0 %v9996
    %v9998 = vpop.f32.mrb[0].mxu0
    %v9999 = vadd.f32 %v9848, %v9998
    %v10000 = vpop.f32.mrb[0].mxu0
    %10001 = vdwg.mxu0
    %10002 = vmatprep.subr.mxu0 0.0
    %v10003 = vand.u32 %v80, 4294901760
    %v10004 = vsub.f32 %v80, %v10003
    %10005 = vmatpush1.msra.mxu0 %v10004
    %10006 = vmatprep.subr.mxu0 0.0
    %v10007 = vand.u32 %v81, 4294901760
    %v10008 = vsub.f32 %v81, %v10007
    %10009 = vmatpush1.msra.mxu0 %v10008
    %10010 = vmatprep.subr.mxu0 0.0
    %v10011 = vand.u32 %v82, 4294901760
    %v10012 = vsub.f32 %v82, %v10011
    %10013 = vmatpush1.msra.mxu0 %v10012
    %10014 = vmatprep.subr.mxu0 0.0
    %v10015 = vand.u32 %v83, 4294901760
    %v10016 = vsub.f32 %v83, %v10015
    %10017 = vmatpush1.msra.mxu0 %v10016
    %10018 = vmatprep.subr.mxu0 0.0
    %v10019 = vand.u32 %v84, 4294901760
    %v10020 = vsub.f32 %v84, %v10019
    %10021 = vmatpush1.msra.mxu0 %v10020
    %10022 = vmatprep.subr.mxu0 0.0
    %v10023 = vand.u32 %v85, 4294901760
    %v10024 = vsub.f32 %v85, %v10023
    %10025 = vmatpush1.msra.mxu0 %v10024
    %10026 = vmatprep.subr.mxu0 0.0
    %v10027 = vand.u32 %v86, 4294901760
    %v10028 = vsub.f32 %v86, %v10027
    %10029 = vmatpush1.msra.mxu0 %v10028
    %10030 = vmatprep.subr.mxu0 0.0
    %v10031 = vand.u32 %v87, 4294901760
    %v10032 = vsub.f32 %v87, %v10031
    %10033 = vmatpush1.msra.mxu0 %v10032
    %10034 = vmatprep.subr.mxu0 0.0
    %v10035 = vand.u32 %v88, 4294901760
    %v10036 = vsub.f32 %v88, %v10035
    %10037 = vmatpush1.msra.mxu0 %v10036
    %10038 = vmatprep.subr.mxu0 0.0
    %v10039 = vand.u32 %v89, 4294901760
    %v10040 = vsub.f32 %v89, %v10039
    %10041 = vmatpush1.msra.mxu0 %v10040
    %10042 = vmatprep.subr.mxu0 0.0
    %v10043 = vand.u32 %v90, 4294901760
    %v10044 = vsub.f32 %v90, %v10043
    %10045 = vmatpush1.msra.mxu0 %v10044
    %10046 = vmatprep.subr.mxu0 0.0
    %v10047 = vand.u32 %v91, 4294901760
    %v10048 = vsub.f32 %v91, %v10047
    %10049 = vmatpush1.msra.mxu0 %v10048
    %10050 = vmatprep.subr.mxu0 0.0
    %v10051 = vand.u32 %v92, 4294901760
    %v10052 = vsub.f32 %v92, %v10051
    %10053 = vmatpush1.msra.mxu0 %v10052
    %10054 = vmatprep.subr.mxu0 0.0
    %v10055 = vand.u32 %v93, 4294901760
    %v10056 = vsub.f32 %v93, %v10055
    %10057 = vmatpush1.msra.mxu0 %v10056
    %10058 = vmatprep.subr.mxu0 0.0
    %v10059 = vand.u32 %v94, 4294901760
    %v10060 = vsub.f32 %v94, %v10059
    %10061 = vmatpush1.msra.mxu0 %v10060
    %10062 = vmatprep.subr.mxu0 0.0
    %v10063 = vand.u32 %v95, 4294901760
    %v10064 = vsub.f32 %v95, %v10063
    %10065 = vmatpush1.msra.mxu0 %v10064
    %10066 = vmatprep.subr.mxu0 0.0
    %10067 = vmatpush1.msra.mxu0 0.0
    %10068 = vmatprep.subr.mxu0 0.0
    %10069 = vmatpush1.msra.mxu0 0.0
    %10070 = vmatprep.subr.mxu0 0.0
    %10071 = vmatpush1.msra.mxu0 0.0
    %10072 = vmatprep.subr.mxu0 0.0
    %10073 = vmatpush1.msra.mxu0 0.0
    %10074 = vmatprep.subr.mxu0 0.0
    %10075 = vmatpush1.msra.mxu0 0.0
    %10076 = vmatprep.subr.mxu0 0.0
    %10077 = vmatpush1.msra.mxu0 0.0
    %10078 = vmatprep.subr.mxu0 0.0
    %10079 = vmatpush1.msra.mxu0 0.0
    %10080 = vmatprep.subr.mxu0 0.0
    %10081 = vmatpush1.msra.mxu0 0.0
    %10082 = vmatprep.subr.mxu0 0.0
    %10083 = vmatpush1.msra.mxu0 0.0
    %10084 = vmatprep.subr.mxu0 0.0
    %10085 = vmatpush1.msra.mxu0 0.0
    %10086 = vmatprep.subr.mxu0 0.0
    %10087 = vmatpush1.msra.mxu0 0.0
    %10088 = vmatprep.subr.mxu0 0.0
    %10089 = vmatpush1.msra.mxu0 0.0
    %10090 = vmatprep.subr.mxu0 0.0
    %10091 = vmatpush1.msra.mxu0 0.0
    %10092 = vmatprep.subr.mxu0 0.0
    %10093 = vmatpush1.msra.mxu0 0.0
    %10094 = vmatprep.subr.mxu0 0.0
    %10095 = vmatpush1.msra.mxu0 0.0
    %10096 = vmatprep.subr.mxu0 0.0
    %10097 = vmatpush1.msra.mxu0 0.0
    %10098 = vmatprep.mubr.f32.mxu0 0.0
    %v10099 = vand.u32 %v9118, 4294901760
    %v10100 = vsub.f32 %v9118, %v10099
    %10101 = vmatmul.mubr.f32.gmra.mrb[0].mxu0 %v10100
    %v10102 = vpop.f32.mrb[0].mxu0
    %v10103 = vadd.f32 %v9999, %v10102
    %v10104 = vpop.f32.mrb[0].mxu0
    %10105 = vdwg.mxu0
    %10106 = vmatprep.subr.mxu0 0.0
    %v10107 = vand.u32 %v80, 4294901760
    %10108 = vmatpush1.msra.mxu0 %v10107
    %10109 = vmatprep.subr.mxu0 0.0
    %v10110 = vand.u32 %v81, 4294901760
    %10111 = vmatpush1.msra.mxu0 %v10110
    %10112 = vmatprep.subr.mxu0 0.0
    %v10113 = vand.u32 %v82, 4294901760
    %10114 = vmatpush1.msra.mxu0 %v10113
    %10115 = vmatprep.subr.mxu0 0.0
    %v10116 = vand.u32 %v83, 4294901760
    %10117 = vmatpush1.msra.mxu0 %v10116
    %10118 = vmatprep.subr.mxu0 0.0
    %v10119 = vand.u32 %v84, 4294901760
    %10120 = vmatpush1.msra.mxu0 %v10119
    %10121 = vmatprep.subr.mxu0 0.0
    %v10122 = vand.u32 %v85, 4294901760
    %10123 = vmatpush1.msra.mxu0 %v10122
    %10124 = vmatprep.subr.mxu0 0.0
    %v10125 = vand.u32 %v86, 4294901760
    %10126 = vmatpush1.msra.mxu0 %v10125
    %10127 = vmatprep.subr.mxu0 0.0
    %v10128 = vand.u32 %v87, 4294901760
    %10129 = vmatpush1.msra.mxu0 %v10128
    %10130 = vmatprep.subr.mxu0 0.0
    %v10131 = vand.u32 %v88, 4294901760
    %10132 = vmatpush1.msra.mxu0 %v10131
    %10133 = vmatprep.subr.mxu0 0.0
    %v10134 = vand.u32 %v89, 4294901760
    %10135 = vmatpush1.msra.mxu0 %v10134
    %10136 = vmatprep.subr.mxu0 0.0
    %v10137 = vand.u32 %v90, 4294901760
    %10138 = vmatpush1.msra.mxu0 %v10137
    %10139 = vmatprep.subr.mxu0 0.0
    %v10140 = vand.u32 %v91, 4294901760
    %10141 = vmatpush1.msra.mxu0 %v10140
    %10142 = vmatprep.subr.mxu0 0.0
    %v10143 = vand.u32 %v92, 4294901760
    %10144 = vmatpush1.msra.mxu0 %v10143
    %10145 = vmatprep.subr.mxu0 0.0
    %v10146 = vand.u32 %v93, 4294901760
    %10147 = vmatpush1.msra.mxu0 %v10146
    %10148 = vmatprep.subr.mxu0 0.0
    %v10149 = vand.u32 %v94, 4294901760
    %10150 = vmatpush1.msra.mxu0 %v10149
    %10151 = vmatprep.subr.mxu0 0.0
    %v10152 = vand.u32 %v95, 4294901760
    %10153 = vmatpush1.msra.mxu0 %v10152
    %10154 = vmatprep.subr.mxu0 0.0
    %10155 = vmatpush1.msra.mxu0 0.0
    %10156 = vmatprep.subr.mxu0 0.0
    %10157 = vmatpush1.msra.mxu0 0.0
    %10158 = vmatprep.subr.mxu0 0.0
    %10159 = vmatpush1.msra.mxu0 0.0
    %10160 = vmatprep.subr.mxu0 0.0
    %10161 = vmatpush1.msra.mxu0 0.0
    %10162 = vmatprep.subr.mxu0 0.0
    %10163 = vmatpush1.msra.mxu0 0.0
    %10164 = vmatprep.subr.mxu0 0.0
    %10165 = vmatpush1.msra.mxu0 0.0
    %10166 = vmatprep.subr.mxu0 0.0
    %10167 = vmatpush1.msra.mxu0 0.0
    %10168 = vmatprep.subr.mxu0 0.0
    %10169 = vmatpush1.msra.mxu0 0.0
    %10170 = vmatprep.subr.mxu0 0.0
    %10171 = vmatpush1.msra.mxu0 0.0
    %10172 = vmatprep.subr.mxu0 0.0
    %10173 = vmatpush1.msra.mxu0 0.0
    %10174 = vmatprep.subr.mxu0 0.0
    %10175 = vmatpush1.msra.mxu0 0.0
    %10176 = vmatprep.subr.mxu0 0.0
    %10177 = vmatpush1.msra.mxu0 0.0
    %10178 = vmatprep.subr.mxu0 0.0
    %10179 = vmatpush1.msra.mxu0 0.0
    %10180 = vmatprep.subr.mxu0 0.0
    %10181 = vmatpush1.msra.mxu0 0.0
    %10182 = vmatprep.subr.mxu0 0.0
    %10183 = vmatpush1.msra.mxu0 0.0
    %10184 = vmatprep.subr.mxu0 0.0
    %10185 = vmatpush1.msra.mxu0 0.0
    %10186 = vmatprep.mubr.f32.mxu0 0.0
    %v10187 = vand.u32 %v9118, 4294901760
    %v10188 = vsub.f32 %v9118, %v10187
    %v10189 = vand.u32 %v10188, 4294901760
    %10190 = vmatmul.mubr.f32.gmra.mrb[0].mxu0 %v10189
    %v10191 = vpop.f32.mrb[0].mxu0
    %v10192 = vadd.f32 %v10103, %v10191
    %v10193 = vpop.f32.mrb[0].mxu0
    %10194 = vdwg.mxu0
    %10195 = vmatprep.subr.mxu0 0.0
    %v10196 = vand.u32 %v80, 4294901760
    %v10197 = vsub.f32 %v80, %v10196
    %v10198 = vand.u32 %v10197, 4294901760
    %10199 = vmatpush1.msra.mxu0 %v10198
    %10200 = vmatprep.subr.mxu0 0.0
    %v10201 = vand.u32 %v81, 4294901760
    %v10202 = vsub.f32 %v81, %v10201
    %v10203 = vand.u32 %v10202, 4294901760
    %10204 = vmatpush1.msra.mxu0 %v10203
    %10205 = vmatprep.subr.mxu0 0.0
    %v10206 = vand.u32 %v82, 4294901760
    %v10207 = vsub.f32 %v82, %v10206
    %v10208 = vand.u32 %v10207, 4294901760
    %10209 = vmatpush1.msra.mxu0 %v10208
    %10210 = vmatprep.subr.mxu0 0.0
    %v10211 = vand.u32 %v83, 4294901760
    %v10212 = vsub.f32 %v83, %v10211
    %v10213 = vand.u32 %v10212, 4294901760
    %10214 = vmatpush1.msra.mxu0 %v10213
    %10215 = vmatprep.subr.mxu0 0.0
    %v10216 = vand.u32 %v84, 4294901760
    %v10217 = vsub.f32 %v84, %v10216
    %v10218 = vand.u32 %v10217, 4294901760
    %10219 = vmatpush1.msra.mxu0 %v10218
    %10220 = vmatprep.subr.mxu0 0.0
    %v10221 = vand.u32 %v85, 4294901760
    %v10222 = vsub.f32 %v85, %v10221
    %v10223 = vand.u32 %v10222, 4294901760
    %10224 = vmatpush1.msra.mxu0 %v10223
    %10225 = vmatprep.subr.mxu0 0.0
    %v10226 = vand.u32 %v86, 4294901760
    %v10227 = vsub.f32 %v86, %v10226
    %v10228 = vand.u32 %v10227, 4294901760
    %10229 = vmatpush1.msra.mxu0 %v10228
    %10230 = vmatprep.subr.mxu0 0.0
    %v10231 = vand.u32 %v87, 4294901760
    %v10232 = vsub.f32 %v87, %v10231
    %v10233 = vand.u32 %v10232, 4294901760
    %10234 = vmatpush1.msra.mxu0 %v10233
    %10235 = vmatprep.subr.mxu0 0.0
    %v10236 = vand.u32 %v88, 4294901760
    %v10237 = vsub.f32 %v88, %v10236
    %v10238 = vand.u32 %v10237, 4294901760
    %10239 = vmatpush1.msra.mxu0 %v10238
    %10240 = vmatprep.subr.mxu0 0.0
    %v10241 = vand.u32 %v89, 4294901760
    %v10242 = vsub.f32 %v89, %v10241
    %v10243 = vand.u32 %v10242, 4294901760
    %10244 = vmatpush1.msra.mxu0 %v10243
    %10245 = vmatprep.subr.mxu0 0.0
    %v10246 = vand.u32 %v90, 4294901760
    %v10247 = vsub.f32 %v90, %v10246
    %v10248 = vand.u32 %v10247, 4294901760
    %10249 = vmatpush1.msra.mxu0 %v10248
    %10250 = vmatprep.subr.mxu0 0.0
    %v10251 = vand.u32 %v91, 4294901760
    %v10252 = vsub.f32 %v91, %v10251
    %v10253 = vand.u32 %v10252, 4294901760
    %10254 = vmatpush1.msra.mxu0 %v10253
    %10255 = vmatprep.subr.mxu0 0.0
    %v10256 = vand.u32 %v92, 4294901760
    %v10257 = vsub.f32 %v92, %v10256
    %v10258 = vand.u32 %v10257, 4294901760
    %10259 = vmatpush1.msra.mxu0 %v10258
    %10260 = vmatprep.subr.mxu0 0.0
    %v10261 = vand.u32 %v93, 4294901760
    %v10262 = vsub.f32 %v93, %v10261
    %v10263 = vand.u32 %v10262, 4294901760
    %10264 = vmatpush1.msra.mxu0 %v10263
    %10265 = vmatprep.subr.mxu0 0.0
    %v10266 = vand.u32 %v94, 4294901760
    %v10267 = vsub.f32 %v94, %v10266
    %v10268 = vand.u32 %v10267, 4294901760
    %10269 = vmatpush1.msra.mxu0 %v10268
    %10270 = vmatprep.subr.mxu0 0.0
    %v10271 = vand.u32 %v95, 4294901760
    %v10272 = vsub.f32 %v95, %v10271
    %v10273 = vand.u32 %v10272, 4294901760
    %10274 = vmatpush1.msra.mxu0 %v10273
    %10275 = vmatprep.subr.mxu0 0.0
    %10276 = vmatpush1.msra.mxu0 0.0
    %10277 = vmatprep.subr.mxu0 0.0
    %10278 = vmatpush1.msra.mxu0 0.0
    %10279 = vmatprep.subr.mxu0 0.0
    %10280 = vmatpush1.msra.mxu0 0.0
    %10281 = vmatprep.subr.mxu0 0.0
    %10282 = vmatpush1.msra.mxu0 0.0
    %10283 = vmatprep.subr.mxu0 0.0
    %10284 = vmatpush1.msra.mxu0 0.0
    %10285 = vmatprep.subr.mxu0 0.0
    %10286 = vmatpush1.msra.mxu0 0.0
    %10287 = vmatprep.subr.mxu0 0.0
    %10288 = vmatpush1.msra.mxu0 0.0
    %10289 = vmatprep.subr.mxu0 0.0
    %10290 = vmatpush1.msra.mxu0 0.0
    %10291 = vmatprep.subr.mxu0 0.0
    %10292 = vmatpush1.msra.mxu0 0.0
    %10293 = vmatprep.subr.mxu0 0.0
    %10294 = vmatpush1.msra.mxu0 0.0
    %10295 = vmatprep.subr.mxu0 0.0
    %10296 = vmatpush1.msra.mxu0 0.0
    %10297 = vmatprep.subr.mxu0 0.0
    %10298 = vmatpush1.msra.mxu0 0.0
    %10299 = vmatprep.subr.mxu0 0.0
    %10300 = vmatpush1.msra.mxu0 0.0
    %10301 = vmatprep.subr.mxu0 0.0
    %10302 = vmatpush1.msra.mxu0 0.0
    %10303 = vmatprep.subr.mxu0 0.0
    %10304 = vmatpush1.msra.mxu0 0.0
    %10305 = vmatprep.subr.mxu0 0.0
    %10306 = vmatpush1.msra.mxu0 0.0
    %10307 = vmatprep.mubr.f32.mxu0 0.0
    %v10308 = vand.u32 %v9118, 4294901760
    %10309 = vmatmul.mubr.f32.gmra.mrb[0].mxu0 %v10308
    %v10310 = vpop.f32.mrb[0].mxu0
    %v10311 = vadd.f32 %v10192, %v10310
    %v10312 = vpop.f32.mrb[0].mxu0
    %10313 = vdwg.mxu0
    %10314 = vmatprep.subr.mxu0 0.0
    %v10315 = vand.u32 %v80, 4294901760
    %10316 = vmatpush1.msra.mxu0 %v10315
    %10317 = vmatprep.subr.mxu0 0.0
    %v10318 = vand.u32 %v81, 4294901760
    %10319 = vmatpush1.msra.mxu0 %v10318
    %10320 = vmatprep.subr.mxu0 0.0
    %v10321 = vand.u32 %v82, 4294901760
    %10322 = vmatpush1.msra.mxu0 %v10321
    %10323 = vmatprep.subr.mxu0 0.0
    %v10324 = vand.u32 %v83, 4294901760
    %10325 = vmatpush1.msra.mxu0 %v10324
    %10326 = vmatprep.subr.mxu0 0.0
    %v10327 = vand.u32 %v84, 4294901760
    %10328 = vmatpush1.msra.mxu0 %v10327
    %10329 = vmatprep.subr.mxu0 0.0
    %v10330 = vand.u32 %v85, 4294901760
    %10331 = vmatpush1.msra.mxu0 %v10330
    %10332 = vmatprep.subr.mxu0 0.0
    %v10333 = vand.u32 %v86, 4294901760
    %10334 = vmatpush1.msra.mxu0 %v10333
    %10335 = vmatprep.subr.mxu0 0.0
    %v10336 = vand.u32 %v87, 4294901760
    %10337 = vmatpush1.msra.mxu0 %v10336
    %10338 = vmatprep.subr.mxu0 0.0
    %v10339 = vand.u32 %v88, 4294901760
    %10340 = vmatpush1.msra.mxu0 %v10339
    %10341 = vmatprep.subr.mxu0 0.0
    %v10342 = vand.u32 %v89, 4294901760
    %10343 = vmatpush1.msra.mxu0 %v10342
    %10344 = vmatprep.subr.mxu0 0.0
    %v10345 = vand.u32 %v90, 4294901760
    %10346 = vmatpush1.msra.mxu0 %v10345
    %10347 = vmatprep.subr.mxu0 0.0
    %v10348 = vand.u32 %v91, 4294901760
    %10349 = vmatpush1.msra.mxu0 %v10348
    %10350 = vmatprep.subr.mxu0 0.0
    %v10351 = vand.u32 %v92, 4294901760
    %10352 = vmatpush1.msra.mxu0 %v10351
    %10353 = vmatprep.subr.mxu0 0.0
    %v10354 = vand.u32 %v93, 4294901760
    %10355 = vmatpush1.msra.mxu0 %v10354
    %10356 = vmatprep.subr.mxu0 0.0
    %v10357 = vand.u32 %v94, 4294901760
    %10358 = vmatpush1.msra.mxu0 %v10357
    %10359 = vmatprep.subr.mxu0 0.0
    %v10360 = vand.u32 %v95, 4294901760
    %10361 = vmatpush1.msra.mxu0 %v10360
    %10362 = vmatprep.subr.mxu0 0.0
    %10363 = vmatpush1.msra.mxu0 0.0
    %10364 = vmatprep.subr.mxu0 0.0
    %10365 = vmatpush1.msra.mxu0 0.0
    %10366 = vmatprep.subr.mxu0 0.0
    %10367 = vmatpush1.msra.mxu0 0.0
    %10368 = vmatprep.subr.mxu0 0.0
    %10369 = vmatpush1.msra.mxu0 0.0
    %10370 = vmatprep.subr.mxu0 0.0
    %10371 = vmatpush1.msra.mxu0 0.0
    %10372 = vmatprep.subr.mxu0 0.0
    %10373 = vmatpush1.msra.mxu0 0.0
    %10374 = vmatprep.subr.mxu0 0.0
    %10375 = vmatpush1.msra.mxu0 0.0
    %10376 = vmatprep.subr.mxu0 0.0
    %10377 = vmatpush1.msra.mxu0 0.0
    %10378 = vmatprep.subr.mxu0 0.0
    %10379 = vmatpush1.msra.mxu0 0.0
    %10380 = vmatprep.subr.mxu0 0.0
    %10381 = vmatpush1.msra.mxu0 0.0
    %10382 = vmatprep.subr.mxu0 0.0
    %10383 = vmatpush1.msra.mxu0 0.0
    %10384 = vmatprep.subr.mxu0 0.0
    %10385 = vmatpush1.msra.mxu0 0.0
    %10386 = vmatprep.subr.mxu0 0.0
    %10387 = vmatpush1.msra.mxu0 0.0
    %10388 = vmatprep.subr.mxu0 0.0
    %10389 = vmatpush1.msra.mxu0 0.0
    %10390 = vmatprep.subr.mxu0 0.0
    %10391 = vmatpush1.msra.mxu0 0.0
    %10392 = vmatprep.subr.mxu0 0.0
    %10393 = vmatpush1.msra.mxu0 0.0
    %10394 = vmatprep.mubr.f32.mxu0 0.0
    %v10395 = vand.u32 %v9118, 4294901760
    %10396 = vmatmul.mubr.f32.gmra.mrb[0].mxu0 %v10395
    %v10397 = vpop.f32.mrb[0].mxu0
    %v10398 = vadd.f32 %v10311, %v10397
    %v10399 = vpop.f32.mrb[0].mxu0
    %10400 = vdwg.mxu0
    %v10401 = vmul.f32 %v9757, %v62
    %v10402 = vmul.f32 %v10398, %v63
    %v10403 = vadd.f32 %v10401, %v10402
    %s10404 = scalar_lea.vmem [#allocation8], 14
    %10405 = vst [vmem:[%s10404] sm:$0x3] %v10403
    // Predicated region
    $region34: #{tpu_custom_call.1} parent=1 // pred_check
      _
    $region35: #{tpu_custom_call.1} parent=1 // pred_check_branch
      %10407 = sbr.rel (0) target = $region37
    $region36: #{tpu_custom_call.1} parent=1 // pred_region
      %s10409 = ssub.s32 256, 256
      %10410 = vsyncadd [#allocation4], %s10409
      %s10411 = sshll.u32 [#allocation8], 4
      %s10412 = int_to_ptr.vmem [resolvable:$true] %s10411
      %10417 = dma.vmem_to_hbm [thread:$0]  %s10412, 256, %s5, [#allocation4], 32, 32, 2
    $region37: #{tpu_custom_call.1} parent=1 // pred_fallthru
      _
    // Predicated region
    $region38: #{tpu_custom_call.1} parent=1 // pred_check
      _
    $region39: #{tpu_custom_call.1} parent=1 // pred_check_branch
      %10419 = sbr.rel (0) target = $region41
    $region40: #{tpu_custom_call.1} parent=1 // pred_region
      %10420 = dma.done [#allocation4], 256
    $region41: #{tpu_custom_call.1} parent=1 // pred_fallthru
      _
    %10421 = vsyncpa [#allocation3], 1
    %10422 = vsyncpa [#allocation6], 1
    %10423 = vsyncpa [#allocation4], 1

</llo_original>
